<compile_context>
chip_gen: v7x
topology: tpu7x:2x2x1
jax: 0.10.0
libtpu: 0.0.40
codegen_flags: <defaults>
</compile_context>

<pallas_src>
import jax
import jax.numpy as jnp
import numpy as np
from jax import lax
from jax.experimental import pallas as pl
from jax.experimental.pallas import tpu as pltpu


_INV_SQRT2 = np.float32(1.0 / np.sqrt(2.0))


def _gelu_exact(x):
    # PyTorch nn.GELU() default is the exact erf formulation (f32 math).
    return 0.5 * x * (1.0 + lax.erf(x * _INV_SQRT2))


# --------------------------------------------------------------------------
# Kernel 1: 3-layer MLP projector (Linear -> GELU -> Linear -> GELU -> Linear)
# Grid: (batch tiles,).  Weights are full-resident (same block every step).
# --------------------------------------------------------------------------
def mlp_kernel(x_ref, w1_ref, b1_ref, w2_ref, b2_ref, w3_ref, b3_ref,
               xproj_ref):
    x = x_ref[...].astype(jnp.bfloat16)

    h = jnp.dot(x, w1_ref[...], preferred_element_type=jnp.float32)
    h = _gelu_exact(h + b1_ref[...])
    h = jnp.dot(h.astype(jnp.bfloat16), w2_ref[...],
                preferred_element_type=jnp.float32)
    h = _gelu_exact(h + b2_ref[...])
    xproj = jnp.dot(h.astype(jnp.bfloat16), w3_ref[...],
                    preferred_element_type=jnp.float32) + b3_ref[...]
    xproj_ref[...] = xproj.astype(xproj_ref.dtype)


# --------------------------------------------------------------------------
# Kernel 2: weight-normalized last layer on the L2-normalized input.
# Grid: (batch tiles, out_dim tiles).  V streams as (in_dim, tn) bf16 blocks;
# weight-norm is applied as a per-column post-scale s = g / ||V||_col.
# --------------------------------------------------------------------------
def logits_kernel(x_ref, v_ref, s_ref, logits_ref):
    x = x_ref[...].astype(jnp.float32)
    # F.normalize(x, p=2, dim=-1) with eps=1e-12:  x / max(||x||, 1e-12)
    ss = jnp.sum(x * x, axis=-1, keepdims=True)
    inv_nrm = lax.rsqrt(jnp.maximum(ss, 1e-24))          # EUP, no divide
    x_n = (x * inv_nrm).astype(jnp.bfloat16)

    raw = jnp.dot(x_n, v_ref[...], preferred_element_type=jnp.float32)
    logits_ref[...] = (raw * s_ref[...]).astype(logits_ref.dtype)


def _tile(dim, target, align):
    """Largest multiple of `align` that divides `dim` and is <= target;
    falls back to the full dim (always a legal block)."""
    if dim <= target:
        return dim
    t = (target // align) * align
    while t >= align:
        if dim % t == 0:
            return t
        t -= align
    return dim


def dino_head_forward(x, params):
    """x: (B, in_dim) float32.  Returns (x_proj, logits) in float32."""
    w1, b1, w2, b2, w3, b3, v, g = params
    B, in_dim = x.shape
    hidden = w1.shape[1]
    bottleneck = w3.shape[1]
    out_dim = v.shape[1]

    # Fold weight-norm into a per-column scale (computed once, in f32).
    v_col_norm = jnp.sqrt(jnp.sum(v.astype(jnp.float32) ** 2, axis=0,
                                  keepdims=True))
    s = (g.astype(jnp.float32) / jnp.maximum(v_col_norm, 1e-12))

    # bf16 weights -> native MXU dtype, half the DMA bytes per V tile.
    w1b = w1.astype(jnp.bfloat16)
    w2b = w2.astype(jnp.bfloat16)
    w3b = w3.astype(jnp.bfloat16)
    vb = v.astype(jnp.bfloat16)

    # Tile sizes: sized so 2x double-buffered V tiles + x/logits tiles stay
    # far below a 48 MiB VMEM cap (fits v7x's 64 MiB as well as v5e/v6e).
    bm = _tile(B, 256, 8)
    tn = _tile(out_dim, 2048, 128)
    vmem_cap = 48 << 20

    # ---- MLP projector ----------------------------------------------------
    xproj = pl.pallas_call(
        mlp_kernel,
        out_shape=jax.ShapeDtypeStruct((B, bottleneck), jnp.float32),
        grid=(B // bm,),
        in_specs=[
            pl.BlockSpec((bm, in_dim), lambda i: (i, 0)),
            pl.BlockSpec((in_dim, hidden), lambda i: (0, 0)),
            pl.BlockSpec((1, hidden), lambda i: (0, 0)),
            pl.BlockSpec((hidden, hidden), lambda i: (0, 0)),
            pl.BlockSpec((1, hidden), lambda i: (0, 0)),
            pl.BlockSpec((hidden, bottleneck), lambda i: (0, 0)),
            pl.BlockSpec((1, bottleneck), lambda i: (0, 0)),
        ],
        out_specs=pl.BlockSpec((bm, bottleneck), lambda i: (i, 0)),
        compiler_params=pltpu.CompilerParams(
            dimension_semantics=("parallel",),
            vmem_limit_bytes=vmem_cap),
    )(x, w1b, b1, w2b, b2, w3b, b3)

    # ---- weight-normalized last layer on normalized x ----------------------
    logits = pl.pallas_call(
        logits_kernel,
        out_shape=jax.ShapeDtypeStruct((B, out_dim), jnp.float32),
        grid=(B // bm, out_dim // tn),
        in_specs=[
            pl.BlockSpec((bm, in_dim), lambda i, j: (i, 0)),
            pl.BlockSpec((in_dim, tn), lambda i, j: (0, j)),
            pl.BlockSpec((1, tn), lambda i, j: (0, j)),
        ],
        out_specs=pl.BlockSpec((bm, tn), lambda i, j: (i, j)),
        compiler_params=pltpu.CompilerParams(
            dimension_semantics=("parallel", "parallel"),
            vmem_limit_bytes=vmem_cap),
    )(x, vb, s)

    return xproj, logits


def make_params(key, in_dim, hidden_dim, bottleneck_dim, out_dim):
    """Deterministic synthetic init (trunc_normal std=0.02 approximated by a
    clipped normal; biases zero; weight_g == 1, as in the module).  All
    weights stored pre-transposed as (fan_in, fan_out)."""
    ks = jax.random.split(key, 4)
    std = 0.02

    def tn(k, shape):
        return jnp.clip(std * jax.random.normal(k, shape, jnp.float32),
                        -2 * std, 2 * std)

    w1 = tn(ks[0], (in_dim, hidden_dim))
    b1 = jnp.zeros((1, hidden_dim), jnp.float32)
    w2 = tn(ks[1], (hidden_dim, hidden_dim))
    b2 = jnp.zeros((1, hidden_dim), jnp.float32)
    w3 = tn(ks[2], (hidden_dim, bottleneck_dim))
    b3 = jnp.zeros((1, bottleneck_dim), jnp.float32)
    # last_layer weight_v generic init; weight_g filled with 1.
    v = jax.random.normal(ks[3], (in_dim, out_dim), jnp.float32) * 0.1
    g = jnp.ones((1, out_dim), jnp.float32)
    return (w1, b1, w2, b2, w3, b3, v, g)


def reference_forward(x, params):
    """Pure-JAX f32 reference mirroring the PyTorch forward."""
    w1, b1, w2, b2, w3, b3, v, g = params
    h = _gelu_exact(x @ w1 + b1)
    h = _gelu_exact(h @ w2 + b2)
    x_proj = h @ w3 + b3
    x_n = x / jnp.maximum(jnp.linalg.norm(x, axis=-1, keepdims=True), 1e-12)
    w_last = v * (g / jnp.linalg.norm(v, axis=0, keepdims=True))
    logits = x_n @ w_last
    return x_proj, logits


if __name__ == "__main__":
    # Small but MXU/lane-friendly shapes (all feature dims multiples of 128,
    # batch a multiple of 8) per the performance review.
    B, in_dim, hidden_dim, bottleneck_dim, out_dim = 256, 256, 512, 256, 1024

    key = jax.random.PRNGKey(0)
    kx, kp = jax.random.split(key)
    x = jax.random.normal(kx, (B, in_dim), jnp.float32)
    params = make_params(kp, in_dim, hidden_dim, bottleneck_dim, out_dim)

    fwd = jax.jit(dino_head_forward)
    x_proj, logits = jax.block_until_ready(fwd(x, params))

    x_proj_ref, logits_ref = reference_forward(x, params)
    assert x_proj.shape == (B, bottleneck_dim) and logits.shape == (B, out_dim)
    # Matmuls run in bf16 with f32 accumulation -> relaxed tolerances vs the
    # pure-f32 reference.
    np.testing.assert_allclose(np.asarray(x_proj), np.asarray(x_proj_ref),
                               rtol=3e-2, atol=2e-3)
    np.testing.assert_allclose(np.asarray(logits), np.asarray(logits_ref),
                               rtol=3e-2, atol=2e-3)
    print("KERNEL_OK")
</pallas_src>

<mosaic_0001>
module attributes {stable_mosaic.version = 11 : i64} {
  func.func @mlp_kernel(%arg0: i32, %arg1: memref<256x256xf32, #tpu.memory_space<vmem>>, %arg2: memref<256x512xbf16, #tpu.memory_space<vmem>>, %arg3: memref<1x512xf32, #tpu.memory_space<vmem>>, %arg4: memref<512x512xbf16, #tpu.memory_space<vmem>>, %arg5: memref<1x512xf32, #tpu.memory_space<vmem>>, %arg6: memref<512x256xbf16, #tpu.memory_space<vmem>>, %arg7: memref<1x256xf32, #tpu.memory_space<vmem>>, %arg8: memref<256x256xf32, #tpu.memory_space<vmem>>) attributes {dimension_semantics = [#tpu.dimension_semantics<parallel>], iteration_bounds = array<i64: 1>, scalar_prefetch = 0 : i64, scratch_operands = 0 : i64, tpu.core_type = #tpu.core_type<tc>, window_params = [{transform_indices = @transform_0, window_bounds = array<i64: 256, 256>}, {pipeline_mode = #tpu.pipeline_mode<synchronous>, transform_indices = @transform_1, window_bounds = array<i64: 256, 512>}, {pipeline_mode = #tpu.pipeline_mode<synchronous>, transform_indices = @transform_2, window_bounds = array<i64: 1, 512>}, {pipeline_mode = #tpu.pipeline_mode<synchronous>, transform_indices = @transform_3, window_bounds = array<i64: 512, 512>}, {pipeline_mode = #tpu.pipeline_mode<synchronous>, transform_indices = @transform_4, window_bounds = array<i64: 1, 512>}, {pipeline_mode = #tpu.pipeline_mode<synchronous>, transform_indices = @transform_5, window_bounds = array<i64: 512, 256>}, {pipeline_mode = #tpu.pipeline_mode<synchronous>, transform_indices = @transform_6, window_bounds = array<i64: 1, 256>}, {transform_indices = @transform_7, window_bounds = array<i64: 256, 256>}]} {
    %c0 = arith.constant 0 : index
    %c0_0 = arith.constant 0 : index
    %0 = vector.load %arg1[%c0, %c0_0] : memref<256x256xf32, #tpu.memory_space<vmem>>, vector<256x256xf32>
    %1 = arith.truncf %0 : vector<256x256xf32> to vector<256x256xbf16>
    %c0_1 = arith.constant 0 : index
    %c0_2 = arith.constant 0 : index
    %2 = vector.load %arg2[%c0_1, %c0_2] : memref<256x512xbf16, #tpu.memory_space<vmem>>, vector<256x512xbf16>
    %cst = arith.constant dense<0.000000e+00> : vector<256x512xf32>
    %3 = tpu.matmul %1, %2, %cst {dimension_numbers = #tpu.dot_dimension_numbers<[1], [0], [0], [1], [0, 0, 1, 1], [], []>} : vector<256x256xbf16>, vector<256x512xbf16>, vector<256x512xf32> -> vector<256x512xf32>
    %c0_3 = arith.constant 0 : index
    %c0_4 = arith.constant 0 : index
    %4 = vector.load %arg3[%c0_3, %c0_4] : memref<1x512xf32, #tpu.memory_space<vmem>>, vector<1x512xf32>
    %5 = vector.broadcast %4 : vector<1x512xf32> to vector<256x512xf32>
    %6 = arith.addf %3, %5 : vector<256x512xf32>
    %cst_5 = arith.constant 5.000000e-01 : f32
    %7 = vector.broadcast %cst_5 : f32 to vector<256x512xf32>
    %8 = arith.mulf %7, %6 : vector<256x512xf32>
    %cst_6 = arith.constant 0.707106769 : f32
    %9 = vector.broadcast %cst_6 : f32 to vector<256x512xf32>
    %10 = arith.mulf %6, %9 : vector<256x512xf32>
    %11 = math.erf %10 : vector<256x512xf32>
    %cst_7 = arith.constant 1.000000e+00 : f32
    %12 = vector.broadcast %cst_7 : f32 to vector<256x512xf32>
    %13 = arith.addf %12, %11 : vector<256x512xf32>
    %14 = arith.mulf %8, %13 : vector<256x512xf32>
    %15 = arith.truncf %14 : vector<256x512xf32> to vector<256x512xbf16>
    %c0_8 = arith.constant 0 : index
    %c0_9 = arith.constant 0 : index
    %16 = vector.load %arg4[%c0_8, %c0_9] : memref<512x512xbf16, #tpu.memory_space<vmem>>, vector<512x512xbf16>
    %cst_10 = arith.constant dense<0.000000e+00> : vector<256x512xf32>
    %17 = tpu.matmul %15, %16, %cst_10 {dimension_numbers = #tpu.dot_dimension_numbers<[1], [0], [0], [1], [0, 0, 1, 1], [], []>} : vector<256x512xbf16>, vector<512x512xbf16>, vector<256x512xf32> -> vector<256x512xf32>
    %c0_11 = arith.constant 0 : index
    %c0_12 = arith.constant 0 : index
    %18 = vector.load %arg5[%c0_11, %c0_12] : memref<1x512xf32, #tpu.memory_space<vmem>>, vector<1x512xf32>
    %19 = vector.broadcast %18 : vector<1x512xf32> to vector<256x512xf32>
    %20 = arith.addf %17, %19 : vector<256x512xf32>
    %cst_13 = arith.constant 5.000000e-01 : f32
    %21 = vector.broadcast %cst_13 : f32 to vector<256x512xf32>
    %22 = arith.mulf %21, %20 : vector<256x512xf32>
    %cst_14 = arith.constant 0.707106769 : f32
    %23 = vector.broadcast %cst_14 : f32 to vector<256x512xf32>
    %24 = arith.mulf %20, %23 : vector<256x512xf32>
    %25 = math.erf %24 : vector<256x512xf32>
    %cst_15 = arith.constant 1.000000e+00 : f32
    %26 = vector.broadcast %cst_15 : f32 to vector<256x512xf32>
    %27 = arith.addf %26, %25 : vector<256x512xf32>
    %28 = arith.mulf %22, %27 : vector<256x512xf32>
    %29 = arith.truncf %28 : vector<256x512xf32> to vector<256x512xbf16>
    %c0_16 = arith.constant 0 : index
    %c0_17 = arith.constant 0 : index
    %30 = vector.load %arg6[%c0_16, %c0_17] : memref<512x256xbf16, #tpu.memory_space<vmem>>, vector<512x256xbf16>
    %cst_18 = arith.constant dense<0.000000e+00> : vector<256x256xf32>
    %31 = tpu.matmul %29, %30, %cst_18 {dimension_numbers = #tpu.dot_dimension_numbers<[1], [0], [0], [1], [0, 0, 1, 1], [], []>} : vector<256x512xbf16>, vector<512x256xbf16>, vector<256x256xf32> -> vector<256x256xf32>
    %c0_19 = arith.constant 0 : index
    %c0_20 = arith.constant 0 : index
    %32 = vector.load %arg7[%c0_19, %c0_20] : memref<1x256xf32, #tpu.memory_space<vmem>>, vector<1x256xf32>
    %33 = vector.broadcast %32 : vector<1x256xf32> to vector<256x256xf32>
    %34 = arith.addf %31, %33 : vector<256x256xf32>
    %c0_21 = arith.constant 0 : index
    %c0_22 = arith.constant 0 : index
    %35 = vector.load %arg8[%c0_21, %c0_22] : memref<256x256xf32, #tpu.memory_space<vmem>>, vector<256x256xf32>
    tpu.vector_store %arg8[%c0_21, %c0_22], %34 {strides = array<i32>} : memref<256x256xf32, #tpu.memory_space<vmem>>, vector<256x256xf32>,
    return
  }
  func.func @transform_0(%arg0: i32) -> (i32, i32) {
    %c0_i32 = arith.constant 0 : i32
    %c0_i32_0 = arith.constant 0 : i32
    return %arg0, %c0_i32 : i32, i32
  }
  func.func @transform_1(%arg0: i32) -> (i32, i32) {
    %c0_i32 = arith.constant 0 : i32
    %c0_i32_0 = arith.constant 0 : i32
    %c0_i32_1 = arith.constant 0 : i32
    return %c0_i32, %c0_i32_0 : i32, i32
  }
  func.func @transform_2(%arg0: i32) -> (i32, i32) {
    %c0_i32 = arith.constant 0 : i32
    %c0_i32_0 = arith.constant 0 : i32
    %c0_i32_1 = arith.constant 0 : i32
    return %c0_i32, %c0_i32_0 : i32, i32
  }
  func.func @transform_3(%arg0: i32) -> (i32, i32) {
    %c0_i32 = arith.constant 0 : i32
    %c0_i32_0 = arith.constant 0 : i32
    %c0_i32_1 = arith.constant 0 : i32
    return %c0_i32, %c0_i32_0 : i32, i32
  }
  func.func @transform_4(%arg0: i32) -> (i32, i32) {
    %c0_i32 = arith.constant 0 : i32
    %c0_i32_0 = arith.constant 0 : i32
    %c0_i32_1 = arith.constant 0 : i32
    return %c0_i32, %c0_i32_0 : i32, i32
  }
  func.func @transform_5(%arg0: i32) -> (i32, i32) {
    %c0_i32 = arith.constant 0 : i32
    %c0_i32_0 = arith.constant 0 : i32
    %c0_i32_1 = arith.constant 0 : i32
    return %c0_i32, %c0_i32_0 : i32, i32
  }
  func.func @transform_6(%arg0: i32) -> (i32, i32) {
    %c0_i32 = arith.constant 0 : i32
    %c0_i32_0 = arith.constant 0 : i32
    %c0_i32_1 = arith.constant 0 : i32
    return %c0_i32, %c0_i32_0 : i32, i32
  }
  func.func @transform_7(%arg0: i32) -> (i32, i32) {
    %c0_i32 = arith.constant 0 : i32
    %c0_i32_0 = arith.constant 0 : i32
    return %arg0, %c0_i32 : i32, i32
  }
}

module attributes {stable_mosaic.version = 11 : i64} {
  func.func @logits_kernel(%arg0: i32, %arg1: i32, %arg2: memref<256x256xf32, #tpu.memory_space<vmem>>, %arg3: memref<256x1024xbf16, #tpu.memory_space<vmem>>, %arg4: memref<1x1024xf32, #tpu.memory_space<vmem>>, %arg5: memref<256x1024xf32, #tpu.memory_space<vmem>>) attributes {dimension_semantics = [#tpu.dimension_semantics<parallel>, #tpu.dimension_semantics<parallel>], iteration_bounds = array<i64: 1, 1>, scalar_prefetch = 0 : i64, scratch_operands = 0 : i64, tpu.core_type = #tpu.core_type<tc>, window_params = [{transform_indices = @transform_0, window_bounds = array<i64: 256, 256>}, {transform_indices = @transform_1, window_bounds = array<i64: 256, 1024>}, {transform_indices = @transform_2, window_bounds = array<i64: 1, 1024>}, {transform_indices = @transform_3, window_bounds = array<i64: 256, 1024>}]} {
    %c0 = arith.constant 0 : index
    %c0_0 = arith.constant 0 : index
    %0 = vector.load %arg2[%c0, %c0_0] : memref<256x256xf32, #tpu.memory_space<vmem>>, vector<256x256xf32>
    %1 = arith.mulf %0, %0 : vector<256x256xf32>
    %cst = arith.constant dense<0.000000e+00> : vector<256xf32>
    %2 = vector.multi_reduction <add>, %1, %cst [1] : vector<256x256xf32> to vector<256xf32>
    %3 = vector.shape_cast %2 : vector<256xf32> to vector<256x1xf32>
    %cst_1 = arith.constant 1.000000e-24 : f32
    %4 = vector.broadcast %cst_1 : f32 to vector<256x1xf32>
    %5 = arith.maximumf %3, %4 : vector<256x1xf32>
    %6 = math.rsqrt %5 : vector<256x1xf32>
    %7 = vector.broadcast %6 : vector<256x1xf32> to vector<256x256xf32>
    %8 = arith.mulf %0, %7 : vector<256x256xf32>
    %9 = arith.truncf %8 : vector<256x256xf32> to vector<256x256xbf16>
    %c0_2 = arith.constant 0 : index
    %c0_3 = arith.constant 0 : index
    %10 = vector.load %arg3[%c0_2, %c0_3] : memref<256x1024xbf16, #tpu.memory_space<vmem>>, vector<256x1024xbf16>
    %cst_4 = arith.constant dense<0.000000e+00> : vector<256x1024xf32>
    %11 = tpu.matmul %9, %10, %cst_4 {dimension_numbers = #tpu.dot_dimension_numbers<[1], [0], [0], [1], [0, 0, 1, 1], [], []>} : vector<256x256xbf16>, vector<256x1024xbf16>, vector<256x1024xf32> -> vector<256x1024xf32>
    %c0_5 = arith.constant 0 : index
    %c0_6 = arith.constant 0 : index
    %12 = vector.load %arg4[%c0_5, %c0_6] : memref<1x1024xf32, #tpu.memory_space<vmem>>, vector<1x1024xf32>
    %13 = vector.broadcast %12 : vector<1x1024xf32> to vector<256x1024xf32>
    %14 = arith.mulf %11, %13 : vector<256x1024xf32>
    %c0_7 = arith.constant 0 : index
    %c0_8 = arith.constant 0 : index
    %15 = vector.load %arg5[%c0_7, %c0_8] : memref<256x1024xf32, #tpu.memory_space<vmem>>, vector<256x1024xf32>
    tpu.vector_store %arg5[%c0_7, %c0_8], %14 {strides = array<i32>} : memref<256x1024xf32, #tpu.memory_space<vmem>>, vector<256x1024xf32>,
    return
  }
  func.func @transform_0(%arg0: i32, %arg1: i32) -> (i32, i32) {
    %c0_i32 = arith.constant 0 : i32
    %c0_i32_0 = arith.constant 0 : i32
    return %arg0, %c0_i32 : i32, i32
  }
  func.func @transform_1(%arg0: i32, %arg1: i32) -> (i32, i32) {
    %c0_i32 = arith.constant 0 : i32
    %c0_i32_0 = arith.constant 0 : i32
    return %c0_i32, %arg1 : i32, i32
  }
  func.func @transform_2(%arg0: i32, %arg1: i32) -> (i32, i32) {
    %c0_i32 = arith.constant 0 : i32
    %c0_i32_0 = arith.constant 0 : i32
    return %c0_i32, %arg1 : i32, i32
  }
  func.func @transform_3(%arg0: i32, %arg1: i32) -> (i32, i32) {
    %c0_i32 = arith.constant 0 : i32
    return %arg0, %arg1 : i32, i32
  }
}

</mosaic_0001>

<llo_original>
// kernel: div.1
$region0: #{div.1}
  #allocation0 [shape = 's32[1]{0}', space=sflag, size = 0x4, scoped, tag = 'scoped memory for div.1']
  %s0 = inlined_call_operand.vmem [shape: f32[1,1024], index: 0, kind: input, shape index: {}]
  %s1 = inlined_call_operand.vmem [shape: f32[1,1024], index: 1, kind: input, shape index: {}]
  %s2 = inlined_call_operand.vmem [shape: f32[1,1024], index: 2, kind: output, shape index: {}]
  %v3 = vld [vmem:[%s0] sm:$0x1]
  %v4 = vld [vmem:[%s1] sm:$0x1]
  %5 = xla_tuple %v3, %v4
  %6 = xla_tuple %5
  %v7 = vrcp.pop %v4
  %v8 = vmul.f32 %v3, %v7
  %9 = xla_tuple %v8
  %10 = vst [vmem:[%s2] sm:$0x1] %v8
  %s11 = scalar_lea.vmem %s0, 1
  %v12 = vld [vmem:[%s11] sm:$0x1]
  %s13 = scalar_lea.vmem %s1, 1
  %v14 = vld [vmem:[%s13] sm:$0x1]
  %15 = xla_tuple %v12, %v14
  %16 = xla_tuple %15
  %v17 = vrcp.pop %v14
  %v18 = vmul.f32 %v12, %v17
  %19 = xla_tuple %v18
  %s20 = scalar_lea.vmem %s2, 1
  %21 = vst [vmem:[%s20] sm:$0x1] %v18
  %s22 = scalar_lea.vmem %s0, 2
  %v23 = vld [vmem:[%s22] sm:$0x1]
  %s24 = scalar_lea.vmem %s1, 2
  %v25 = vld [vmem:[%s24] sm:$0x1]
  %26 = xla_tuple %v23, %v25
  %27 = xla_tuple %26
  %v28 = vrcp.pop %v25
  %v29 = vmul.f32 %v23, %v28
  %30 = xla_tuple %v29
  %s31 = scalar_lea.vmem %s2, 2
  %32 = vst [vmem:[%s31] sm:$0x1] %v29
  %s33 = scalar_lea.vmem %s0, 3
  %v34 = vld [vmem:[%s33] sm:$0x1]
  %s35 = scalar_lea.vmem %s1, 3
  %v36 = vld [vmem:[%s35] sm:$0x1]
  %37 = xla_tuple %v34, %v36
  %38 = xla_tuple %37
  %v39 = vrcp.pop %v36
  %v40 = vmul.f32 %v34, %v39
  %41 = xla_tuple %v40
  %s42 = scalar_lea.vmem %s2, 3
  %43 = vst [vmem:[%s42] sm:$0x1] %v40
  %s44 = scalar_lea.vmem %s0, 4
  %v45 = vld [vmem:[%s44] sm:$0x1]
  %s46 = scalar_lea.vmem %s1, 4
  %v47 = vld [vmem:[%s46] sm:$0x1]
  %48 = xla_tuple %v45, %v47
  %49 = xla_tuple %48
  %v50 = vrcp.pop %v47
  %v51 = vmul.f32 %v45, %v50
  %52 = xla_tuple %v51
  %s53 = scalar_lea.vmem %s2, 4
  %54 = vst [vmem:[%s53] sm:$0x1] %v51
  %s55 = scalar_lea.vmem %s0, 5
  %v56 = vld [vmem:[%s55] sm:$0x1]
  %s57 = scalar_lea.vmem %s1, 5
  %v58 = vld [vmem:[%s57] sm:$0x1]
  %59 = xla_tuple %v56, %v58
  %60 = xla_tuple %59
  %v61 = vrcp.pop %v58
  %v62 = vmul.f32 %v56, %v61
  %63 = xla_tuple %v62
  %s64 = scalar_lea.vmem %s2, 5
  %65 = vst [vmem:[%s64] sm:$0x1] %v62
  %s66 = scalar_lea.vmem %s0, 6
  %v67 = vld [vmem:[%s66] sm:$0x1]
  %s68 = scalar_lea.vmem %s1, 6
  %v69 = vld [vmem:[%s68] sm:$0x1]
  %70 = xla_tuple %v67, %v69
  %71 = xla_tuple %70
  %v72 = vrcp.pop %v69
  %v73 = vmul.f32 %v67, %v72
  %74 = xla_tuple %v73
  %s75 = scalar_lea.vmem %s2, 6
  %76 = vst [vmem:[%s75] sm:$0x1] %v73
  %s77 = scalar_lea.vmem %s0, 7
  %v78 = vld [vmem:[%s77] sm:$0x1]
  %s79 = scalar_lea.vmem %s1, 7
  %v80 = vld [vmem:[%s79] sm:$0x1]
  %81 = xla_tuple %v78, %v80
  %82 = xla_tuple %81
  %v83 = vrcp.pop %v80
  %v84 = vmul.f32 %v78, %v83
  %85 = xla_tuple %v84
  %s86 = scalar_lea.vmem %s2, 7
  %87 = vst [vmem:[%s86] sm:$0x1] %v84

// kernel: dino_head_forward.3
$region0: #{dino_head_forward.3}
  #allocation0 [shape = 'u32[]', space=smem, size = 0x4, offset = 0x4, fixed_abs, tag = 'smem constant byte address 0x4 - core index']
  #allocation1 [shape = 'u32[144,128]{1,0:T(1,128)}', space=vmem, size = 0x12000, scoped, tag = 'internal scratch']
  %s0 = inlined_call_operand.vmem [shape: f32[256,256], index: 0, kind: input, shape index: {}]
  %s1 = inlined_call_operand.vmem [shape: bf16[256,1024], index: 1, kind: input, shape index: {}]
  %s2 = inlined_call_operand.vmem [shape: f32[1,1024], index: 2, kind: input, shape index: {}]
  %s3 = inlined_call_operand.hbm [shape: f32[256,1024], index: 3, kind: output, shape index: {}]
  %s4 = sld [smem:[#allocation0]]
  $region22: #{dino_head_forward.3} parent=0
    _
  %s6 = ssub.s32 1, %s4
  %s7 = scalar_select 0, %s6, %s4
  $region1: #{dino_head_forward.3} parent=0
    #allocation2 [shape = 'u8[1048576]{0}', space=vmem, size = 0x100000, scoped, tag = 'output window, operand 0, single buffered']
    #allocation3 [shape = 's32[1]{0}', space=sflag, size = 0x4, scoped, tag = 'scoped memory for dino_head_forward.3']
    %8 = vsyncpa [#allocation3], 0
    // Predicated region
    $region2: #{dino_head_forward.3} parent=1 // pred_check
      _
    $region3: #{dino_head_forward.3} parent=1 // pred_check_branch
      %10 = sbr.rel (0) target = $region5
    $region4: #{dino_head_forward.3} parent=1 // pred_region
      _
    $region5: #{dino_head_forward.3} parent=1 // pred_fallthru
      _
    // Predicated region
    $region6: #{dino_head_forward.3} parent=1 // pred_check
      _
    $region7: #{dino_head_forward.3} parent=1 // pred_check_branch
      %12 = sbr.rel (0) target = $region9
    $region8: #{dino_head_forward.3} parent=1 // pred_region
      _
    $region9: #{dino_head_forward.3} parent=1 // pred_fallthru
      _
    // Predicated region
    $region10: #{dino_head_forward.3} parent=1 // pred_check
      _
    $region11: #{dino_head_forward.3} parent=1 // pred_check_branch
      %14 = sbr.rel (0) target = $region13
    $region12: #{dino_head_forward.3} parent=1 // pred_region
      _
    $region13: #{dino_head_forward.3} parent=1 // pred_fallthru
      _
    %v15 = vld [vmem:[%s0] sm:$0xff]
    %v16 = vld [vmem:[%s0 + $0x8] sm:$0xff]
    %v17 = vld [vmem:[%s0 + $0x10] sm:$0xff]
    %v18 = vld [vmem:[%s0 + $0x18] sm:$0xff]
    %v19 = vld [vmem:[%s0 + $0x20] sm:$0xff]
    %v20 = vld [vmem:[%s0 + $0x28] sm:$0xff]
    %v21 = vld [vmem:[%s0 + $0x30] sm:$0xff]
    %v22 = vld [vmem:[%s0 + $0x38] sm:$0xff]
    %v23 = vld [vmem:[%s0 + $0x40] sm:$0xff]
    %v24 = vld [vmem:[%s0 + $0x48] sm:$0xff]
    %v25 = vld [vmem:[%s0 + $0x50] sm:$0xff]
    %v26 = vld [vmem:[%s0 + $0x58] sm:$0xff]
    %v27 = vld [vmem:[%s0 + $0x60] sm:$0xff]
    %v28 = vld [vmem:[%s0 + $0x68] sm:$0xff]
    %v29 = vld [vmem:[%s0 + $0x70] sm:$0xff]
    %v30 = vld [vmem:[%s0 + $0x78] sm:$0xff]
    %v31 = vld [vmem:[%s0 + $0x80] sm:$0xff]
    %v32 = vld [vmem:[%s0 + $0x88] sm:$0xff]
    %v33 = vld [vmem:[%s0 + $0x90] sm:$0xff]
    %v34 = vld [vmem:[%s0 + $0x98] sm:$0xff]
    %v35 = vld [vmem:[%s0 + $0xa0] sm:$0xff]
    %v36 = vld [vmem:[%s0 + $0xa8] sm:$0xff]
    %v37 = vld [vmem:[%s0 + $0xb0] sm:$0xff]
    %v38 = vld [vmem:[%s0 + $0xb8] sm:$0xff]
    %v39 = vld [vmem:[%s0 + $0xc0] sm:$0xff]
    %v40 = vld [vmem:[%s0 + $0xc8] sm:$0xff]
    %v41 = vld [vmem:[%s0 + $0xd0] sm:$0xff]
    %v42 = vld [vmem:[%s0 + $0xd8] sm:$0xff]
    %v43 = vld [vmem:[%s0 + $0xe0] sm:$0xff]
    %v44 = vld [vmem:[%s0 + $0xe8] sm:$0xff]
    %v45 = vld [vmem:[%s0 + $0xf0] sm:$0xff]
    %v46 = vld [vmem:[%s0 + $0xf8] sm:$0xff]
    %v47 = vld [vmem:[%s0 + $0x100] sm:$0xff]
    %v48 = vld [vmem:[%s0 + $0x108] sm:$0xff]
    %v49 = vld [vmem:[%s0 + $0x110] sm:$0xff]
    %v50 = vld [vmem:[%s0 + $0x118] sm:$0xff]
    %v51 = vld [vmem:[%s0 + $0x120] sm:$0xff]
    %v52 = vld [vmem:[%s0 + $0x128] sm:$0xff]
    %v53 = vld [vmem:[%s0 + $0x130] sm:$0xff]
    %v54 = vld [vmem:[%s0 + $0x138] sm:$0xff]
    %v55 = vld [vmem:[%s0 + $0x140] sm:$0xff]
    %v56 = vld [vmem:[%s0 + $0x148] sm:$0xff]
    %v57 = vld [vmem:[%s0 + $0x150] sm:$0xff]
    %v58 = vld [vmem:[%s0 + $0x158] sm:$0xff]
    %v59 = vld [vmem:[%s0 + $0x160] sm:$0xff]
    %v60 = vld [vmem:[%s0 + $0x168] sm:$0xff]
    %v61 = vld [vmem:[%s0 + $0x170] sm:$0xff]
    %v62 = vld [vmem:[%s0 + $0x178] sm:$0xff]
    %v63 = vld [vmem:[%s0 + $0x180] sm:$0xff]
    %v64 = vld [vmem:[%s0 + $0x188] sm:$0xff]
    %v65 = vld [vmem:[%s0 + $0x190] sm:$0xff]
    %v66 = vld [vmem:[%s0 + $0x198] sm:$0xff]
    %v67 = vld [vmem:[%s0 + $0x1a0] sm:$0xff]
    %v68 = vld [vmem:[%s0 + $0x1a8] sm:$0xff]
    %v69 = vld [vmem:[%s0 + $0x1b0] sm:$0xff]
    %v70 = vld [vmem:[%s0 + $0x1b8] sm:$0xff]
    %v71 = vld [vmem:[%s0 + $0x1c0] sm:$0xff]
    %v72 = vld [vmem:[%s0 + $0x1c8] sm:$0xff]
    %v73 = vld [vmem:[%s0 + $0x1d0] sm:$0xff]
    %v74 = vld [vmem:[%s0 + $0x1d8] sm:$0xff]
    %v75 = vld [vmem:[%s0 + $0x1e0] sm:$0xff]
    %v76 = vld [vmem:[%s0 + $0x1e8] sm:$0xff]
    %v77 = vld [vmem:[%s0 + $0x1f0] sm:$0xff]
    %v78 = vld [vmem:[%s0 + $0x1f8] sm:$0xff]
    %v79 = vmul.f32 %v15, %v15
    %v80 = vmul.f32 %v16, %v16
    %v81 = vmul.f32 %v17, %v17
    %v82 = vmul.f32 %v18, %v18
    %v83 = vmul.f32 %v19, %v19
    %v84 = vmul.f32 %v20, %v20
    %v85 = vmul.f32 %v21, %v21
    %v86 = vmul.f32 %v22, %v22
    %v87 = vmul.f32 %v23, %v23
    %v88 = vmul.f32 %v24, %v24
    %v89 = vmul.f32 %v25, %v25
    %v90 = vmul.f32 %v26, %v26
    %v91 = vmul.f32 %v27, %v27
    %v92 = vmul.f32 %v28, %v28
    %v93 = vmul.f32 %v29, %v29
    %v94 = vmul.f32 %v30, %v30
    %v95 = vmul.f32 %v31, %v31
    %v96 = vmul.f32 %v32, %v32
    %v97 = vmul.f32 %v33, %v33
    %v98 = vmul.f32 %v34, %v34
    %v99 = vmul.f32 %v35, %v35
    %v100 = vmul.f32 %v36, %v36
    %v101 = vmul.f32 %v37, %v37
    %v102 = vmul.f32 %v38, %v38
    %v103 = vmul.f32 %v39, %v39
    %v104 = vmul.f32 %v40, %v40
    %v105 = vmul.f32 %v41, %v41
    %v106 = vmul.f32 %v42, %v42
    %v107 = vmul.f32 %v43, %v43
    %v108 = vmul.f32 %v44, %v44
    %v109 = vmul.f32 %v45, %v45
    %v110 = vmul.f32 %v46, %v46
    %v111 = vmul.f32 %v47, %v47
    %v112 = vmul.f32 %v48, %v48
    %v113 = vmul.f32 %v49, %v49
    %v114 = vmul.f32 %v50, %v50
    %v115 = vmul.f32 %v51, %v51
    %v116 = vmul.f32 %v52, %v52
    %v117 = vmul.f32 %v53, %v53
    %v118 = vmul.f32 %v54, %v54
    %v119 = vmul.f32 %v55, %v55
    %v120 = vmul.f32 %v56, %v56
    %v121 = vmul.f32 %v57, %v57
    %v122 = vmul.f32 %v58, %v58
    %v123 = vmul.f32 %v59, %v59
    %v124 = vmul.f32 %v60, %v60
    %v125 = vmul.f32 %v61, %v61
    %v126 = vmul.f32 %v62, %v62
    %v127 = vmul.f32 %v63, %v63
    %v128 = vmul.f32 %v64, %v64
    %v129 = vmul.f32 %v65, %v65
    %v130 = vmul.f32 %v66, %v66
    %v131 = vmul.f32 %v67, %v67
    %v132 = vmul.f32 %v68, %v68
    %v133 = vmul.f32 %v69, %v69
    %v134 = vmul.f32 %v70, %v70
    %v135 = vmul.f32 %v71, %v71
    %v136 = vmul.f32 %v72, %v72
    %v137 = vmul.f32 %v73, %v73
    %v138 = vmul.f32 %v74, %v74
    %v139 = vmul.f32 %v75, %v75
    %v140 = vmul.f32 %v76, %v76
    %v141 = vmul.f32 %v77, %v77
    %v142 = vmul.f32 %v78, %v78
    %v143 = vadd.f32 %v79, %v80
    %144 = vadd.xlane.f32.xlu0 %v143
    %v145 = vpop.xlane.xlu0 %144
    %v146 = vadd.f32 %v81, %v82
    %147 = vadd.xlane.f32.xlu0 %v146
    %v148 = vpop.xlane.xlu0 %147
    %v149 = vadd.f32 %v83, %v84
    %150 = vadd.xlane.f32.xlu0 %v149
    %v151 = vpop.xlane.xlu0 %150
    %v152 = vadd.f32 %v85, %v86
    %153 = vadd.xlane.f32.xlu0 %v152
    %v154 = vpop.xlane.xlu0 %153
    %v155 = vadd.f32 %v87, %v88
    %156 = vadd.xlane.f32.xlu0 %v155
    %v157 = vpop.xlane.xlu0 %156
    %v158 = vadd.f32 %v89, %v90
    %159 = vadd.xlane.f32.xlu0 %v158
    %v160 = vpop.xlane.xlu0 %159
    %v161 = vadd.f32 %v91, %v92
    %162 = vadd.xlane.f32.xlu0 %v161
    %v163 = vpop.xlane.xlu0 %162
    %v164 = vadd.f32 %v93, %v94
    %165 = vadd.xlane.f32.xlu0 %v164
    %v166 = vpop.xlane.xlu0 %165
    %v167 = vadd.f32 %v95, %v96
    %168 = vadd.xlane.f32.xlu0 %v167
    %v169 = vpop.xlane.xlu0 %168
    %v170 = vadd.f32 %v97, %v98
    %171 = vadd.xlane.f32.xlu0 %v170
    %v172 = vpop.xlane.xlu0 %171
    %v173 = vadd.f32 %v99, %v100
    %174 = vadd.xlane.f32.xlu0 %v173
    %v175 = vpop.xlane.xlu0 %174
    %v176 = vadd.f32 %v101, %v102
    %177 = vadd.xlane.f32.xlu0 %v176
    %v178 = vpop.xlane.xlu0 %177
    %v179 = vadd.f32 %v103, %v104
    %180 = vadd.xlane.f32.xlu0 %v179
    %v181 = vpop.xlane.xlu0 %180
    %v182 = vadd.f32 %v105, %v106
    %183 = vadd.xlane.f32.xlu0 %v182
    %v184 = vpop.xlane.xlu0 %183
    %v185 = vadd.f32 %v107, %v108
    %186 = vadd.xlane.f32.xlu0 %v185
    %v187 = vpop.xlane.xlu0 %186
    %v188 = vadd.f32 %v109, %v110
    %189 = vadd.xlane.f32.xlu0 %v188
    %v190 = vpop.xlane.xlu0 %189
    %v191 = vadd.f32 %v111, %v112
    %192 = vadd.xlane.f32.xlu0 %v191
    %v193 = vpop.xlane.xlu0 %192
    %v194 = vadd.f32 %v113, %v114
    %195 = vadd.xlane.f32.xlu0 %v194
    %v196 = vpop.xlane.xlu0 %195
    %v197 = vadd.f32 %v115, %v116
    %198 = vadd.xlane.f32.xlu0 %v197
    %v199 = vpop.xlane.xlu0 %198
    %v200 = vadd.f32 %v117, %v118
    %201 = vadd.xlane.f32.xlu0 %v200
    %v202 = vpop.xlane.xlu0 %201
    %v203 = vadd.f32 %v119, %v120
    %204 = vadd.xlane.f32.xlu0 %v203
    %v205 = vpop.xlane.xlu0 %204
    %v206 = vadd.f32 %v121, %v122
    %207 = vadd.xlane.f32.xlu0 %v206
    %v208 = vpop.xlane.xlu0 %207
    %v209 = vadd.f32 %v123, %v124
    %210 = vadd.xlane.f32.xlu0 %v209
    %v211 = vpop.xlane.xlu0 %210
    %v212 = vadd.f32 %v125, %v126
    %213 = vadd.xlane.f32.xlu0 %v212
    %v214 = vpop.xlane.xlu0 %213
    %v215 = vadd.f32 %v127, %v128
    %216 = vadd.xlane.f32.xlu0 %v215
    %v217 = vpop.xlane.xlu0 %216
    %v218 = vadd.f32 %v129, %v130
    %219 = vadd.xlane.f32.xlu0 %v218
    %v220 = vpop.xlane.xlu0 %219
    %v221 = vadd.f32 %v131, %v132
    %222 = vadd.xlane.f32.xlu0 %v221
    %v223 = vpop.xlane.xlu0 %222
    %v224 = vadd.f32 %v133, %v134
    %225 = vadd.xlane.f32.xlu0 %v224
    %v226 = vpop.xlane.xlu0 %225
    %v227 = vadd.f32 %v135, %v136
    %228 = vadd.xlane.f32.xlu0 %v227
    %v229 = vpop.xlane.xlu0 %228
    %v230 = vadd.f32 %v137, %v138
    %231 = vadd.xlane.f32.xlu0 %v230
    %v232 = vpop.xlane.xlu0 %231
    %v233 = vadd.f32 %v139, %v140
    %234 = vadd.xlane.f32.xlu0 %v233
    %v235 = vpop.xlane.xlu0 %234
    %v236 = vadd.f32 %v141, %v142
    %237 = vadd.xlane.f32.xlu0 %v236
    %v238 = vpop.xlane.xlu0 %237
    %v239 = vmax.f32 %v145, 1e-24
    %v240 = vmax.f32 %v148, 1e-24
    %v241 = vmax.f32 %v151, 1e-24
    %v242 = vmax.f32 %v154, 1e-24
    %v243 = vmax.f32 %v157, 1e-24
    %v244 = vmax.f32 %v160, 1e-24
    %v245 = vmax.f32 %v163, 1e-24
    %v246 = vmax.f32 %v166, 1e-24
    %v247 = vmax.f32 %v169, 1e-24
    %v248 = vmax.f32 %v172, 1e-24
    %v249 = vmax.f32 %v175, 1e-24
    %v250 = vmax.f32 %v178, 1e-24
    %v251 = vmax.f32 %v181, 1e-24
    %v252 = vmax.f32 %v184, 1e-24
    %v253 = vmax.f32 %v187, 1e-24
    %v254 = vmax.f32 %v190, 1e-24
    %v255 = vmax.f32 %v193, 1e-24
    %v256 = vmax.f32 %v196, 1e-24
    %v257 = vmax.f32 %v199, 1e-24
    %v258 = vmax.f32 %v202, 1e-24
    %v259 = vmax.f32 %v205, 1e-24
    %v260 = vmax.f32 %v208, 1e-24
    %v261 = vmax.f32 %v211, 1e-24
    %v262 = vmax.f32 %v214, 1e-24
    %v263 = vmax.f32 %v217, 1e-24
    %v264 = vmax.f32 %v220, 1e-24
    %v265 = vmax.f32 %v223, 1e-24
    %v266 = vmax.f32 %v226, 1e-24
    %v267 = vmax.f32 %v229, 1e-24
    %v268 = vmax.f32 %v232, 1e-24
    %v269 = vmax.f32 %v235, 1e-24
    %v270 = vmax.f32 %v238, 1e-24
    %v271 = vrsqrt.pop %v239
    %v272 = vrsqrt.pop %v240
    %v273 = vrsqrt.pop %v241
    %v274 = vrsqrt.pop %v242
    %v275 = vrsqrt.pop %v243
    %v276 = vrsqrt.pop %v244
    %v277 = vrsqrt.pop %v245
    %v278 = vrsqrt.pop %v246
    %v279 = vrsqrt.pop %v247
    %v280 = vrsqrt.pop %v248
    %v281 = vrsqrt.pop %v249
    %v282 = vrsqrt.pop %v250
    %v283 = vrsqrt.pop %v251
    %v284 = vrsqrt.pop %v252
    %v285 = vrsqrt.pop %v253
    %v286 = vrsqrt.pop %v254
    %v287 = vrsqrt.pop %v255
    %v288 = vrsqrt.pop %v256
    %v289 = vrsqrt.pop %v257
    %v290 = vrsqrt.pop %v258
    %v291 = vrsqrt.pop %v259
    %v292 = vrsqrt.pop %v260
    %v293 = vrsqrt.pop %v261
    %v294 = vrsqrt.pop %v262
    %v295 = vrsqrt.pop %v263
    %v296 = vrsqrt.pop %v264
    %v297 = vrsqrt.pop %v265
    %v298 = vrsqrt.pop %v266
    %v299 = vrsqrt.pop %v267
    %v300 = vrsqrt.pop %v268
    %v301 = vrsqrt.pop %v269
    %v302 = vrsqrt.pop %v270
    %v303 = vmul.f32 %v15, %v271
    %v304 = vmul.f32 %v16, %v271
    %v305 = vmul.f32 %v17, %v272
    %v306 = vmul.f32 %v18, %v272
    %v307 = vmul.f32 %v19, %v273
    %v308 = vmul.f32 %v20, %v273
    %v309 = vmul.f32 %v21, %v274
    %v310 = vmul.f32 %v22, %v274
    %v311 = vmul.f32 %v23, %v275
    %v312 = vmul.f32 %v24, %v275
    %v313 = vmul.f32 %v25, %v276
    %v314 = vmul.f32 %v26, %v276
    %v315 = vmul.f32 %v27, %v277
    %v316 = vmul.f32 %v28, %v277
    %v317 = vmul.f32 %v29, %v278
    %v318 = vmul.f32 %v30, %v278
    %v319 = vmul.f32 %v31, %v279
    %v320 = vmul.f32 %v32, %v279
    %v321 = vmul.f32 %v33, %v280
    %v322 = vmul.f32 %v34, %v280
    %v323 = vmul.f32 %v35, %v281
    %v324 = vmul.f32 %v36, %v281
    %v325 = vmul.f32 %v37, %v282
    %v326 = vmul.f32 %v38, %v282
    %v327 = vmul.f32 %v39, %v283
    %v328 = vmul.f32 %v40, %v283
    %v329 = vmul.f32 %v41, %v284
    %v330 = vmul.f32 %v42, %v284
    %v331 = vmul.f32 %v43, %v285
    %v332 = vmul.f32 %v44, %v285
    %v333 = vmul.f32 %v45, %v286
    %v334 = vmul.f32 %v46, %v286
    %v335 = vmul.f32 %v47, %v287
    %v336 = vmul.f32 %v48, %v287
    %v337 = vmul.f32 %v49, %v288
    %v338 = vmul.f32 %v50, %v288
    %v339 = vmul.f32 %v51, %v289
    %v340 = vmul.f32 %v52, %v289
    %v341 = vmul.f32 %v53, %v290
    %v342 = vmul.f32 %v54, %v290
    %v343 = vmul.f32 %v55, %v291
    %v344 = vmul.f32 %v56, %v291
    %v345 = vmul.f32 %v57, %v292
    %v346 = vmul.f32 %v58, %v292
    %v347 = vmul.f32 %v59, %v293
    %v348 = vmul.f32 %v60, %v293
    %v349 = vmul.f32 %v61, %v294
    %v350 = vmul.f32 %v62, %v294
    %v351 = vmul.f32 %v63, %v295
    %v352 = vmul.f32 %v64, %v295
    %v353 = vmul.f32 %v65, %v296
    %v354 = vmul.f32 %v66, %v296
    %v355 = vmul.f32 %v67, %v297
    %v356 = vmul.f32 %v68, %v297
    %v357 = vmul.f32 %v69, %v298
    %v358 = vmul.f32 %v70, %v298
    %v359 = vmul.f32 %v71, %v299
    %v360 = vmul.f32 %v72, %v299
    %v361 = vmul.f32 %v73, %v300
    %v362 = vmul.f32 %v74, %v300
    %v363 = vmul.f32 %v75, %v301
    %v364 = vmul.f32 %v76, %v301
    %v365 = vmul.f32 %v77, %v302
    %v366 = vmul.f32 %v78, %v302
    %v367 = vpack.c.bf16 %v305, %v303
    %v368 = vpack.c.bf16 %v306, %v304
    %v369 = vpack.c.bf16 %v309, %v307
    %v370 = vpack.c.bf16 %v310, %v308
    %v371 = vpack.c.bf16 %v313, %v311
    %v372 = vpack.c.bf16 %v314, %v312
    %v373 = vpack.c.bf16 %v317, %v315
    %v374 = vpack.c.bf16 %v318, %v316
    %v375 = vpack.c.bf16 %v321, %v319
    %v376 = vpack.c.bf16 %v322, %v320
    %v377 = vpack.c.bf16 %v325, %v323
    %v378 = vpack.c.bf16 %v326, %v324
    %v379 = vpack.c.bf16 %v329, %v327
    %v380 = vpack.c.bf16 %v330, %v328
    %v381 = vpack.c.bf16 %v333, %v331
    %v382 = vpack.c.bf16 %v334, %v332
    %v383 = vpack.c.bf16 %v337, %v335
    %v384 = vpack.c.bf16 %v338, %v336
    %v385 = vpack.c.bf16 %v341, %v339
    %v386 = vpack.c.bf16 %v342, %v340
    %v387 = vpack.c.bf16 %v345, %v343
    %v388 = vpack.c.bf16 %v346, %v344
    %v389 = vpack.c.bf16 %v349, %v347
    %v390 = vpack.c.bf16 %v350, %v348
    %v391 = vpack.c.bf16 %v353, %v351
    %v392 = vpack.c.bf16 %v354, %v352
    %v393 = vpack.c.bf16 %v357, %v355
    %v394 = vpack.c.bf16 %v358, %v356
    %v395 = vpack.c.bf16 %v361, %v359
    %v396 = vpack.c.bf16 %v362, %v360
    %v397 = vpack.c.bf16 %v365, %v363
    %v398 = vpack.c.bf16 %v366, %v364
    %v399 = vld [vmem:[%s1] sm:$0xff]
    %v400 = vld [vmem:[%s1 + $0x8] sm:$0xff]
    %v401 = vld [vmem:[%s1 + $0x10] sm:$0xff]
    %v402 = vld [vmem:[%s1 + $0x18] sm:$0xff]
    %v403 = vld [vmem:[%s1 + $0x20] sm:$0xff]
    %v404 = vld [vmem:[%s1 + $0x28] sm:$0xff]
    %v405 = vld [vmem:[%s1 + $0x30] sm:$0xff]
    %v406 = vld [vmem:[%s1 + $0x38] sm:$0xff]
    %v407 = vld [vmem:[%s1 + $0x40] sm:$0xff]
    %v408 = vld [vmem:[%s1 + $0x48] sm:$0xff]
    %v409 = vld [vmem:[%s1 + $0x50] sm:$0xff]
    %v410 = vld [vmem:[%s1 + $0x58] sm:$0xff]
    %v411 = vld [vmem:[%s1 + $0x60] sm:$0xff]
    %v412 = vld [vmem:[%s1 + $0x68] sm:$0xff]
    %v413 = vld [vmem:[%s1 + $0x70] sm:$0xff]
    %v414 = vld [vmem:[%s1 + $0x78] sm:$0xff]
    %v415 = vld [vmem:[%s1 + $0x80] sm:$0xff]
    %v416 = vld [vmem:[%s1 + $0x88] sm:$0xff]
    %v417 = vld [vmem:[%s1 + $0x90] sm:$0xff]
    %v418 = vld [vmem:[%s1 + $0x98] sm:$0xff]
    %v419 = vld [vmem:[%s1 + $0xa0] sm:$0xff]
    %v420 = vld [vmem:[%s1 + $0xa8] sm:$0xff]
    %v421 = vld [vmem:[%s1 + $0xb0] sm:$0xff]
    %v422 = vld [vmem:[%s1 + $0xb8] sm:$0xff]
    %v423 = vld [vmem:[%s1 + $0xc0] sm:$0xff]
    %v424 = vld [vmem:[%s1 + $0xc8] sm:$0xff]
    %v425 = vld [vmem:[%s1 + $0xd0] sm:$0xff]
    %v426 = vld [vmem:[%s1 + $0xd8] sm:$0xff]
    %v427 = vld [vmem:[%s1 + $0xe0] sm:$0xff]
    %v428 = vld [vmem:[%s1 + $0xe8] sm:$0xff]
    %v429 = vld [vmem:[%s1 + $0xf0] sm:$0xff]
    %v430 = vld [vmem:[%s1 + $0xf8] sm:$0xff]
    %v431 = vld [vmem:[%s1 + $0x100] sm:$0xff]
    %v432 = vld [vmem:[%s1 + $0x108] sm:$0xff]
    %v433 = vld [vmem:[%s1 + $0x110] sm:$0xff]
    %v434 = vld [vmem:[%s1 + $0x118] sm:$0xff]
    %v435 = vld [vmem:[%s1 + $0x120] sm:$0xff]
    %v436 = vld [vmem:[%s1 + $0x128] sm:$0xff]
    %v437 = vld [vmem:[%s1 + $0x130] sm:$0xff]
    %v438 = vld [vmem:[%s1 + $0x138] sm:$0xff]
    %v439 = vld [vmem:[%s1 + $0x140] sm:$0xff]
    %v440 = vld [vmem:[%s1 + $0x148] sm:$0xff]
    %v441 = vld [vmem:[%s1 + $0x150] sm:$0xff]
    %v442 = vld [vmem:[%s1 + $0x158] sm:$0xff]
    %v443 = vld [vmem:[%s1 + $0x160] sm:$0xff]
    %v444 = vld [vmem:[%s1 + $0x168] sm:$0xff]
    %v445 = vld [vmem:[%s1 + $0x170] sm:$0xff]
    %v446 = vld [vmem:[%s1 + $0x178] sm:$0xff]
    %v447 = vld [vmem:[%s1 + $0x180] sm:$0xff]
    %v448 = vld [vmem:[%s1 + $0x188] sm:$0xff]
    %v449 = vld [vmem:[%s1 + $0x190] sm:$0xff]
    %v450 = vld [vmem:[%s1 + $0x198] sm:$0xff]
    %v451 = vld [vmem:[%s1 + $0x1a0] sm:$0xff]
    %v452 = vld [vmem:[%s1 + $0x1a8] sm:$0xff]
    %v453 = vld [vmem:[%s1 + $0x1b0] sm:$0xff]
    %v454 = vld [vmem:[%s1 + $0x1b8] sm:$0xff]
    %v455 = vld [vmem:[%s1 + $0x1c0] sm:$0xff]
    %v456 = vld [vmem:[%s1 + $0x1c8] sm:$0xff]
    %v457 = vld [vmem:[%s1 + $0x1d0] sm:$0xff]
    %v458 = vld [vmem:[%s1 + $0x1d8] sm:$0xff]
    %v459 = vld [vmem:[%s1 + $0x1e0] sm:$0xff]
    %v460 = vld [vmem:[%s1 + $0x1e8] sm:$0xff]
    %v461 = vld [vmem:[%s1 + $0x1f0] sm:$0xff]
    %v462 = vld [vmem:[%s1 + $0x1f8] sm:$0xff]
    %v463 = vld [vmem:[%s1 + $0x200] sm:$0xff]
    %v464 = vld [vmem:[%s1 + $0x208] sm:$0xff]
    %v465 = vld [vmem:[%s1 + $0x210] sm:$0xff]
    %v466 = vld [vmem:[%s1 + $0x218] sm:$0xff]
    %v467 = vld [vmem:[%s1 + $0x220] sm:$0xff]
    %v468 = vld [vmem:[%s1 + $0x228] sm:$0xff]
    %v469 = vld [vmem:[%s1 + $0x230] sm:$0xff]
    %v470 = vld [vmem:[%s1 + $0x238] sm:$0xff]
    %v471 = vld [vmem:[%s1 + $0x240] sm:$0xff]
    %v472 = vld [vmem:[%s1 + $0x248] sm:$0xff]
    %v473 = vld [vmem:[%s1 + $0x250] sm:$0xff]
    %v474 = vld [vmem:[%s1 + $0x258] sm:$0xff]
    %v475 = vld [vmem:[%s1 + $0x260] sm:$0xff]
    %v476 = vld [vmem:[%s1 + $0x268] sm:$0xff]
    %v477 = vld [vmem:[%s1 + $0x270] sm:$0xff]
    %v478 = vld [vmem:[%s1 + $0x278] sm:$0xff]
    %v479 = vld [vmem:[%s1 + $0x280] sm:$0xff]
    %v480 = vld [vmem:[%s1 + $0x288] sm:$0xff]
    %v481 = vld [vmem:[%s1 + $0x290] sm:$0xff]
    %v482 = vld [vmem:[%s1 + $0x298] sm:$0xff]
    %v483 = vld [vmem:[%s1 + $0x2a0] sm:$0xff]
    %v484 = vld [vmem:[%s1 + $0x2a8] sm:$0xff]
    %v485 = vld [vmem:[%s1 + $0x2b0] sm:$0xff]
    %v486 = vld [vmem:[%s1 + $0x2b8] sm:$0xff]
    %v487 = vld [vmem:[%s1 + $0x2c0] sm:$0xff]
    %v488 = vld [vmem:[%s1 + $0x2c8] sm:$0xff]
    %v489 = vld [vmem:[%s1 + $0x2d0] sm:$0xff]
    %v490 = vld [vmem:[%s1 + $0x2d8] sm:$0xff]
    %v491 = vld [vmem:[%s1 + $0x2e0] sm:$0xff]
    %v492 = vld [vmem:[%s1 + $0x2e8] sm:$0xff]
    %v493 = vld [vmem:[%s1 + $0x2f0] sm:$0xff]
    %v494 = vld [vmem:[%s1 + $0x2f8] sm:$0xff]
    %v495 = vld [vmem:[%s1 + $0x300] sm:$0xff]
    %v496 = vld [vmem:[%s1 + $0x308] sm:$0xff]
    %v497 = vld [vmem:[%s1 + $0x310] sm:$0xff]
    %v498 = vld [vmem:[%s1 + $0x318] sm:$0xff]
    %v499 = vld [vmem:[%s1 + $0x320] sm:$0xff]
    %v500 = vld [vmem:[%s1 + $0x328] sm:$0xff]
    %v501 = vld [vmem:[%s1 + $0x330] sm:$0xff]
    %v502 = vld [vmem:[%s1 + $0x338] sm:$0xff]
    %v503 = vld [vmem:[%s1 + $0x340] sm:$0xff]
    %v504 = vld [vmem:[%s1 + $0x348] sm:$0xff]
    %v505 = vld [vmem:[%s1 + $0x350] sm:$0xff]
    %v506 = vld [vmem:[%s1 + $0x358] sm:$0xff]
    %v507 = vld [vmem:[%s1 + $0x360] sm:$0xff]
    %v508 = vld [vmem:[%s1 + $0x368] sm:$0xff]
    %v509 = vld [vmem:[%s1 + $0x370] sm:$0xff]
    %v510 = vld [vmem:[%s1 + $0x378] sm:$0xff]
    %v511 = vld [vmem:[%s1 + $0x380] sm:$0xff]
    %v512 = vld [vmem:[%s1 + $0x388] sm:$0xff]
    %v513 = vld [vmem:[%s1 + $0x390] sm:$0xff]
    %v514 = vld [vmem:[%s1 + $0x398] sm:$0xff]
    %v515 = vld [vmem:[%s1 + $0x3a0] sm:$0xff]
    %v516 = vld [vmem:[%s1 + $0x3a8] sm:$0xff]
    %v517 = vld [vmem:[%s1 + $0x3b0] sm:$0xff]
    %v518 = vld [vmem:[%s1 + $0x3b8] sm:$0xff]
    %v519 = vld [vmem:[%s1 + $0x3c0] sm:$0xff]
    %v520 = vld [vmem:[%s1 + $0x3c8] sm:$0xff]
    %v521 = vld [vmem:[%s1 + $0x3d0] sm:$0xff]
    %v522 = vld [vmem:[%s1 + $0x3d8] sm:$0xff]
    %v523 = vld [vmem:[%s1 + $0x3e0] sm:$0xff]
    %v524 = vld [vmem:[%s1 + $0x3e8] sm:$0xff]
    %v525 = vld [vmem:[%s1 + $0x3f0] sm:$0xff]
    %v526 = vld [vmem:[%s1 + $0x3f8] sm:$0xff]
    %v655 = vunpack.c.l.b16 %v399
    %v656 = vunpack.c.h.b16 %v399
    %v657 = vunpack.c.l.b16 %v400
    %v658 = vunpack.c.h.b16 %v400
    %v659 = vunpack.c.l.b16 %v401
    %v660 = vunpack.c.h.b16 %v401
    %v661 = vunpack.c.l.b16 %v402
    %v662 = vunpack.c.h.b16 %v402
    %v663 = vunpack.c.l.b16 %v403
    %v664 = vunpack.c.h.b16 %v403
    %v665 = vunpack.c.l.b16 %v404
    %v666 = vunpack.c.h.b16 %v404
    %v667 = vunpack.c.l.b16 %v405
    %v668 = vunpack.c.h.b16 %v405
    %v669 = vunpack.c.l.b16 %v406
    %v670 = vunpack.c.h.b16 %v406
    %v671 = vunpack.c.l.b16 %v407
    %v672 = vunpack.c.h.b16 %v407
    %v673 = vunpack.c.l.b16 %v408
    %v674 = vunpack.c.h.b16 %v408
    %v675 = vunpack.c.l.b16 %v409
    %v676 = vunpack.c.h.b16 %v409
    %v677 = vunpack.c.l.b16 %v410
    %v678 = vunpack.c.h.b16 %v410
    %v679 = vunpack.c.l.b16 %v411
    %v680 = vunpack.c.h.b16 %v411
    %v681 = vunpack.c.l.b16 %v412
    %v682 = vunpack.c.h.b16 %v412
    %v683 = vunpack.c.l.b16 %v413
    %v684 = vunpack.c.h.b16 %v413
    %v685 = vunpack.c.l.b16 %v414
    %v686 = vunpack.c.h.b16 %v414
    %v687 = vunpack.c.l.b16 %v415
    %v688 = vunpack.c.h.b16 %v415
    %v689 = vunpack.c.l.b16 %v416
    %v690 = vunpack.c.h.b16 %v416
    %v691 = vunpack.c.l.b16 %v417
    %v692 = vunpack.c.h.b16 %v417
    %v693 = vunpack.c.l.b16 %v418
    %v694 = vunpack.c.h.b16 %v418
    %v695 = vunpack.c.l.b16 %v419
    %v696 = vunpack.c.h.b16 %v419
    %v697 = vunpack.c.l.b16 %v420
    %v698 = vunpack.c.h.b16 %v420
    %v699 = vunpack.c.l.b16 %v421
    %v700 = vunpack.c.h.b16 %v421
    %v701 = vunpack.c.l.b16 %v422
    %v702 = vunpack.c.h.b16 %v422
    %v703 = vunpack.c.l.b16 %v423
    %v704 = vunpack.c.h.b16 %v423
    %v705 = vunpack.c.l.b16 %v424
    %v706 = vunpack.c.h.b16 %v424
    %v707 = vunpack.c.l.b16 %v425
    %v708 = vunpack.c.h.b16 %v425
    %v709 = vunpack.c.l.b16 %v426
    %v710 = vunpack.c.h.b16 %v426
    %v711 = vunpack.c.l.b16 %v427
    %v712 = vunpack.c.h.b16 %v427
    %v713 = vunpack.c.l.b16 %v428
    %v714 = vunpack.c.h.b16 %v428
    %v715 = vunpack.c.l.b16 %v429
    %v716 = vunpack.c.h.b16 %v429
    %v717 = vunpack.c.l.b16 %v430
    %v718 = vunpack.c.h.b16 %v430
    %v719 = vunpack.c.l.b16 %v431
    %v720 = vunpack.c.h.b16 %v431
    %v721 = vunpack.c.l.b16 %v432
    %v722 = vunpack.c.h.b16 %v432
    %v723 = vunpack.c.l.b16 %v433
    %v724 = vunpack.c.h.b16 %v433
    %v725 = vunpack.c.l.b16 %v434
    %v726 = vunpack.c.h.b16 %v434
    %v727 = vunpack.c.l.b16 %v435
    %v728 = vunpack.c.h.b16 %v435
    %v729 = vunpack.c.l.b16 %v436
    %v730 = vunpack.c.h.b16 %v436
    %v731 = vunpack.c.l.b16 %v437
    %v732 = vunpack.c.h.b16 %v437
    %v733 = vunpack.c.l.b16 %v438
    %v734 = vunpack.c.h.b16 %v438
    %v735 = vunpack.c.l.b16 %v439
    %v736 = vunpack.c.h.b16 %v439
    %v737 = vunpack.c.l.b16 %v440
    %v738 = vunpack.c.h.b16 %v440
    %v739 = vunpack.c.l.b16 %v441
    %v740 = vunpack.c.h.b16 %v441
    %v741 = vunpack.c.l.b16 %v442
    %v742 = vunpack.c.h.b16 %v442
    %v743 = vunpack.c.l.b16 %v443
    %v744 = vunpack.c.h.b16 %v443
    %v745 = vunpack.c.l.b16 %v444
    %v746 = vunpack.c.h.b16 %v444
    %v747 = vunpack.c.l.b16 %v445
    %v748 = vunpack.c.h.b16 %v445
    %v749 = vunpack.c.l.b16 %v446
    %v750 = vunpack.c.h.b16 %v446
    %v751 = vunpack.c.l.b16 %v447
    %v752 = vunpack.c.h.b16 %v447
    %v753 = vunpack.c.l.b16 %v448
    %v754 = vunpack.c.h.b16 %v448
    %v755 = vunpack.c.l.b16 %v449
    %v756 = vunpack.c.h.b16 %v449
    %v757 = vunpack.c.l.b16 %v450
    %v758 = vunpack.c.h.b16 %v450
    %v759 = vunpack.c.l.b16 %v451
    %v760 = vunpack.c.h.b16 %v451
    %v761 = vunpack.c.l.b16 %v452
    %v762 = vunpack.c.h.b16 %v452
    %v763 = vunpack.c.l.b16 %v453
    %v764 = vunpack.c.h.b16 %v453
    %v765 = vunpack.c.l.b16 %v454
    %v766 = vunpack.c.h.b16 %v454
    %v767 = vunpack.c.l.b16 %v455
    %v768 = vunpack.c.h.b16 %v455
    %v769 = vunpack.c.l.b16 %v456
    %v770 = vunpack.c.h.b16 %v456
    %v771 = vunpack.c.l.b16 %v457
    %v772 = vunpack.c.h.b16 %v457
    %v773 = vunpack.c.l.b16 %v458
    %v774 = vunpack.c.h.b16 %v458
    %v775 = vunpack.c.l.b16 %v459
    %v776 = vunpack.c.h.b16 %v459
    %v777 = vunpack.c.l.b16 %v460
    %v778 = vunpack.c.h.b16 %v460
    %v779 = vunpack.c.l.b16 %v461
    %v780 = vunpack.c.h.b16 %v461
    %v781 = vunpack.c.l.b16 %v462
    %v782 = vunpack.c.h.b16 %v462
    %v783 = vunpack.c.l.b16 %v463
    %v784 = vunpack.c.h.b16 %v463
    %v785 = vunpack.c.l.b16 %v464
    %v786 = vunpack.c.h.b16 %v464
    %v787 = vunpack.c.l.b16 %v465
    %v788 = vunpack.c.h.b16 %v465
    %v789 = vunpack.c.l.b16 %v466
    %v790 = vunpack.c.h.b16 %v466
    %v791 = vunpack.c.l.b16 %v467
    %v792 = vunpack.c.h.b16 %v467
    %v793 = vunpack.c.l.b16 %v468
    %v794 = vunpack.c.h.b16 %v468
    %v795 = vunpack.c.l.b16 %v469
    %v796 = vunpack.c.h.b16 %v469
    %v797 = vunpack.c.l.b16 %v470
    %v798 = vunpack.c.h.b16 %v470
    %v799 = vunpack.c.l.b16 %v471
    %v800 = vunpack.c.h.b16 %v471
    %v801 = vunpack.c.l.b16 %v472
    %v802 = vunpack.c.h.b16 %v472
    %v803 = vunpack.c.l.b16 %v473
    %v804 = vunpack.c.h.b16 %v473
    %v805 = vunpack.c.l.b16 %v474
    %v806 = vunpack.c.h.b16 %v474
    %v807 = vunpack.c.l.b16 %v475
    %v808 = vunpack.c.h.b16 %v475
    %v809 = vunpack.c.l.b16 %v476
    %v810 = vunpack.c.h.b16 %v476
    %v811 = vunpack.c.l.b16 %v477
    %v812 = vunpack.c.h.b16 %v477
    %v813 = vunpack.c.l.b16 %v478
    %v814 = vunpack.c.h.b16 %v478
    %v815 = vunpack.c.l.b16 %v479
    %v816 = vunpack.c.h.b16 %v479
    %v817 = vunpack.c.l.b16 %v480
    %v818 = vunpack.c.h.b16 %v480
    %v819 = vunpack.c.l.b16 %v481
    %v820 = vunpack.c.h.b16 %v481
    %v821 = vunpack.c.l.b16 %v482
    %v822 = vunpack.c.h.b16 %v482
    %v823 = vunpack.c.l.b16 %v483
    %v824 = vunpack.c.h.b16 %v483
    %v825 = vunpack.c.l.b16 %v484
    %v826 = vunpack.c.h.b16 %v484
    %v827 = vunpack.c.l.b16 %v485
    %v828 = vunpack.c.h.b16 %v485
    %v829 = vunpack.c.l.b16 %v486
    %v830 = vunpack.c.h.b16 %v486
    %v831 = vunpack.c.l.b16 %v487
    %v832 = vunpack.c.h.b16 %v487
    %v833 = vunpack.c.l.b16 %v488
    %v834 = vunpack.c.h.b16 %v488
    %v835 = vunpack.c.l.b16 %v489
    %v836 = vunpack.c.h.b16 %v489
    %v837 = vunpack.c.l.b16 %v490
    %v838 = vunpack.c.h.b16 %v490
    %v839 = vunpack.c.l.b16 %v491
    %v840 = vunpack.c.h.b16 %v491
    %v841 = vunpack.c.l.b16 %v492
    %v842 = vunpack.c.h.b16 %v492
    %v843 = vunpack.c.l.b16 %v493
    %v844 = vunpack.c.h.b16 %v493
    %v845 = vunpack.c.l.b16 %v494
    %v846 = vunpack.c.h.b16 %v494
    %v847 = vunpack.c.l.b16 %v495
    %v848 = vunpack.c.h.b16 %v495
    %v849 = vunpack.c.l.b16 %v496
    %v850 = vunpack.c.h.b16 %v496
    %v851 = vunpack.c.l.b16 %v497
    %v852 = vunpack.c.h.b16 %v497
    %v853 = vunpack.c.l.b16 %v498
    %v854 = vunpack.c.h.b16 %v498
    %v855 = vunpack.c.l.b16 %v499
    %v856 = vunpack.c.h.b16 %v499
    %v857 = vunpack.c.l.b16 %v500
    %v858 = vunpack.c.h.b16 %v500
    %v859 = vunpack.c.l.b16 %v501
    %v860 = vunpack.c.h.b16 %v501
    %v861 = vunpack.c.l.b16 %v502
    %v862 = vunpack.c.h.b16 %v502
    %v863 = vunpack.c.l.b16 %v503
    %v864 = vunpack.c.h.b16 %v503
    %v865 = vunpack.c.l.b16 %v504
    %v866 = vunpack.c.h.b16 %v504
    %v867 = vunpack.c.l.b16 %v505
    %v868 = vunpack.c.h.b16 %v505
    %v869 = vunpack.c.l.b16 %v506
    %v870 = vunpack.c.h.b16 %v506
    %v871 = vunpack.c.l.b16 %v507
    %v872 = vunpack.c.h.b16 %v507
    %v873 = vunpack.c.l.b16 %v508
    %v874 = vunpack.c.h.b16 %v508
    %v875 = vunpack.c.l.b16 %v509
    %v876 = vunpack.c.h.b16 %v509
    %v877 = vunpack.c.l.b16 %v510
    %v878 = vunpack.c.h.b16 %v510
    %v879 = vunpack.c.l.b16 %v511
    %v880 = vunpack.c.h.b16 %v511
    %v881 = vunpack.c.l.b16 %v512
    %v882 = vunpack.c.h.b16 %v512
    %v883 = vunpack.c.l.b16 %v513
    %v884 = vunpack.c.h.b16 %v513
    %v885 = vunpack.c.l.b16 %v514
    %v886 = vunpack.c.h.b16 %v514
    %v887 = vunpack.c.l.b16 %v515
    %v888 = vunpack.c.h.b16 %v515
    %v889 = vunpack.c.l.b16 %v516
    %v890 = vunpack.c.h.b16 %v516
    %v891 = vunpack.c.l.b16 %v517
    %v892 = vunpack.c.h.b16 %v517
    %v893 = vunpack.c.l.b16 %v518
    %v894 = vunpack.c.h.b16 %v518
    %v895 = vunpack.c.l.b16 %v519
    %v896 = vunpack.c.h.b16 %v519
    %v897 = vunpack.c.l.b16 %v520
    %v898 = vunpack.c.h.b16 %v520
    %v899 = vunpack.c.l.b16 %v521
    %v900 = vunpack.c.h.b16 %v521
    %v901 = vunpack.c.l.b16 %v522
    %v902 = vunpack.c.h.b16 %v522
    %v903 = vunpack.c.l.b16 %v523
    %v904 = vunpack.c.h.b16 %v523
    %v905 = vunpack.c.l.b16 %v524
    %v906 = vunpack.c.h.b16 %v524
    %v907 = vunpack.c.l.b16 %v525
    %v908 = vunpack.c.h.b16 %v525
    %v909 = vunpack.c.l.b16 %v526
    %v910 = vunpack.c.h.b16 %v526
    %v911 = vpack.c.b16 %v663, %v655
    %v912 = vpack.c.b16 %v664, %v656
    %v913 = vpack.c.b16 %v665, %v657
    %v914 = vpack.c.b16 %v666, %v658
    %v915 = vpack.c.b16 %v667, %v659
    %v916 = vpack.c.b16 %v668, %v660
    %v917 = vpack.c.b16 %v669, %v661
    %v918 = vpack.c.b16 %v670, %v662
    %v919 = vpack.c.b16 %v679, %v671
    %v920 = vpack.c.b16 %v680, %v672
    %v921 = vpack.c.b16 %v681, %v673
    %v922 = vpack.c.b16 %v682, %v674
    %v923 = vpack.c.b16 %v683, %v675
    %v924 = vpack.c.b16 %v684, %v676
    %v925 = vpack.c.b16 %v685, %v677
    %v926 = vpack.c.b16 %v686, %v678
    %v927 = vpack.c.b16 %v695, %v687
    %v928 = vpack.c.b16 %v696, %v688
    %v929 = vpack.c.b16 %v697, %v689
    %v930 = vpack.c.b16 %v698, %v690
    %v931 = vpack.c.b16 %v699, %v691
    %v932 = vpack.c.b16 %v700, %v692
    %v933 = vpack.c.b16 %v701, %v693
    %v934 = vpack.c.b16 %v702, %v694
    %v935 = vpack.c.b16 %v711, %v703
    %v936 = vpack.c.b16 %v712, %v704
    %v937 = vpack.c.b16 %v713, %v705
    %v938 = vpack.c.b16 %v714, %v706
    %v939 = vpack.c.b16 %v715, %v707
    %v940 = vpack.c.b16 %v716, %v708
    %v941 = vpack.c.b16 %v717, %v709
    %v942 = vpack.c.b16 %v718, %v710
    %v943 = vpack.c.b16 %v727, %v719
    %v944 = vpack.c.b16 %v728, %v720
    %v945 = vpack.c.b16 %v729, %v721
    %v946 = vpack.c.b16 %v730, %v722
    %v947 = vpack.c.b16 %v731, %v723
    %v948 = vpack.c.b16 %v732, %v724
    %v949 = vpack.c.b16 %v733, %v725
    %v950 = vpack.c.b16 %v734, %v726
    %v951 = vpack.c.b16 %v743, %v735
    %v952 = vpack.c.b16 %v744, %v736
    %v953 = vpack.c.b16 %v745, %v737
    %v954 = vpack.c.b16 %v746, %v738
    %v955 = vpack.c.b16 %v747, %v739
    %v956 = vpack.c.b16 %v748, %v740
    %v957 = vpack.c.b16 %v749, %v741
    %v958 = vpack.c.b16 %v750, %v742
    %v959 = vpack.c.b16 %v759, %v751
    %v960 = vpack.c.b16 %v760, %v752
    %v961 = vpack.c.b16 %v761, %v753
    %v962 = vpack.c.b16 %v762, %v754
    %v963 = vpack.c.b16 %v763, %v755
    %v964 = vpack.c.b16 %v764, %v756
    %v965 = vpack.c.b16 %v765, %v757
    %v966 = vpack.c.b16 %v766, %v758
    %v967 = vpack.c.b16 %v775, %v767
    %v968 = vpack.c.b16 %v776, %v768
    %v969 = vpack.c.b16 %v777, %v769
    %v970 = vpack.c.b16 %v778, %v770
    %v971 = vpack.c.b16 %v779, %v771
    %v972 = vpack.c.b16 %v780, %v772
    %v973 = vpack.c.b16 %v781, %v773
    %v974 = vpack.c.b16 %v782, %v774
    %v975 = vpack.c.b16 %v791, %v783
    %v976 = vpack.c.b16 %v792, %v784
    %v977 = vpack.c.b16 %v793, %v785
    %v978 = vpack.c.b16 %v794, %v786
    %v979 = vpack.c.b16 %v795, %v787
    %v980 = vpack.c.b16 %v796, %v788
    %v981 = vpack.c.b16 %v797, %v789
    %v982 = vpack.c.b16 %v798, %v790
    %v983 = vpack.c.b16 %v807, %v799
    %v984 = vpack.c.b16 %v808, %v800
    %v985 = vpack.c.b16 %v809, %v801
    %v986 = vpack.c.b16 %v810, %v802
    %v987 = vpack.c.b16 %v811, %v803
    %v988 = vpack.c.b16 %v812, %v804
    %v989 = vpack.c.b16 %v813, %v805
    %v990 = vpack.c.b16 %v814, %v806
    %v991 = vpack.c.b16 %v823, %v815
    %v992 = vpack.c.b16 %v824, %v816
    %v993 = vpack.c.b16 %v825, %v817
    %v994 = vpack.c.b16 %v826, %v818
    %v995 = vpack.c.b16 %v827, %v819
    %v996 = vpack.c.b16 %v828, %v820
    %v997 = vpack.c.b16 %v829, %v821
    %v998 = vpack.c.b16 %v830, %v822
    %v999 = vpack.c.b16 %v839, %v831
    %v1000 = vpack.c.b16 %v840, %v832
    %v1001 = vpack.c.b16 %v841, %v833
    %v1002 = vpack.c.b16 %v842, %v834
    %v1003 = vpack.c.b16 %v843, %v835
    %v1004 = vpack.c.b16 %v844, %v836
    %v1005 = vpack.c.b16 %v845, %v837
    %v1006 = vpack.c.b16 %v846, %v838
    %v1007 = vpack.c.b16 %v855, %v847
    %v1008 = vpack.c.b16 %v856, %v848
    %v1009 = vpack.c.b16 %v857, %v849
    %v1010 = vpack.c.b16 %v858, %v850
    %v1011 = vpack.c.b16 %v859, %v851
    %v1012 = vpack.c.b16 %v860, %v852
    %v1013 = vpack.c.b16 %v861, %v853
    %v1014 = vpack.c.b16 %v862, %v854
    %v1015 = vpack.c.b16 %v871, %v863
    %v1016 = vpack.c.b16 %v872, %v864
    %v1017 = vpack.c.b16 %v873, %v865
    %v1018 = vpack.c.b16 %v874, %v866
    %v1019 = vpack.c.b16 %v875, %v867
    %v1020 = vpack.c.b16 %v876, %v868
    %v1021 = vpack.c.b16 %v877, %v869
    %v1022 = vpack.c.b16 %v878, %v870
    %v1023 = vpack.c.b16 %v887, %v879
    %v1024 = vpack.c.b16 %v888, %v880
    %v1025 = vpack.c.b16 %v889, %v881
    %v1026 = vpack.c.b16 %v890, %v882
    %v1027 = vpack.c.b16 %v891, %v883
    %v1028 = vpack.c.b16 %v892, %v884
    %v1029 = vpack.c.b16 %v893, %v885
    %v1030 = vpack.c.b16 %v894, %v886
    %v1031 = vpack.c.b16 %v903, %v895
    %v1032 = vpack.c.b16 %v904, %v896
    %v1033 = vpack.c.b16 %v905, %v897
    %v1034 = vpack.c.b16 %v906, %v898
    %v1035 = vpack.c.b16 %v907, %v899
    %v1036 = vpack.c.b16 %v908, %v900
    %v1037 = vpack.c.b16 %v909, %v901
    %v1038 = vpack.c.b16 %v910, %v902
    %1167 = vmatprep.subr.bf16.mxu0 %v912
    %1168 = vmatpush1.bf16.msra.mxu0 %v911
    %1169 = vmatprep.subr.bf16.mxu0 %v920
    %1170 = vmatpush1.bf16.msra.mxu0 %v919
    %1171 = vmatprep.subr.bf16.mxu0 %v928
    %1172 = vmatpush1.bf16.msra.mxu0 %v927
    %1173 = vmatprep.subr.bf16.mxu0 %v936
    %1174 = vmatpush1.bf16.msra.mxu0 %v935
    %1175 = vmatprep.subr.bf16.mxu0 %v944
    %1176 = vmatpush1.bf16.msra.mxu0 %v943
    %1177 = vmatprep.subr.bf16.mxu0 %v952
    %1178 = vmatpush1.bf16.msra.mxu0 %v951
    %1179 = vmatprep.subr.bf16.mxu0 %v960
    %1180 = vmatpush1.bf16.msra.mxu0 %v959
    %1181 = vmatprep.subr.bf16.mxu0 %v968
    %1182 = vmatpush1.bf16.msra.mxu0 %v967
    %1183 = vmatprep.subr.bf16.mxu0 %v976
    %1184 = vmatpush1.bf16.msra.mxu0 %v975
    %1185 = vmatprep.subr.bf16.mxu0 %v984
    %1186 = vmatpush1.bf16.msra.mxu0 %v983
    %1187 = vmatprep.subr.bf16.mxu0 %v992
    %1188 = vmatpush1.bf16.msra.mxu0 %v991
    %1189 = vmatprep.subr.bf16.mxu0 %v1000
    %1190 = vmatpush1.bf16.msra.mxu0 %v999
    %1191 = vmatprep.subr.bf16.mxu0 %v1008
    %1192 = vmatpush1.bf16.msra.mxu0 %v1007
    %1193 = vmatprep.subr.bf16.mxu0 %v1016
    %1194 = vmatpush1.bf16.msra.mxu0 %v1015
    %1195 = vmatprep.subr.bf16.mxu0 %v1024
    %1196 = vmatpush1.bf16.msra.mxu0 %v1023
    %1197 = vmatprep.subr.bf16.mxu0 %v1032
    %1198 = vmatpush1.bf16.msra.mxu0 %v1031
    %1199 = vmatprep.mubr.bf16.mxu0 %v368
    %1200 = vmatmul.mubr.bf16.gmra.mrb[0].mxu0 %v367
    %v1201 = vpop.f32.mrb[0].mxu0
    %v1202 = vadd.f32 0.0, %v1201
    %v1203 = vpop.f32.mrb[0].mxu0
    %v1204 = vadd.f32 0.0, %v1203
    %v1205 = vpop.f32.mrb[0].mxu0
    %v1206 = vadd.f32 0.0, %v1205
    %v1207 = vpop.f32.mrb[0].mxu0
    %v1208 = vadd.f32 0.0, %v1207
    %1209 = vmatprep.mubr.bf16.mxu0 %v370
    %1210 = vmatmul.mubr.bf16.gmra.mrb[0].mxu0 %v369
    %v1211 = vpop.f32.mrb[0].mxu0
    %v1212 = vadd.f32 0.0, %v1211
    %v1213 = vpop.f32.mrb[0].mxu0
    %v1214 = vadd.f32 0.0, %v1213
    %v1215 = vpop.f32.mrb[0].mxu0
    %v1216 = vadd.f32 0.0, %v1215
    %v1217 = vpop.f32.mrb[0].mxu0
    %v1218 = vadd.f32 0.0, %v1217
    %1219 = vmatprep.mubr.bf16.mxu0 %v372
    %1220 = vmatmul.mubr.bf16.gmra.mrb[0].mxu0 %v371
    %v1221 = vpop.f32.mrb[0].mxu0
    %v1222 = vadd.f32 0.0, %v1221
    %v1223 = vpop.f32.mrb[0].mxu0
    %v1224 = vadd.f32 0.0, %v1223
    %v1225 = vpop.f32.mrb[0].mxu0
    %v1226 = vadd.f32 0.0, %v1225
    %v1227 = vpop.f32.mrb[0].mxu0
    %v1228 = vadd.f32 0.0, %v1227
    %1229 = vmatprep.mubr.bf16.mxu0 %v374
    %1230 = vmatmul.mubr.bf16.gmra.mrb[0].mxu0 %v373
    %v1231 = vpop.f32.mrb[0].mxu0
    %v1232 = vadd.f32 0.0, %v1231
    %v1233 = vpop.f32.mrb[0].mxu0
    %v1234 = vadd.f32 0.0, %v1233
    %v1235 = vpop.f32.mrb[0].mxu0
    %v1236 = vadd.f32 0.0, %v1235
    %v1237 = vpop.f32.mrb[0].mxu0
    %v1238 = vadd.f32 0.0, %v1237
    %1239 = vmatprep.mubr.bf16.mxu0 %v376
    %1240 = vmatmul.mubr.bf16.gmra.mrb[0].mxu0 %v375
    %v1241 = vpop.f32.mrb[0].mxu0
    %v1242 = vadd.f32 0.0, %v1241
    %v1243 = vpop.f32.mrb[0].mxu0
    %v1244 = vadd.f32 0.0, %v1243
    %v1245 = vpop.f32.mrb[0].mxu0
    %v1246 = vadd.f32 0.0, %v1245
    %v1247 = vpop.f32.mrb[0].mxu0
    %v1248 = vadd.f32 0.0, %v1247
    %1249 = vmatprep.mubr.bf16.mxu0 %v378
    %1250 = vmatmul.mubr.bf16.gmra.mrb[0].mxu0 %v377
    %v1251 = vpop.f32.mrb[0].mxu0
    %v1252 = vadd.f32 0.0, %v1251
    %v1253 = vpop.f32.mrb[0].mxu0
    %v1254 = vadd.f32 0.0, %v1253
    %v1255 = vpop.f32.mrb[0].mxu0
    %v1256 = vadd.f32 0.0, %v1255
    %v1257 = vpop.f32.mrb[0].mxu0
    %v1258 = vadd.f32 0.0, %v1257
    %1259 = vmatprep.mubr.bf16.mxu0 %v380
    %1260 = vmatmul.mubr.bf16.gmra.mrb[0].mxu0 %v379
    %v1261 = vpop.f32.mrb[0].mxu0
    %v1262 = vadd.f32 0.0, %v1261
    %v1263 = vpop.f32.mrb[0].mxu0
    %v1264 = vadd.f32 0.0, %v1263
    %v1265 = vpop.f32.mrb[0].mxu0
    %v1266 = vadd.f32 0.0, %v1265
    %v1267 = vpop.f32.mrb[0].mxu0
    %v1268 = vadd.f32 0.0, %v1267
    %1269 = vmatprep.mubr.bf16.mxu0 %v382
    %1270 = vmatmul.mubr.bf16.gmra.mrb[0].mxu0 %v381
    %v1271 = vpop.f32.mrb[0].mxu0
    %v1272 = vadd.f32 0.0, %v1271
    %v1273 = vpop.f32.mrb[0].mxu0
    %v1274 = vadd.f32 0.0, %v1273
    %v1275 = vpop.f32.mrb[0].mxu0
    %v1276 = vadd.f32 0.0, %v1275
    %v1277 = vpop.f32.mrb[0].mxu0
    %v1278 = vadd.f32 0.0, %v1277
    %1279 = vmatprep.mubr.bf16.mxu0 %v384
    %1280 = vmatmul.mubr.bf16.gmra.mrb[0].mxu0 %v383
    %v1281 = vpop.f32.mrb[0].mxu0
    %v1282 = vadd.f32 0.0, %v1281
    %v1283 = vpop.f32.mrb[0].mxu0
    %v1284 = vadd.f32 0.0, %v1283
    %v1285 = vpop.f32.mrb[0].mxu0
    %v1286 = vadd.f32 0.0, %v1285
    %v1287 = vpop.f32.mrb[0].mxu0
    %v1288 = vadd.f32 0.0, %v1287
    %1289 = vmatprep.mubr.bf16.mxu0 %v386
    %1290 = vmatmul.mubr.bf16.gmra.mrb[0].mxu0 %v385
    %v1291 = vpop.f32.mrb[0].mxu0
    %v1292 = vadd.f32 0.0, %v1291
    %v1293 = vpop.f32.mrb[0].mxu0
    %v1294 = vadd.f32 0.0, %v1293
    %v1295 = vpop.f32.mrb[0].mxu0
    %v1296 = vadd.f32 0.0, %v1295
    %v1297 = vpop.f32.mrb[0].mxu0
    %v1298 = vadd.f32 0.0, %v1297
    %1299 = vmatprep.mubr.bf16.mxu0 %v388
    %1300 = vmatmul.mubr.bf16.gmra.mrb[0].mxu0 %v387
    %v1301 = vpop.f32.mrb[0].mxu0
    %v1302 = vadd.f32 0.0, %v1301
    %v1303 = vpop.f32.mrb[0].mxu0
    %v1304 = vadd.f32 0.0, %v1303
    %v1305 = vpop.f32.mrb[0].mxu0
    %v1306 = vadd.f32 0.0, %v1305
    %v1307 = vpop.f32.mrb[0].mxu0
    %v1308 = vadd.f32 0.0, %v1307
    %1309 = vmatprep.mubr.bf16.mxu0 %v390
    %1310 = vmatmul.mubr.bf16.gmra.mrb[0].mxu0 %v389
    %v1311 = vpop.f32.mrb[0].mxu0
    %v1312 = vadd.f32 0.0, %v1311
    %v1313 = vpop.f32.mrb[0].mxu0
    %v1314 = vadd.f32 0.0, %v1313
    %v1315 = vpop.f32.mrb[0].mxu0
    %v1316 = vadd.f32 0.0, %v1315
    %v1317 = vpop.f32.mrb[0].mxu0
    %v1318 = vadd.f32 0.0, %v1317
    %1319 = vmatprep.mubr.bf16.mxu0 %v392
    %1320 = vmatmul.mubr.bf16.gmra.mrb[0].mxu0 %v391
    %v1321 = vpop.f32.mrb[0].mxu0
    %v1322 = vadd.f32 0.0, %v1321
    %v1323 = vpop.f32.mrb[0].mxu0
    %v1324 = vadd.f32 0.0, %v1323
    %v1325 = vpop.f32.mrb[0].mxu0
    %v1326 = vadd.f32 0.0, %v1325
    %v1327 = vpop.f32.mrb[0].mxu0
    %v1328 = vadd.f32 0.0, %v1327
    %1329 = vmatprep.mubr.bf16.mxu0 %v394
    %1330 = vmatmul.mubr.bf16.gmra.mrb[0].mxu0 %v393
    %v1331 = vpop.f32.mrb[0].mxu0
    %v1332 = vadd.f32 0.0, %v1331
    %v1333 = vpop.f32.mrb[0].mxu0
    %v1334 = vadd.f32 0.0, %v1333
    %v1335 = vpop.f32.mrb[0].mxu0
    %v1336 = vadd.f32 0.0, %v1335
    %v1337 = vpop.f32.mrb[0].mxu0
    %v1338 = vadd.f32 0.0, %v1337
    %1339 = vmatprep.mubr.bf16.mxu0 %v396
    %1340 = vmatmul.mubr.bf16.gmra.mrb[0].mxu0 %v395
    %v1341 = vpop.f32.mrb[0].mxu0
    %v1342 = vadd.f32 0.0, %v1341
    %v1343 = vpop.f32.mrb[0].mxu0
    %v1344 = vadd.f32 0.0, %v1343
    %v1345 = vpop.f32.mrb[0].mxu0
    %v1346 = vadd.f32 0.0, %v1345
    %v1347 = vpop.f32.mrb[0].mxu0
    %v1348 = vadd.f32 0.0, %v1347
    %1349 = vmatprep.mubr.bf16.mxu0 %v398
    %1350 = vmatmul.mubr.bf16.gmra.mrb[0].mxu0 %v397
    %v1351 = vpop.f32.mrb[0].mxu0
    %v1352 = vadd.f32 0.0, %v1351
    %v1353 = vpop.f32.mrb[0].mxu0
    %v1354 = vadd.f32 0.0, %v1353
    %v1355 = vpop.f32.mrb[0].mxu0
    %v1356 = vadd.f32 0.0, %v1355
    %v1357 = vpop.f32.mrb[0].mxu0
    %v1358 = vadd.f32 0.0, %v1357
    %1359 = vdwg.mxu0
    %1360 = vmatprep.subr.bf16.mxu0 %v914
    %1361 = vmatpush1.bf16.msra.mxu0 %v913
    %1362 = vmatprep.subr.bf16.mxu0 %v922
    %1363 = vmatpush1.bf16.msra.mxu0 %v921
    %1364 = vmatprep.subr.bf16.mxu0 %v930
    %1365 = vmatpush1.bf16.msra.mxu0 %v929
    %1366 = vmatprep.subr.bf16.mxu0 %v938
    %1367 = vmatpush1.bf16.msra.mxu0 %v937
    %1368 = vmatprep.subr.bf16.mxu0 %v946
    %1369 = vmatpush1.bf16.msra.mxu0 %v945
    %1370 = vmatprep.subr.bf16.mxu0 %v954
    %1371 = vmatpush1.bf16.msra.mxu0 %v953
    %1372 = vmatprep.subr.bf16.mxu0 %v962
    %1373 = vmatpush1.bf16.msra.mxu0 %v961
    %1374 = vmatprep.subr.bf16.mxu0 %v970
    %1375 = vmatpush1.bf16.msra.mxu0 %v969
    %1376 = vmatprep.subr.bf16.mxu0 %v978
    %1377 = vmatpush1.bf16.msra.mxu0 %v977
    %1378 = vmatprep.subr.bf16.mxu0 %v986
    %1379 = vmatpush1.bf16.msra.mxu0 %v985
    %1380 = vmatprep.subr.bf16.mxu0 %v994
    %1381 = vmatpush1.bf16.msra.mxu0 %v993
    %1382 = vmatprep.subr.bf16.mxu0 %v1002
    %1383 = vmatpush1.bf16.msra.mxu0 %v1001
    %1384 = vmatprep.subr.bf16.mxu0 %v1010
    %1385 = vmatpush1.bf16.msra.mxu0 %v1009
    %1386 = vmatprep.subr.bf16.mxu0 %v1018
    %1387 = vmatpush1.bf16.msra.mxu0 %v1017
    %1388 = vmatprep.subr.bf16.mxu0 %v1026
    %1389 = vmatpush1.bf16.msra.mxu0 %v1025
    %1390 = vmatprep.subr.bf16.mxu0 %v1034
    %1391 = vmatpush1.bf16.msra.mxu0 %v1033
    %1392 = vmatprep.mubr.bf16.mxu0 %v368
    %1393 = vmatmul.mubr.bf16.gmra.mrb[0].mxu0 %v367
    %v1394 = vpop.f32.mrb[0].mxu0
    %v1395 = vadd.f32 0.0, %v1394
    %v1396 = vpop.f32.mrb[0].mxu0
    %v1397 = vadd.f32 0.0, %v1396
    %v1398 = vpop.f32.mrb[0].mxu0
    %v1399 = vadd.f32 0.0, %v1398
    %v1400 = vpop.f32.mrb[0].mxu0
    %v1401 = vadd.f32 0.0, %v1400
    %1402 = vmatprep.mubr.bf16.mxu0 %v370
    %1403 = vmatmul.mubr.bf16.gmra.mrb[0].mxu0 %v369
    %v1404 = vpop.f32.mrb[0].mxu0
    %v1405 = vadd.f32 0.0, %v1404
    %v1406 = vpop.f32.mrb[0].mxu0
    %v1407 = vadd.f32 0.0, %v1406
    %v1408 = vpop.f32.mrb[0].mxu0
    %v1409 = vadd.f32 0.0, %v1408
    %v1410 = vpop.f32.mrb[0].mxu0
    %v1411 = vadd.f32 0.0, %v1410
    %1412 = vmatprep.mubr.bf16.mxu0 %v372
    %1413 = vmatmul.mubr.bf16.gmra.mrb[0].mxu0 %v371
    %v1414 = vpop.f32.mrb[0].mxu0
    %v1415 = vadd.f32 0.0, %v1414
    %v1416 = vpop.f32.mrb[0].mxu0
    %v1417 = vadd.f32 0.0, %v1416
    %v1418 = vpop.f32.mrb[0].mxu0
    %v1419 = vadd.f32 0.0, %v1418
    %v1420 = vpop.f32.mrb[0].mxu0
    %v1421 = vadd.f32 0.0, %v1420
    %1422 = vmatprep.mubr.bf16.mxu0 %v374
    %1423 = vmatmul.mubr.bf16.gmra.mrb[0].mxu0 %v373
    %v1424 = vpop.f32.mrb[0].mxu0
    %v1425 = vadd.f32 0.0, %v1424
    %v1426 = vpop.f32.mrb[0].mxu0
    %v1427 = vadd.f32 0.0, %v1426
    %v1428 = vpop.f32.mrb[0].mxu0
    %v1429 = vadd.f32 0.0, %v1428
    %v1430 = vpop.f32.mrb[0].mxu0
    %v1431 = vadd.f32 0.0, %v1430
    %1432 = vmatprep.mubr.bf16.mxu0 %v376
    %1433 = vmatmul.mubr.bf16.gmra.mrb[0].mxu0 %v375
    %v1434 = vpop.f32.mrb[0].mxu0
    %v1435 = vadd.f32 0.0, %v1434
    %v1436 = vpop.f32.mrb[0].mxu0
    %v1437 = vadd.f32 0.0, %v1436
    %v1438 = vpop.f32.mrb[0].mxu0
    %v1439 = vadd.f32 0.0, %v1438
    %v1440 = vpop.f32.mrb[0].mxu0
    %v1441 = vadd.f32 0.0, %v1440
    %1442 = vmatprep.mubr.bf16.mxu0 %v378
    %1443 = vmatmul.mubr.bf16.gmra.mrb[0].mxu0 %v377
    %v1444 = vpop.f32.mrb[0].mxu0
    %v1445 = vadd.f32 0.0, %v1444
    %v1446 = vpop.f32.mrb[0].mxu0
    %v1447 = vadd.f32 0.0, %v1446
    %v1448 = vpop.f32.mrb[0].mxu0
    %v1449 = vadd.f32 0.0, %v1448
    %v1450 = vpop.f32.mrb[0].mxu0
    %v1451 = vadd.f32 0.0, %v1450
    %1452 = vmatprep.mubr.bf16.mxu0 %v380
    %1453 = vmatmul.mubr.bf16.gmra.mrb[0].mxu0 %v379
    %v1454 = vpop.f32.mrb[0].mxu0
    %v1455 = vadd.f32 0.0, %v1454
    %v1456 = vpop.f32.mrb[0].mxu0
    %v1457 = vadd.f32 0.0, %v1456
    %v1458 = vpop.f32.mrb[0].mxu0
    %v1459 = vadd.f32 0.0, %v1458
    %v1460 = vpop.f32.mrb[0].mxu0
    %v1461 = vadd.f32 0.0, %v1460
    %1462 = vmatprep.mubr.bf16.mxu0 %v382
    %1463 = vmatmul.mubr.bf16.gmra.mrb[0].mxu0 %v381
    %v1464 = vpop.f32.mrb[0].mxu0
    %v1465 = vadd.f32 0.0, %v1464
    %v1466 = vpop.f32.mrb[0].mxu0
    %v1467 = vadd.f32 0.0, %v1466
    %v1468 = vpop.f32.mrb[0].mxu0
    %v1469 = vadd.f32 0.0, %v1468
    %v1470 = vpop.f32.mrb[0].mxu0
    %v1471 = vadd.f32 0.0, %v1470
    %1472 = vmatprep.mubr.bf16.mxu0 %v384
    %1473 = vmatmul.mubr.bf16.gmra.mrb[0].mxu0 %v383
    %v1474 = vpop.f32.mrb[0].mxu0
    %v1475 = vadd.f32 0.0, %v1474
    %v1476 = vpop.f32.mrb[0].mxu0
    %v1477 = vadd.f32 0.0, %v1476
    %v1478 = vpop.f32.mrb[0].mxu0
    %v1479 = vadd.f32 0.0, %v1478
    %v1480 = vpop.f32.mrb[0].mxu0
    %v1481 = vadd.f32 0.0, %v1480
    %1482 = vmatprep.mubr.bf16.mxu0 %v386
    %1483 = vmatmul.mubr.bf16.gmra.mrb[0].mxu0 %v385
    %v1484 = vpop.f32.mrb[0].mxu0
    %v1485 = vadd.f32 0.0, %v1484
    %v1486 = vpop.f32.mrb[0].mxu0
    %v1487 = vadd.f32 0.0, %v1486
    %v1488 = vpop.f32.mrb[0].mxu0
    %v1489 = vadd.f32 0.0, %v1488
    %v1490 = vpop.f32.mrb[0].mxu0
    %v1491 = vadd.f32 0.0, %v1490
    %1492 = vmatprep.mubr.bf16.mxu0 %v388
    %1493 = vmatmul.mubr.bf16.gmra.mrb[0].mxu0 %v387
    %v1494 = vpop.f32.mrb[0].mxu0
    %v1495 = vadd.f32 0.0, %v1494
    %v1496 = vpop.f32.mrb[0].mxu0
    %v1497 = vadd.f32 0.0, %v1496
    %v1498 = vpop.f32.mrb[0].mxu0
    %v1499 = vadd.f32 0.0, %v1498
    %v1500 = vpop.f32.mrb[0].mxu0
    %v1501 = vadd.f32 0.0, %v1500
    %1502 = vmatprep.mubr.bf16.mxu0 %v390
    %1503 = vmatmul.mubr.bf16.gmra.mrb[0].mxu0 %v389
    %v1504 = vpop.f32.mrb[0].mxu0
    %v1505 = vadd.f32 0.0, %v1504
    %v1506 = vpop.f32.mrb[0].mxu0
    %v1507 = vadd.f32 0.0, %v1506
    %v1508 = vpop.f32.mrb[0].mxu0
    %v1509 = vadd.f32 0.0, %v1508
    %v1510 = vpop.f32.mrb[0].mxu0
    %v1511 = vadd.f32 0.0, %v1510
    %1512 = vmatprep.mubr.bf16.mxu0 %v392
    %1513 = vmatmul.mubr.bf16.gmra.mrb[0].mxu0 %v391
    %v1514 = vpop.f32.mrb[0].mxu0
    %v1515 = vadd.f32 0.0, %v1514
    %v1516 = vpop.f32.mrb[0].mxu0
    %v1517 = vadd.f32 0.0, %v1516
    %v1518 = vpop.f32.mrb[0].mxu0
    %v1519 = vadd.f32 0.0, %v1518
    %v1520 = vpop.f32.mrb[0].mxu0
    %v1521 = vadd.f32 0.0, %v1520
    %1522 = vmatprep.mubr.bf16.mxu0 %v394
    %1523 = vmatmul.mubr.bf16.gmra.mrb[0].mxu0 %v393
    %v1524 = vpop.f32.mrb[0].mxu0
    %v1525 = vadd.f32 0.0, %v1524
    %v1526 = vpop.f32.mrb[0].mxu0
    %v1527 = vadd.f32 0.0, %v1526
    %v1528 = vpop.f32.mrb[0].mxu0
    %v1529 = vadd.f32 0.0, %v1528
    %v1530 = vpop.f32.mrb[0].mxu0
    %v1531 = vadd.f32 0.0, %v1530
    %1532 = vmatprep.mubr.bf16.mxu0 %v396
    %1533 = vmatmul.mubr.bf16.gmra.mrb[0].mxu0 %v395
    %v1534 = vpop.f32.mrb[0].mxu0
    %v1535 = vadd.f32 0.0, %v1534
    %v1536 = vpop.f32.mrb[0].mxu0
    %v1537 = vadd.f32 0.0, %v1536
    %v1538 = vpop.f32.mrb[0].mxu0
    %v1539 = vadd.f32 0.0, %v1538
    %v1540 = vpop.f32.mrb[0].mxu0
    %v1541 = vadd.f32 0.0, %v1540
    %1542 = vmatprep.mubr.bf16.mxu0 %v398
    %1543 = vmatmul.mubr.bf16.gmra.mrb[0].mxu0 %v397
    %v1544 = vpop.f32.mrb[0].mxu0
    %v1545 = vadd.f32 0.0, %v1544
    %v1546 = vpop.f32.mrb[0].mxu0
    %v1547 = vadd.f32 0.0, %v1546
    %v1548 = vpop.f32.mrb[0].mxu0
    %v1549 = vadd.f32 0.0, %v1548
    %v1550 = vpop.f32.mrb[0].mxu0
    %v1551 = vadd.f32 0.0, %v1550
    %1552 = vdwg.mxu0
    %1553 = vmatprep.subr.bf16.mxu0 %v916
    %1554 = vmatpush1.bf16.msra.mxu0 %v915
    %1555 = vmatprep.subr.bf16.mxu0 %v924
    %1556 = vmatpush1.bf16.msra.mxu0 %v923
    %1557 = vmatprep.subr.bf16.mxu0 %v932
    %1558 = vmatpush1.bf16.msra.mxu0 %v931
    %1559 = vmatprep.subr.bf16.mxu0 %v940
    %1560 = vmatpush1.bf16.msra.mxu0 %v939
    %1561 = vmatprep.subr.bf16.mxu0 %v948
    %1562 = vmatpush1.bf16.msra.mxu0 %v947
    %1563 = vmatprep.subr.bf16.mxu0 %v956
    %1564 = vmatpush1.bf16.msra.mxu0 %v955
    %1565 = vmatprep.subr.bf16.mxu0 %v964
    %1566 = vmatpush1.bf16.msra.mxu0 %v963
    %1567 = vmatprep.subr.bf16.mxu0 %v972
    %1568 = vmatpush1.bf16.msra.mxu0 %v971
    %1569 = vmatprep.subr.bf16.mxu0 %v980
    %1570 = vmatpush1.bf16.msra.mxu0 %v979
    %1571 = vmatprep.subr.bf16.mxu0 %v988
    %1572 = vmatpush1.bf16.msra.mxu0 %v987
    %1573 = vmatprep.subr.bf16.mxu0 %v996
    %1574 = vmatpush1.bf16.msra.mxu0 %v995
    %1575 = vmatprep.subr.bf16.mxu0 %v1004
    %1576 = vmatpush1.bf16.msra.mxu0 %v1003
    %1577 = vmatprep.subr.bf16.mxu0 %v1012
    %1578 = vmatpush1.bf16.msra.mxu0 %v1011
    %1579 = vmatprep.subr.bf16.mxu0 %v1020
    %1580 = vmatpush1.bf16.msra.mxu0 %v1019
    %1581 = vmatprep.subr.bf16.mxu0 %v1028
    %1582 = vmatpush1.bf16.msra.mxu0 %v1027
    %1583 = vmatprep.subr.bf16.mxu0 %v1036
    %1584 = vmatpush1.bf16.msra.mxu0 %v1035
    %1585 = vmatprep.mubr.bf16.mxu0 %v368
    %1586 = vmatmul.mubr.bf16.gmra.mrb[0].mxu0 %v367
    %v1587 = vpop.f32.mrb[0].mxu0
    %v1588 = vadd.f32 0.0, %v1587
    %v1589 = vpop.f32.mrb[0].mxu0
    %v1590 = vadd.f32 0.0, %v1589
    %v1591 = vpop.f32.mrb[0].mxu0
    %v1592 = vadd.f32 0.0, %v1591
    %v1593 = vpop.f32.mrb[0].mxu0
    %v1594 = vadd.f32 0.0, %v1593
    %1595 = vmatprep.mubr.bf16.mxu0 %v370
    %1596 = vmatmul.mubr.bf16.gmra.mrb[0].mxu0 %v369
    %v1597 = vpop.f32.mrb[0].mxu0
    %v1598 = vadd.f32 0.0, %v1597
    %v1599 = vpop.f32.mrb[0].mxu0
    %v1600 = vadd.f32 0.0, %v1599
    %v1601 = vpop.f32.mrb[0].mxu0
    %v1602 = vadd.f32 0.0, %v1601
    %v1603 = vpop.f32.mrb[0].mxu0
    %v1604 = vadd.f32 0.0, %v1603
    %1605 = vmatprep.mubr.bf16.mxu0 %v372
    %1606 = vmatmul.mubr.bf16.gmra.mrb[0].mxu0 %v371
    %v1607 = vpop.f32.mrb[0].mxu0
    %v1608 = vadd.f32 0.0, %v1607
    %v1609 = vpop.f32.mrb[0].mxu0
    %v1610 = vadd.f32 0.0, %v1609
    %v1611 = vpop.f32.mrb[0].mxu0
    %v1612 = vadd.f32 0.0, %v1611
    %v1613 = vpop.f32.mrb[0].mxu0
    %v1614 = vadd.f32 0.0, %v1613
    %1615 = vmatprep.mubr.bf16.mxu0 %v374
    %1616 = vmatmul.mubr.bf16.gmra.mrb[0].mxu0 %v373
    %v1617 = vpop.f32.mrb[0].mxu0
    %v1618 = vadd.f32 0.0, %v1617
    %v1619 = vpop.f32.mrb[0].mxu0
    %v1620 = vadd.f32 0.0, %v1619
    %v1621 = vpop.f32.mrb[0].mxu0
    %v1622 = vadd.f32 0.0, %v1621
    %v1623 = vpop.f32.mrb[0].mxu0
    %v1624 = vadd.f32 0.0, %v1623
    %1625 = vmatprep.mubr.bf16.mxu0 %v376
    %1626 = vmatmul.mubr.bf16.gmra.mrb[0].mxu0 %v375
    %v1627 = vpop.f32.mrb[0].mxu0
    %v1628 = vadd.f32 0.0, %v1627
    %v1629 = vpop.f32.mrb[0].mxu0
    %v1630 = vadd.f32 0.0, %v1629
    %v1631 = vpop.f32.mrb[0].mxu0
    %v1632 = vadd.f32 0.0, %v1631
    %v1633 = vpop.f32.mrb[0].mxu0
    %v1634 = vadd.f32 0.0, %v1633
    %1635 = vmatprep.mubr.bf16.mxu0 %v378
    %1636 = vmatmul.mubr.bf16.gmra.mrb[0].mxu0 %v377
    %v1637 = vpop.f32.mrb[0].mxu0
    %v1638 = vadd.f32 0.0, %v1637
    %v1639 = vpop.f32.mrb[0].mxu0
    %v1640 = vadd.f32 0.0, %v1639
    %v1641 = vpop.f32.mrb[0].mxu0
    %v1642 = vadd.f32 0.0, %v1641
    %v1643 = vpop.f32.mrb[0].mxu0
    %v1644 = vadd.f32 0.0, %v1643
    %1645 = vmatprep.mubr.bf16.mxu0 %v380
    %1646 = vmatmul.mubr.bf16.gmra.mrb[0].mxu0 %v379
    %v1647 = vpop.f32.mrb[0].mxu0
    %v1648 = vadd.f32 0.0, %v1647
    %v1649 = vpop.f32.mrb[0].mxu0
    %v1650 = vadd.f32 0.0, %v1649
    %v1651 = vpop.f32.mrb[0].mxu0
    %v1652 = vadd.f32 0.0, %v1651
    %v1653 = vpop.f32.mrb[0].mxu0
    %v1654 = vadd.f32 0.0, %v1653
    %1655 = vmatprep.mubr.bf16.mxu0 %v382
    %1656 = vmatmul.mubr.bf16.gmra.mrb[0].mxu0 %v381
    %v1657 = vpop.f32.mrb[0].mxu0
    %v1658 = vadd.f32 0.0, %v1657
    %v1659 = vpop.f32.mrb[0].mxu0
    %v1660 = vadd.f32 0.0, %v1659
    %v1661 = vpop.f32.mrb[0].mxu0
    %v1662 = vadd.f32 0.0, %v1661
    %v1663 = vpop.f32.mrb[0].mxu0
    %v1664 = vadd.f32 0.0, %v1663
    %1665 = vmatprep.mubr.bf16.mxu0 %v384
    %1666 = vmatmul.mubr.bf16.gmra.mrb[0].mxu0 %v383
    %v1667 = vpop.f32.mrb[0].mxu0
    %v1668 = vadd.f32 0.0, %v1667
    %v1669 = vpop.f32.mrb[0].mxu0
    %v1670 = vadd.f32 0.0, %v1669
    %v1671 = vpop.f32.mrb[0].mxu0
    %v1672 = vadd.f32 0.0, %v1671
    %v1673 = vpop.f32.mrb[0].mxu0
    %v1674 = vadd.f32 0.0, %v1673
    %1675 = vmatprep.mubr.bf16.mxu0 %v386
    %1676 = vmatmul.mubr.bf16.gmra.mrb[0].mxu0 %v385
    %v1677 = vpop.f32.mrb[0].mxu0
    %v1678 = vadd.f32 0.0, %v1677
    %v1679 = vpop.f32.mrb[0].mxu0
    %v1680 = vadd.f32 0.0, %v1679
    %v1681 = vpop.f32.mrb[0].mxu0
    %v1682 = vadd.f32 0.0, %v1681
    %v1683 = vpop.f32.mrb[0].mxu0
    %v1684 = vadd.f32 0.0, %v1683
    %1685 = vmatprep.mubr.bf16.mxu0 %v388
    %1686 = vmatmul.mubr.bf16.gmra.mrb[0].mxu0 %v387
    %v1687 = vpop.f32.mrb[0].mxu0
    %v1688 = vadd.f32 0.0, %v1687
    %v1689 = vpop.f32.mrb[0].mxu0
    %v1690 = vadd.f32 0.0, %v1689
    %v1691 = vpop.f32.mrb[0].mxu0
    %v1692 = vadd.f32 0.0, %v1691
    %v1693 = vpop.f32.mrb[0].mxu0
    %v1694 = vadd.f32 0.0, %v1693
    %1695 = vmatprep.mubr.bf16.mxu0 %v390
    %1696 = vmatmul.mubr.bf16.gmra.mrb[0].mxu0 %v389
    %v1697 = vpop.f32.mrb[0].mxu0
    %v1698 = vadd.f32 0.0, %v1697
    %v1699 = vpop.f32.mrb[0].mxu0
    %v1700 = vadd.f32 0.0, %v1699
    %v1701 = vpop.f32.mrb[0].mxu0
    %v1702 = vadd.f32 0.0, %v1701
    %v1703 = vpop.f32.mrb[0].mxu0
    %v1704 = vadd.f32 0.0, %v1703
    %1705 = vmatprep.mubr.bf16.mxu0 %v392
    %1706 = vmatmul.mubr.bf16.gmra.mrb[0].mxu0 %v391
    %v1707 = vpop.f32.mrb[0].mxu0
    %v1708 = vadd.f32 0.0, %v1707
    %v1709 = vpop.f32.mrb[0].mxu0
    %v1710 = vadd.f32 0.0, %v1709
    %v1711 = vpop.f32.mrb[0].mxu0
    %v1712 = vadd.f32 0.0, %v1711
    %v1713 = vpop.f32.mrb[0].mxu0
    %v1714 = vadd.f32 0.0, %v1713
    %1715 = vmatprep.mubr.bf16.mxu0 %v394
    %1716 = vmatmul.mubr.bf16.gmra.mrb[0].mxu0 %v393
    %v1717 = vpop.f32.mrb[0].mxu0
    %v1718 = vadd.f32 0.0, %v1717
    %v1719 = vpop.f32.mrb[0].mxu0
    %v1720 = vadd.f32 0.0, %v1719
    %v1721 = vpop.f32.mrb[0].mxu0
    %v1722 = vadd.f32 0.0, %v1721
    %v1723 = vpop.f32.mrb[0].mxu0
    %v1724 = vadd.f32 0.0, %v1723
    %1725 = vmatprep.mubr.bf16.mxu0 %v396
    %1726 = vmatmul.mubr.bf16.gmra.mrb[0].mxu0 %v395
    %v1727 = vpop.f32.mrb[0].mxu0
    %v1728 = vadd.f32 0.0, %v1727
    %v1729 = vpop.f32.mrb[0].mxu0
    %v1730 = vadd.f32 0.0, %v1729
    %v1731 = vpop.f32.mrb[0].mxu0
    %v1732 = vadd.f32 0.0, %v1731
    %v1733 = vpop.f32.mrb[0].mxu0
    %v1734 = vadd.f32 0.0, %v1733
    %1735 = vmatprep.mubr.bf16.mxu0 %v398
    %1736 = vmatmul.mubr.bf16.gmra.mrb[0].mxu0 %v397
    %v1737 = vpop.f32.mrb[0].mxu0
    %v1738 = vadd.f32 0.0, %v1737
    %v1739 = vpop.f32.mrb[0].mxu0
    %v1740 = vadd.f32 0.0, %v1739
    %v1741 = vpop.f32.mrb[0].mxu0
    %v1742 = vadd.f32 0.0, %v1741
    %v1743 = vpop.f32.mrb[0].mxu0
    %v1744 = vadd.f32 0.0, %v1743
    %1745 = vdwg.mxu0
    %1746 = vmatprep.subr.bf16.mxu0 %v918
    %1747 = vmatpush1.bf16.msra.mxu0 %v917
    %1748 = vmatprep.subr.bf16.mxu0 %v926
    %1749 = vmatpush1.bf16.msra.mxu0 %v925
    %1750 = vmatprep.subr.bf16.mxu0 %v934
    %1751 = vmatpush1.bf16.msra.mxu0 %v933
    %1752 = vmatprep.subr.bf16.mxu0 %v942
    %1753 = vmatpush1.bf16.msra.mxu0 %v941
    %1754 = vmatprep.subr.bf16.mxu0 %v950
    %1755 = vmatpush1.bf16.msra.mxu0 %v949
    %1756 = vmatprep.subr.bf16.mxu0 %v958
    %1757 = vmatpush1.bf16.msra.mxu0 %v957
    %1758 = vmatprep.subr.bf16.mxu0 %v966
    %1759 = vmatpush1.bf16.msra.mxu0 %v965
    %1760 = vmatprep.subr.bf16.mxu0 %v974
    %1761 = vmatpush1.bf16.msra.mxu0 %v973
    %1762 = vmatprep.subr.bf16.mxu0 %v982
    %1763 = vmatpush1.bf16.msra.mxu0 %v981
    %1764 = vmatprep.subr.bf16.mxu0 %v990
    %1765 = vmatpush1.bf16.msra.mxu0 %v989
    %1766 = vmatprep.subr.bf16.mxu0 %v998
    %1767 = vmatpush1.bf16.msra.mxu0 %v997
    %1768 = vmatprep.subr.bf16.mxu0 %v1006
    %1769 = vmatpush1.bf16.msra.mxu0 %v1005
    %1770 = vmatprep.subr.bf16.mxu0 %v1014
    %1771 = vmatpush1.bf16.msra.mxu0 %v1013
    %1772 = vmatprep.subr.bf16.mxu0 %v1022
    %1773 = vmatpush1.bf16.msra.mxu0 %v1021
    %1774 = vmatprep.subr.bf16.mxu0 %v1030
    %1775 = vmatpush1.bf16.msra.mxu0 %v1029
    %1776 = vmatprep.subr.bf16.mxu0 %v1038
    %1777 = vmatpush1.bf16.msra.mxu0 %v1037
    %1778 = vmatprep.mubr.bf16.mxu0 %v368
    %1779 = vmatmul.mubr.bf16.gmra.mrb[0].mxu0 %v367
    %v1780 = vpop.f32.mrb[0].mxu0
    %v1781 = vadd.f32 0.0, %v1780
    %v1782 = vpop.f32.mrb[0].mxu0
    %v1783 = vadd.f32 0.0, %v1782
    %v1784 = vpop.f32.mrb[0].mxu0
    %v1785 = vadd.f32 0.0, %v1784
    %v1786 = vpop.f32.mrb[0].mxu0
    %v1787 = vadd.f32 0.0, %v1786
    %1788 = vmatprep.mubr.bf16.mxu0 %v370
    %1789 = vmatmul.mubr.bf16.gmra.mrb[0].mxu0 %v369
    %v1790 = vpop.f32.mrb[0].mxu0
    %v1791 = vadd.f32 0.0, %v1790
    %v1792 = vpop.f32.mrb[0].mxu0
    %v1793 = vadd.f32 0.0, %v1792
    %v1794 = vpop.f32.mrb[0].mxu0
    %v1795 = vadd.f32 0.0, %v1794
    %v1796 = vpop.f32.mrb[0].mxu0
    %v1797 = vadd.f32 0.0, %v1796
    %1798 = vmatprep.mubr.bf16.mxu0 %v372
    %1799 = vmatmul.mubr.bf16.gmra.mrb[0].mxu0 %v371
    %v1800 = vpop.f32.mrb[0].mxu0
    %v1801 = vadd.f32 0.0, %v1800
    %v1802 = vpop.f32.mrb[0].mxu0
    %v1803 = vadd.f32 0.0, %v1802
    %v1804 = vpop.f32.mrb[0].mxu0
    %v1805 = vadd.f32 0.0, %v1804
    %v1806 = vpop.f32.mrb[0].mxu0
    %v1807 = vadd.f32 0.0, %v1806
    %1808 = vmatprep.mubr.bf16.mxu0 %v374
    %1809 = vmatmul.mubr.bf16.gmra.mrb[0].mxu0 %v373
    %v1810 = vpop.f32.mrb[0].mxu0
    %v1811 = vadd.f32 0.0, %v1810
    %v1812 = vpop.f32.mrb[0].mxu0
    %v1813 = vadd.f32 0.0, %v1812
    %v1814 = vpop.f32.mrb[0].mxu0
    %v1815 = vadd.f32 0.0, %v1814
    %v1816 = vpop.f32.mrb[0].mxu0
    %v1817 = vadd.f32 0.0, %v1816
    %1818 = vmatprep.mubr.bf16.mxu0 %v376
    %1819 = vmatmul.mubr.bf16.gmra.mrb[0].mxu0 %v375
    %v1820 = vpop.f32.mrb[0].mxu0
    %v1821 = vadd.f32 0.0, %v1820
    %v1822 = vpop.f32.mrb[0].mxu0
    %v1823 = vadd.f32 0.0, %v1822
    %v1824 = vpop.f32.mrb[0].mxu0
    %v1825 = vadd.f32 0.0, %v1824
    %v1826 = vpop.f32.mrb[0].mxu0
    %v1827 = vadd.f32 0.0, %v1826
    %1828 = vmatprep.mubr.bf16.mxu0 %v378
    %1829 = vmatmul.mubr.bf16.gmra.mrb[0].mxu0 %v377
    %v1830 = vpop.f32.mrb[0].mxu0
    %v1831 = vadd.f32 0.0, %v1830
    %v1832 = vpop.f32.mrb[0].mxu0
    %v1833 = vadd.f32 0.0, %v1832
    %v1834 = vpop.f32.mrb[0].mxu0
    %v1835 = vadd.f32 0.0, %v1834
    %v1836 = vpop.f32.mrb[0].mxu0
    %v1837 = vadd.f32 0.0, %v1836
    %1838 = vmatprep.mubr.bf16.mxu0 %v380
    %1839 = vmatmul.mubr.bf16.gmra.mrb[0].mxu0 %v379
    %v1840 = vpop.f32.mrb[0].mxu0
    %v1841 = vadd.f32 0.0, %v1840
    %v1842 = vpop.f32.mrb[0].mxu0
    %v1843 = vadd.f32 0.0, %v1842
    %v1844 = vpop.f32.mrb[0].mxu0
    %v1845 = vadd.f32 0.0, %v1844
    %v1846 = vpop.f32.mrb[0].mxu0
    %v1847 = vadd.f32 0.0, %v1846
    %1848 = vmatprep.mubr.bf16.mxu0 %v382
    %1849 = vmatmul.mubr.bf16.gmra.mrb[0].mxu0 %v381
    %v1850 = vpop.f32.mrb[0].mxu0
    %v1851 = vadd.f32 0.0, %v1850
    %v1852 = vpop.f32.mrb[0].mxu0
    %v1853 = vadd.f32 0.0, %v1852
    %v1854 = vpop.f32.mrb[0].mxu0
    %v1855 = vadd.f32 0.0, %v1854
    %v1856 = vpop.f32.mrb[0].mxu0
    %v1857 = vadd.f32 0.0, %v1856
    %1858 = vmatprep.mubr.bf16.mxu0 %v384
    %1859 = vmatmul.mubr.bf16.gmra.mrb[0].mxu0 %v383
    %v1860 = vpop.f32.mrb[0].mxu0
    %v1861 = vadd.f32 0.0, %v1860
    %v1862 = vpop.f32.mrb[0].mxu0
    %v1863 = vadd.f32 0.0, %v1862
    %v1864 = vpop.f32.mrb[0].mxu0
    %v1865 = vadd.f32 0.0, %v1864
    %v1866 = vpop.f32.mrb[0].mxu0
    %v1867 = vadd.f32 0.0, %v1866
    %1868 = vmatprep.mubr.bf16.mxu0 %v386
    %1869 = vmatmul.mubr.bf16.gmra.mrb[0].mxu0 %v385
    %v1870 = vpop.f32.mrb[0].mxu0
    %v1871 = vadd.f32 0.0, %v1870
    %v1872 = vpop.f32.mrb[0].mxu0
    %v1873 = vadd.f32 0.0, %v1872
    %v1874 = vpop.f32.mrb[0].mxu0
    %v1875 = vadd.f32 0.0, %v1874
    %v1876 = vpop.f32.mrb[0].mxu0
    %v1877 = vadd.f32 0.0, %v1876
    %1878 = vmatprep.mubr.bf16.mxu0 %v388
    %1879 = vmatmul.mubr.bf16.gmra.mrb[0].mxu0 %v387
    %v1880 = vpop.f32.mrb[0].mxu0
    %v1881 = vadd.f32 0.0, %v1880
    %v1882 = vpop.f32.mrb[0].mxu0
    %v1883 = vadd.f32 0.0, %v1882
    %v1884 = vpop.f32.mrb[0].mxu0
    %v1885 = vadd.f32 0.0, %v1884
    %v1886 = vpop.f32.mrb[0].mxu0
    %v1887 = vadd.f32 0.0, %v1886
    %1888 = vmatprep.mubr.bf16.mxu0 %v390
    %1889 = vmatmul.mubr.bf16.gmra.mrb[0].mxu0 %v389
    %v1890 = vpop.f32.mrb[0].mxu0
    %v1891 = vadd.f32 0.0, %v1890
    %v1892 = vpop.f32.mrb[0].mxu0
    %v1893 = vadd.f32 0.0, %v1892
    %v1894 = vpop.f32.mrb[0].mxu0
    %v1895 = vadd.f32 0.0, %v1894
    %v1896 = vpop.f32.mrb[0].mxu0
    %v1897 = vadd.f32 0.0, %v1896
    %1898 = vmatprep.mubr.bf16.mxu0 %v392
    %1899 = vmatmul.mubr.bf16.gmra.mrb[0].mxu0 %v391
    %v1900 = vpop.f32.mrb[0].mxu0
    %v1901 = vadd.f32 0.0, %v1900
    %v1902 = vpop.f32.mrb[0].mxu0
    %v1903 = vadd.f32 0.0, %v1902
    %v1904 = vpop.f32.mrb[0].mxu0
    %v1905 = vadd.f32 0.0, %v1904
    %v1906 = vpop.f32.mrb[0].mxu0
    %v1907 = vadd.f32 0.0, %v1906
    %1908 = vmatprep.mubr.bf16.mxu0 %v394
    %1909 = vmatmul.mubr.bf16.gmra.mrb[0].mxu0 %v393
    %v1910 = vpop.f32.mrb[0].mxu0
    %v1911 = vadd.f32 0.0, %v1910
    %v1912 = vpop.f32.mrb[0].mxu0
    %v1913 = vadd.f32 0.0, %v1912
    %v1914 = vpop.f32.mrb[0].mxu0
    %v1915 = vadd.f32 0.0, %v1914
    %v1916 = vpop.f32.mrb[0].mxu0
    %v1917 = vadd.f32 0.0, %v1916
    %1918 = vmatprep.mubr.bf16.mxu0 %v396
    %1919 = vmatmul.mubr.bf16.gmra.mrb[0].mxu0 %v395
    %v1920 = vpop.f32.mrb[0].mxu0
    %v1921 = vadd.f32 0.0, %v1920
    %v1922 = vpop.f32.mrb[0].mxu0
    %v1923 = vadd.f32 0.0, %v1922
    %v1924 = vpop.f32.mrb[0].mxu0
    %v1925 = vadd.f32 0.0, %v1924
    %v1926 = vpop.f32.mrb[0].mxu0
    %v1927 = vadd.f32 0.0, %v1926
    %1928 = vmatprep.mubr.bf16.mxu0 %v398
    %1929 = vmatmul.mubr.bf16.gmra.mrb[0].mxu0 %v397
    %v1930 = vpop.f32.mrb[0].mxu0
    %v1931 = vadd.f32 0.0, %v1930
    %v1932 = vpop.f32.mrb[0].mxu0
    %v1933 = vadd.f32 0.0, %v1932
    %v1934 = vpop.f32.mrb[0].mxu0
    %v1935 = vadd.f32 0.0, %v1934
    %v1936 = vpop.f32.mrb[0].mxu0
    %v1937 = vadd.f32 0.0, %v1936
    %1938 = vdwg.mxu0
    %v1939 = vld [vmem:[%s2] sm:$0xff]
    %v1941 = vlaneseq
    %v1942 = vshrl.u32 %v1941, 7
    %v1943 = vsub.s32 0, %v1942
    %v1944 = vrot.slane %v1939, %v1943
    %v1945 = vlaneseq
    %v1946 = vshrl.u32 %v1945, 7
    %v1947 = vsub.s32 1, %v1946
    %v1948 = vrot.slane %v1939, %v1947
    %v1949 = vlaneseq
    %v1950 = vshrl.u32 %v1949, 7
    %v1951 = vsub.s32 2, %v1950
    %v1952 = vrot.slane %v1939, %v1951
    %v1953 = vlaneseq
    %v1954 = vshrl.u32 %v1953, 7
    %v1955 = vsub.s32 3, %v1954
    %v1956 = vrot.slane %v1939, %v1955
    %v1957 = vlaneseq
    %v1958 = vshrl.u32 %v1957, 7
    %v1959 = vsub.s32 4, %v1958
    %v1960 = vrot.slane %v1939, %v1959
    %v1961 = vlaneseq
    %v1962 = vshrl.u32 %v1961, 7
    %v1963 = vsub.s32 5, %v1962
    %v1964 = vrot.slane %v1939, %v1963
    %v1965 = vlaneseq
    %v1966 = vshrl.u32 %v1965, 7
    %v1967 = vsub.s32 6, %v1966
    %v1968 = vrot.slane %v1939, %v1967
    %v1969 = vlaneseq
    %v1970 = vshrl.u32 %v1969, 7
    %v1971 = vsub.s32 7, %v1970
    %v1972 = vrot.slane %v1939, %v1971
    %v1981 = vmul.f32 %v1202, %v1944
    %v1982 = vmul.f32 %v1204, %v1948
    %v1983 = vmul.f32 %v1395, %v1952
    %v1984 = vmul.f32 %v1397, %v1956
    %v1985 = vmul.f32 %v1588, %v1960
    %v1986 = vmul.f32 %v1590, %v1964
    %v1987 = vmul.f32 %v1781, %v1968
    %v1988 = vmul.f32 %v1783, %v1972
    %v1989 = vmul.f32 %v1206, %v1944
    %v1990 = vmul.f32 %v1208, %v1948
    %v1991 = vmul.f32 %v1399, %v1952
    %v1992 = vmul.f32 %v1401, %v1956
    %v1993 = vmul.f32 %v1592, %v1960
    %v1994 = vmul.f32 %v1594, %v1964
    %v1995 = vmul.f32 %v1785, %v1968
    %v1996 = vmul.f32 %v1787, %v1972
    %v1997 = vmul.f32 %v1212, %v1944
    %v1998 = vmul.f32 %v1214, %v1948
    %v1999 = vmul.f32 %v1405, %v1952
    %v2000 = vmul.f32 %v1407, %v1956
    %v2001 = vmul.f32 %v1598, %v1960
    %v2002 = vmul.f32 %v1600, %v1964
    %v2003 = vmul.f32 %v1791, %v1968
    %v2004 = vmul.f32 %v1793, %v1972
    %v2005 = vmul.f32 %v1216, %v1944
    %v2006 = vmul.f32 %v1218, %v1948
    %v2007 = vmul.f32 %v1409, %v1952
    %v2008 = vmul.f32 %v1411, %v1956
    %v2009 = vmul.f32 %v1602, %v1960
    %v2010 = vmul.f32 %v1604, %v1964
    %v2011 = vmul.f32 %v1795, %v1968
    %v2012 = vmul.f32 %v1797, %v1972
    %v2013 = vmul.f32 %v1222, %v1944
    %v2014 = vmul.f32 %v1224, %v1948
    %v2015 = vmul.f32 %v1415, %v1952
    %v2016 = vmul.f32 %v1417, %v1956
    %v2017 = vmul.f32 %v1608, %v1960
    %v2018 = vmul.f32 %v1610, %v1964
    %v2019 = vmul.f32 %v1801, %v1968
    %v2020 = vmul.f32 %v1803, %v1972
    %v2021 = vmul.f32 %v1226, %v1944
    %v2022 = vmul.f32 %v1228, %v1948
    %v2023 = vmul.f32 %v1419, %v1952
    %v2024 = vmul.f32 %v1421, %v1956
    %v2025 = vmul.f32 %v1612, %v1960
    %v2026 = vmul.f32 %v1614, %v1964
    %v2027 = vmul.f32 %v1805, %v1968
    %v2028 = vmul.f32 %v1807, %v1972
    %v2029 = vmul.f32 %v1232, %v1944
    %v2030 = vmul.f32 %v1234, %v1948
    %v2031 = vmul.f32 %v1425, %v1952
    %v2032 = vmul.f32 %v1427, %v1956
    %v2033 = vmul.f32 %v1618, %v1960
    %v2034 = vmul.f32 %v1620, %v1964
    %v2035 = vmul.f32 %v1811, %v1968
    %v2036 = vmul.f32 %v1813, %v1972
    %v2037 = vmul.f32 %v1236, %v1944
    %v2038 = vmul.f32 %v1238, %v1948
    %v2039 = vmul.f32 %v1429, %v1952
    %v2040 = vmul.f32 %v1431, %v1956
    %v2041 = vmul.f32 %v1622, %v1960
    %v2042 = vmul.f32 %v1624, %v1964
    %v2043 = vmul.f32 %v1815, %v1968
    %v2044 = vmul.f32 %v1817, %v1972
    %v2045 = vmul.f32 %v1242, %v1944
    %v2046 = vmul.f32 %v1244, %v1948
    %v2047 = vmul.f32 %v1435, %v1952
    %v2048 = vmul.f32 %v1437, %v1956
    %v2049 = vmul.f32 %v1628, %v1960
    %v2050 = vmul.f32 %v1630, %v1964
    %v2051 = vmul.f32 %v1821, %v1968
    %v2052 = vmul.f32 %v1823, %v1972
    %v2053 = vmul.f32 %v1246, %v1944
    %v2054 = vmul.f32 %v1248, %v1948
    %v2055 = vmul.f32 %v1439, %v1952
    %v2056 = vmul.f32 %v1441, %v1956
    %v2057 = vmul.f32 %v1632, %v1960
    %v2058 = vmul.f32 %v1634, %v1964
    %v2059 = vmul.f32 %v1825, %v1968
    %v2060 = vmul.f32 %v1827, %v1972
    %v2061 = vmul.f32 %v1252, %v1944
    %v2062 = vmul.f32 %v1254, %v1948
    %v2063 = vmul.f32 %v1445, %v1952
    %v2064 = vmul.f32 %v1447, %v1956
    %v2065 = vmul.f32 %v1638, %v1960
    %v2066 = vmul.f32 %v1640, %v1964
    %v2067 = vmul.f32 %v1831, %v1968
    %v2068 = vmul.f32 %v1833, %v1972
    %v2069 = vmul.f32 %v1256, %v1944
    %v2070 = vmul.f32 %v1258, %v1948
    %v2071 = vmul.f32 %v1449, %v1952
    %v2072 = vmul.f32 %v1451, %v1956
    %v2073 = vmul.f32 %v1642, %v1960
    %v2074 = vmul.f32 %v1644, %v1964
    %v2075 = vmul.f32 %v1835, %v1968
    %v2076 = vmul.f32 %v1837, %v1972
    %v2077 = vmul.f32 %v1262, %v1944
    %v2078 = vmul.f32 %v1264, %v1948
    %v2079 = vmul.f32 %v1455, %v1952
    %v2080 = vmul.f32 %v1457, %v1956
    %v2081 = vmul.f32 %v1648, %v1960
    %v2082 = vmul.f32 %v1650, %v1964
    %v2083 = vmul.f32 %v1841, %v1968
    %v2084 = vmul.f32 %v1843, %v1972
    %v2085 = vmul.f32 %v1266, %v1944
    %v2086 = vmul.f32 %v1268, %v1948
    %v2087 = vmul.f32 %v1459, %v1952
    %v2088 = vmul.f32 %v1461, %v1956
    %v2089 = vmul.f32 %v1652, %v1960
    %v2090 = vmul.f32 %v1654, %v1964
    %v2091 = vmul.f32 %v1845, %v1968
    %v2092 = vmul.f32 %v1847, %v1972
    %v2093 = vmul.f32 %v1272, %v1944
    %v2094 = vmul.f32 %v1274, %v1948
    %v2095 = vmul.f32 %v1465, %v1952
    %v2096 = vmul.f32 %v1467, %v1956
    %v2097 = vmul.f32 %v1658, %v1960
    %v2098 = vmul.f32 %v1660, %v1964
    %v2099 = vmul.f32 %v1851, %v1968
    %v2100 = vmul.f32 %v1853, %v1972
    %v2101 = vmul.f32 %v1276, %v1944
    %v2102 = vmul.f32 %v1278, %v1948
    %v2103 = vmul.f32 %v1469, %v1952
    %v2104 = vmul.f32 %v1471, %v1956
    %v2105 = vmul.f32 %v1662, %v1960
    %v2106 = vmul.f32 %v1664, %v1964
    %v2107 = vmul.f32 %v1855, %v1968
    %v2108 = vmul.f32 %v1857, %v1972
    %v2109 = vmul.f32 %v1282, %v1944
    %v2110 = vmul.f32 %v1284, %v1948
    %v2111 = vmul.f32 %v1475, %v1952
    %v2112 = vmul.f32 %v1477, %v1956
    %v2113 = vmul.f32 %v1668, %v1960
    %v2114 = vmul.f32 %v1670, %v1964
    %v2115 = vmul.f32 %v1861, %v1968
    %v2116 = vmul.f32 %v1863, %v1972
    %v2117 = vmul.f32 %v1286, %v1944
    %v2118 = vmul.f32 %v1288, %v1948
    %v2119 = vmul.f32 %v1479, %v1952
    %v2120 = vmul.f32 %v1481, %v1956
    %v2121 = vmul.f32 %v1672, %v1960
    %v2122 = vmul.f32 %v1674, %v1964
    %v2123 = vmul.f32 %v1865, %v1968
    %v2124 = vmul.f32 %v1867, %v1972
    %v2125 = vmul.f32 %v1292, %v1944
    %v2126 = vmul.f32 %v1294, %v1948
    %v2127 = vmul.f32 %v1485, %v1952
    %v2128 = vmul.f32 %v1487, %v1956
    %v2129 = vmul.f32 %v1678, %v1960
    %v2130 = vmul.f32 %v1680, %v1964
    %v2131 = vmul.f32 %v1871, %v1968
    %v2132 = vmul.f32 %v1873, %v1972
    %v2133 = vmul.f32 %v1296, %v1944
    %v2134 = vmul.f32 %v1298, %v1948
    %v2135 = vmul.f32 %v1489, %v1952
    %v2136 = vmul.f32 %v1491, %v1956
    %v2137 = vmul.f32 %v1682, %v1960
    %v2138 = vmul.f32 %v1684, %v1964
    %v2139 = vmul.f32 %v1875, %v1968
    %v2140 = vmul.f32 %v1877, %v1972
    %v2141 = vmul.f32 %v1302, %v1944
    %v2142 = vmul.f32 %v1304, %v1948
    %v2143 = vmul.f32 %v1495, %v1952
    %v2144 = vmul.f32 %v1497, %v1956
    %v2145 = vmul.f32 %v1688, %v1960
    %v2146 = vmul.f32 %v1690, %v1964
    %v2147 = vmul.f32 %v1881, %v1968
    %v2148 = vmul.f32 %v1883, %v1972
    %v2149 = vmul.f32 %v1306, %v1944
    %v2150 = vmul.f32 %v1308, %v1948
    %v2151 = vmul.f32 %v1499, %v1952
    %v2152 = vmul.f32 %v1501, %v1956
    %v2153 = vmul.f32 %v1692, %v1960
    %v2154 = vmul.f32 %v1694, %v1964
    %v2155 = vmul.f32 %v1885, %v1968
    %v2156 = vmul.f32 %v1887, %v1972
    %v2157 = vmul.f32 %v1312, %v1944
    %v2158 = vmul.f32 %v1314, %v1948
    %v2159 = vmul.f32 %v1505, %v1952
    %v2160 = vmul.f32 %v1507, %v1956
    %v2161 = vmul.f32 %v1698, %v1960
    %v2162 = vmul.f32 %v1700, %v1964
    %v2163 = vmul.f32 %v1891, %v1968
    %v2164 = vmul.f32 %v1893, %v1972
    %v2165 = vmul.f32 %v1316, %v1944
    %v2166 = vmul.f32 %v1318, %v1948
    %v2167 = vmul.f32 %v1509, %v1952
    %v2168 = vmul.f32 %v1511, %v1956
    %v2169 = vmul.f32 %v1702, %v1960
    %v2170 = vmul.f32 %v1704, %v1964
    %v2171 = vmul.f32 %v1895, %v1968
    %v2172 = vmul.f32 %v1897, %v1972
    %v2173 = vmul.f32 %v1322, %v1944
    %v2174 = vmul.f32 %v1324, %v1948
    %v2175 = vmul.f32 %v1515, %v1952
    %v2176 = vmul.f32 %v1517, %v1956
    %v2177 = vmul.f32 %v1708, %v1960
    %v2178 = vmul.f32 %v1710, %v1964
    %v2179 = vmul.f32 %v1901, %v1968
    %v2180 = vmul.f32 %v1903, %v1972
    %v2181 = vmul.f32 %v1326, %v1944
    %v2182 = vmul.f32 %v1328, %v1948
    %v2183 = vmul.f32 %v1519, %v1952
    %v2184 = vmul.f32 %v1521, %v1956
    %v2185 = vmul.f32 %v1712, %v1960
    %v2186 = vmul.f32 %v1714, %v1964
    %v2187 = vmul.f32 %v1905, %v1968
    %v2188 = vmul.f32 %v1907, %v1972
    %v2189 = vmul.f32 %v1332, %v1944
    %v2190 = vmul.f32 %v1334, %v1948
    %v2191 = vmul.f32 %v1525, %v1952
    %v2192 = vmul.f32 %v1527, %v1956
    %v2193 = vmul.f32 %v1718, %v1960
    %v2194 = vmul.f32 %v1720, %v1964
    %v2195 = vmul.f32 %v1911, %v1968
    %v2196 = vmul.f32 %v1913, %v1972
    %v2197 = vmul.f32 %v1336, %v1944
    %v2198 = vmul.f32 %v1338, %v1948
    %v2199 = vmul.f32 %v1529, %v1952
    %v2200 = vmul.f32 %v1531, %v1956
    %v2201 = vmul.f32 %v1722, %v1960
    %v2202 = vmul.f32 %v1724, %v1964
    %v2203 = vmul.f32 %v1915, %v1968
    %v2204 = vmul.f32 %v1917, %v1972
    %v2205 = vmul.f32 %v1342, %v1944
    %v2206 = vmul.f32 %v1344, %v1948
    %v2207 = vmul.f32 %v1535, %v1952
    %v2208 = vmul.f32 %v1537, %v1956
    %v2209 = vmul.f32 %v1728, %v1960
    %v2210 = vmul.f32 %v1730, %v1964
    %v2211 = vmul.f32 %v1921, %v1968
    %v2212 = vmul.f32 %v1923, %v1972
    %v2213 = vmul.f32 %v1346, %v1944
    %v2214 = vmul.f32 %v1348, %v1948
    %v2215 = vmul.f32 %v1539, %v1952
    %v2216 = vmul.f32 %v1541, %v1956
    %v2217 = vmul.f32 %v1732, %v1960
    %v2218 = vmul.f32 %v1734, %v1964
    %v2219 = vmul.f32 %v1925, %v1968
    %v2220 = vmul.f32 %v1927, %v1972
    %v2221 = vmul.f32 %v1352, %v1944
    %v2222 = vmul.f32 %v1354, %v1948
    %v2223 = vmul.f32 %v1545, %v1952
    %v2224 = vmul.f32 %v1547, %v1956
    %v2225 = vmul.f32 %v1738, %v1960
    %v2226 = vmul.f32 %v1740, %v1964
    %v2227 = vmul.f32 %v1931, %v1968
    %v2228 = vmul.f32 %v1933, %v1972
    %v2229 = vmul.f32 %v1356, %v1944
    %v2230 = vmul.f32 %v1358, %v1948
    %v2231 = vmul.f32 %v1549, %v1952
    %v2232 = vmul.f32 %v1551, %v1956
    %v2233 = vmul.f32 %v1742, %v1960
    %v2234 = vmul.f32 %v1744, %v1964
    %v2235 = vmul.f32 %v1935, %v1968
    %v2236 = vmul.f32 %v1937, %v1972
    %2237 = vst [vmem:[#allocation2] sm:$0xff] %v1981
    %2238 = vst [vmem:[#allocation2 + $0x8] sm:$0xff] %v1982
    %2239 = vst [vmem:[#allocation2 + $0x10] sm:$0xff] %v1983
    %2240 = vst [vmem:[#allocation2 + $0x18] sm:$0xff] %v1984
    %2241 = vst [vmem:[#allocation2 + $0x20] sm:$0xff] %v1985
    %2242 = vst [vmem:[#allocation2 + $0x28] sm:$0xff] %v1986
    %2243 = vst [vmem:[#allocation2 + $0x30] sm:$0xff] %v1987
    %2244 = vst [vmem:[#allocation2 + $0x38] sm:$0xff] %v1988
    %2245 = vst [vmem:[#allocation2 + $0x40] sm:$0xff] %v1989
    %2246 = vst [vmem:[#allocation2 + $0x48] sm:$0xff] %v1990
    %2247 = vst [vmem:[#allocation2 + $0x50] sm:$0xff] %v1991
    %2248 = vst [vmem:[#allocation2 + $0x58] sm:$0xff] %v1992
    %2249 = vst [vmem:[#allocation2 + $0x60] sm:$0xff] %v1993
    %2250 = vst [vmem:[#allocation2 + $0x68] sm:$0xff] %v1994
    %2251 = vst [vmem:[#allocation2 + $0x70] sm:$0xff] %v1995
    %2252 = vst [vmem:[#allocation2 + $0x78] sm:$0xff] %v1996
    %2253 = vst [vmem:[#allocation2 + $0x80] sm:$0xff] %v1997
    %2254 = vst [vmem:[#allocation2 + $0x88] sm:$0xff] %v1998
    %2255 = vst [vmem:[#allocation2 + $0x90] sm:$0xff] %v1999
    %2256 = vst [vmem:[#allocation2 + $0x98] sm:$0xff] %v2000
    %2257 = vst [vmem:[#allocation2 + $0xa0] sm:$0xff] %v2001
    %2258 = vst [vmem:[#allocation2 + $0xa8] sm:$0xff] %v2002
    %2259 = vst [vmem:[#allocation2 + $0xb0] sm:$0xff] %v2003
    %2260 = vst [vmem:[#allocation2 + $0xb8] sm:$0xff] %v2004
    %2261 = vst [vmem:[#allocation2 + $0xc0] sm:$0xff] %v2005
    %2262 = vst [vmem:[#allocation2 + $0xc8] sm:$0xff] %v2006
    %2263 = vst [vmem:[#allocation2 + $0xd0] sm:$0xff] %v2007
    %2264 = vst [vmem:[#allocation2 + $0xd8] sm:$0xff] %v2008
    %2265 = vst [vmem:[#allocation2 + $0xe0] sm:$0xff] %v2009
    %2266 = vst [vmem:[#allocation2 + $0xe8] sm:$0xff] %v2010
    %2267 = vst [vmem:[#allocation2 + $0xf0] sm:$0xff] %v2011
    %2268 = vst [vmem:[#allocation2 + $0xf8] sm:$0xff] %v2012
    %2269 = vst [vmem:[#allocation2 + $0x100] sm:$0xff] %v2013
    %2270 = vst [vmem:[#allocation2 + $0x108] sm:$0xff] %v2014
    %2271 = vst [vmem:[#allocation2 + $0x110] sm:$0xff] %v2015
    %2272 = vst [vmem:[#allocation2 + $0x118] sm:$0xff] %v2016
    %2273 = vst [vmem:[#allocation2 + $0x120] sm:$0xff] %v2017
    %2274 = vst [vmem:[#allocation2 + $0x128] sm:$0xff] %v2018
    %2275 = vst [vmem:[#allocation2 + $0x130] sm:$0xff] %v2019
    %2276 = vst [vmem:[#allocation2 + $0x138] sm:$0xff] %v2020
    %2277 = vst [vmem:[#allocation2 + $0x140] sm:$0xff] %v2021
    %2278 = vst [vmem:[#allocation2 + $0x148] sm:$0xff] %v2022
    %2279 = vst [vmem:[#allocation2 + $0x150] sm:$0xff] %v2023
    %2280 = vst [vmem:[#allocation2 + $0x158] sm:$0xff] %v2024
    %2281 = vst [vmem:[#allocation2 + $0x160] sm:$0xff] %v2025
    %2282 = vst [vmem:[#allocation2 + $0x168] sm:$0xff] %v2026
    %2283 = vst [vmem:[#allocation2 + $0x170] sm:$0xff] %v2027
    %2284 = vst [vmem:[#allocation2 + $0x178] sm:$0xff] %v2028
    %2285 = vst [vmem:[#allocation2 + $0x180] sm:$0xff] %v2029
    %2286 = vst [vmem:[#allocation2 + $0x188] sm:$0xff] %v2030
    %2287 = vst [vmem:[#allocation2 + $0x190] sm:$0xff] %v2031
    %2288 = vst [vmem:[#allocation2 + $0x198] sm:$0xff] %v2032
    %2289 = vst [vmem:[#allocation2 + $0x1a0] sm:$0xff] %v2033
    %2290 = vst [vmem:[#allocation2 + $0x1a8] sm:$0xff] %v2034
    %2291 = vst [vmem:[#allocation2 + $0x1b0] sm:$0xff] %v2035
    %2292 = vst [vmem:[#allocation2 + $0x1b8] sm:$0xff] %v2036
    %2293 = vst [vmem:[#allocation2 + $0x1c0] sm:$0xff] %v2037
    %2294 = vst [vmem:[#allocation2 + $0x1c8] sm:$0xff] %v2038
    %2295 = vst [vmem:[#allocation2 + $0x1d0] sm:$0xff] %v2039
    %2296 = vst [vmem:[#allocation2 + $0x1d8] sm:$0xff] %v2040
    %2297 = vst [vmem:[#allocation2 + $0x1e0] sm:$0xff] %v2041
    %2298 = vst [vmem:[#allocation2 + $0x1e8] sm:$0xff] %v2042
    %2299 = vst [vmem:[#allocation2 + $0x1f0] sm:$0xff] %v2043
    %2300 = vst [vmem:[#allocation2 + $0x1f8] sm:$0xff] %v2044
    %2301 = vst [vmem:[#allocation2 + $0x200] sm:$0xff] %v2045
    %2302 = vst [vmem:[#allocation2 + $0x208] sm:$0xff] %v2046
    %2303 = vst [vmem:[#allocation2 + $0x210] sm:$0xff] %v2047
    %2304 = vst [vmem:[#allocation2 + $0x218] sm:$0xff] %v2048
    %2305 = vst [vmem:[#allocation2 + $0x220] sm:$0xff] %v2049
    %2306 = vst [vmem:[#allocation2 + $0x228] sm:$0xff] %v2050
    %2307 = vst [vmem:[#allocation2 + $0x230] sm:$0xff] %v2051
    %2308 = vst [vmem:[#allocation2 + $0x238] sm:$0xff] %v2052
    %2309 = vst [vmem:[#allocation2 + $0x240] sm:$0xff] %v2053
    %2310 = vst [vmem:[#allocation2 + $0x248] sm:$0xff] %v2054
    %2311 = vst [vmem:[#allocation2 + $0x250] sm:$0xff] %v2055
    %2312 = vst [vmem:[#allocation2 + $0x258] sm:$0xff] %v2056
    %2313 = vst [vmem:[#allocation2 + $0x260] sm:$0xff] %v2057
    %2314 = vst [vmem:[#allocation2 + $0x268] sm:$0xff] %v2058
    %2315 = vst [vmem:[#allocation2 + $0x270] sm:$0xff] %v2059
    %2316 = vst [vmem:[#allocation2 + $0x278] sm:$0xff] %v2060
    %2317 = vst [vmem:[#allocation2 + $0x280] sm:$0xff] %v2061
    %2318 = vst [vmem:[#allocation2 + $0x288] sm:$0xff] %v2062
    %2319 = vst [vmem:[#allocation2 + $0x290] sm:$0xff] %v2063
    %2320 = vst [vmem:[#allocation2 + $0x298] sm:$0xff] %v2064
    %2321 = vst [vmem:[#allocation2 + $0x2a0] sm:$0xff] %v2065
    %2322 = vst [vmem:[#allocation2 + $0x2a8] sm:$0xff] %v2066
    %2323 = vst [vmem:[#allocation2 + $0x2b0] sm:$0xff] %v2067
    %2324 = vst [vmem:[#allocation2 + $0x2b8] sm:$0xff] %v2068
    %2325 = vst [vmem:[#allocation2 + $0x2c0] sm:$0xff] %v2069
    %2326 = vst [vmem:[#allocation2 + $0x2c8] sm:$0xff] %v2070
    %2327 = vst [vmem:[#allocation2 + $0x2d0] sm:$0xff] %v2071
    %2328 = vst [vmem:[#allocation2 + $0x2d8] sm:$0xff] %v2072
    %2329 = vst [vmem:[#allocation2 + $0x2e0] sm:$0xff] %v2073
    %2330 = vst [vmem:[#allocation2 + $0x2e8] sm:$0xff] %v2074
    %2331 = vst [vmem:[#allocation2 + $0x2f0] sm:$0xff] %v2075
    %2332 = vst [vmem:[#allocation2 + $0x2f8] sm:$0xff] %v2076
    %2333 = vst [vmem:[#allocation2 + $0x300] sm:$0xff] %v2077
    %2334 = vst [vmem:[#allocation2 + $0x308] sm:$0xff] %v2078
    %2335 = vst [vmem:[#allocation2 + $0x310] sm:$0xff] %v2079
    %2336 = vst [vmem:[#allocation2 + $0x318] sm:$0xff] %v2080
    %2337 = vst [vmem:[#allocation2 + $0x320] sm:$0xff] %v2081
    %2338 = vst [vmem:[#allocation2 + $0x328] sm:$0xff] %v2082
    %2339 = vst [vmem:[#allocation2 + $0x330] sm:$0xff] %v2083
    %2340 = vst [vmem:[#allocation2 + $0x338] sm:$0xff] %v2084
    %2341 = vst [vmem:[#allocation2 + $0x340] sm:$0xff] %v2085
    %2342 = vst [vmem:[#allocation2 + $0x348] sm:$0xff] %v2086
    %2343 = vst [vmem:[#allocation2 + $0x350] sm:$0xff] %v2087
    %2344 = vst [vmem:[#allocation2 + $0x358] sm:$0xff] %v2088
    %2345 = vst [vmem:[#allocation2 + $0x360] sm:$0xff] %v2089
    %2346 = vst [vmem:[#allocation2 + $0x368] sm:$0xff] %v2090
    %2347 = vst [vmem:[#allocation2 + $0x370] sm:$0xff] %v2091
    %2348 = vst [vmem:[#allocation2 + $0x378] sm:$0xff] %v2092
    %2349 = vst [vmem:[#allocation2 + $0x380] sm:$0xff] %v2093
    %2350 = vst [vmem:[#allocation2 + $0x388] sm:$0xff] %v2094
    %2351 = vst [vmem:[#allocation2 + $0x390] sm:$0xff] %v2095
    %2352 = vst [vmem:[#allocation2 + $0x398] sm:$0xff] %v2096
    %2353 = vst [vmem:[#allocation2 + $0x3a0] sm:$0xff] %v2097
    %2354 = vst [vmem:[#allocation2 + $0x3a8] sm:$0xff] %v2098
    %2355 = vst [vmem:[#allocation2 + $0x3b0] sm:$0xff] %v2099
    %2356 = vst [vmem:[#allocation2 + $0x3b8] sm:$0xff] %v2100
    %2357 = vst [vmem:[#allocation2 + $0x3c0] sm:$0xff] %v2101
    %2358 = vst [vmem:[#allocation2 + $0x3c8] sm:$0xff] %v2102
    %2359 = vst [vmem:[#allocation2 + $0x3d0] sm:$0xff] %v2103
    %2360 = vst [vmem:[#allocation2 + $0x3d8] sm:$0xff] %v2104
    %2361 = vst [vmem:[#allocation2 + $0x3e0] sm:$0xff] %v2105
    %2362 = vst [vmem:[#allocation2 + $0x3e8] sm:$0xff] %v2106
    %2363 = vst [vmem:[#allocation2 + $0x3f0] sm:$0xff] %v2107
    %2364 = vst [vmem:[#allocation2 + $0x3f8] sm:$0xff] %v2108
    %2365 = vst [vmem:[#allocation2 + $0x400] sm:$0xff] %v2109
    %2366 = vst [vmem:[#allocation2 + $0x408] sm:$0xff] %v2110
    %2367 = vst [vmem:[#allocation2 + $0x410] sm:$0xff] %v2111
    %2368 = vst [vmem:[#allocation2 + $0x418] sm:$0xff] %v2112
    %2369 = vst [vmem:[#allocation2 + $0x420] sm:$0xff] %v2113
    %2370 = vst [vmem:[#allocation2 + $0x428] sm:$0xff] %v2114
    %2371 = vst [vmem:[#allocation2 + $0x430] sm:$0xff] %v2115
    %2372 = vst [vmem:[#allocation2 + $0x438] sm:$0xff] %v2116
    %2373 = vst [vmem:[#allocation2 + $0x440] sm:$0xff] %v2117
    %2374 = vst [vmem:[#allocation2 + $0x448] sm:$0xff] %v2118
    %2375 = vst [vmem:[#allocation2 + $0x450] sm:$0xff] %v2119
    %2376 = vst [vmem:[#allocation2 + $0x458] sm:$0xff] %v2120
    %2377 = vst [vmem:[#allocation2 + $0x460] sm:$0xff] %v2121
    %2378 = vst [vmem:[#allocation2 + $0x468] sm:$0xff] %v2122
    %2379 = vst [vmem:[#allocation2 + $0x470] sm:$0xff] %v2123
    %2380 = vst [vmem:[#allocation2 + $0x478] sm:$0xff] %v2124
    %2381 = vst [vmem:[#allocation2 + $0x480] sm:$0xff] %v2125
    %2382 = vst [vmem:[#allocation2 + $0x488] sm:$0xff] %v2126
    %2383 = vst [vmem:[#allocation2 + $0x490] sm:$0xff] %v2127
    %2384 = vst [vmem:[#allocation2 + $0x498] sm:$0xff] %v2128
    %2385 = vst [vmem:[#allocation2 + $0x4a0] sm:$0xff] %v2129
    %2386 = vst [vmem:[#allocation2 + $0x4a8] sm:$0xff] %v2130
    %2387 = vst [vmem:[#allocation2 + $0x4b0] sm:$0xff] %v2131
    %2388 = vst [vmem:[#allocation2 + $0x4b8] sm:$0xff] %v2132
    %2389 = vst [vmem:[#allocation2 + $0x4c0] sm:$0xff] %v2133
    %2390 = vst [vmem:[#allocation2 + $0x4c8] sm:$0xff] %v2134
    %2391 = vst [vmem:[#allocation2 + $0x4d0] sm:$0xff] %v2135
    %2392 = vst [vmem:[#allocation2 + $0x4d8] sm:$0xff] %v2136
    %2393 = vst [vmem:[#allocation2 + $0x4e0] sm:$0xff] %v2137
    %2394 = vst [vmem:[#allocation2 + $0x4e8] sm:$0xff] %v2138
    %2395 = vst [vmem:[#allocation2 + $0x4f0] sm:$0xff] %v2139
    %2396 = vst [vmem:[#allocation2 + $0x4f8] sm:$0xff] %v2140
    %2397 = vst [vmem:[#allocation2 + $0x500] sm:$0xff] %v2141
    %2398 = vst [vmem:[#allocation2 + $0x508] sm:$0xff] %v2142
    %2399 = vst [vmem:[#allocation2 + $0x510] sm:$0xff] %v2143
    %2400 = vst [vmem:[#allocation2 + $0x518] sm:$0xff] %v2144
    %2401 = vst [vmem:[#allocation2 + $0x520] sm:$0xff] %v2145
    %2402 = vst [vmem:[#allocation2 + $0x528] sm:$0xff] %v2146
    %2403 = vst [vmem:[#allocation2 + $0x530] sm:$0xff] %v2147
    %2404 = vst [vmem:[#allocation2 + $0x538] sm:$0xff] %v2148
    %2405 = vst [vmem:[#allocation2 + $0x540] sm:$0xff] %v2149
    %2406 = vst [vmem:[#allocation2 + $0x548] sm:$0xff] %v2150
    %2407 = vst [vmem:[#allocation2 + $0x550] sm:$0xff] %v2151
    %2408 = vst [vmem:[#allocation2 + $0x558] sm:$0xff] %v2152
    %2409 = vst [vmem:[#allocation2 + $0x560] sm:$0xff] %v2153
    %2410 = vst [vmem:[#allocation2 + $0x568] sm:$0xff] %v2154
    %2411 = vst [vmem:[#allocation2 + $0x570] sm:$0xff] %v2155
    %2412 = vst [vmem:[#allocation2 + $0x578] sm:$0xff] %v2156
    %2413 = vst [vmem:[#allocation2 + $0x580] sm:$0xff] %v2157
    %2414 = vst [vmem:[#allocation2 + $0x588] sm:$0xff] %v2158
    %2415 = vst [vmem:[#allocation2 + $0x590] sm:$0xff] %v2159
    %2416 = vst [vmem:[#allocation2 + $0x598] sm:$0xff] %v2160
    %2417 = vst [vmem:[#allocation2 + $0x5a0] sm:$0xff] %v2161
    %2418 = vst [vmem:[#allocation2 + $0x5a8] sm:$0xff] %v2162
    %2419 = vst [vmem:[#allocation2 + $0x5b0] sm:$0xff] %v2163
    %2420 = vst [vmem:[#allocation2 + $0x5b8] sm:$0xff] %v2164
    %2421 = vst [vmem:[#allocation2 + $0x5c0] sm:$0xff] %v2165
    %2422 = vst [vmem:[#allocation2 + $0x5c8] sm:$0xff] %v2166
    %2423 = vst [vmem:[#allocation2 + $0x5d0] sm:$0xff] %v2167
    %2424 = vst [vmem:[#allocation2 + $0x5d8] sm:$0xff] %v2168
    %2425 = vst [vmem:[#allocation2 + $0x5e0] sm:$0xff] %v2169
    %2426 = vst [vmem:[#allocation2 + $0x5e8] sm:$0xff] %v2170
    %2427 = vst [vmem:[#allocation2 + $0x5f0] sm:$0xff] %v2171
    %2428 = vst [vmem:[#allocation2 + $0x5f8] sm:$0xff] %v2172
    %2429 = vst [vmem:[#allocation2 + $0x600] sm:$0xff] %v2173
    %2430 = vst [vmem:[#allocation2 + $0x608] sm:$0xff] %v2174
    %2431 = vst [vmem:[#allocation2 + $0x610] sm:$0xff] %v2175
    %2432 = vst [vmem:[#allocation2 + $0x618] sm:$0xff] %v2176
    %2433 = vst [vmem:[#allocation2 + $0x620] sm:$0xff] %v2177
    %2434 = vst [vmem:[#allocation2 + $0x628] sm:$0xff] %v2178
    %2435 = vst [vmem:[#allocation2 + $0x630] sm:$0xff] %v2179
    %2436 = vst [vmem:[#allocation2 + $0x638] sm:$0xff] %v2180
    %2437 = vst [vmem:[#allocation2 + $0x640] sm:$0xff] %v2181
    %2438 = vst [vmem:[#allocation2 + $0x648] sm:$0xff] %v2182
    %2439 = vst [vmem:[#allocation2 + $0x650] sm:$0xff] %v2183
    %2440 = vst [vmem:[#allocation2 + $0x658] sm:$0xff] %v2184
    %2441 = vst [vmem:[#allocation2 + $0x660] sm:$0xff] %v2185
    %2442 = vst [vmem:[#allocation2 + $0x668] sm:$0xff] %v2186
    %2443 = vst [vmem:[#allocation2 + $0x670] sm:$0xff] %v2187
    %2444 = vst [vmem:[#allocation2 + $0x678] sm:$0xff] %v2188
    %2445 = vst [vmem:[#allocation2 + $0x680] sm:$0xff] %v2189
    %2446 = vst [vmem:[#allocation2 + $0x688] sm:$0xff] %v2190
    %2447 = vst [vmem:[#allocation2 + $0x690] sm:$0xff] %v2191
    %2448 = vst [vmem:[#allocation2 + $0x698] sm:$0xff] %v2192
    %2449 = vst [vmem:[#allocation2 + $0x6a0] sm:$0xff] %v2193
    %2450 = vst [vmem:[#allocation2 + $0x6a8] sm:$0xff] %v2194
    %2451 = vst [vmem:[#allocation2 + $0x6b0] sm:$0xff] %v2195
    %2452 = vst [vmem:[#allocation2 + $0x6b8] sm:$0xff] %v2196
    %2453 = vst [vmem:[#allocation2 + $0x6c0] sm:$0xff] %v2197
    %2454 = vst [vmem:[#allocation2 + $0x6c8] sm:$0xff] %v2198
    %2455 = vst [vmem:[#allocation2 + $0x6d0] sm:$0xff] %v2199
    %2456 = vst [vmem:[#allocation2 + $0x6d8] sm:$0xff] %v2200
    %2457 = vst [vmem:[#allocation2 + $0x6e0] sm:$0xff] %v2201
    %2458 = vst [vmem:[#allocation2 + $0x6e8] sm:$0xff] %v2202
    %2459 = vst [vmem:[#allocation2 + $0x6f0] sm:$0xff] %v2203
    %2460 = vst [vmem:[#allocation2 + $0x6f8] sm:$0xff] %v2204
    %2461 = vst [vmem:[#allocation2 + $0x700] sm:$0xff] %v2205
    %2462 = vst [vmem:[#allocation2 + $0x708] sm:$0xff] %v2206
    %2463 = vst [vmem:[#allocation2 + $0x710] sm:$0xff] %v2207
    %2464 = vst [vmem:[#allocation2 + $0x718] sm:$0xff] %v2208
    %2465 = vst [vmem:[#allocation2 + $0x720] sm:$0xff] %v2209
    %2466 = vst [vmem:[#allocation2 + $0x728] sm:$0xff] %v2210
    %2467 = vst [vmem:[#allocation2 + $0x730] sm:$0xff] %v2211
    %2468 = vst [vmem:[#allocation2 + $0x738] sm:$0xff] %v2212
    %2469 = vst [vmem:[#allocation2 + $0x740] sm:$0xff] %v2213
    %2470 = vst [vmem:[#allocation2 + $0x748] sm:$0xff] %v2214
    %2471 = vst [vmem:[#allocation2 + $0x750] sm:$0xff] %v2215
    %2472 = vst [vmem:[#allocation2 + $0x758] sm:$0xff] %v2216
    %2473 = vst [vmem:[#allocation2 + $0x760] sm:$0xff] %v2217
    %2474 = vst [vmem:[#allocation2 + $0x768] sm:$0xff] %v2218
    %2475 = vst [vmem:[#allocation2 + $0x770] sm:$0xff] %v2219
    %2476 = vst [vmem:[#allocation2 + $0x778] sm:$0xff] %v2220
    %2477 = vst [vmem:[#allocation2 + $0x780] sm:$0xff] %v2221
    %2478 = vst [vmem:[#allocation2 + $0x788] sm:$0xff] %v2222
    %2479 = vst [vmem:[#allocation2 + $0x790] sm:$0xff] %v2223
    %2480 = vst [vmem:[#allocation2 + $0x798] sm:$0xff] %v2224
    %2481 = vst [vmem:[#allocation2 + $0x7a0] sm:$0xff] %v2225
    %2482 = vst [vmem:[#allocation2 + $0x7a8] sm:$0xff] %v2226
    %2483 = vst [vmem:[#allocation2 + $0x7b0] sm:$0xff] %v2227
    %2484 = vst [vmem:[#allocation2 + $0x7b8] sm:$0xff] %v2228
    %2485 = vst [vmem:[#allocation2 + $0x7c0] sm:$0xff] %v2229
    %2486 = vst [vmem:[#allocation2 + $0x7c8] sm:$0xff] %v2230
    %2487 = vst [vmem:[#allocation2 + $0x7d0] sm:$0xff] %v2231
    %2488 = vst [vmem:[#allocation2 + $0x7d8] sm:$0xff] %v2232
    %2489 = vst [vmem:[#allocation2 + $0x7e0] sm:$0xff] %v2233
    %2490 = vst [vmem:[#allocation2 + $0x7e8] sm:$0xff] %v2234
    %2491 = vst [vmem:[#allocation2 + $0x7f0] sm:$0xff] %v2235
    %2492 = vst [vmem:[#allocation2 + $0x7f8] sm:$0xff] %v2236
    // Predicated region
    $region14: #{dino_head_forward.3} parent=1 // pred_check
      _
    $region15: #{dino_head_forward.3} parent=1 // pred_check_branch
      %2494 = sbr.rel (0) target = $region17
    $region16: #{dino_head_forward.3} parent=1 // pred_region
      %s2496 = ssub.s32 32768, 32768
      %2497 = vsyncadd [#allocation3], %s2496
      %s2498 = sshll.u32 [#allocation2], 4
      %s2499 = int_to_ptr.vmem [resolvable:$true] %s2498
      %2504 = dma.vmem_to_hbm [thread:$0]  %s2499, 32768, %s3, [#allocation3], 1024, 1024, 64
    $region17: #{dino_head_forward.3} parent=1 // pred_fallthru
      _
    // Predicated region
    $region18: #{dino_head_forward.3} parent=1 // pred_check
      _
    $region19: #{dino_head_forward.3} parent=1 // pred_check_branch
      %2506 = sbr.rel (0) target = $region21
    $region20: #{dino_head_forward.3} parent=1 // pred_region
      %2507 = dma.done [#allocation3], 32768
    $region21: #{dino_head_forward.3} parent=1 // pred_fallthru
      _
    %2508 = vsyncpa [#allocation3], 1

// kernel: dino_head_forward.2
$region0: #{dino_head_forward.2}
  #allocation0 [shape = 'u32[]', space=smem, size = 0x4, offset = 0x4, fixed_abs, tag = 'smem constant byte address 0x4 - core index']
  #allocation1 [shape = 'u32[144,128]{1,0:T(1,128)}', space=vmem, size = 0x12000, scoped, tag = 'internal scratch']
  %s0 = inlined_call_operand.vmem [shape: f32[256,256], index: 0, kind: input, shape index: {}]
  %s1 = inlined_call_operand.vmem [shape: bf16[256,512], index: 1, kind: input, shape index: {}]
  %s2 = inlined_call_operand.vmem [shape: f32[1,512], index: 2, kind: input, shape index: {}]
  %s3 = inlined_call_operand.vmem [shape: bf16[512,512], index: 3, kind: input, shape index: {}]
  %s4 = inlined_call_operand.vmem [shape: f32[1,512], index: 4, kind: input, shape index: {}]
  %s5 = inlined_call_operand.vmem [shape: bf16[512,256], index: 5, kind: input, shape index: {}]
  %s6 = inlined_call_operand.vmem [shape: f32[1,256], index: 6, kind: input, shape index: {}]
  %s7 = inlined_call_operand.hbm [shape: f32[256,256], index: 7, kind: output, shape index: {}]
  %s8 = sld [smem:[#allocation0]]
  $region38: #{dino_head_forward.2} parent=0
    _
  %s10 = ssub.s32 1, %s8
  %s11 = scalar_select 0, %s10, %s8
  $region1: #{dino_head_forward.2} parent=0
    #allocation2 [shape = 'u8[262144]{0}', space=vmem, size = 0x40000, scoped, tag = 'output window, operand 0, single buffered']
    #allocation3 [shape = 's32[1]{0}', space=sflag, size = 0x4, scoped, tag = 'scoped memory for dino_head_forward.2']
    %12 = vsyncpa [#allocation3], 0
    // Predicated region
    $region2: #{dino_head_forward.2} parent=1 // pred_check
      _
    $region3: #{dino_head_forward.2} parent=1 // pred_check_branch
      %14 = sbr.rel (0) target = $region5
    $region4: #{dino_head_forward.2} parent=1 // pred_region
      _
    $region5: #{dino_head_forward.2} parent=1 // pred_fallthru
      _
    // Predicated region
    $region6: #{dino_head_forward.2} parent=1 // pred_check
      _
    $region7: #{dino_head_forward.2} parent=1 // pred_check_branch
      %16 = sbr.rel (0) target = $region9
    $region8: #{dino_head_forward.2} parent=1 // pred_region
      _
    $region9: #{dino_head_forward.2} parent=1 // pred_fallthru
      _
    // Predicated region
    $region10: #{dino_head_forward.2} parent=1 // pred_check
      _
    $region11: #{dino_head_forward.2} parent=1 // pred_check_branch
      %18 = sbr.rel (0) target = $region13
    $region12: #{dino_head_forward.2} parent=1 // pred_region
      _
    $region13: #{dino_head_forward.2} parent=1 // pred_fallthru
      _
    // Predicated region
    $region14: #{dino_head_forward.2} parent=1 // pred_check
      _
    $region15: #{dino_head_forward.2} parent=1 // pred_check_branch
      %20 = sbr.rel (0) target = $region17
    $region16: #{dino_head_forward.2} parent=1 // pred_region
      _
    $region17: #{dino_head_forward.2} parent=1 // pred_fallthru
      _
    // Predicated region
    $region18: #{dino_head_forward.2} parent=1 // pred_check
      _
    $region19: #{dino_head_forward.2} parent=1 // pred_check_branch
      %22 = sbr.rel (0) target = $region21
    $region20: #{dino_head_forward.2} parent=1 // pred_region
      _
    $region21: #{dino_head_forward.2} parent=1 // pred_fallthru
      _
    // Predicated region
    $region22: #{dino_head_forward.2} parent=1 // pred_check
      _
    $region23: #{dino_head_forward.2} parent=1 // pred_check_branch
      %24 = sbr.rel (0) target = $region25
    $region24: #{dino_head_forward.2} parent=1 // pred_region
      _
    $region25: #{dino_head_forward.2} parent=1 // pred_fallthru
      _
    // Predicated region
    $region26: #{dino_head_forward.2} parent=1 // pred_check
      _
    $region27: #{dino_head_forward.2} parent=1 // pred_check_branch
      %26 = sbr.rel (0) target = $region29
    $region28: #{dino_head_forward.2} parent=1 // pred_region
      _
    $region29: #{dino_head_forward.2} parent=1 // pred_fallthru
      _
    %v27 = vld [vmem:[%s0] sm:$0xff]
    %v28 = vld [vmem:[%s0 + $0x8] sm:$0xff]
    %v29 = vld [vmem:[%s0 + $0x10] sm:$0xff]
    %v30 = vld [vmem:[%s0 + $0x18] sm:$0xff]
    %v31 = vld [vmem:[%s0 + $0x20] sm:$0xff]
    %v32 = vld [vmem:[%s0 + $0x28] sm:$0xff]
    %v33 = vld [vmem:[%s0 + $0x30] sm:$0xff]
    %v34 = vld [vmem:[%s0 + $0x38] sm:$0xff]
    %v35 = vld [vmem:[%s0 + $0x40] sm:$0xff]
    %v36 = vld [vmem:[%s0 + $0x48] sm:$0xff]
    %v37 = vld [vmem:[%s0 + $0x50] sm:$0xff]
    %v38 = vld [vmem:[%s0 + $0x58] sm:$0xff]
    %v39 = vld [vmem:[%s0 + $0x60] sm:$0xff]
    %v40 = vld [vmem:[%s0 + $0x68] sm:$0xff]
    %v41 = vld [vmem:[%s0 + $0x70] sm:$0xff]
    %v42 = vld [vmem:[%s0 + $0x78] sm:$0xff]
    %v43 = vld [vmem:[%s0 + $0x80] sm:$0xff]
    %v44 = vld [vmem:[%s0 + $0x88] sm:$0xff]
    %v45 = vld [vmem:[%s0 + $0x90] sm:$0xff]
    %v46 = vld [vmem:[%s0 + $0x98] sm:$0xff]
    %v47 = vld [vmem:[%s0 + $0xa0] sm:$0xff]
    %v48 = vld [vmem:[%s0 + $0xa8] sm:$0xff]
    %v49 = vld [vmem:[%s0 + $0xb0] sm:$0xff]
    %v50 = vld [vmem:[%s0 + $0xb8] sm:$0xff]
    %v51 = vld [vmem:[%s0 + $0xc0] sm:$0xff]
    %v52 = vld [vmem:[%s0 + $0xc8] sm:$0xff]
    %v53 = vld [vmem:[%s0 + $0xd0] sm:$0xff]
    %v54 = vld [vmem:[%s0 + $0xd8] sm:$0xff]
    %v55 = vld [vmem:[%s0 + $0xe0] sm:$0xff]
    %v56 = vld [vmem:[%s0 + $0xe8] sm:$0xff]
    %v57 = vld [vmem:[%s0 + $0xf0] sm:$0xff]
    %v58 = vld [vmem:[%s0 + $0xf8] sm:$0xff]
    %v59 = vld [vmem:[%s0 + $0x100] sm:$0xff]
    %v60 = vld [vmem:[%s0 + $0x108] sm:$0xff]
    %v61 = vld [vmem:[%s0 + $0x110] sm:$0xff]
    %v62 = vld [vmem:[%s0 + $0x118] sm:$0xff]
    %v63 = vld [vmem:[%s0 + $0x120] sm:$0xff]
    %v64 = vld [vmem:[%s0 + $0x128] sm:$0xff]
    %v65 = vld [vmem:[%s0 + $0x130] sm:$0xff]
    %v66 = vld [vmem:[%s0 + $0x138] sm:$0xff]
    %v67 = vld [vmem:[%s0 + $0x140] sm:$0xff]
    %v68 = vld [vmem:[%s0 + $0x148] sm:$0xff]
    %v69 = vld [vmem:[%s0 + $0x150] sm:$0xff]
    %v70 = vld [vmem:[%s0 + $0x158] sm:$0xff]
    %v71 = vld [vmem:[%s0 + $0x160] sm:$0xff]
    %v72 = vld [vmem:[%s0 + $0x168] sm:$0xff]
    %v73 = vld [vmem:[%s0 + $0x170] sm:$0xff]
    %v74 = vld [vmem:[%s0 + $0x178] sm:$0xff]
    %v75 = vld [vmem:[%s0 + $0x180] sm:$0xff]
    %v76 = vld [vmem:[%s0 + $0x188] sm:$0xff]
    %v77 = vld [vmem:[%s0 + $0x190] sm:$0xff]
    %v78 = vld [vmem:[%s0 + $0x198] sm:$0xff]
    %v79 = vld [vmem:[%s0 + $0x1a0] sm:$0xff]
    %v80 = vld [vmem:[%s0 + $0x1a8] sm:$0xff]
    %v81 = vld [vmem:[%s0 + $0x1b0] sm:$0xff]
    %v82 = vld [vmem:[%s0 + $0x1b8] sm:$0xff]
    %v83 = vld [vmem:[%s0 + $0x1c0] sm:$0xff]
    %v84 = vld [vmem:[%s0 + $0x1c8] sm:$0xff]
    %v85 = vld [vmem:[%s0 + $0x1d0] sm:$0xff]
    %v86 = vld [vmem:[%s0 + $0x1d8] sm:$0xff]
    %v87 = vld [vmem:[%s0 + $0x1e0] sm:$0xff]
    %v88 = vld [vmem:[%s0 + $0x1e8] sm:$0xff]
    %v89 = vld [vmem:[%s0 + $0x1f0] sm:$0xff]
    %v90 = vld [vmem:[%s0 + $0x1f8] sm:$0xff]
    %v91 = vpack.c.bf16 %v29, %v27
    %v92 = vpack.c.bf16 %v30, %v28
    %v93 = vpack.c.bf16 %v33, %v31
    %v94 = vpack.c.bf16 %v34, %v32
    %v95 = vpack.c.bf16 %v37, %v35
    %v96 = vpack.c.bf16 %v38, %v36
    %v97 = vpack.c.bf16 %v41, %v39
    %v98 = vpack.c.bf16 %v42, %v40
    %v99 = vpack.c.bf16 %v45, %v43
    %v100 = vpack.c.bf16 %v46, %v44
    %v101 = vpack.c.bf16 %v49, %v47
    %v102 = vpack.c.bf16 %v50, %v48
    %v103 = vpack.c.bf16 %v53, %v51
    %v104 = vpack.c.bf16 %v54, %v52
    %v105 = vpack.c.bf16 %v57, %v55
    %v106 = vpack.c.bf16 %v58, %v56
    %v107 = vpack.c.bf16 %v61, %v59
    %v108 = vpack.c.bf16 %v62, %v60
    %v109 = vpack.c.bf16 %v65, %v63
    %v110 = vpack.c.bf16 %v66, %v64
    %v111 = vpack.c.bf16 %v69, %v67
    %v112 = vpack.c.bf16 %v70, %v68
    %v113 = vpack.c.bf16 %v73, %v71
    %v114 = vpack.c.bf16 %v74, %v72
    %v115 = vpack.c.bf16 %v77, %v75
    %v116 = vpack.c.bf16 %v78, %v76
    %v117 = vpack.c.bf16 %v81, %v79
    %v118 = vpack.c.bf16 %v82, %v80
    %v119 = vpack.c.bf16 %v85, %v83
    %v120 = vpack.c.bf16 %v86, %v84
    %v121 = vpack.c.bf16 %v89, %v87
    %v122 = vpack.c.bf16 %v90, %v88
    %v123 = vld [vmem:[%s1] sm:$0xff]
    %v124 = vld [vmem:[%s1 + $0x8] sm:$0xff]
    %v125 = vld [vmem:[%s1 + $0x10] sm:$0xff]
    %v126 = vld [vmem:[%s1 + $0x18] sm:$0xff]
    %v127 = vld [vmem:[%s1 + $0x20] sm:$0xff]
    %v128 = vld [vmem:[%s1 + $0x28] sm:$0xff]
    %v129 = vld [vmem:[%s1 + $0x30] sm:$0xff]
    %v130 = vld [vmem:[%s1 + $0x38] sm:$0xff]
    %v131 = vld [vmem:[%s1 + $0x40] sm:$0xff]
    %v132 = vld [vmem:[%s1 + $0x48] sm:$0xff]
    %v133 = vld [vmem:[%s1 + $0x50] sm:$0xff]
    %v134 = vld [vmem:[%s1 + $0x58] sm:$0xff]
    %v135 = vld [vmem:[%s1 + $0x60] sm:$0xff]
    %v136 = vld [vmem:[%s1 + $0x68] sm:$0xff]
    %v137 = vld [vmem:[%s1 + $0x70] sm:$0xff]
    %v138 = vld [vmem:[%s1 + $0x78] sm:$0xff]
    %v139 = vld [vmem:[%s1 + $0x80] sm:$0xff]
    %v140 = vld [vmem:[%s1 + $0x88] sm:$0xff]
    %v141 = vld [vmem:[%s1 + $0x90] sm:$0xff]
    %v142 = vld [vmem:[%s1 + $0x98] sm:$0xff]
    %v143 = vld [vmem:[%s1 + $0xa0] sm:$0xff]
    %v144 = vld [vmem:[%s1 + $0xa8] sm:$0xff]
    %v145 = vld [vmem:[%s1 + $0xb0] sm:$0xff]
    %v146 = vld [vmem:[%s1 + $0xb8] sm:$0xff]
    %v147 = vld [vmem:[%s1 + $0xc0] sm:$0xff]
    %v148 = vld [vmem:[%s1 + $0xc8] sm:$0xff]
    %v149 = vld [vmem:[%s1 + $0xd0] sm:$0xff]
    %v150 = vld [vmem:[%s1 + $0xd8] sm:$0xff]
    %v151 = vld [vmem:[%s1 + $0xe0] sm:$0xff]
    %v152 = vld [vmem:[%s1 + $0xe8] sm:$0xff]
    %v153 = vld [vmem:[%s1 + $0xf0] sm:$0xff]
    %v154 = vld [vmem:[%s1 + $0xf8] sm:$0xff]
    %v155 = vld [vmem:[%s1 + $0x100] sm:$0xff]
    %v156 = vld [vmem:[%s1 + $0x108] sm:$0xff]
    %v157 = vld [vmem:[%s1 + $0x110] sm:$0xff]
    %v158 = vld [vmem:[%s1 + $0x118] sm:$0xff]
    %v159 = vld [vmem:[%s1 + $0x120] sm:$0xff]
    %v160 = vld [vmem:[%s1 + $0x128] sm:$0xff]
    %v161 = vld [vmem:[%s1 + $0x130] sm:$0xff]
    %v162 = vld [vmem:[%s1 + $0x138] sm:$0xff]
    %v163 = vld [vmem:[%s1 + $0x140] sm:$0xff]
    %v164 = vld [vmem:[%s1 + $0x148] sm:$0xff]
    %v165 = vld [vmem:[%s1 + $0x150] sm:$0xff]
    %v166 = vld [vmem:[%s1 + $0x158] sm:$0xff]
    %v167 = vld [vmem:[%s1 + $0x160] sm:$0xff]
    %v168 = vld [vmem:[%s1 + $0x168] sm:$0xff]
    %v169 = vld [vmem:[%s1 + $0x170] sm:$0xff]
    %v170 = vld [vmem:[%s1 + $0x178] sm:$0xff]
    %v171 = vld [vmem:[%s1 + $0x180] sm:$0xff]
    %v172 = vld [vmem:[%s1 + $0x188] sm:$0xff]
    %v173 = vld [vmem:[%s1 + $0x190] sm:$0xff]
    %v174 = vld [vmem:[%s1 + $0x198] sm:$0xff]
    %v175 = vld [vmem:[%s1 + $0x1a0] sm:$0xff]
    %v176 = vld [vmem:[%s1 + $0x1a8] sm:$0xff]
    %v177 = vld [vmem:[%s1 + $0x1b0] sm:$0xff]
    %v178 = vld [vmem:[%s1 + $0x1b8] sm:$0xff]
    %v179 = vld [vmem:[%s1 + $0x1c0] sm:$0xff]
    %v180 = vld [vmem:[%s1 + $0x1c8] sm:$0xff]
    %v181 = vld [vmem:[%s1 + $0x1d0] sm:$0xff]
    %v182 = vld [vmem:[%s1 + $0x1d8] sm:$0xff]
    %v183 = vld [vmem:[%s1 + $0x1e0] sm:$0xff]
    %v184 = vld [vmem:[%s1 + $0x1e8] sm:$0xff]
    %v185 = vld [vmem:[%s1 + $0x1f0] sm:$0xff]
    %v186 = vld [vmem:[%s1 + $0x1f8] sm:$0xff]
    %v187 = vld [vmem:[%s2] sm:$0xf]
    %v189 = vlaneseq
    %v190 = vshrl.u32 %v189, 7
    %v191 = vsub.s32 0, %v190
    %v192 = vrot.slane %v187, %v191
    %v193 = vlaneseq
    %v194 = vshrl.u32 %v193, 7
    %v195 = vsub.s32 1, %v194
    %v196 = vrot.slane %v187, %v195
    %v197 = vlaneseq
    %v198 = vshrl.u32 %v197, 7
    %v199 = vsub.s32 2, %v198
    %v200 = vrot.slane %v187, %v199
    %v201 = vlaneseq
    %v202 = vshrl.u32 %v201, 7
    %v203 = vsub.s32 3, %v202
    %v204 = vrot.slane %v187, %v203
    %v273 = vunpack.c.l.b16 %v123
    %v274 = vunpack.c.h.b16 %v123
    %v275 = vunpack.c.l.b16 %v124
    %v276 = vunpack.c.h.b16 %v124
    %v277 = vunpack.c.l.b16 %v125
    %v278 = vunpack.c.h.b16 %v125
    %v279 = vunpack.c.l.b16 %v126
    %v280 = vunpack.c.h.b16 %v126
    %v281 = vunpack.c.l.b16 %v127
    %v282 = vunpack.c.h.b16 %v127
    %v283 = vunpack.c.l.b16 %v128
    %v284 = vunpack.c.h.b16 %v128
    %v285 = vunpack.c.l.b16 %v129
    %v286 = vunpack.c.h.b16 %v129
    %v287 = vunpack.c.l.b16 %v130
    %v288 = vunpack.c.h.b16 %v130
    %v289 = vunpack.c.l.b16 %v131
    %v290 = vunpack.c.h.b16 %v131
    %v291 = vunpack.c.l.b16 %v132
    %v292 = vunpack.c.h.b16 %v132
    %v293 = vunpack.c.l.b16 %v133
    %v294 = vunpack.c.h.b16 %v133
    %v295 = vunpack.c.l.b16 %v134
    %v296 = vunpack.c.h.b16 %v134
    %v297 = vunpack.c.l.b16 %v135
    %v298 = vunpack.c.h.b16 %v135
    %v299 = vunpack.c.l.b16 %v136
    %v300 = vunpack.c.h.b16 %v136
    %v301 = vunpack.c.l.b16 %v137
    %v302 = vunpack.c.h.b16 %v137
    %v303 = vunpack.c.l.b16 %v138
    %v304 = vunpack.c.h.b16 %v138
    %v305 = vunpack.c.l.b16 %v139
    %v306 = vunpack.c.h.b16 %v139
    %v307 = vunpack.c.l.b16 %v140
    %v308 = vunpack.c.h.b16 %v140
    %v309 = vunpack.c.l.b16 %v141
    %v310 = vunpack.c.h.b16 %v141
    %v311 = vunpack.c.l.b16 %v142
    %v312 = vunpack.c.h.b16 %v142
    %v313 = vunpack.c.l.b16 %v143
    %v314 = vunpack.c.h.b16 %v143
    %v315 = vunpack.c.l.b16 %v144
    %v316 = vunpack.c.h.b16 %v144
    %v317 = vunpack.c.l.b16 %v145
    %v318 = vunpack.c.h.b16 %v145
    %v319 = vunpack.c.l.b16 %v146
    %v320 = vunpack.c.h.b16 %v146
    %v321 = vunpack.c.l.b16 %v147
    %v322 = vunpack.c.h.b16 %v147
    %v323 = vunpack.c.l.b16 %v148
    %v324 = vunpack.c.h.b16 %v148
    %v325 = vunpack.c.l.b16 %v149
    %v326 = vunpack.c.h.b16 %v149
    %v327 = vunpack.c.l.b16 %v150
    %v328 = vunpack.c.h.b16 %v150
    %v329 = vunpack.c.l.b16 %v151
    %v330 = vunpack.c.h.b16 %v151
    %v331 = vunpack.c.l.b16 %v152
    %v332 = vunpack.c.h.b16 %v152
    %v333 = vunpack.c.l.b16 %v153
    %v334 = vunpack.c.h.b16 %v153
    %v335 = vunpack.c.l.b16 %v154
    %v336 = vunpack.c.h.b16 %v154
    %v337 = vunpack.c.l.b16 %v155
    %v338 = vunpack.c.h.b16 %v155
    %v339 = vunpack.c.l.b16 %v156
    %v340 = vunpack.c.h.b16 %v156
    %v341 = vunpack.c.l.b16 %v157
    %v342 = vunpack.c.h.b16 %v157
    %v343 = vunpack.c.l.b16 %v158
    %v344 = vunpack.c.h.b16 %v158
    %v345 = vunpack.c.l.b16 %v159
    %v346 = vunpack.c.h.b16 %v159
    %v347 = vunpack.c.l.b16 %v160
    %v348 = vunpack.c.h.b16 %v160
    %v349 = vunpack.c.l.b16 %v161
    %v350 = vunpack.c.h.b16 %v161
    %v351 = vunpack.c.l.b16 %v162
    %v352 = vunpack.c.h.b16 %v162
    %v353 = vunpack.c.l.b16 %v163
    %v354 = vunpack.c.h.b16 %v163
    %v355 = vunpack.c.l.b16 %v164
    %v356 = vunpack.c.h.b16 %v164
    %v357 = vunpack.c.l.b16 %v165
    %v358 = vunpack.c.h.b16 %v165
    %v359 = vunpack.c.l.b16 %v166
    %v360 = vunpack.c.h.b16 %v166
    %v361 = vunpack.c.l.b16 %v167
    %v362 = vunpack.c.h.b16 %v167
    %v363 = vunpack.c.l.b16 %v168
    %v364 = vunpack.c.h.b16 %v168
    %v365 = vunpack.c.l.b16 %v169
    %v366 = vunpack.c.h.b16 %v169
    %v367 = vunpack.c.l.b16 %v170
    %v368 = vunpack.c.h.b16 %v170
    %v369 = vunpack.c.l.b16 %v171
    %v370 = vunpack.c.h.b16 %v171
    %v371 = vunpack.c.l.b16 %v172
    %v372 = vunpack.c.h.b16 %v172
    %v373 = vunpack.c.l.b16 %v173
    %v374 = vunpack.c.h.b16 %v173
    %v375 = vunpack.c.l.b16 %v174
    %v376 = vunpack.c.h.b16 %v174
    %v377 = vunpack.c.l.b16 %v175
    %v378 = vunpack.c.h.b16 %v175
    %v379 = vunpack.c.l.b16 %v176
    %v380 = vunpack.c.h.b16 %v176
    %v381 = vunpack.c.l.b16 %v177
    %v382 = vunpack.c.h.b16 %v177
    %v383 = vunpack.c.l.b16 %v178
    %v384 = vunpack.c.h.b16 %v178
    %v385 = vunpack.c.l.b16 %v179
    %v386 = vunpack.c.h.b16 %v179
    %v387 = vunpack.c.l.b16 %v180
    %v388 = vunpack.c.h.b16 %v180
    %v389 = vunpack.c.l.b16 %v181
    %v390 = vunpack.c.h.b16 %v181
    %v391 = vunpack.c.l.b16 %v182
    %v392 = vunpack.c.h.b16 %v182
    %v393 = vunpack.c.l.b16 %v183
    %v394 = vunpack.c.h.b16 %v183
    %v395 = vunpack.c.l.b16 %v184
    %v396 = vunpack.c.h.b16 %v184
    %v397 = vunpack.c.l.b16 %v185
    %v398 = vunpack.c.h.b16 %v185
    %v399 = vunpack.c.l.b16 %v186
    %v400 = vunpack.c.h.b16 %v186
    %v401 = vpack.c.b16 %v277, %v273
    %v402 = vpack.c.b16 %v278, %v274
    %v403 = vpack.c.b16 %v279, %v275
    %v404 = vpack.c.b16 %v280, %v276
    %v405 = vpack.c.b16 %v285, %v281
    %v406 = vpack.c.b16 %v286, %v282
    %v407 = vpack.c.b16 %v287, %v283
    %v408 = vpack.c.b16 %v288, %v284
    %v409 = vpack.c.b16 %v293, %v289
    %v410 = vpack.c.b16 %v294, %v290
    %v411 = vpack.c.b16 %v295, %v291
    %v412 = vpack.c.b16 %v296, %v292
    %v413 = vpack.c.b16 %v301, %v297
    %v414 = vpack.c.b16 %v302, %v298
    %v415 = vpack.c.b16 %v303, %v299
    %v416 = vpack.c.b16 %v304, %v300
    %v417 = vpack.c.b16 %v309, %v305
    %v418 = vpack.c.b16 %v310, %v306
    %v419 = vpack.c.b16 %v311, %v307
    %v420 = vpack.c.b16 %v312, %v308
    %v421 = vpack.c.b16 %v317, %v313
    %v422 = vpack.c.b16 %v318, %v314
    %v423 = vpack.c.b16 %v319, %v315
    %v424 = vpack.c.b16 %v320, %v316
    %v425 = vpack.c.b16 %v325, %v321
    %v426 = vpack.c.b16 %v326, %v322
    %v427 = vpack.c.b16 %v327, %v323
    %v428 = vpack.c.b16 %v328, %v324
    %v429 = vpack.c.b16 %v333, %v329
    %v430 = vpack.c.b16 %v334, %v330
    %v431 = vpack.c.b16 %v335, %v331
    %v432 = vpack.c.b16 %v336, %v332
    %v433 = vpack.c.b16 %v341, %v337
    %v434 = vpack.c.b16 %v342, %v338
    %v435 = vpack.c.b16 %v343, %v339
    %v436 = vpack.c.b16 %v344, %v340
    %v437 = vpack.c.b16 %v349, %v345
    %v438 = vpack.c.b16 %v350, %v346
    %v439 = vpack.c.b16 %v351, %v347
    %v440 = vpack.c.b16 %v352, %v348
    %v441 = vpack.c.b16 %v357, %v353
    %v442 = vpack.c.b16 %v358, %v354
    %v443 = vpack.c.b16 %v359, %v355
    %v444 = vpack.c.b16 %v360, %v356
    %v445 = vpack.c.b16 %v365, %v361
    %v446 = vpack.c.b16 %v366, %v362
    %v447 = vpack.c.b16 %v367, %v363
    %v448 = vpack.c.b16 %v368, %v364
    %v449 = vpack.c.b16 %v373, %v369
    %v450 = vpack.c.b16 %v374, %v370
    %v451 = vpack.c.b16 %v375, %v371
    %v452 = vpack.c.b16 %v376, %v372
    %v453 = vpack.c.b16 %v381, %v377
    %v454 = vpack.c.b16 %v382, %v378
    %v455 = vpack.c.b16 %v383, %v379
    %v456 = vpack.c.b16 %v384, %v380
    %v457 = vpack.c.b16 %v389, %v385
    %v458 = vpack.c.b16 %v390, %v386
    %v459 = vpack.c.b16 %v391, %v387
    %v460 = vpack.c.b16 %v392, %v388
    %v461 = vpack.c.b16 %v397, %v393
    %v462 = vpack.c.b16 %v398, %v394
    %v463 = vpack.c.b16 %v399, %v395
    %v464 = vpack.c.b16 %v400, %v396
    %529 = vmatprep.subr.bf16.mxu0 %v402
    %530 = vmatpush1.bf16.msra.mxu0 %v401
    %531 = vmatprep.subr.bf16.mxu0 %v406
    %532 = vmatpush1.bf16.msra.mxu0 %v405
    %533 = vmatprep.subr.bf16.mxu0 %v410
    %534 = vmatpush1.bf16.msra.mxu0 %v409
    %535 = vmatprep.subr.bf16.mxu0 %v414
    %536 = vmatpush1.bf16.msra.mxu0 %v413
    %537 = vmatprep.subr.bf16.mxu0 %v418
    %538 = vmatpush1.bf16.msra.mxu0 %v417
    %539 = vmatprep.subr.bf16.mxu0 %v422
    %540 = vmatpush1.bf16.msra.mxu0 %v421
    %541 = vmatprep.subr.bf16.mxu0 %v426
    %542 = vmatpush1.bf16.msra.mxu0 %v425
    %543 = vmatprep.subr.bf16.mxu0 %v430
    %544 = vmatpush1.bf16.msra.mxu0 %v429
    %545 = vmatprep.subr.bf16.mxu0 %v434
    %546 = vmatpush1.bf16.msra.mxu0 %v433
    %547 = vmatprep.subr.bf16.mxu0 %v438
    %548 = vmatpush1.bf16.msra.mxu0 %v437
    %549 = vmatprep.subr.bf16.mxu0 %v442
    %550 = vmatpush1.bf16.msra.mxu0 %v441
    %551 = vmatprep.subr.bf16.mxu0 %v446
    %552 = vmatpush1.bf16.msra.mxu0 %v445
    %553 = vmatprep.subr.bf16.mxu0 %v450
    %554 = vmatpush1.bf16.msra.mxu0 %v449
    %555 = vmatprep.subr.bf16.mxu0 %v454
    %556 = vmatpush1.bf16.msra.mxu0 %v453
    %557 = vmatprep.subr.bf16.mxu0 %v458
    %558 = vmatpush1.bf16.msra.mxu0 %v457
    %559 = vmatprep.subr.bf16.mxu0 %v462
    %560 = vmatpush1.bf16.msra.mxu0 %v461
    %561 = vmatprep.mubr.bf16.mxu0 %v92
    %562 = vmatmul.mubr.bf16.gmra.mrb[0].mxu0 %v91
    %v563 = vpop.f32.mrb[0].mxu0
    %v564 = vadd.f32 %v192, %v563
    %v565 = vpop.f32.mrb[0].mxu0
    %v566 = vadd.f32 %v196, %v565
    %v567 = vpop.f32.mrb[0].mxu0
    %v568 = vadd.f32 %v192, %v567
    %v569 = vpop.f32.mrb[0].mxu0
    %v570 = vadd.f32 %v196, %v569
    %571 = vmatprep.mubr.bf16.mxu0 %v94
    %572 = vmatmul.mubr.bf16.gmra.mrb[0].mxu0 %v93
    %v573 = vpop.f32.mrb[0].mxu0
    %v574 = vadd.f32 %v192, %v573
    %v575 = vpop.f32.mrb[0].mxu0
    %v576 = vadd.f32 %v196, %v575
    %v577 = vpop.f32.mrb[0].mxu0
    %v578 = vadd.f32 %v192, %v577
    %v579 = vpop.f32.mrb[0].mxu0
    %v580 = vadd.f32 %v196, %v579
    %581 = vmatprep.mubr.bf16.mxu0 %v96
    %582 = vmatmul.mubr.bf16.gmra.mrb[0].mxu0 %v95
    %v583 = vpop.f32.mrb[0].mxu0
    %v584 = vadd.f32 %v192, %v583
    %v585 = vpop.f32.mrb[0].mxu0
    %v586 = vadd.f32 %v196, %v585
    %v587 = vpop.f32.mrb[0].mxu0
    %v588 = vadd.f32 %v192, %v587
    %v589 = vpop.f32.mrb[0].mxu0
    %v590 = vadd.f32 %v196, %v589
    %591 = vmatprep.mubr.bf16.mxu0 %v98
    %592 = vmatmul.mubr.bf16.gmra.mrb[0].mxu0 %v97
    %v593 = vpop.f32.mrb[0].mxu0
    %v594 = vadd.f32 %v192, %v593
    %v595 = vpop.f32.mrb[0].mxu0
    %v596 = vadd.f32 %v196, %v595
    %v597 = vpop.f32.mrb[0].mxu0
    %v598 = vadd.f32 %v192, %v597
    %v599 = vpop.f32.mrb[0].mxu0
    %v600 = vadd.f32 %v196, %v599
    %601 = vmatprep.mubr.bf16.mxu0 %v100
    %602 = vmatmul.mubr.bf16.gmra.mrb[0].mxu0 %v99
    %v603 = vpop.f32.mrb[0].mxu0
    %v604 = vadd.f32 %v192, %v603
    %v605 = vpop.f32.mrb[0].mxu0
    %v606 = vadd.f32 %v196, %v605
    %v607 = vpop.f32.mrb[0].mxu0
    %v608 = vadd.f32 %v192, %v607
    %v609 = vpop.f32.mrb[0].mxu0
    %v610 = vadd.f32 %v196, %v609
    %611 = vmatprep.mubr.bf16.mxu0 %v102
    %612 = vmatmul.mubr.bf16.gmra.mrb[0].mxu0 %v101
    %v613 = vpop.f32.mrb[0].mxu0
    %v614 = vadd.f32 %v192, %v613
    %v615 = vpop.f32.mrb[0].mxu0
    %v616 = vadd.f32 %v196, %v615
    %v617 = vpop.f32.mrb[0].mxu0
    %v618 = vadd.f32 %v192, %v617
    %v619 = vpop.f32.mrb[0].mxu0
    %v620 = vadd.f32 %v196, %v619
    %621 = vmatprep.mubr.bf16.mxu0 %v104
    %622 = vmatmul.mubr.bf16.gmra.mrb[0].mxu0 %v103
    %v623 = vpop.f32.mrb[0].mxu0
    %v624 = vadd.f32 %v192, %v623
    %v625 = vpop.f32.mrb[0].mxu0
    %v626 = vadd.f32 %v196, %v625
    %v627 = vpop.f32.mrb[0].mxu0
    %v628 = vadd.f32 %v192, %v627
    %v629 = vpop.f32.mrb[0].mxu0
    %v630 = vadd.f32 %v196, %v629
    %631 = vmatprep.mubr.bf16.mxu0 %v106
    %632 = vmatmul.mubr.bf16.gmra.mrb[0].mxu0 %v105
    %v633 = vpop.f32.mrb[0].mxu0
    %v634 = vadd.f32 %v192, %v633
    %v635 = vpop.f32.mrb[0].mxu0
    %v636 = vadd.f32 %v196, %v635
    %v637 = vpop.f32.mrb[0].mxu0
    %v638 = vadd.f32 %v192, %v637
    %v639 = vpop.f32.mrb[0].mxu0
    %v640 = vadd.f32 %v196, %v639
    %641 = vmatprep.mubr.bf16.mxu0 %v108
    %642 = vmatmul.mubr.bf16.gmra.mrb[0].mxu0 %v107
    %v643 = vpop.f32.mrb[0].mxu0
    %v644 = vadd.f32 %v192, %v643
    %v645 = vpop.f32.mrb[0].mxu0
    %v646 = vadd.f32 %v196, %v645
    %v647 = vpop.f32.mrb[0].mxu0
    %v648 = vadd.f32 %v192, %v647
    %v649 = vpop.f32.mrb[0].mxu0
    %v650 = vadd.f32 %v196, %v649
    %651 = vmatprep.mubr.bf16.mxu0 %v110
    %652 = vmatmul.mubr.bf16.gmra.mrb[0].mxu0 %v109
    %v653 = vpop.f32.mrb[0].mxu0
    %v654 = vadd.f32 %v192, %v653
    %v655 = vpop.f32.mrb[0].mxu0
    %v656 = vadd.f32 %v196, %v655
    %v657 = vpop.f32.mrb[0].mxu0
    %v658 = vadd.f32 %v192, %v657
    %v659 = vpop.f32.mrb[0].mxu0
    %v660 = vadd.f32 %v196, %v659
    %661 = vmatprep.mubr.bf16.mxu0 %v112
    %662 = vmatmul.mubr.bf16.gmra.mrb[0].mxu0 %v111
    %v663 = vpop.f32.mrb[0].mxu0
    %v664 = vadd.f32 %v192, %v663
    %v665 = vpop.f32.mrb[0].mxu0
    %v666 = vadd.f32 %v196, %v665
    %v667 = vpop.f32.mrb[0].mxu0
    %v668 = vadd.f32 %v192, %v667
    %v669 = vpop.f32.mrb[0].mxu0
    %v670 = vadd.f32 %v196, %v669
    %671 = vmatprep.mubr.bf16.mxu0 %v114
    %672 = vmatmul.mubr.bf16.gmra.mrb[0].mxu0 %v113
    %v673 = vpop.f32.mrb[0].mxu0
    %v674 = vadd.f32 %v192, %v673
    %v675 = vpop.f32.mrb[0].mxu0
    %v676 = vadd.f32 %v196, %v675
    %v677 = vpop.f32.mrb[0].mxu0
    %v678 = vadd.f32 %v192, %v677
    %v679 = vpop.f32.mrb[0].mxu0
    %v680 = vadd.f32 %v196, %v679
    %681 = vmatprep.mubr.bf16.mxu0 %v116
    %682 = vmatmul.mubr.bf16.gmra.mrb[0].mxu0 %v115
    %v683 = vpop.f32.mrb[0].mxu0
    %v684 = vadd.f32 %v192, %v683
    %v685 = vpop.f32.mrb[0].mxu0
    %v686 = vadd.f32 %v196, %v685
    %v687 = vpop.f32.mrb[0].mxu0
    %v688 = vadd.f32 %v192, %v687
    %v689 = vpop.f32.mrb[0].mxu0
    %v690 = vadd.f32 %v196, %v689
    %691 = vmatprep.mubr.bf16.mxu0 %v118
    %692 = vmatmul.mubr.bf16.gmra.mrb[0].mxu0 %v117
    %v693 = vpop.f32.mrb[0].mxu0
    %v694 = vadd.f32 %v192, %v693
    %v695 = vpop.f32.mrb[0].mxu0
    %v696 = vadd.f32 %v196, %v695
    %v697 = vpop.f32.mrb[0].mxu0
    %v698 = vadd.f32 %v192, %v697
    %v699 = vpop.f32.mrb[0].mxu0
    %v700 = vadd.f32 %v196, %v699
    %701 = vmatprep.mubr.bf16.mxu0 %v120
    %702 = vmatmul.mubr.bf16.gmra.mrb[0].mxu0 %v119
    %v703 = vpop.f32.mrb[0].mxu0
    %v704 = vadd.f32 %v192, %v703
    %v705 = vpop.f32.mrb[0].mxu0
    %v706 = vadd.f32 %v196, %v705
    %v707 = vpop.f32.mrb[0].mxu0
    %v708 = vadd.f32 %v192, %v707
    %v709 = vpop.f32.mrb[0].mxu0
    %v710 = vadd.f32 %v196, %v709
    %711 = vmatprep.mubr.bf16.mxu0 %v122
    %712 = vmatmul.mubr.bf16.gmra.mrb[0].mxu0 %v121
    %v713 = vpop.f32.mrb[0].mxu0
    %v714 = vadd.f32 %v192, %v713
    %v715 = vpop.f32.mrb[0].mxu0
    %v716 = vadd.f32 %v196, %v715
    %v717 = vpop.f32.mrb[0].mxu0
    %v718 = vadd.f32 %v192, %v717
    %v719 = vpop.f32.mrb[0].mxu0
    %v720 = vadd.f32 %v196, %v719
    %721 = vdwg.mxu0
    %722 = vmatprep.subr.bf16.mxu0 %v404
    %723 = vmatpush1.bf16.msra.mxu0 %v403
    %724 = vmatprep.subr.bf16.mxu0 %v408
    %725 = vmatpush1.bf16.msra.mxu0 %v407
    %726 = vmatprep.subr.bf16.mxu0 %v412
    %727 = vmatpush1.bf16.msra.mxu0 %v411
    %728 = vmatprep.subr.bf16.mxu0 %v416
    %729 = vmatpush1.bf16.msra.mxu0 %v415
    %730 = vmatprep.subr.bf16.mxu0 %v420
    %731 = vmatpush1.bf16.msra.mxu0 %v419
    %732 = vmatprep.subr.bf16.mxu0 %v424
    %733 = vmatpush1.bf16.msra.mxu0 %v423
    %734 = vmatprep.subr.bf16.mxu0 %v428
    %735 = vmatpush1.bf16.msra.mxu0 %v427
    %736 = vmatprep.subr.bf16.mxu0 %v432
    %737 = vmatpush1.bf16.msra.mxu0 %v431
    %738 = vmatprep.subr.bf16.mxu0 %v436
    %739 = vmatpush1.bf16.msra.mxu0 %v435
    %740 = vmatprep.subr.bf16.mxu0 %v440
    %741 = vmatpush1.bf16.msra.mxu0 %v439
    %742 = vmatprep.subr.bf16.mxu0 %v444
    %743 = vmatpush1.bf16.msra.mxu0 %v443
    %744 = vmatprep.subr.bf16.mxu0 %v448
    %745 = vmatpush1.bf16.msra.mxu0 %v447
    %746 = vmatprep.subr.bf16.mxu0 %v452
    %747 = vmatpush1.bf16.msra.mxu0 %v451
    %748 = vmatprep.subr.bf16.mxu0 %v456
    %749 = vmatpush1.bf16.msra.mxu0 %v455
    %750 = vmatprep.subr.bf16.mxu0 %v460
    %751 = vmatpush1.bf16.msra.mxu0 %v459
    %752 = vmatprep.subr.bf16.mxu0 %v464
    %753 = vmatpush1.bf16.msra.mxu0 %v463
    %754 = vmatprep.mubr.bf16.mxu0 %v92
    %755 = vmatmul.mubr.bf16.gmra.mrb[0].mxu0 %v91
    %v756 = vpop.f32.mrb[0].mxu0
    %v757 = vadd.f32 %v200, %v756
    %v758 = vpop.f32.mrb[0].mxu0
    %v759 = vadd.f32 %v204, %v758
    %v760 = vpop.f32.mrb[0].mxu0
    %v761 = vadd.f32 %v200, %v760
    %v762 = vpop.f32.mrb[0].mxu0
    %v763 = vadd.f32 %v204, %v762
    %764 = vmatprep.mubr.bf16.mxu0 %v94
    %765 = vmatmul.mubr.bf16.gmra.mrb[0].mxu0 %v93
    %v766 = vpop.f32.mrb[0].mxu0
    %v767 = vadd.f32 %v200, %v766
    %v768 = vpop.f32.mrb[0].mxu0
    %v769 = vadd.f32 %v204, %v768
    %v770 = vpop.f32.mrb[0].mxu0
    %v771 = vadd.f32 %v200, %v770
    %v772 = vpop.f32.mrb[0].mxu0
    %v773 = vadd.f32 %v204, %v772
    %774 = vmatprep.mubr.bf16.mxu0 %v96
    %775 = vmatmul.mubr.bf16.gmra.mrb[0].mxu0 %v95
    %v776 = vpop.f32.mrb[0].mxu0
    %v777 = vadd.f32 %v200, %v776
    %v778 = vpop.f32.mrb[0].mxu0
    %v779 = vadd.f32 %v204, %v778
    %v780 = vpop.f32.mrb[0].mxu0
    %v781 = vadd.f32 %v200, %v780
    %v782 = vpop.f32.mrb[0].mxu0
    %v783 = vadd.f32 %v204, %v782
    %784 = vmatprep.mubr.bf16.mxu0 %v98
    %785 = vmatmul.mubr.bf16.gmra.mrb[0].mxu0 %v97
    %v786 = vpop.f32.mrb[0].mxu0
    %v787 = vadd.f32 %v200, %v786
    %v788 = vpop.f32.mrb[0].mxu0
    %v789 = vadd.f32 %v204, %v788
    %v790 = vpop.f32.mrb[0].mxu0
    %v791 = vadd.f32 %v200, %v790
    %v792 = vpop.f32.mrb[0].mxu0
    %v793 = vadd.f32 %v204, %v792
    %794 = vmatprep.mubr.bf16.mxu0 %v100
    %795 = vmatmul.mubr.bf16.gmra.mrb[0].mxu0 %v99
    %v796 = vpop.f32.mrb[0].mxu0
    %v797 = vadd.f32 %v200, %v796
    %v798 = vpop.f32.mrb[0].mxu0
    %v799 = vadd.f32 %v204, %v798
    %v800 = vpop.f32.mrb[0].mxu0
    %v801 = vadd.f32 %v200, %v800
    %v802 = vpop.f32.mrb[0].mxu0
    %v803 = vadd.f32 %v204, %v802
    %804 = vmatprep.mubr.bf16.mxu0 %v102
    %805 = vmatmul.mubr.bf16.gmra.mrb[0].mxu0 %v101
    %v806 = vpop.f32.mrb[0].mxu0
    %v807 = vadd.f32 %v200, %v806
    %v808 = vpop.f32.mrb[0].mxu0
    %v809 = vadd.f32 %v204, %v808
    %v810 = vpop.f32.mrb[0].mxu0
    %v811 = vadd.f32 %v200, %v810
    %v812 = vpop.f32.mrb[0].mxu0
    %v813 = vadd.f32 %v204, %v812
    %814 = vmatprep.mubr.bf16.mxu0 %v104
    %815 = vmatmul.mubr.bf16.gmra.mrb[0].mxu0 %v103
    %v816 = vpop.f32.mrb[0].mxu0
    %v817 = vadd.f32 %v200, %v816
    %v818 = vpop.f32.mrb[0].mxu0
    %v819 = vadd.f32 %v204, %v818
    %v820 = vpop.f32.mrb[0].mxu0
    %v821 = vadd.f32 %v200, %v820
    %v822 = vpop.f32.mrb[0].mxu0
    %v823 = vadd.f32 %v204, %v822
    %824 = vmatprep.mubr.bf16.mxu0 %v106
    %825 = vmatmul.mubr.bf16.gmra.mrb[0].mxu0 %v105
    %v826 = vpop.f32.mrb[0].mxu0
    %v827 = vadd.f32 %v200, %v826
    %v828 = vpop.f32.mrb[0].mxu0
    %v829 = vadd.f32 %v204, %v828
    %v830 = vpop.f32.mrb[0].mxu0
    %v831 = vadd.f32 %v200, %v830
    %v832 = vpop.f32.mrb[0].mxu0
    %v833 = vadd.f32 %v204, %v832
    %834 = vmatprep.mubr.bf16.mxu0 %v108
    %835 = vmatmul.mubr.bf16.gmra.mrb[0].mxu0 %v107
    %v836 = vpop.f32.mrb[0].mxu0
    %v837 = vadd.f32 %v200, %v836
    %v838 = vpop.f32.mrb[0].mxu0
    %v839 = vadd.f32 %v204, %v838
    %v840 = vpop.f32.mrb[0].mxu0
    %v841 = vadd.f32 %v200, %v840
    %v842 = vpop.f32.mrb[0].mxu0
    %v843 = vadd.f32 %v204, %v842
    %844 = vmatprep.mubr.bf16.mxu0 %v110
    %845 = vmatmul.mubr.bf16.gmra.mrb[0].mxu0 %v109
    %v846 = vpop.f32.mrb[0].mxu0
    %v847 = vadd.f32 %v200, %v846
    %v848 = vpop.f32.mrb[0].mxu0
    %v849 = vadd.f32 %v204, %v848
    %v850 = vpop.f32.mrb[0].mxu0
    %v851 = vadd.f32 %v200, %v850
    %v852 = vpop.f32.mrb[0].mxu0
    %v853 = vadd.f32 %v204, %v852
    %854 = vmatprep.mubr.bf16.mxu0 %v112
    %855 = vmatmul.mubr.bf16.gmra.mrb[0].mxu0 %v111
    %v856 = vpop.f32.mrb[0].mxu0
    %v857 = vadd.f32 %v200, %v856
    %v858 = vpop.f32.mrb[0].mxu0
    %v859 = vadd.f32 %v204, %v858
    %v860 = vpop.f32.mrb[0].mxu0
    %v861 = vadd.f32 %v200, %v860
    %v862 = vpop.f32.mrb[0].mxu0
    %v863 = vadd.f32 %v204, %v862
    %864 = vmatprep.mubr.bf16.mxu0 %v114
    %865 = vmatmul.mubr.bf16.gmra.mrb[0].mxu0 %v113
    %v866 = vpop.f32.mrb[0].mxu0
    %v867 = vadd.f32 %v200, %v866
    %v868 = vpop.f32.mrb[0].mxu0
    %v869 = vadd.f32 %v204, %v868
    %v870 = vpop.f32.mrb[0].mxu0
    %v871 = vadd.f32 %v200, %v870
    %v872 = vpop.f32.mrb[0].mxu0
    %v873 = vadd.f32 %v204, %v872
    %874 = vmatprep.mubr.bf16.mxu0 %v116
    %875 = vmatmul.mubr.bf16.gmra.mrb[0].mxu0 %v115
    %v876 = vpop.f32.mrb[0].mxu0
    %v877 = vadd.f32 %v200, %v876
    %v878 = vpop.f32.mrb[0].mxu0
    %v879 = vadd.f32 %v204, %v878
    %v880 = vpop.f32.mrb[0].mxu0
    %v881 = vadd.f32 %v200, %v880
    %v882 = vpop.f32.mrb[0].mxu0
    %v883 = vadd.f32 %v204, %v882
    %884 = vmatprep.mubr.bf16.mxu0 %v118
    %885 = vmatmul.mubr.bf16.gmra.mrb[0].mxu0 %v117
    %v886 = vpop.f32.mrb[0].mxu0
    %v887 = vadd.f32 %v200, %v886
    %v888 = vpop.f32.mrb[0].mxu0
    %v889 = vadd.f32 %v204, %v888
    %v890 = vpop.f32.mrb[0].mxu0
    %v891 = vadd.f32 %v200, %v890
    %v892 = vpop.f32.mrb[0].mxu0
    %v893 = vadd.f32 %v204, %v892
    %894 = vmatprep.mubr.bf16.mxu0 %v120
    %895 = vmatmul.mubr.bf16.gmra.mrb[0].mxu0 %v119
    %v896 = vpop.f32.mrb[0].mxu0
    %v897 = vadd.f32 %v200, %v896
    %v898 = vpop.f32.mrb[0].mxu0
    %v899 = vadd.f32 %v204, %v898
    %v900 = vpop.f32.mrb[0].mxu0
    %v901 = vadd.f32 %v200, %v900
    %v902 = vpop.f32.mrb[0].mxu0
    %v903 = vadd.f32 %v204, %v902
    %904 = vmatprep.mubr.bf16.mxu0 %v122
    %905 = vmatmul.mubr.bf16.gmra.mrb[0].mxu0 %v121
    %v906 = vpop.f32.mrb[0].mxu0
    %v907 = vadd.f32 %v200, %v906
    %v908 = vpop.f32.mrb[0].mxu0
    %v909 = vadd.f32 %v204, %v908
    %v910 = vpop.f32.mrb[0].mxu0
    %v911 = vadd.f32 %v200, %v910
    %v912 = vpop.f32.mrb[0].mxu0
    %v913 = vadd.f32 %v204, %v912
    %914 = vdwg.mxu0
    %v915 = vmul.f32 %v564, 0.5
    %v916 = vmul.f32 %v566, 0.5
    %v917 = vmul.f32 %v757, 0.5
    %v918 = vmul.f32 %v759, 0.5
    %v919 = vmul.f32 %v568, 0.5
    %v920 = vmul.f32 %v570, 0.5
    %v921 = vmul.f32 %v761, 0.5
    %v922 = vmul.f32 %v763, 0.5
    %v923 = vmul.f32 %v574, 0.5
    %v924 = vmul.f32 %v576, 0.5
    %v925 = vmul.f32 %v767, 0.5
    %v926 = vmul.f32 %v769, 0.5
    %v927 = vmul.f32 %v578, 0.5
    %v928 = vmul.f32 %v580, 0.5
    %v929 = vmul.f32 %v771, 0.5
    %v930 = vmul.f32 %v773, 0.5
    %v931 = vmul.f32 %v584, 0.5
    %v932 = vmul.f32 %v586, 0.5
    %v933 = vmul.f32 %v777, 0.5
    %v934 = vmul.f32 %v779, 0.5
    %v935 = vmul.f32 %v588, 0.5
    %v936 = vmul.f32 %v590, 0.5
    %v937 = vmul.f32 %v781, 0.5
    %v938 = vmul.f32 %v783, 0.5
    %v939 = vmul.f32 %v594, 0.5
    %v940 = vmul.f32 %v596, 0.5
    %v941 = vmul.f32 %v787, 0.5
    %v942 = vmul.f32 %v789, 0.5
    %v943 = vmul.f32 %v598, 0.5
    %v944 = vmul.f32 %v600, 0.5
    %v945 = vmul.f32 %v791, 0.5
    %v946 = vmul.f32 %v793, 0.5
    %v947 = vmul.f32 %v604, 0.5
    %v948 = vmul.f32 %v606, 0.5
    %v949 = vmul.f32 %v797, 0.5
    %v950 = vmul.f32 %v799, 0.5
    %v951 = vmul.f32 %v608, 0.5
    %v952 = vmul.f32 %v610, 0.5
    %v953 = vmul.f32 %v801, 0.5
    %v954 = vmul.f32 %v803, 0.5
    %v955 = vmul.f32 %v614, 0.5
    %v956 = vmul.f32 %v616, 0.5
    %v957 = vmul.f32 %v807, 0.5
    %v958 = vmul.f32 %v809, 0.5
    %v959 = vmul.f32 %v618, 0.5
    %v960 = vmul.f32 %v620, 0.5
    %v961 = vmul.f32 %v811, 0.5
    %v962 = vmul.f32 %v813, 0.5
    %v963 = vmul.f32 %v624, 0.5
    %v964 = vmul.f32 %v626, 0.5
    %v965 = vmul.f32 %v817, 0.5
    %v966 = vmul.f32 %v819, 0.5
    %v967 = vmul.f32 %v628, 0.5
    %v968 = vmul.f32 %v630, 0.5
    %v969 = vmul.f32 %v821, 0.5
    %v970 = vmul.f32 %v823, 0.5
    %v971 = vmul.f32 %v634, 0.5
    %v972 = vmul.f32 %v636, 0.5
    %v973 = vmul.f32 %v827, 0.5
    %v974 = vmul.f32 %v829, 0.5
    %v975 = vmul.f32 %v638, 0.5
    %v976 = vmul.f32 %v640, 0.5
    %v977 = vmul.f32 %v831, 0.5
    %v978 = vmul.f32 %v833, 0.5
    %v979 = vmul.f32 %v644, 0.5
    %v980 = vmul.f32 %v646, 0.5
    %v981 = vmul.f32 %v837, 0.5
    %v982 = vmul.f32 %v839, 0.5
    %v983 = vmul.f32 %v648, 0.5
    %v984 = vmul.f32 %v650, 0.5
    %v985 = vmul.f32 %v841, 0.5
    %v986 = vmul.f32 %v843, 0.5
    %v987 = vmul.f32 %v654, 0.5
    %v988 = vmul.f32 %v656, 0.5
    %v989 = vmul.f32 %v847, 0.5
    %v990 = vmul.f32 %v849, 0.5
    %v991 = vmul.f32 %v658, 0.5
    %v992 = vmul.f32 %v660, 0.5
    %v993 = vmul.f32 %v851, 0.5
    %v994 = vmul.f32 %v853, 0.5
    %v995 = vmul.f32 %v664, 0.5
    %v996 = vmul.f32 %v666, 0.5
    %v997 = vmul.f32 %v857, 0.5
    %v998 = vmul.f32 %v859, 0.5
    %v999 = vmul.f32 %v668, 0.5
    %v1000 = vmul.f32 %v670, 0.5
    %v1001 = vmul.f32 %v861, 0.5
    %v1002 = vmul.f32 %v863, 0.5
    %v1003 = vmul.f32 %v674, 0.5
    %v1004 = vmul.f32 %v676, 0.5
    %v1005 = vmul.f32 %v867, 0.5
    %v1006 = vmul.f32 %v869, 0.5
    %v1007 = vmul.f32 %v678, 0.5
    %v1008 = vmul.f32 %v680, 0.5
    %v1009 = vmul.f32 %v871, 0.5
    %v1010 = vmul.f32 %v873, 0.5
    %v1011 = vmul.f32 %v684, 0.5
    %v1012 = vmul.f32 %v686, 0.5
    %v1013 = vmul.f32 %v877, 0.5
    %v1014 = vmul.f32 %v879, 0.5
    %v1015 = vmul.f32 %v688, 0.5
    %v1016 = vmul.f32 %v690, 0.5
    %v1017 = vmul.f32 %v881, 0.5
    %v1018 = vmul.f32 %v883, 0.5
    %v1019 = vmul.f32 %v694, 0.5
    %v1020 = vmul.f32 %v696, 0.5
    %v1021 = vmul.f32 %v887, 0.5
    %v1022 = vmul.f32 %v889, 0.5
    %v1023 = vmul.f32 %v698, 0.5
    %v1024 = vmul.f32 %v700, 0.5
    %v1025 = vmul.f32 %v891, 0.5
    %v1026 = vmul.f32 %v893, 0.5
    %v1027 = vmul.f32 %v704, 0.5
    %v1028 = vmul.f32 %v706, 0.5
    %v1029 = vmul.f32 %v897, 0.5
    %v1030 = vmul.f32 %v899, 0.5
    %v1031 = vmul.f32 %v708, 0.5
    %v1032 = vmul.f32 %v710, 0.5
    %v1033 = vmul.f32 %v901, 0.5
    %v1034 = vmul.f32 %v903, 0.5
    %v1035 = vmul.f32 %v714, 0.5
    %v1036 = vmul.f32 %v716, 0.5
    %v1037 = vmul.f32 %v907, 0.5
    %v1038 = vmul.f32 %v909, 0.5
    %v1039 = vmul.f32 %v718, 0.5
    %v1040 = vmul.f32 %v720, 0.5
    %v1041 = vmul.f32 %v911, 0.5
    %v1042 = vmul.f32 %v913, 0.5
    %v1043 = vmul.f32 %v564, 0.70710677
    %v1044 = vmul.f32 %v566, 0.70710677
    %v1045 = vmul.f32 %v757, 0.70710677
    %v1046 = vmul.f32 %v759, 0.70710677
    %v1047 = vmul.f32 %v568, 0.70710677
    %v1048 = vmul.f32 %v570, 0.70710677
    %v1049 = vmul.f32 %v761, 0.70710677
    %v1050 = vmul.f32 %v763, 0.70710677
    %v1051 = vmul.f32 %v574, 0.70710677
    %v1052 = vmul.f32 %v576, 0.70710677
    %v1053 = vmul.f32 %v767, 0.70710677
    %v1054 = vmul.f32 %v769, 0.70710677
    %v1055 = vmul.f32 %v578, 0.70710677
    %v1056 = vmul.f32 %v580, 0.70710677
    %v1057 = vmul.f32 %v771, 0.70710677
    %v1058 = vmul.f32 %v773, 0.70710677
    %v1059 = vmul.f32 %v584, 0.70710677
    %v1060 = vmul.f32 %v586, 0.70710677
    %v1061 = vmul.f32 %v777, 0.70710677
    %v1062 = vmul.f32 %v779, 0.70710677
    %v1063 = vmul.f32 %v588, 0.70710677
    %v1064 = vmul.f32 %v590, 0.70710677
    %v1065 = vmul.f32 %v781, 0.70710677
    %v1066 = vmul.f32 %v783, 0.70710677
    %v1067 = vmul.f32 %v594, 0.70710677
    %v1068 = vmul.f32 %v596, 0.70710677
    %v1069 = vmul.f32 %v787, 0.70710677
    %v1070 = vmul.f32 %v789, 0.70710677
    %v1071 = vmul.f32 %v598, 0.70710677
    %v1072 = vmul.f32 %v600, 0.70710677
    %v1073 = vmul.f32 %v791, 0.70710677
    %v1074 = vmul.f32 %v793, 0.70710677
    %v1075 = vmul.f32 %v604, 0.70710677
    %v1076 = vmul.f32 %v606, 0.70710677
    %v1077 = vmul.f32 %v797, 0.70710677
    %v1078 = vmul.f32 %v799, 0.70710677
    %v1079 = vmul.f32 %v608, 0.70710677
    %v1080 = vmul.f32 %v610, 0.70710677
    %v1081 = vmul.f32 %v801, 0.70710677
    %v1082 = vmul.f32 %v803, 0.70710677
    %v1083 = vmul.f32 %v614, 0.70710677
    %v1084 = vmul.f32 %v616, 0.70710677
    %v1085 = vmul.f32 %v807, 0.70710677
    %v1086 = vmul.f32 %v809, 0.70710677
    %v1087 = vmul.f32 %v618, 0.70710677
    %v1088 = vmul.f32 %v620, 0.70710677
    %v1089 = vmul.f32 %v811, 0.70710677
    %v1090 = vmul.f32 %v813, 0.70710677
    %v1091 = vmul.f32 %v624, 0.70710677
    %v1092 = vmul.f32 %v626, 0.70710677
    %v1093 = vmul.f32 %v817, 0.70710677
    %v1094 = vmul.f32 %v819, 0.70710677
    %v1095 = vmul.f32 %v628, 0.70710677
    %v1096 = vmul.f32 %v630, 0.70710677
    %v1097 = vmul.f32 %v821, 0.70710677
    %v1098 = vmul.f32 %v823, 0.70710677
    %v1099 = vmul.f32 %v634, 0.70710677
    %v1100 = vmul.f32 %v636, 0.70710677
    %v1101 = vmul.f32 %v827, 0.70710677
    %v1102 = vmul.f32 %v829, 0.70710677
    %v1103 = vmul.f32 %v638, 0.70710677
    %v1104 = vmul.f32 %v640, 0.70710677
    %v1105 = vmul.f32 %v831, 0.70710677
    %v1106 = vmul.f32 %v833, 0.70710677
    %v1107 = vmul.f32 %v644, 0.70710677
    %v1108 = vmul.f32 %v646, 0.70710677
    %v1109 = vmul.f32 %v837, 0.70710677
    %v1110 = vmul.f32 %v839, 0.70710677
    %v1111 = vmul.f32 %v648, 0.70710677
    %v1112 = vmul.f32 %v650, 0.70710677
    %v1113 = vmul.f32 %v841, 0.70710677
    %v1114 = vmul.f32 %v843, 0.70710677
    %v1115 = vmul.f32 %v654, 0.70710677
    %v1116 = vmul.f32 %v656, 0.70710677
    %v1117 = vmul.f32 %v847, 0.70710677
    %v1118 = vmul.f32 %v849, 0.70710677
    %v1119 = vmul.f32 %v658, 0.70710677
    %v1120 = vmul.f32 %v660, 0.70710677
    %v1121 = vmul.f32 %v851, 0.70710677
    %v1122 = vmul.f32 %v853, 0.70710677
    %v1123 = vmul.f32 %v664, 0.70710677
    %v1124 = vmul.f32 %v666, 0.70710677
    %v1125 = vmul.f32 %v857, 0.70710677
    %v1126 = vmul.f32 %v859, 0.70710677
    %v1127 = vmul.f32 %v668, 0.70710677
    %v1128 = vmul.f32 %v670, 0.70710677
    %v1129 = vmul.f32 %v861, 0.70710677
    %v1130 = vmul.f32 %v863, 0.70710677
    %v1131 = vmul.f32 %v674, 0.70710677
    %v1132 = vmul.f32 %v676, 0.70710677
    %v1133 = vmul.f32 %v867, 0.70710677
    %v1134 = vmul.f32 %v869, 0.70710677
    %v1135 = vmul.f32 %v678, 0.70710677
    %v1136 = vmul.f32 %v680, 0.70710677
    %v1137 = vmul.f32 %v871, 0.70710677
    %v1138 = vmul.f32 %v873, 0.70710677
    %v1139 = vmul.f32 %v684, 0.70710677
    %v1140 = vmul.f32 %v686, 0.70710677
    %v1141 = vmul.f32 %v877, 0.70710677
    %v1142 = vmul.f32 %v879, 0.70710677
    %v1143 = vmul.f32 %v688, 0.70710677
    %v1144 = vmul.f32 %v690, 0.70710677
    %v1145 = vmul.f32 %v881, 0.70710677
    %v1146 = vmul.f32 %v883, 0.70710677
    %v1147 = vmul.f32 %v694, 0.70710677
    %v1148 = vmul.f32 %v696, 0.70710677
    %v1149 = vmul.f32 %v887, 0.70710677
    %v1150 = vmul.f32 %v889, 0.70710677
    %v1151 = vmul.f32 %v698, 0.70710677
    %v1152 = vmul.f32 %v700, 0.70710677
    %v1153 = vmul.f32 %v891, 0.70710677
    %v1154 = vmul.f32 %v893, 0.70710677
    %v1155 = vmul.f32 %v704, 0.70710677
    %v1156 = vmul.f32 %v706, 0.70710677
    %v1157 = vmul.f32 %v897, 0.70710677
    %v1158 = vmul.f32 %v899, 0.70710677
    %v1159 = vmul.f32 %v708, 0.70710677
    %v1160 = vmul.f32 %v710, 0.70710677
    %v1161 = vmul.f32 %v901, 0.70710677
    %v1162 = vmul.f32 %v903, 0.70710677
    %v1163 = vmul.f32 %v714, 0.70710677
    %v1164 = vmul.f32 %v716, 0.70710677
    %v1165 = vmul.f32 %v907, 0.70710677
    %v1166 = vmul.f32 %v909, 0.70710677
    %v1167 = vmul.f32 %v718, 0.70710677
    %v1168 = vmul.f32 %v720, 0.70710677
    %v1169 = vmul.f32 %v911, 0.70710677
    %v1170 = vmul.f32 %v913, 0.70710677
    %v1171 = verf.f32.pop %v1043
    %v1172 = verf.f32.pop %v1044
    %v1173 = verf.f32.pop %v1045
    %v1174 = verf.f32.pop %v1046
    %v1175 = verf.f32.pop %v1047
    %v1176 = verf.f32.pop %v1048
    %v1177 = verf.f32.pop %v1049
    %v1178 = verf.f32.pop %v1050
    %v1179 = verf.f32.pop %v1051
    %v1180 = verf.f32.pop %v1052
    %v1181 = verf.f32.pop %v1053
    %v1182 = verf.f32.pop %v1054
    %v1183 = verf.f32.pop %v1055
    %v1184 = verf.f32.pop %v1056
    %v1185 = verf.f32.pop %v1057
    %v1186 = verf.f32.pop %v1058
    %v1187 = verf.f32.pop %v1059
    %v1188 = verf.f32.pop %v1060
    %v1189 = verf.f32.pop %v1061
    %v1190 = verf.f32.pop %v1062
    %v1191 = verf.f32.pop %v1063
    %v1192 = verf.f32.pop %v1064
    %v1193 = verf.f32.pop %v1065
    %v1194 = verf.f32.pop %v1066
    %v1195 = verf.f32.pop %v1067
    %v1196 = verf.f32.pop %v1068
    %v1197 = verf.f32.pop %v1069
    %v1198 = verf.f32.pop %v1070
    %v1199 = verf.f32.pop %v1071
    %v1200 = verf.f32.pop %v1072
    %v1201 = verf.f32.pop %v1073
    %v1202 = verf.f32.pop %v1074
    %v1203 = verf.f32.pop %v1075
    %v1204 = verf.f32.pop %v1076
    %v1205 = verf.f32.pop %v1077
    %v1206 = verf.f32.pop %v1078
    %v1207 = verf.f32.pop %v1079
    %v1208 = verf.f32.pop %v1080
    %v1209 = verf.f32.pop %v1081
    %v1210 = verf.f32.pop %v1082
    %v1211 = verf.f32.pop %v1083
    %v1212 = verf.f32.pop %v1084
    %v1213 = verf.f32.pop %v1085
    %v1214 = verf.f32.pop %v1086
    %v1215 = verf.f32.pop %v1087
    %v1216 = verf.f32.pop %v1088
    %v1217 = verf.f32.pop %v1089
    %v1218 = verf.f32.pop %v1090
    %v1219 = verf.f32.pop %v1091
    %v1220 = verf.f32.pop %v1092
    %v1221 = verf.f32.pop %v1093
    %v1222 = verf.f32.pop %v1094
    %v1223 = verf.f32.pop %v1095
    %v1224 = verf.f32.pop %v1096
    %v1225 = verf.f32.pop %v1097
    %v1226 = verf.f32.pop %v1098
    %v1227 = verf.f32.pop %v1099
    %v1228 = verf.f32.pop %v1100
    %v1229 = verf.f32.pop %v1101
    %v1230 = verf.f32.pop %v1102
    %v1231 = verf.f32.pop %v1103
    %v1232 = verf.f32.pop %v1104
    %v1233 = verf.f32.pop %v1105
    %v1234 = verf.f32.pop %v1106
    %v1235 = verf.f32.pop %v1107
    %v1236 = verf.f32.pop %v1108
    %v1237 = verf.f32.pop %v1109
    %v1238 = verf.f32.pop %v1110
    %v1239 = verf.f32.pop %v1111
    %v1240 = verf.f32.pop %v1112
    %v1241 = verf.f32.pop %v1113
    %v1242 = verf.f32.pop %v1114
    %v1243 = verf.f32.pop %v1115
    %v1244 = verf.f32.pop %v1116
    %v1245 = verf.f32.pop %v1117
    %v1246 = verf.f32.pop %v1118
    %v1247 = verf.f32.pop %v1119
    %v1248 = verf.f32.pop %v1120
    %v1249 = verf.f32.pop %v1121
    %v1250 = verf.f32.pop %v1122
    %v1251 = verf.f32.pop %v1123
    %v1252 = verf.f32.pop %v1124
    %v1253 = verf.f32.pop %v1125
    %v1254 = verf.f32.pop %v1126
    %v1255 = verf.f32.pop %v1127
    %v1256 = verf.f32.pop %v1128
    %v1257 = verf.f32.pop %v1129
    %v1258 = verf.f32.pop %v1130
    %v1259 = verf.f32.pop %v1131
    %v1260 = verf.f32.pop %v1132
    %v1261 = verf.f32.pop %v1133
    %v1262 = verf.f32.pop %v1134
    %v1263 = verf.f32.pop %v1135
    %v1264 = verf.f32.pop %v1136
    %v1265 = verf.f32.pop %v1137
    %v1266 = verf.f32.pop %v1138
    %v1267 = verf.f32.pop %v1139
    %v1268 = verf.f32.pop %v1140
    %v1269 = verf.f32.pop %v1141
    %v1270 = verf.f32.pop %v1142
    %v1271 = verf.f32.pop %v1143
    %v1272 = verf.f32.pop %v1144
    %v1273 = verf.f32.pop %v1145
    %v1274 = verf.f32.pop %v1146
    %v1275 = verf.f32.pop %v1147
    %v1276 = verf.f32.pop %v1148
    %v1277 = verf.f32.pop %v1149
    %v1278 = verf.f32.pop %v1150
    %v1279 = verf.f32.pop %v1151
    %v1280 = verf.f32.pop %v1152
    %v1281 = verf.f32.pop %v1153
    %v1282 = verf.f32.pop %v1154
    %v1283 = verf.f32.pop %v1155
    %v1284 = verf.f32.pop %v1156
    %v1285 = verf.f32.pop %v1157
    %v1286 = verf.f32.pop %v1158
    %v1287 = verf.f32.pop %v1159
    %v1288 = verf.f32.pop %v1160
    %v1289 = verf.f32.pop %v1161
    %v1290 = verf.f32.pop %v1162
    %v1291 = verf.f32.pop %v1163
    %v1292 = verf.f32.pop %v1164
    %v1293 = verf.f32.pop %v1165
    %v1294 = verf.f32.pop %v1166
    %v1295 = verf.f32.pop %v1167
    %v1296 = verf.f32.pop %v1168
    %v1297 = verf.f32.pop %v1169
    %v1298 = verf.f32.pop %v1170
    %v1299 = vadd.f32 %v1171, 1.0
    %v1300 = vadd.f32 %v1172, 1.0
    %v1301 = vadd.f32 %v1173, 1.0
    %v1302 = vadd.f32 %v1174, 1.0
    %v1303 = vadd.f32 %v1175, 1.0
    %v1304 = vadd.f32 %v1176, 1.0
    %v1305 = vadd.f32 %v1177, 1.0
    %v1306 = vadd.f32 %v1178, 1.0
    %v1307 = vadd.f32 %v1179, 1.0
    %v1308 = vadd.f32 %v1180, 1.0
    %v1309 = vadd.f32 %v1181, 1.0
    %v1310 = vadd.f32 %v1182, 1.0
    %v1311 = vadd.f32 %v1183, 1.0
    %v1312 = vadd.f32 %v1184, 1.0
    %v1313 = vadd.f32 %v1185, 1.0
    %v1314 = vadd.f32 %v1186, 1.0
    %v1315 = vadd.f32 %v1187, 1.0
    %v1316 = vadd.f32 %v1188, 1.0
    %v1317 = vadd.f32 %v1189, 1.0
    %v1318 = vadd.f32 %v1190, 1.0
    %v1319 = vadd.f32 %v1191, 1.0
    %v1320 = vadd.f32 %v1192, 1.0
    %v1321 = vadd.f32 %v1193, 1.0
    %v1322 = vadd.f32 %v1194, 1.0
    %v1323 = vadd.f32 %v1195, 1.0
    %v1324 = vadd.f32 %v1196, 1.0
    %v1325 = vadd.f32 %v1197, 1.0
    %v1326 = vadd.f32 %v1198, 1.0
    %v1327 = vadd.f32 %v1199, 1.0
    %v1328 = vadd.f32 %v1200, 1.0
    %v1329 = vadd.f32 %v1201, 1.0
    %v1330 = vadd.f32 %v1202, 1.0
    %v1331 = vadd.f32 %v1203, 1.0
    %v1332 = vadd.f32 %v1204, 1.0
    %v1333 = vadd.f32 %v1205, 1.0
    %v1334 = vadd.f32 %v1206, 1.0
    %v1335 = vadd.f32 %v1207, 1.0
    %v1336 = vadd.f32 %v1208, 1.0
    %v1337 = vadd.f32 %v1209, 1.0
    %v1338 = vadd.f32 %v1210, 1.0
    %v1339 = vadd.f32 %v1211, 1.0
    %v1340 = vadd.f32 %v1212, 1.0
    %v1341 = vadd.f32 %v1213, 1.0
    %v1342 = vadd.f32 %v1214, 1.0
    %v1343 = vadd.f32 %v1215, 1.0
    %v1344 = vadd.f32 %v1216, 1.0
    %v1345 = vadd.f32 %v1217, 1.0
    %v1346 = vadd.f32 %v1218, 1.0
    %v1347 = vadd.f32 %v1219, 1.0
    %v1348 = vadd.f32 %v1220, 1.0
    %v1349 = vadd.f32 %v1221, 1.0
    %v1350 = vadd.f32 %v1222, 1.0
    %v1351 = vadd.f32 %v1223, 1.0
    %v1352 = vadd.f32 %v1224, 1.0
    %v1353 = vadd.f32 %v1225, 1.0
    %v1354 = vadd.f32 %v1226, 1.0
    %v1355 = vadd.f32 %v1227, 1.0
    %v1356 = vadd.f32 %v1228, 1.0
    %v1357 = vadd.f32 %v1229, 1.0
    %v1358 = vadd.f32 %v1230, 1.0
    %v1359 = vadd.f32 %v1231, 1.0
    %v1360 = vadd.f32 %v1232, 1.0
    %v1361 = vadd.f32 %v1233, 1.0
    %v1362 = vadd.f32 %v1234, 1.0
    %v1363 = vadd.f32 %v1235, 1.0
    %v1364 = vadd.f32 %v1236, 1.0
    %v1365 = vadd.f32 %v1237, 1.0
    %v1366 = vadd.f32 %v1238, 1.0
    %v1367 = vadd.f32 %v1239, 1.0
    %v1368 = vadd.f32 %v1240, 1.0
    %v1369 = vadd.f32 %v1241, 1.0
    %v1370 = vadd.f32 %v1242, 1.0
    %v1371 = vadd.f32 %v1243, 1.0
    %v1372 = vadd.f32 %v1244, 1.0
    %v1373 = vadd.f32 %v1245, 1.0
    %v1374 = vadd.f32 %v1246, 1.0
    %v1375 = vadd.f32 %v1247, 1.0
    %v1376 = vadd.f32 %v1248, 1.0
    %v1377 = vadd.f32 %v1249, 1.0
    %v1378 = vadd.f32 %v1250, 1.0
    %v1379 = vadd.f32 %v1251, 1.0
    %v1380 = vadd.f32 %v1252, 1.0
    %v1381 = vadd.f32 %v1253, 1.0
    %v1382 = vadd.f32 %v1254, 1.0
    %v1383 = vadd.f32 %v1255, 1.0
    %v1384 = vadd.f32 %v1256, 1.0
    %v1385 = vadd.f32 %v1257, 1.0
    %v1386 = vadd.f32 %v1258, 1.0
    %v1387 = vadd.f32 %v1259, 1.0
    %v1388 = vadd.f32 %v1260, 1.0
    %v1389 = vadd.f32 %v1261, 1.0
    %v1390 = vadd.f32 %v1262, 1.0
    %v1391 = vadd.f32 %v1263, 1.0
    %v1392 = vadd.f32 %v1264, 1.0
    %v1393 = vadd.f32 %v1265, 1.0
    %v1394 = vadd.f32 %v1266, 1.0
    %v1395 = vadd.f32 %v1267, 1.0
    %v1396 = vadd.f32 %v1268, 1.0
    %v1397 = vadd.f32 %v1269, 1.0
    %v1398 = vadd.f32 %v1270, 1.0
    %v1399 = vadd.f32 %v1271, 1.0
    %v1400 = vadd.f32 %v1272, 1.0
    %v1401 = vadd.f32 %v1273, 1.0
    %v1402 = vadd.f32 %v1274, 1.0
    %v1403 = vadd.f32 %v1275, 1.0
    %v1404 = vadd.f32 %v1276, 1.0
    %v1405 = vadd.f32 %v1277, 1.0
    %v1406 = vadd.f32 %v1278, 1.0
    %v1407 = vadd.f32 %v1279, 1.0
    %v1408 = vadd.f32 %v1280, 1.0
    %v1409 = vadd.f32 %v1281, 1.0
    %v1410 = vadd.f32 %v1282, 1.0
    %v1411 = vadd.f32 %v1283, 1.0
    %v1412 = vadd.f32 %v1284, 1.0
    %v1413 = vadd.f32 %v1285, 1.0
    %v1414 = vadd.f32 %v1286, 1.0
    %v1415 = vadd.f32 %v1287, 1.0
    %v1416 = vadd.f32 %v1288, 1.0
    %v1417 = vadd.f32 %v1289, 1.0
    %v1418 = vadd.f32 %v1290, 1.0
    %v1419 = vadd.f32 %v1291, 1.0
    %v1420 = vadd.f32 %v1292, 1.0
    %v1421 = vadd.f32 %v1293, 1.0
    %v1422 = vadd.f32 %v1294, 1.0
    %v1423 = vadd.f32 %v1295, 1.0
    %v1424 = vadd.f32 %v1296, 1.0
    %v1425 = vadd.f32 %v1297, 1.0
    %v1426 = vadd.f32 %v1298, 1.0
    %v1427 = vmul.f32 %v915, %v1299
    %v1428 = vmul.f32 %v916, %v1300
    %v1429 = vmul.f32 %v917, %v1301
    %v1430 = vmul.f32 %v918, %v1302
    %v1431 = vmul.f32 %v919, %v1303
    %v1432 = vmul.f32 %v920, %v1304
    %v1433 = vmul.f32 %v921, %v1305
    %v1434 = vmul.f32 %v922, %v1306
    %v1435 = vmul.f32 %v923, %v1307
    %v1436 = vmul.f32 %v924, %v1308
    %v1437 = vmul.f32 %v925, %v1309
    %v1438 = vmul.f32 %v926, %v1310
    %v1439 = vmul.f32 %v927, %v1311
    %v1440 = vmul.f32 %v928, %v1312
    %v1441 = vmul.f32 %v929, %v1313
    %v1442 = vmul.f32 %v930, %v1314
    %v1443 = vmul.f32 %v931, %v1315
    %v1444 = vmul.f32 %v932, %v1316
    %v1445 = vmul.f32 %v933, %v1317
    %v1446 = vmul.f32 %v934, %v1318
    %v1447 = vmul.f32 %v935, %v1319
    %v1448 = vmul.f32 %v936, %v1320
    %v1449 = vmul.f32 %v937, %v1321
    %v1450 = vmul.f32 %v938, %v1322
    %v1451 = vmul.f32 %v939, %v1323
    %v1452 = vmul.f32 %v940, %v1324
    %v1453 = vmul.f32 %v941, %v1325
    %v1454 = vmul.f32 %v942, %v1326
    %v1455 = vmul.f32 %v943, %v1327
    %v1456 = vmul.f32 %v944, %v1328
    %v1457 = vmul.f32 %v945, %v1329
    %v1458 = vmul.f32 %v946, %v1330
    %v1459 = vmul.f32 %v947, %v1331
    %v1460 = vmul.f32 %v948, %v1332
    %v1461 = vmul.f32 %v949, %v1333
    %v1462 = vmul.f32 %v950, %v1334
    %v1463 = vmul.f32 %v951, %v1335
    %v1464 = vmul.f32 %v952, %v1336
    %v1465 = vmul.f32 %v953, %v1337
    %v1466 = vmul.f32 %v954, %v1338
    %v1467 = vmul.f32 %v955, %v1339
    %v1468 = vmul.f32 %v956, %v1340
    %v1469 = vmul.f32 %v957, %v1341
    %v1470 = vmul.f32 %v958, %v1342
    %v1471 = vmul.f32 %v959, %v1343
    %v1472 = vmul.f32 %v960, %v1344
    %v1473 = vmul.f32 %v961, %v1345
    %v1474 = vmul.f32 %v962, %v1346
    %v1475 = vmul.f32 %v963, %v1347
    %v1476 = vmul.f32 %v964, %v1348
    %v1477 = vmul.f32 %v965, %v1349
    %v1478 = vmul.f32 %v966, %v1350
    %v1479 = vmul.f32 %v967, %v1351
    %v1480 = vmul.f32 %v968, %v1352
    %v1481 = vmul.f32 %v969, %v1353
    %v1482 = vmul.f32 %v970, %v1354
    %v1483 = vmul.f32 %v971, %v1355
    %v1484 = vmul.f32 %v972, %v1356
    %v1485 = vmul.f32 %v973, %v1357
    %v1486 = vmul.f32 %v974, %v1358
    %v1487 = vmul.f32 %v975, %v1359
    %v1488 = vmul.f32 %v976, %v1360
    %v1489 = vmul.f32 %v977, %v1361
    %v1490 = vmul.f32 %v978, %v1362
    %v1491 = vmul.f32 %v979, %v1363
    %v1492 = vmul.f32 %v980, %v1364
    %v1493 = vmul.f32 %v981, %v1365
    %v1494 = vmul.f32 %v982, %v1366
    %v1495 = vmul.f32 %v983, %v1367
    %v1496 = vmul.f32 %v984, %v1368
    %v1497 = vmul.f32 %v985, %v1369
    %v1498 = vmul.f32 %v986, %v1370
    %v1499 = vmul.f32 %v987, %v1371
    %v1500 = vmul.f32 %v988, %v1372
    %v1501 = vmul.f32 %v989, %v1373
    %v1502 = vmul.f32 %v990, %v1374
    %v1503 = vmul.f32 %v991, %v1375
    %v1504 = vmul.f32 %v992, %v1376
    %v1505 = vmul.f32 %v993, %v1377
    %v1506 = vmul.f32 %v994, %v1378
    %v1507 = vmul.f32 %v995, %v1379
    %v1508 = vmul.f32 %v996, %v1380
    %v1509 = vmul.f32 %v997, %v1381
    %v1510 = vmul.f32 %v998, %v1382
    %v1511 = vmul.f32 %v999, %v1383
    %v1512 = vmul.f32 %v1000, %v1384
    %v1513 = vmul.f32 %v1001, %v1385
    %v1514 = vmul.f32 %v1002, %v1386
    %v1515 = vmul.f32 %v1003, %v1387
    %v1516 = vmul.f32 %v1004, %v1388
    %v1517 = vmul.f32 %v1005, %v1389
    %v1518 = vmul.f32 %v1006, %v1390
    %v1519 = vmul.f32 %v1007, %v1391
    %v1520 = vmul.f32 %v1008, %v1392
    %v1521 = vmul.f32 %v1009, %v1393
    %v1522 = vmul.f32 %v1010, %v1394
    %v1523 = vmul.f32 %v1011, %v1395
    %v1524 = vmul.f32 %v1012, %v1396
    %v1525 = vmul.f32 %v1013, %v1397
    %v1526 = vmul.f32 %v1014, %v1398
    %v1527 = vmul.f32 %v1015, %v1399
    %v1528 = vmul.f32 %v1016, %v1400
    %v1529 = vmul.f32 %v1017, %v1401
    %v1530 = vmul.f32 %v1018, %v1402
    %v1531 = vmul.f32 %v1019, %v1403
    %v1532 = vmul.f32 %v1020, %v1404
    %v1533 = vmul.f32 %v1021, %v1405
    %v1534 = vmul.f32 %v1022, %v1406
    %v1535 = vmul.f32 %v1023, %v1407
    %v1536 = vmul.f32 %v1024, %v1408
    %v1537 = vmul.f32 %v1025, %v1409
    %v1538 = vmul.f32 %v1026, %v1410
    %v1539 = vmul.f32 %v1027, %v1411
    %v1540 = vmul.f32 %v1028, %v1412
    %v1541 = vmul.f32 %v1029, %v1413
    %v1542 = vmul.f32 %v1030, %v1414
    %v1543 = vmul.f32 %v1031, %v1415
    %v1544 = vmul.f32 %v1032, %v1416
    %v1545 = vmul.f32 %v1033, %v1417
    %v1546 = vmul.f32 %v1034, %v1418
    %v1547 = vmul.f32 %v1035, %v1419
    %v1548 = vmul.f32 %v1036, %v1420
    %v1549 = vmul.f32 %v1037, %v1421
    %v1550 = vmul.f32 %v1038, %v1422
    %v1551 = vmul.f32 %v1039, %v1423
    %v1552 = vmul.f32 %v1040, %v1424
    %v1553 = vmul.f32 %v1041, %v1425
    %v1554 = vmul.f32 %v1042, %v1426
    %v1555 = vpack.c.bf16 %v1431, %v1427
    %v1556 = vpack.c.bf16 %v1432, %v1428
    %v1557 = vpack.c.bf16 %v1433, %v1429
    %v1558 = vpack.c.bf16 %v1434, %v1430
    %v1559 = vpack.c.bf16 %v1439, %v1435
    %v1560 = vpack.c.bf16 %v1440, %v1436
    %v1561 = vpack.c.bf16 %v1441, %v1437
    %v1562 = vpack.c.bf16 %v1442, %v1438
    %v1563 = vpack.c.bf16 %v1447, %v1443
    %v1564 = vpack.c.bf16 %v1448, %v1444
    %v1565 = vpack.c.bf16 %v1449, %v1445
    %v1566 = vpack.c.bf16 %v1450, %v1446
    %v1567 = vpack.c.bf16 %v1455, %v1451
    %v1568 = vpack.c.bf16 %v1456, %v1452
    %v1569 = vpack.c.bf16 %v1457, %v1453
    %v1570 = vpack.c.bf16 %v1458, %v1454
    %v1571 = vpack.c.bf16 %v1463, %v1459
    %v1572 = vpack.c.bf16 %v1464, %v1460
    %v1573 = vpack.c.bf16 %v1465, %v1461
    %v1574 = vpack.c.bf16 %v1466, %v1462
    %v1575 = vpack.c.bf16 %v1471, %v1467
    %v1576 = vpack.c.bf16 %v1472, %v1468
    %v1577 = vpack.c.bf16 %v1473, %v1469
    %v1578 = vpack.c.bf16 %v1474, %v1470
    %v1579 = vpack.c.bf16 %v1479, %v1475
    %v1580 = vpack.c.bf16 %v1480, %v1476
    %v1581 = vpack.c.bf16 %v1481, %v1477
    %v1582 = vpack.c.bf16 %v1482, %v1478
    %v1583 = vpack.c.bf16 %v1487, %v1483
    %v1584 = vpack.c.bf16 %v1488, %v1484
    %v1585 = vpack.c.bf16 %v1489, %v1485
    %v1586 = vpack.c.bf16 %v1490, %v1486
    %v1587 = vpack.c.bf16 %v1495, %v1491
    %v1588 = vpack.c.bf16 %v1496, %v1492
    %v1589 = vpack.c.bf16 %v1497, %v1493
    %v1590 = vpack.c.bf16 %v1498, %v1494
    %v1591 = vpack.c.bf16 %v1503, %v1499
    %v1592 = vpack.c.bf16 %v1504, %v1500
    %v1593 = vpack.c.bf16 %v1505, %v1501
    %v1594 = vpack.c.bf16 %v1506, %v1502
    %v1595 = vpack.c.bf16 %v1511, %v1507
    %v1596 = vpack.c.bf16 %v1512, %v1508
    %v1597 = vpack.c.bf16 %v1513, %v1509
    %v1598 = vpack.c.bf16 %v1514, %v1510
    %v1599 = vpack.c.bf16 %v1519, %v1515
    %v1600 = vpack.c.bf16 %v1520, %v1516
    %v1601 = vpack.c.bf16 %v1521, %v1517
    %v1602 = vpack.c.bf16 %v1522, %v1518
    %v1603 = vpack.c.bf16 %v1527, %v1523
    %v1604 = vpack.c.bf16 %v1528, %v1524
    %v1605 = vpack.c.bf16 %v1529, %v1525
    %v1606 = vpack.c.bf16 %v1530, %v1526
    %v1607 = vpack.c.bf16 %v1535, %v1531
    %v1608 = vpack.c.bf16 %v1536, %v1532
    %v1609 = vpack.c.bf16 %v1537, %v1533
    %v1610 = vpack.c.bf16 %v1538, %v1534
    %v1611 = vpack.c.bf16 %v1543, %v1539
    %v1612 = vpack.c.bf16 %v1544, %v1540
    %v1613 = vpack.c.bf16 %v1545, %v1541
    %v1614 = vpack.c.bf16 %v1546, %v1542
    %v1615 = vpack.c.bf16 %v1551, %v1547
    %v1616 = vpack.c.bf16 %v1552, %v1548
    %v1617 = vpack.c.bf16 %v1553, %v1549
    %v1618 = vpack.c.bf16 %v1554, %v1550
    %v1619 = vld [vmem:[%s3] sm:$0xff]
    %v1620 = vld [vmem:[%s3 + $0x8] sm:$0xff]
    %v1621 = vld [vmem:[%s3 + $0x10] sm:$0xff]
    %v1622 = vld [vmem:[%s3 + $0x18] sm:$0xff]
    %v1623 = vld [vmem:[%s3 + $0x20] sm:$0xff]
    %v1624 = vld [vmem:[%s3 + $0x28] sm:$0xff]
    %v1625 = vld [vmem:[%s3 + $0x30] sm:$0xff]
    %v1626 = vld [vmem:[%s3 + $0x38] sm:$0xff]
    %v1627 = vld [vmem:[%s3 + $0x40] sm:$0xff]
    %v1628 = vld [vmem:[%s3 + $0x48] sm:$0xff]
    %v1629 = vld [vmem:[%s3 + $0x50] sm:$0xff]
    %v1630 = vld [vmem:[%s3 + $0x58] sm:$0xff]
    %v1631 = vld [vmem:[%s3 + $0x60] sm:$0xff]
    %v1632 = vld [vmem:[%s3 + $0x68] sm:$0xff]
    %v1633 = vld [vmem:[%s3 + $0x70] sm:$0xff]
    %v1634 = vld [vmem:[%s3 + $0x78] sm:$0xff]
    %v1635 = vld [vmem:[%s3 + $0x80] sm:$0xff]
    %v1636 = vld [vmem:[%s3 + $0x88] sm:$0xff]
    %v1637 = vld [vmem:[%s3 + $0x90] sm:$0xff]
    %v1638 = vld [vmem:[%s3 + $0x98] sm:$0xff]
    %v1639 = vld [vmem:[%s3 + $0xa0] sm:$0xff]
    %v1640 = vld [vmem:[%s3 + $0xa8] sm:$0xff]
    %v1641 = vld [vmem:[%s3 + $0xb0] sm:$0xff]
    %v1642 = vld [vmem:[%s3 + $0xb8] sm:$0xff]
    %v1643 = vld [vmem:[%s3 + $0xc0] sm:$0xff]
    %v1644 = vld [vmem:[%s3 + $0xc8] sm:$0xff]
    %v1645 = vld [vmem:[%s3 + $0xd0] sm:$0xff]
    %v1646 = vld [vmem:[%s3 + $0xd8] sm:$0xff]
    %v1647 = vld [vmem:[%s3 + $0xe0] sm:$0xff]
    %v1648 = vld [vmem:[%s3 + $0xe8] sm:$0xff]
    %v1649 = vld [vmem:[%s3 + $0xf0] sm:$0xff]
    %v1650 = vld [vmem:[%s3 + $0xf8] sm:$0xff]
    %v1651 = vld [vmem:[%s3 + $0x100] sm:$0xff]
    %v1652 = vld [vmem:[%s3 + $0x108] sm:$0xff]
    %v1653 = vld [vmem:[%s3 + $0x110] sm:$0xff]
    %v1654 = vld [vmem:[%s3 + $0x118] sm:$0xff]
    %v1655 = vld [vmem:[%s3 + $0x120] sm:$0xff]
    %v1656 = vld [vmem:[%s3 + $0x128] sm:$0xff]
    %v1657 = vld [vmem:[%s3 + $0x130] sm:$0xff]
    %v1658 = vld [vmem:[%s3 + $0x138] sm:$0xff]
    %v1659 = vld [vmem:[%s3 + $0x140] sm:$0xff]
    %v1660 = vld [vmem:[%s3 + $0x148] sm:$0xff]
    %v1661 = vld [vmem:[%s3 + $0x150] sm:$0xff]
    %v1662 = vld [vmem:[%s3 + $0x158] sm:$0xff]
    %v1663 = vld [vmem:[%s3 + $0x160] sm:$0xff]
    %v1664 = vld [vmem:[%s3 + $0x168] sm:$0xff]
    %v1665 = vld [vmem:[%s3 + $0x170] sm:$0xff]
    %v1666 = vld [vmem:[%s3 + $0x178] sm:$0xff]
    %v1667 = vld [vmem:[%s3 + $0x180] sm:$0xff]
    %v1668 = vld [vmem:[%s3 + $0x188] sm:$0xff]
    %v1669 = vld [vmem:[%s3 + $0x190] sm:$0xff]
    %v1670 = vld [vmem:[%s3 + $0x198] sm:$0xff]
    %v1671 = vld [vmem:[%s3 + $0x1a0] sm:$0xff]
    %v1672 = vld [vmem:[%s3 + $0x1a8] sm:$0xff]
    %v1673 = vld [vmem:[%s3 + $0x1b0] sm:$0xff]
    %v1674 = vld [vmem:[%s3 + $0x1b8] sm:$0xff]
    %v1675 = vld [vmem:[%s3 + $0x1c0] sm:$0xff]
    %v1676 = vld [vmem:[%s3 + $0x1c8] sm:$0xff]
    %v1677 = vld [vmem:[%s3 + $0x1d0] sm:$0xff]
    %v1678 = vld [vmem:[%s3 + $0x1d8] sm:$0xff]
    %v1679 = vld [vmem:[%s3 + $0x1e0] sm:$0xff]
    %v1680 = vld [vmem:[%s3 + $0x1e8] sm:$0xff]
    %v1681 = vld [vmem:[%s3 + $0x1f0] sm:$0xff]
    %v1682 = vld [vmem:[%s3 + $0x1f8] sm:$0xff]
    %v1683 = vld [vmem:[%s3 + $0x200] sm:$0xff]
    %v1684 = vld [vmem:[%s3 + $0x208] sm:$0xff]
    %v1685 = vld [vmem:[%s3 + $0x210] sm:$0xff]
    %v1686 = vld [vmem:[%s3 + $0x218] sm:$0xff]
    %v1687 = vld [vmem:[%s3 + $0x220] sm:$0xff]
    %v1688 = vld [vmem:[%s3 + $0x228] sm:$0xff]
    %v1689 = vld [vmem:[%s3 + $0x230] sm:$0xff]
    %v1690 = vld [vmem:[%s3 + $0x238] sm:$0xff]
    %v1691 = vld [vmem:[%s3 + $0x240] sm:$0xff]
    %v1692 = vld [vmem:[%s3 + $0x248] sm:$0xff]
    %v1693 = vld [vmem:[%s3 + $0x250] sm:$0xff]
    %v1694 = vld [vmem:[%s3 + $0x258] sm:$0xff]
    %v1695 = vld [vmem:[%s3 + $0x260] sm:$0xff]
    %v1696 = vld [vmem:[%s3 + $0x268] sm:$0xff]
    %v1697 = vld [vmem:[%s3 + $0x270] sm:$0xff]
    %v1698 = vld [vmem:[%s3 + $0x278] sm:$0xff]
    %v1699 = vld [vmem:[%s3 + $0x280] sm:$0xff]
    %v1700 = vld [vmem:[%s3 + $0x288] sm:$0xff]
    %v1701 = vld [vmem:[%s3 + $0x290] sm:$0xff]
    %v1702 = vld [vmem:[%s3 + $0x298] sm:$0xff]
    %v1703 = vld [vmem:[%s3 + $0x2a0] sm:$0xff]
    %v1704 = vld [vmem:[%s3 + $0x2a8] sm:$0xff]
    %v1705 = vld [vmem:[%s3 + $0x2b0] sm:$0xff]
    %v1706 = vld [vmem:[%s3 + $0x2b8] sm:$0xff]
    %v1707 = vld [vmem:[%s3 + $0x2c0] sm:$0xff]
    %v1708 = vld [vmem:[%s3 + $0x2c8] sm:$0xff]
    %v1709 = vld [vmem:[%s3 + $0x2d0] sm:$0xff]
    %v1710 = vld [vmem:[%s3 + $0x2d8] sm:$0xff]
    %v1711 = vld [vmem:[%s3 + $0x2e0] sm:$0xff]
    %v1712 = vld [vmem:[%s3 + $0x2e8] sm:$0xff]
    %v1713 = vld [vmem:[%s3 + $0x2f0] sm:$0xff]
    %v1714 = vld [vmem:[%s3 + $0x2f8] sm:$0xff]
    %v1715 = vld [vmem:[%s3 + $0x300] sm:$0xff]
    %v1716 = vld [vmem:[%s3 + $0x308] sm:$0xff]
    %v1717 = vld [vmem:[%s3 + $0x310] sm:$0xff]
    %v1718 = vld [vmem:[%s3 + $0x318] sm:$0xff]
    %v1719 = vld [vmem:[%s3 + $0x320] sm:$0xff]
    %v1720 = vld [vmem:[%s3 + $0x328] sm:$0xff]
    %v1721 = vld [vmem:[%s3 + $0x330] sm:$0xff]
    %v1722 = vld [vmem:[%s3 + $0x338] sm:$0xff]
    %v1723 = vld [vmem:[%s3 + $0x340] sm:$0xff]
    %v1724 = vld [vmem:[%s3 + $0x348] sm:$0xff]
    %v1725 = vld [vmem:[%s3 + $0x350] sm:$0xff]
    %v1726 = vld [vmem:[%s3 + $0x358] sm:$0xff]
    %v1727 = vld [vmem:[%s3 + $0x360] sm:$0xff]
    %v1728 = vld [vmem:[%s3 + $0x368] sm:$0xff]
    %v1729 = vld [vmem:[%s3 + $0x370] sm:$0xff]
    %v1730 = vld [vmem:[%s3 + $0x378] sm:$0xff]
    %v1731 = vld [vmem:[%s3 + $0x380] sm:$0xff]
    %v1732 = vld [vmem:[%s3 + $0x388] sm:$0xff]
    %v1733 = vld [vmem:[%s3 + $0x390] sm:$0xff]
    %v1734 = vld [vmem:[%s3 + $0x398] sm:$0xff]
    %v1735 = vld [vmem:[%s3 + $0x3a0] sm:$0xff]
    %v1736 = vld [vmem:[%s3 + $0x3a8] sm:$0xff]
    %v1737 = vld [vmem:[%s3 + $0x3b0] sm:$0xff]
    %v1738 = vld [vmem:[%s3 + $0x3b8] sm:$0xff]
    %v1739 = vld [vmem:[%s3 + $0x3c0] sm:$0xff]
    %v1740 = vld [vmem:[%s3 + $0x3c8] sm:$0xff]
    %v1741 = vld [vmem:[%s3 + $0x3d0] sm:$0xff]
    %v1742 = vld [vmem:[%s3 + $0x3d8] sm:$0xff]
    %v1743 = vld [vmem:[%s3 + $0x3e0] sm:$0xff]
    %v1744 = vld [vmem:[%s3 + $0x3e8] sm:$0xff]
    %v1745 = vld [vmem:[%s3 + $0x3f0] sm:$0xff]
    %v1746 = vld [vmem:[%s3 + $0x3f8] sm:$0xff]
    %v1747 = vld [vmem:[%s4] sm:$0xf]
    %v1749 = vlaneseq
    %v1750 = vshrl.u32 %v1749, 7
    %v1751 = vsub.s32 0, %v1750
    %v1752 = vrot.slane %v1747, %v1751
    %v1753 = vlaneseq
    %v1754 = vshrl.u32 %v1753, 7
    %v1755 = vsub.s32 1, %v1754
    %v1756 = vrot.slane %v1747, %v1755
    %v1757 = vlaneseq
    %v1758 = vshrl.u32 %v1757, 7
    %v1759 = vsub.s32 2, %v1758
    %v1760 = vrot.slane %v1747, %v1759
    %v1761 = vlaneseq
    %v1762 = vshrl.u32 %v1761, 7
    %v1763 = vsub.s32 3, %v1762
    %v1764 = vrot.slane %v1747, %v1763
    %v1897 = vunpack.c.l.b16 %v1619
    %v1898 = vunpack.c.h.b16 %v1619
    %v1899 = vunpack.c.l.b16 %v1620
    %v1900 = vunpack.c.h.b16 %v1620
    %v1901 = vunpack.c.l.b16 %v1621
    %v1902 = vunpack.c.h.b16 %v1621
    %v1903 = vunpack.c.l.b16 %v1622
    %v1904 = vunpack.c.h.b16 %v1622
    %v1905 = vunpack.c.l.b16 %v1623
    %v1906 = vunpack.c.h.b16 %v1623
    %v1907 = vunpack.c.l.b16 %v1624
    %v1908 = vunpack.c.h.b16 %v1624
    %v1909 = vunpack.c.l.b16 %v1625
    %v1910 = vunpack.c.h.b16 %v1625
    %v1911 = vunpack.c.l.b16 %v1626
    %v1912 = vunpack.c.h.b16 %v1626
    %v1913 = vunpack.c.l.b16 %v1627
    %v1914 = vunpack.c.h.b16 %v1627
    %v1915 = vunpack.c.l.b16 %v1628
    %v1916 = vunpack.c.h.b16 %v1628
    %v1917 = vunpack.c.l.b16 %v1629
    %v1918 = vunpack.c.h.b16 %v1629
    %v1919 = vunpack.c.l.b16 %v1630
    %v1920 = vunpack.c.h.b16 %v1630
    %v1921 = vunpack.c.l.b16 %v1631
    %v1922 = vunpack.c.h.b16 %v1631
    %v1923 = vunpack.c.l.b16 %v1632
    %v1924 = vunpack.c.h.b16 %v1632
    %v1925 = vunpack.c.l.b16 %v1633
    %v1926 = vunpack.c.h.b16 %v1633
    %v1927 = vunpack.c.l.b16 %v1634
    %v1928 = vunpack.c.h.b16 %v1634
    %v1929 = vunpack.c.l.b16 %v1635
    %v1930 = vunpack.c.h.b16 %v1635
    %v1931 = vunpack.c.l.b16 %v1636
    %v1932 = vunpack.c.h.b16 %v1636
    %v1933 = vunpack.c.l.b16 %v1637
    %v1934 = vunpack.c.h.b16 %v1637
    %v1935 = vunpack.c.l.b16 %v1638
    %v1936 = vunpack.c.h.b16 %v1638
    %v1937 = vunpack.c.l.b16 %v1639
    %v1938 = vunpack.c.h.b16 %v1639
    %v1939 = vunpack.c.l.b16 %v1640
    %v1940 = vunpack.c.h.b16 %v1640
    %v1941 = vunpack.c.l.b16 %v1641
    %v1942 = vunpack.c.h.b16 %v1641
    %v1943 = vunpack.c.l.b16 %v1642
    %v1944 = vunpack.c.h.b16 %v1642
    %v1945 = vunpack.c.l.b16 %v1643
    %v1946 = vunpack.c.h.b16 %v1643
    %v1947 = vunpack.c.l.b16 %v1644
    %v1948 = vunpack.c.h.b16 %v1644
    %v1949 = vunpack.c.l.b16 %v1645
    %v1950 = vunpack.c.h.b16 %v1645
    %v1951 = vunpack.c.l.b16 %v1646
    %v1952 = vunpack.c.h.b16 %v1646
    %v1953 = vunpack.c.l.b16 %v1647
    %v1954 = vunpack.c.h.b16 %v1647
    %v1955 = vunpack.c.l.b16 %v1648
    %v1956 = vunpack.c.h.b16 %v1648
    %v1957 = vunpack.c.l.b16 %v1649
    %v1958 = vunpack.c.h.b16 %v1649
    %v1959 = vunpack.c.l.b16 %v1650
    %v1960 = vunpack.c.h.b16 %v1650
    %v1961 = vunpack.c.l.b16 %v1651
    %v1962 = vunpack.c.h.b16 %v1651
    %v1963 = vunpack.c.l.b16 %v1652
    %v1964 = vunpack.c.h.b16 %v1652
    %v1965 = vunpack.c.l.b16 %v1653
    %v1966 = vunpack.c.h.b16 %v1653
    %v1967 = vunpack.c.l.b16 %v1654
    %v1968 = vunpack.c.h.b16 %v1654
    %v1969 = vunpack.c.l.b16 %v1655
    %v1970 = vunpack.c.h.b16 %v1655
    %v1971 = vunpack.c.l.b16 %v1656
    %v1972 = vunpack.c.h.b16 %v1656
    %v1973 = vunpack.c.l.b16 %v1657
    %v1974 = vunpack.c.h.b16 %v1657
    %v1975 = vunpack.c.l.b16 %v1658
    %v1976 = vunpack.c.h.b16 %v1658
    %v1977 = vunpack.c.l.b16 %v1659
    %v1978 = vunpack.c.h.b16 %v1659
    %v1979 = vunpack.c.l.b16 %v1660
    %v1980 = vunpack.c.h.b16 %v1660
    %v1981 = vunpack.c.l.b16 %v1661
    %v1982 = vunpack.c.h.b16 %v1661
    %v1983 = vunpack.c.l.b16 %v1662
    %v1984 = vunpack.c.h.b16 %v1662
    %v1985 = vunpack.c.l.b16 %v1663
    %v1986 = vunpack.c.h.b16 %v1663
    %v1987 = vunpack.c.l.b16 %v1664
    %v1988 = vunpack.c.h.b16 %v1664
    %v1989 = vunpack.c.l.b16 %v1665
    %v1990 = vunpack.c.h.b16 %v1665
    %v1991 = vunpack.c.l.b16 %v1666
    %v1992 = vunpack.c.h.b16 %v1666
    %v1993 = vunpack.c.l.b16 %v1667
    %v1994 = vunpack.c.h.b16 %v1667
    %v1995 = vunpack.c.l.b16 %v1668
    %v1996 = vunpack.c.h.b16 %v1668
    %v1997 = vunpack.c.l.b16 %v1669
    %v1998 = vunpack.c.h.b16 %v1669
    %v1999 = vunpack.c.l.b16 %v1670
    %v2000 = vunpack.c.h.b16 %v1670
    %v2001 = vunpack.c.l.b16 %v1671
    %v2002 = vunpack.c.h.b16 %v1671
    %v2003 = vunpack.c.l.b16 %v1672
    %v2004 = vunpack.c.h.b16 %v1672
    %v2005 = vunpack.c.l.b16 %v1673
    %v2006 = vunpack.c.h.b16 %v1673
    %v2007 = vunpack.c.l.b16 %v1674
    %v2008 = vunpack.c.h.b16 %v1674
    %v2009 = vunpack.c.l.b16 %v1675
    %v2010 = vunpack.c.h.b16 %v1675
    %v2011 = vunpack.c.l.b16 %v1676
    %v2012 = vunpack.c.h.b16 %v1676
    %v2013 = vunpack.c.l.b16 %v1677
    %v2014 = vunpack.c.h.b16 %v1677
    %v2015 = vunpack.c.l.b16 %v1678
    %v2016 = vunpack.c.h.b16 %v1678
    %v2017 = vunpack.c.l.b16 %v1679
    %v2018 = vunpack.c.h.b16 %v1679
    %v2019 = vunpack.c.l.b16 %v1680
    %v2020 = vunpack.c.h.b16 %v1680
    %v2021 = vunpack.c.l.b16 %v1681
    %v2022 = vunpack.c.h.b16 %v1681
    %v2023 = vunpack.c.l.b16 %v1682
    %v2024 = vunpack.c.h.b16 %v1682
    %v2025 = vunpack.c.l.b16 %v1683
    %v2026 = vunpack.c.h.b16 %v1683
    %v2027 = vunpack.c.l.b16 %v1684
    %v2028 = vunpack.c.h.b16 %v1684
    %v2029 = vunpack.c.l.b16 %v1685
    %v2030 = vunpack.c.h.b16 %v1685
    %v2031 = vunpack.c.l.b16 %v1686
    %v2032 = vunpack.c.h.b16 %v1686
    %v2033 = vunpack.c.l.b16 %v1687
    %v2034 = vunpack.c.h.b16 %v1687
    %v2035 = vunpack.c.l.b16 %v1688
    %v2036 = vunpack.c.h.b16 %v1688
    %v2037 = vunpack.c.l.b16 %v1689
    %v2038 = vunpack.c.h.b16 %v1689
    %v2039 = vunpack.c.l.b16 %v1690
    %v2040 = vunpack.c.h.b16 %v1690
    %v2041 = vunpack.c.l.b16 %v1691
    %v2042 = vunpack.c.h.b16 %v1691
    %v2043 = vunpack.c.l.b16 %v1692
    %v2044 = vunpack.c.h.b16 %v1692
    %v2045 = vunpack.c.l.b16 %v1693
    %v2046 = vunpack.c.h.b16 %v1693
    %v2047 = vunpack.c.l.b16 %v1694
    %v2048 = vunpack.c.h.b16 %v1694
    %v2049 = vunpack.c.l.b16 %v1695
    %v2050 = vunpack.c.h.b16 %v1695
    %v2051 = vunpack.c.l.b16 %v1696
    %v2052 = vunpack.c.h.b16 %v1696
    %v2053 = vunpack.c.l.b16 %v1697
    %v2054 = vunpack.c.h.b16 %v1697
    %v2055 = vunpack.c.l.b16 %v1698
    %v2056 = vunpack.c.h.b16 %v1698
    %v2057 = vunpack.c.l.b16 %v1699
    %v2058 = vunpack.c.h.b16 %v1699
    %v2059 = vunpack.c.l.b16 %v1700
    %v2060 = vunpack.c.h.b16 %v1700
    %v2061 = vunpack.c.l.b16 %v1701
    %v2062 = vunpack.c.h.b16 %v1701
    %v2063 = vunpack.c.l.b16 %v1702
    %v2064 = vunpack.c.h.b16 %v1702
    %v2065 = vunpack.c.l.b16 %v1703
    %v2066 = vunpack.c.h.b16 %v1703
    %v2067 = vunpack.c.l.b16 %v1704
    %v2068 = vunpack.c.h.b16 %v1704
    %v2069 = vunpack.c.l.b16 %v1705
    %v2070 = vunpack.c.h.b16 %v1705
    %v2071 = vunpack.c.l.b16 %v1706
    %v2072 = vunpack.c.h.b16 %v1706
    %v2073 = vunpack.c.l.b16 %v1707
    %v2074 = vunpack.c.h.b16 %v1707
    %v2075 = vunpack.c.l.b16 %v1708
    %v2076 = vunpack.c.h.b16 %v1708
    %v2077 = vunpack.c.l.b16 %v1709
    %v2078 = vunpack.c.h.b16 %v1709
    %v2079 = vunpack.c.l.b16 %v1710
    %v2080 = vunpack.c.h.b16 %v1710
    %v2081 = vunpack.c.l.b16 %v1711
    %v2082 = vunpack.c.h.b16 %v1711
    %v2083 = vunpack.c.l.b16 %v1712
    %v2084 = vunpack.c.h.b16 %v1712
    %v2085 = vunpack.c.l.b16 %v1713
    %v2086 = vunpack.c.h.b16 %v1713
    %v2087 = vunpack.c.l.b16 %v1714
    %v2088 = vunpack.c.h.b16 %v1714
    %v2089 = vunpack.c.l.b16 %v1715
    %v2090 = vunpack.c.h.b16 %v1715
    %v2091 = vunpack.c.l.b16 %v1716
    %v2092 = vunpack.c.h.b16 %v1716
    %v2093 = vunpack.c.l.b16 %v1717
    %v2094 = vunpack.c.h.b16 %v1717
    %v2095 = vunpack.c.l.b16 %v1718
    %v2096 = vunpack.c.h.b16 %v1718
    %v2097 = vunpack.c.l.b16 %v1719
    %v2098 = vunpack.c.h.b16 %v1719
    %v2099 = vunpack.c.l.b16 %v1720
    %v2100 = vunpack.c.h.b16 %v1720
    %v2101 = vunpack.c.l.b16 %v1721
    %v2102 = vunpack.c.h.b16 %v1721
    %v2103 = vunpack.c.l.b16 %v1722
    %v2104 = vunpack.c.h.b16 %v1722
    %v2105 = vunpack.c.l.b16 %v1723
    %v2106 = vunpack.c.h.b16 %v1723
    %v2107 = vunpack.c.l.b16 %v1724
    %v2108 = vunpack.c.h.b16 %v1724
    %v2109 = vunpack.c.l.b16 %v1725
    %v2110 = vunpack.c.h.b16 %v1725
    %v2111 = vunpack.c.l.b16 %v1726
    %v2112 = vunpack.c.h.b16 %v1726
    %v2113 = vunpack.c.l.b16 %v1727
    %v2114 = vunpack.c.h.b16 %v1727
    %v2115 = vunpack.c.l.b16 %v1728
    %v2116 = vunpack.c.h.b16 %v1728
    %v2117 = vunpack.c.l.b16 %v1729
    %v2118 = vunpack.c.h.b16 %v1729
    %v2119 = vunpack.c.l.b16 %v1730
    %v2120 = vunpack.c.h.b16 %v1730
    %v2121 = vunpack.c.l.b16 %v1731
    %v2122 = vunpack.c.h.b16 %v1731
    %v2123 = vunpack.c.l.b16 %v1732
    %v2124 = vunpack.c.h.b16 %v1732
    %v2125 = vunpack.c.l.b16 %v1733
    %v2126 = vunpack.c.h.b16 %v1733
    %v2127 = vunpack.c.l.b16 %v1734
    %v2128 = vunpack.c.h.b16 %v1734
    %v2129 = vunpack.c.l.b16 %v1735
    %v2130 = vunpack.c.h.b16 %v1735
    %v2131 = vunpack.c.l.b16 %v1736
    %v2132 = vunpack.c.h.b16 %v1736
    %v2133 = vunpack.c.l.b16 %v1737
    %v2134 = vunpack.c.h.b16 %v1737
    %v2135 = vunpack.c.l.b16 %v1738
    %v2136 = vunpack.c.h.b16 %v1738
    %v2137 = vunpack.c.l.b16 %v1739
    %v2138 = vunpack.c.h.b16 %v1739
    %v2139 = vunpack.c.l.b16 %v1740
    %v2140 = vunpack.c.h.b16 %v1740
    %v2141 = vunpack.c.l.b16 %v1741
    %v2142 = vunpack.c.h.b16 %v1741
    %v2143 = vunpack.c.l.b16 %v1742
    %v2144 = vunpack.c.h.b16 %v1742
    %v2145 = vunpack.c.l.b16 %v1743
    %v2146 = vunpack.c.h.b16 %v1743
    %v2147 = vunpack.c.l.b16 %v1744
    %v2148 = vunpack.c.h.b16 %v1744
    %v2149 = vunpack.c.l.b16 %v1745
    %v2150 = vunpack.c.h.b16 %v1745
    %v2151 = vunpack.c.l.b16 %v1746
    %v2152 = vunpack.c.h.b16 %v1746
    %v2153 = vpack.c.b16 %v1901, %v1897
    %v2154 = vpack.c.b16 %v1902, %v1898
    %v2155 = vpack.c.b16 %v1903, %v1899
    %v2156 = vpack.c.b16 %v1904, %v1900
    %v2157 = vpack.c.b16 %v1909, %v1905
    %v2158 = vpack.c.b16 %v1910, %v1906
    %v2159 = vpack.c.b16 %v1911, %v1907
    %v2160 = vpack.c.b16 %v1912, %v1908
    %v2161 = vpack.c.b16 %v1917, %v1913
    %v2162 = vpack.c.b16 %v1918, %v1914
    %v2163 = vpack.c.b16 %v1919, %v1915
    %v2164 = vpack.c.b16 %v1920, %v1916
    %v2165 = vpack.c.b16 %v1925, %v1921
    %v2166 = vpack.c.b16 %v1926, %v1922
    %v2167 = vpack.c.b16 %v1927, %v1923
    %v2168 = vpack.c.b16 %v1928, %v1924
    %v2169 = vpack.c.b16 %v1933, %v1929
    %v2170 = vpack.c.b16 %v1934, %v1930
    %v2171 = vpack.c.b16 %v1935, %v1931
    %v2172 = vpack.c.b16 %v1936, %v1932
    %v2173 = vpack.c.b16 %v1941, %v1937
    %v2174 = vpack.c.b16 %v1942, %v1938
    %v2175 = vpack.c.b16 %v1943, %v1939
    %v2176 = vpack.c.b16 %v1944, %v1940
    %v2177 = vpack.c.b16 %v1949, %v1945
    %v2178 = vpack.c.b16 %v1950, %v1946
    %v2179 = vpack.c.b16 %v1951, %v1947
    %v2180 = vpack.c.b16 %v1952, %v1948
    %v2181 = vpack.c.b16 %v1957, %v1953
    %v2182 = vpack.c.b16 %v1958, %v1954
    %v2183 = vpack.c.b16 %v1959, %v1955
    %v2184 = vpack.c.b16 %v1960, %v1956
    %v2185 = vpack.c.b16 %v1965, %v1961
    %v2186 = vpack.c.b16 %v1966, %v1962
    %v2187 = vpack.c.b16 %v1967, %v1963
    %v2188 = vpack.c.b16 %v1968, %v1964
    %v2189 = vpack.c.b16 %v1973, %v1969
    %v2190 = vpack.c.b16 %v1974, %v1970
    %v2191 = vpack.c.b16 %v1975, %v1971
    %v2192 = vpack.c.b16 %v1976, %v1972
    %v2193 = vpack.c.b16 %v1981, %v1977
    %v2194 = vpack.c.b16 %v1982, %v1978
    %v2195 = vpack.c.b16 %v1983, %v1979
    %v2196 = vpack.c.b16 %v1984, %v1980
    %v2197 = vpack.c.b16 %v1989, %v1985
    %v2198 = vpack.c.b16 %v1990, %v1986
    %v2199 = vpack.c.b16 %v1991, %v1987
    %v2200 = vpack.c.b16 %v1992, %v1988
    %v2201 = vpack.c.b16 %v1997, %v1993
    %v2202 = vpack.c.b16 %v1998, %v1994
    %v2203 = vpack.c.b16 %v1999, %v1995
    %v2204 = vpack.c.b16 %v2000, %v1996
    %v2205 = vpack.c.b16 %v2005, %v2001
    %v2206 = vpack.c.b16 %v2006, %v2002
    %v2207 = vpack.c.b16 %v2007, %v2003
    %v2208 = vpack.c.b16 %v2008, %v2004
    %v2209 = vpack.c.b16 %v2013, %v2009
    %v2210 = vpack.c.b16 %v2014, %v2010
    %v2211 = vpack.c.b16 %v2015, %v2011
    %v2212 = vpack.c.b16 %v2016, %v2012
    %v2213 = vpack.c.b16 %v2021, %v2017
    %v2214 = vpack.c.b16 %v2022, %v2018
    %v2215 = vpack.c.b16 %v2023, %v2019
    %v2216 = vpack.c.b16 %v2024, %v2020
    %v2217 = vpack.c.b16 %v2029, %v2025
    %v2218 = vpack.c.b16 %v2030, %v2026
    %v2219 = vpack.c.b16 %v2031, %v2027
    %v2220 = vpack.c.b16 %v2032, %v2028
    %v2221 = vpack.c.b16 %v2037, %v2033
    %v2222 = vpack.c.b16 %v2038, %v2034
    %v2223 = vpack.c.b16 %v2039, %v2035
    %v2224 = vpack.c.b16 %v2040, %v2036
    %v2225 = vpack.c.b16 %v2045, %v2041
    %v2226 = vpack.c.b16 %v2046, %v2042
    %v2227 = vpack.c.b16 %v2047, %v2043
    %v2228 = vpack.c.b16 %v2048, %v2044
    %v2229 = vpack.c.b16 %v2053, %v2049
    %v2230 = vpack.c.b16 %v2054, %v2050
    %v2231 = vpack.c.b16 %v2055, %v2051
    %v2232 = vpack.c.b16 %v2056, %v2052
    %v2233 = vpack.c.b16 %v2061, %v2057
    %v2234 = vpack.c.b16 %v2062, %v2058
    %v2235 = vpack.c.b16 %v2063, %v2059
    %v2236 = vpack.c.b16 %v2064, %v2060
    %v2237 = vpack.c.b16 %v2069, %v2065
    %v2238 = vpack.c.b16 %v2070, %v2066
    %v2239 = vpack.c.b16 %v2071, %v2067
    %v2240 = vpack.c.b16 %v2072, %v2068
    %v2241 = vpack.c.b16 %v2077, %v2073
    %v2242 = vpack.c.b16 %v2078, %v2074
    %v2243 = vpack.c.b16 %v2079, %v2075
    %v2244 = vpack.c.b16 %v2080, %v2076
    %v2245 = vpack.c.b16 %v2085, %v2081
    %v2246 = vpack.c.b16 %v2086, %v2082
    %v2247 = vpack.c.b16 %v2087, %v2083
    %v2248 = vpack.c.b16 %v2088, %v2084
    %v2249 = vpack.c.b16 %v2093, %v2089
    %v2250 = vpack.c.b16 %v2094, %v2090
    %v2251 = vpack.c.b16 %v2095, %v2091
    %v2252 = vpack.c.b16 %v2096, %v2092
    %v2253 = vpack.c.b16 %v2101, %v2097
    %v2254 = vpack.c.b16 %v2102, %v2098
    %v2255 = vpack.c.b16 %v2103, %v2099
    %v2256 = vpack.c.b16 %v2104, %v2100
    %v2257 = vpack.c.b16 %v2109, %v2105
    %v2258 = vpack.c.b16 %v2110, %v2106
    %v2259 = vpack.c.b16 %v2111, %v2107
    %v2260 = vpack.c.b16 %v2112, %v2108
    %v2261 = vpack.c.b16 %v2117, %v2113
    %v2262 = vpack.c.b16 %v2118, %v2114
    %v2263 = vpack.c.b16 %v2119, %v2115
    %v2264 = vpack.c.b16 %v2120, %v2116
    %v2265 = vpack.c.b16 %v2125, %v2121
    %v2266 = vpack.c.b16 %v2126, %v2122
    %v2267 = vpack.c.b16 %v2127, %v2123
    %v2268 = vpack.c.b16 %v2128, %v2124
    %v2269 = vpack.c.b16 %v2133, %v2129
    %v2270 = vpack.c.b16 %v2134, %v2130
    %v2271 = vpack.c.b16 %v2135, %v2131
    %v2272 = vpack.c.b16 %v2136, %v2132
    %v2273 = vpack.c.b16 %v2141, %v2137
    %v2274 = vpack.c.b16 %v2142, %v2138
    %v2275 = vpack.c.b16 %v2143, %v2139
    %v2276 = vpack.c.b16 %v2144, %v2140
    %v2277 = vpack.c.b16 %v2149, %v2145
    %v2278 = vpack.c.b16 %v2150, %v2146
    %v2279 = vpack.c.b16 %v2151, %v2147
    %v2280 = vpack.c.b16 %v2152, %v2148
    %2409 = vmatprep.subr.bf16.mxu0 %v2154
    %2410 = vmatpush1.bf16.msra.mxu0 %v2153
    %2411 = vmatprep.subr.bf16.mxu0 %v2158
    %2412 = vmatpush1.bf16.msra.mxu0 %v2157
    %2413 = vmatprep.subr.bf16.mxu0 %v2162
    %2414 = vmatpush1.bf16.msra.mxu0 %v2161
    %2415 = vmatprep.subr.bf16.mxu0 %v2166
    %2416 = vmatpush1.bf16.msra.mxu0 %v2165
    %2417 = vmatprep.subr.bf16.mxu0 %v2170
    %2418 = vmatpush1.bf16.msra.mxu0 %v2169
    %2419 = vmatprep.subr.bf16.mxu0 %v2174
    %2420 = vmatpush1.bf16.msra.mxu0 %v2173
    %2421 = vmatprep.subr.bf16.mxu0 %v2178
    %2422 = vmatpush1.bf16.msra.mxu0 %v2177
    %2423 = vmatprep.subr.bf16.mxu0 %v2182
    %2424 = vmatpush1.bf16.msra.mxu0 %v2181
    %2425 = vmatprep.subr.bf16.mxu0 %v2186
    %2426 = vmatpush1.bf16.msra.mxu0 %v2185
    %2427 = vmatprep.subr.bf16.mxu0 %v2190
    %2428 = vmatpush1.bf16.msra.mxu0 %v2189
    %2429 = vmatprep.subr.bf16.mxu0 %v2194
    %2430 = vmatpush1.bf16.msra.mxu0 %v2193
    %2431 = vmatprep.subr.bf16.mxu0 %v2198
    %2432 = vmatpush1.bf16.msra.mxu0 %v2197
    %2433 = vmatprep.subr.bf16.mxu0 %v2202
    %2434 = vmatpush1.bf16.msra.mxu0 %v2201
    %2435 = vmatprep.subr.bf16.mxu0 %v2206
    %2436 = vmatpush1.bf16.msra.mxu0 %v2205
    %2437 = vmatprep.subr.bf16.mxu0 %v2210
    %2438 = vmatpush1.bf16.msra.mxu0 %v2209
    %2439 = vmatprep.subr.bf16.mxu0 %v2214
    %2440 = vmatpush1.bf16.msra.mxu0 %v2213
    %2441 = vmatprep.mubr.bf16.mxu0 %v1556
    %2442 = vmatmul.mubr.bf16.gmra.mrb[0].mxu0 %v1555
    %v2443 = vpop.f32.mrb[0].mxu0
    %v2444 = vadd.f32 %v1752, %v2443
    %v2445 = vpop.f32.mrb[0].mxu0
    %v2446 = vadd.f32 %v1756, %v2445
    %v2447 = vpop.f32.mrb[0].mxu0
    %v2448 = vadd.f32 %v1752, %v2447
    %v2449 = vpop.f32.mrb[0].mxu0
    %v2450 = vadd.f32 %v1756, %v2449
    %2451 = vmatprep.mubr.bf16.mxu0 %v1560
    %2452 = vmatmul.mubr.bf16.gmra.mrb[0].mxu0 %v1559
    %v2453 = vpop.f32.mrb[0].mxu0
    %v2454 = vadd.f32 %v1752, %v2453
    %v2455 = vpop.f32.mrb[0].mxu0
    %v2456 = vadd.f32 %v1756, %v2455
    %v2457 = vpop.f32.mrb[0].mxu0
    %v2458 = vadd.f32 %v1752, %v2457
    %v2459 = vpop.f32.mrb[0].mxu0
    %v2460 = vadd.f32 %v1756, %v2459
    %2461 = vmatprep.mubr.bf16.mxu0 %v1564
    %2462 = vmatmul.mubr.bf16.gmra.mrb[0].mxu0 %v1563
    %v2463 = vpop.f32.mrb[0].mxu0
    %v2464 = vadd.f32 %v1752, %v2463
    %v2465 = vpop.f32.mrb[0].mxu0
    %v2466 = vadd.f32 %v1756, %v2465
    %v2467 = vpop.f32.mrb[0].mxu0
    %v2468 = vadd.f32 %v1752, %v2467
    %v2469 = vpop.f32.mrb[0].mxu0
    %v2470 = vadd.f32 %v1756, %v2469
    %2471 = vmatprep.mubr.bf16.mxu0 %v1568
    %2472 = vmatmul.mubr.bf16.gmra.mrb[0].mxu0 %v1567
    %v2473 = vpop.f32.mrb[0].mxu0
    %v2474 = vadd.f32 %v1752, %v2473
    %v2475 = vpop.f32.mrb[0].mxu0
    %v2476 = vadd.f32 %v1756, %v2475
    %v2477 = vpop.f32.mrb[0].mxu0
    %v2478 = vadd.f32 %v1752, %v2477
    %v2479 = vpop.f32.mrb[0].mxu0
    %v2480 = vadd.f32 %v1756, %v2479
    %2481 = vmatprep.mubr.bf16.mxu0 %v1572
    %2482 = vmatmul.mubr.bf16.gmra.mrb[0].mxu0 %v1571
    %v2483 = vpop.f32.mrb[0].mxu0
    %v2484 = vadd.f32 %v1752, %v2483
    %v2485 = vpop.f32.mrb[0].mxu0
    %v2486 = vadd.f32 %v1756, %v2485
    %v2487 = vpop.f32.mrb[0].mxu0
    %v2488 = vadd.f32 %v1752, %v2487
    %v2489 = vpop.f32.mrb[0].mxu0
    %v2490 = vadd.f32 %v1756, %v2489
    %2491 = vmatprep.mubr.bf16.mxu0 %v1576
    %2492 = vmatmul.mubr.bf16.gmra.mrb[0].mxu0 %v1575
    %v2493 = vpop.f32.mrb[0].mxu0
    %v2494 = vadd.f32 %v1752, %v2493
    %v2495 = vpop.f32.mrb[0].mxu0
    %v2496 = vadd.f32 %v1756, %v2495
    %v2497 = vpop.f32.mrb[0].mxu0
    %v2498 = vadd.f32 %v1752, %v2497
    %v2499 = vpop.f32.mrb[0].mxu0
    %v2500 = vadd.f32 %v1756, %v2499
    %2501 = vmatprep.mubr.bf16.mxu0 %v1580
    %2502 = vmatmul.mubr.bf16.gmra.mrb[0].mxu0 %v1579
    %v2503 = vpop.f32.mrb[0].mxu0
    %v2504 = vadd.f32 %v1752, %v2503
    %v2505 = vpop.f32.mrb[0].mxu0
    %v2506 = vadd.f32 %v1756, %v2505
    %v2507 = vpop.f32.mrb[0].mxu0
    %v2508 = vadd.f32 %v1752, %v2507
    %v2509 = vpop.f32.mrb[0].mxu0
    %v2510 = vadd.f32 %v1756, %v2509
    %2511 = vmatprep.mubr.bf16.mxu0 %v1584
    %2512 = vmatmul.mubr.bf16.gmra.mrb[0].mxu0 %v1583
    %v2513 = vpop.f32.mrb[0].mxu0
    %v2514 = vadd.f32 %v1752, %v2513
    %v2515 = vpop.f32.mrb[0].mxu0
    %v2516 = vadd.f32 %v1756, %v2515
    %v2517 = vpop.f32.mrb[0].mxu0
    %v2518 = vadd.f32 %v1752, %v2517
    %v2519 = vpop.f32.mrb[0].mxu0
    %v2520 = vadd.f32 %v1756, %v2519
    %2521 = vmatprep.mubr.bf16.mxu0 %v1588
    %2522 = vmatmul.mubr.bf16.gmra.mrb[0].mxu0 %v1587
    %v2523 = vpop.f32.mrb[0].mxu0
    %v2524 = vadd.f32 %v1752, %v2523
    %v2525 = vpop.f32.mrb[0].mxu0
    %v2526 = vadd.f32 %v1756, %v2525
    %v2527 = vpop.f32.mrb[0].mxu0
    %v2528 = vadd.f32 %v1752, %v2527
    %v2529 = vpop.f32.mrb[0].mxu0
    %v2530 = vadd.f32 %v1756, %v2529
    %2531 = vmatprep.mubr.bf16.mxu0 %v1592
    %2532 = vmatmul.mubr.bf16.gmra.mrb[0].mxu0 %v1591
    %v2533 = vpop.f32.mrb[0].mxu0
    %v2534 = vadd.f32 %v1752, %v2533
    %v2535 = vpop.f32.mrb[0].mxu0
    %v2536 = vadd.f32 %v1756, %v2535
    %v2537 = vpop.f32.mrb[0].mxu0
    %v2538 = vadd.f32 %v1752, %v2537
    %v2539 = vpop.f32.mrb[0].mxu0
    %v2540 = vadd.f32 %v1756, %v2539
    %2541 = vmatprep.mubr.bf16.mxu0 %v1596
    %2542 = vmatmul.mubr.bf16.gmra.mrb[0].mxu0 %v1595
    %v2543 = vpop.f32.mrb[0].mxu0
    %v2544 = vadd.f32 %v1752, %v2543
    %v2545 = vpop.f32.mrb[0].mxu0
    %v2546 = vadd.f32 %v1756, %v2545
    %v2547 = vpop.f32.mrb[0].mxu0
    %v2548 = vadd.f32 %v1752, %v2547
    %v2549 = vpop.f32.mrb[0].mxu0
    %v2550 = vadd.f32 %v1756, %v2549
    %2551 = vmatprep.mubr.bf16.mxu0 %v1600
    %2552 = vmatmul.mubr.bf16.gmra.mrb[0].mxu0 %v1599
    %v2553 = vpop.f32.mrb[0].mxu0
    %v2554 = vadd.f32 %v1752, %v2553
    %v2555 = vpop.f32.mrb[0].mxu0
    %v2556 = vadd.f32 %v1756, %v2555
    %v2557 = vpop.f32.mrb[0].mxu0
    %v2558 = vadd.f32 %v1752, %v2557
    %v2559 = vpop.f32.mrb[0].mxu0
    %v2560 = vadd.f32 %v1756, %v2559
    %2561 = vmatprep.mubr.bf16.mxu0 %v1604
    %2562 = vmatmul.mubr.bf16.gmra.mrb[0].mxu0 %v1603
    %v2563 = vpop.f32.mrb[0].mxu0
    %v2564 = vadd.f32 %v1752, %v2563
    %v2565 = vpop.f32.mrb[0].mxu0
    %v2566 = vadd.f32 %v1756, %v2565
    %v2567 = vpop.f32.mrb[0].mxu0
    %v2568 = vadd.f32 %v1752, %v2567
    %v2569 = vpop.f32.mrb[0].mxu0
    %v2570 = vadd.f32 %v1756, %v2569
    %2571 = vmatprep.mubr.bf16.mxu0 %v1608
    %2572 = vmatmul.mubr.bf16.gmra.mrb[0].mxu0 %v1607
    %v2573 = vpop.f32.mrb[0].mxu0
    %v2574 = vadd.f32 %v1752, %v2573
    %v2575 = vpop.f32.mrb[0].mxu0
    %v2576 = vadd.f32 %v1756, %v2575
    %v2577 = vpop.f32.mrb[0].mxu0
    %v2578 = vadd.f32 %v1752, %v2577
    %v2579 = vpop.f32.mrb[0].mxu0
    %v2580 = vadd.f32 %v1756, %v2579
    %2581 = vmatprep.mubr.bf16.mxu0 %v1612
    %2582 = vmatmul.mubr.bf16.gmra.mrb[0].mxu0 %v1611
    %v2583 = vpop.f32.mrb[0].mxu0
    %v2584 = vadd.f32 %v1752, %v2583
    %v2585 = vpop.f32.mrb[0].mxu0
    %v2586 = vadd.f32 %v1756, %v2585
    %v2587 = vpop.f32.mrb[0].mxu0
    %v2588 = vadd.f32 %v1752, %v2587
    %v2589 = vpop.f32.mrb[0].mxu0
    %v2590 = vadd.f32 %v1756, %v2589
    %2591 = vmatprep.mubr.bf16.mxu0 %v1616
    %2592 = vmatmul.mubr.bf16.gmra.mrb[0].mxu0 %v1615
    %v2593 = vpop.f32.mrb[0].mxu0
    %v2594 = vadd.f32 %v1752, %v2593
    %v2595 = vpop.f32.mrb[0].mxu0
    %v2596 = vadd.f32 %v1756, %v2595
    %v2597 = vpop.f32.mrb[0].mxu0
    %v2598 = vadd.f32 %v1752, %v2597
    %v2599 = vpop.f32.mrb[0].mxu0
    %v2600 = vadd.f32 %v1756, %v2599
    %2601 = vdwg.mxu0
    %2602 = vmatprep.subr.bf16.mxu0 %v2218
    %2603 = vmatpush1.bf16.msra.mxu0 %v2217
    %2604 = vmatprep.subr.bf16.mxu0 %v2222
    %2605 = vmatpush1.bf16.msra.mxu0 %v2221
    %2606 = vmatprep.subr.bf16.mxu0 %v2226
    %2607 = vmatpush1.bf16.msra.mxu0 %v2225
    %2608 = vmatprep.subr.bf16.mxu0 %v2230
    %2609 = vmatpush1.bf16.msra.mxu0 %v2229
    %2610 = vmatprep.subr.bf16.mxu0 %v2234
    %2611 = vmatpush1.bf16.msra.mxu0 %v2233
    %2612 = vmatprep.subr.bf16.mxu0 %v2238
    %2613 = vmatpush1.bf16.msra.mxu0 %v2237
    %2614 = vmatprep.subr.bf16.mxu0 %v2242
    %2615 = vmatpush1.bf16.msra.mxu0 %v2241
    %2616 = vmatprep.subr.bf16.mxu0 %v2246
    %2617 = vmatpush1.bf16.msra.mxu0 %v2245
    %2618 = vmatprep.subr.bf16.mxu0 %v2250
    %2619 = vmatpush1.bf16.msra.mxu0 %v2249
    %2620 = vmatprep.subr.bf16.mxu0 %v2254
    %2621 = vmatpush1.bf16.msra.mxu0 %v2253
    %2622 = vmatprep.subr.bf16.mxu0 %v2258
    %2623 = vmatpush1.bf16.msra.mxu0 %v2257
    %2624 = vmatprep.subr.bf16.mxu0 %v2262
    %2625 = vmatpush1.bf16.msra.mxu0 %v2261
    %2626 = vmatprep.subr.bf16.mxu0 %v2266
    %2627 = vmatpush1.bf16.msra.mxu0 %v2265
    %2628 = vmatprep.subr.bf16.mxu0 %v2270
    %2629 = vmatpush1.bf16.msra.mxu0 %v2269
    %2630 = vmatprep.subr.bf16.mxu0 %v2274
    %2631 = vmatpush1.bf16.msra.mxu0 %v2273
    %2632 = vmatprep.subr.bf16.mxu0 %v2278
    %2633 = vmatpush1.bf16.msra.mxu0 %v2277
    %2634 = vmatprep.mubr.bf16.mxu0 %v1558
    %2635 = vmatmul.mubr.bf16.gmra.mrb[0].mxu0 %v1557
    %v2636 = vpop.f32.mrb[0].mxu0
    %v2637 = vadd.f32 %v2444, %v2636
    %v2638 = vpop.f32.mrb[0].mxu0
    %v2639 = vadd.f32 %v2446, %v2638
    %v2640 = vpop.f32.mrb[0].mxu0
    %v2641 = vadd.f32 %v2448, %v2640
    %v2642 = vpop.f32.mrb[0].mxu0
    %v2643 = vadd.f32 %v2450, %v2642
    %2644 = vmatprep.mubr.bf16.mxu0 %v1562
    %2645 = vmatmul.mubr.bf16.gmra.mrb[0].mxu0 %v1561
    %v2646 = vpop.f32.mrb[0].mxu0
    %v2647 = vadd.f32 %v2454, %v2646
    %v2648 = vpop.f32.mrb[0].mxu0
    %v2649 = vadd.f32 %v2456, %v2648
    %v2650 = vpop.f32.mrb[0].mxu0
    %v2651 = vadd.f32 %v2458, %v2650
    %v2652 = vpop.f32.mrb[0].mxu0
    %v2653 = vadd.f32 %v2460, %v2652
    %2654 = vmatprep.mubr.bf16.mxu0 %v1566
    %2655 = vmatmul.mubr.bf16.gmra.mrb[0].mxu0 %v1565
    %v2656 = vpop.f32.mrb[0].mxu0
    %v2657 = vadd.f32 %v2464, %v2656
    %v2658 = vpop.f32.mrb[0].mxu0
    %v2659 = vadd.f32 %v2466, %v2658
    %v2660 = vpop.f32.mrb[0].mxu0
    %v2661 = vadd.f32 %v2468, %v2660
    %v2662 = vpop.f32.mrb[0].mxu0
    %v2663 = vadd.f32 %v2470, %v2662
    %2664 = vmatprep.mubr.bf16.mxu0 %v1570
    %2665 = vmatmul.mubr.bf16.gmra.mrb[0].mxu0 %v1569
    %v2666 = vpop.f32.mrb[0].mxu0
    %v2667 = vadd.f32 %v2474, %v2666
    %v2668 = vpop.f32.mrb[0].mxu0
    %v2669 = vadd.f32 %v2476, %v2668
    %v2670 = vpop.f32.mrb[0].mxu0
    %v2671 = vadd.f32 %v2478, %v2670
    %v2672 = vpop.f32.mrb[0].mxu0
    %v2673 = vadd.f32 %v2480, %v2672
    %2674 = vmatprep.mubr.bf16.mxu0 %v1574
    %2675 = vmatmul.mubr.bf16.gmra.mrb[0].mxu0 %v1573
    %v2676 = vpop.f32.mrb[0].mxu0
    %v2677 = vadd.f32 %v2484, %v2676
    %v2678 = vpop.f32.mrb[0].mxu0
    %v2679 = vadd.f32 %v2486, %v2678
    %v2680 = vpop.f32.mrb[0].mxu0
    %v2681 = vadd.f32 %v2488, %v2680
    %v2682 = vpop.f32.mrb[0].mxu0
    %v2683 = vadd.f32 %v2490, %v2682
    %2684 = vmatprep.mubr.bf16.mxu0 %v1578
    %2685 = vmatmul.mubr.bf16.gmra.mrb[0].mxu0 %v1577
    %v2686 = vpop.f32.mrb[0].mxu0
    %v2687 = vadd.f32 %v2494, %v2686
    %v2688 = vpop.f32.mrb[0].mxu0
    %v2689 = vadd.f32 %v2496, %v2688
    %v2690 = vpop.f32.mrb[0].mxu0
    %v2691 = vadd.f32 %v2498, %v2690
    %v2692 = vpop.f32.mrb[0].mxu0
    %v2693 = vadd.f32 %v2500, %v2692
    %2694 = vmatprep.mubr.bf16.mxu0 %v1582
    %2695 = vmatmul.mubr.bf16.gmra.mrb[0].mxu0 %v1581
    %v2696 = vpop.f32.mrb[0].mxu0
    %v2697 = vadd.f32 %v2504, %v2696
    %v2698 = vpop.f32.mrb[0].mxu0
    %v2699 = vadd.f32 %v2506, %v2698
    %v2700 = vpop.f32.mrb[0].mxu0
    %v2701 = vadd.f32 %v2508, %v2700
    %v2702 = vpop.f32.mrb[0].mxu0
    %v2703 = vadd.f32 %v2510, %v2702
    %2704 = vmatprep.mubr.bf16.mxu0 %v1586
    %2705 = vmatmul.mubr.bf16.gmra.mrb[0].mxu0 %v1585
    %v2706 = vpop.f32.mrb[0].mxu0
    %v2707 = vadd.f32 %v2514, %v2706
    %v2708 = vpop.f32.mrb[0].mxu0
    %v2709 = vadd.f32 %v2516, %v2708
    %v2710 = vpop.f32.mrb[0].mxu0
    %v2711 = vadd.f32 %v2518, %v2710
    %v2712 = vpop.f32.mrb[0].mxu0
    %v2713 = vadd.f32 %v2520, %v2712
    %2714 = vmatprep.mubr.bf16.mxu0 %v1590
    %2715 = vmatmul.mubr.bf16.gmra.mrb[0].mxu0 %v1589
    %v2716 = vpop.f32.mrb[0].mxu0
    %v2717 = vadd.f32 %v2524, %v2716
    %v2718 = vpop.f32.mrb[0].mxu0
    %v2719 = vadd.f32 %v2526, %v2718
    %v2720 = vpop.f32.mrb[0].mxu0
    %v2721 = vadd.f32 %v2528, %v2720
    %v2722 = vpop.f32.mrb[0].mxu0
    %v2723 = vadd.f32 %v2530, %v2722
    %2724 = vmatprep.mubr.bf16.mxu0 %v1594
    %2725 = vmatmul.mubr.bf16.gmra.mrb[0].mxu0 %v1593
    %v2726 = vpop.f32.mrb[0].mxu0
    %v2727 = vadd.f32 %v2534, %v2726
    %v2728 = vpop.f32.mrb[0].mxu0
    %v2729 = vadd.f32 %v2536, %v2728
    %v2730 = vpop.f32.mrb[0].mxu0
    %v2731 = vadd.f32 %v2538, %v2730
    %v2732 = vpop.f32.mrb[0].mxu0
    %v2733 = vadd.f32 %v2540, %v2732
    %2734 = vmatprep.mubr.bf16.mxu0 %v1598
    %2735 = vmatmul.mubr.bf16.gmra.mrb[0].mxu0 %v1597
    %v2736 = vpop.f32.mrb[0].mxu0
    %v2737 = vadd.f32 %v2544, %v2736
    %v2738 = vpop.f32.mrb[0].mxu0
    %v2739 = vadd.f32 %v2546, %v2738
    %v2740 = vpop.f32.mrb[0].mxu0
    %v2741 = vadd.f32 %v2548, %v2740
    %v2742 = vpop.f32.mrb[0].mxu0
    %v2743 = vadd.f32 %v2550, %v2742
    %2744 = vmatprep.mubr.bf16.mxu0 %v1602
    %2745 = vmatmul.mubr.bf16.gmra.mrb[0].mxu0 %v1601
    %v2746 = vpop.f32.mrb[0].mxu0
    %v2747 = vadd.f32 %v2554, %v2746
    %v2748 = vpop.f32.mrb[0].mxu0
    %v2749 = vadd.f32 %v2556, %v2748
    %v2750 = vpop.f32.mrb[0].mxu0
    %v2751 = vadd.f32 %v2558, %v2750
    %v2752 = vpop.f32.mrb[0].mxu0
    %v2753 = vadd.f32 %v2560, %v2752
    %2754 = vmatprep.mubr.bf16.mxu0 %v1606
    %2755 = vmatmul.mubr.bf16.gmra.mrb[0].mxu0 %v1605
    %v2756 = vpop.f32.mrb[0].mxu0
    %v2757 = vadd.f32 %v2564, %v2756
    %v2758 = vpop.f32.mrb[0].mxu0
    %v2759 = vadd.f32 %v2566, %v2758
    %v2760 = vpop.f32.mrb[0].mxu0
    %v2761 = vadd.f32 %v2568, %v2760
    %v2762 = vpop.f32.mrb[0].mxu0
    %v2763 = vadd.f32 %v2570, %v2762
    %2764 = vmatprep.mubr.bf16.mxu0 %v1610
    %2765 = vmatmul.mubr.bf16.gmra.mrb[0].mxu0 %v1609
    %v2766 = vpop.f32.mrb[0].mxu0
    %v2767 = vadd.f32 %v2574, %v2766
    %v2768 = vpop.f32.mrb[0].mxu0
    %v2769 = vadd.f32 %v2576, %v2768
    %v2770 = vpop.f32.mrb[0].mxu0
    %v2771 = vadd.f32 %v2578, %v2770
    %v2772 = vpop.f32.mrb[0].mxu0
    %v2773 = vadd.f32 %v2580, %v2772
    %2774 = vmatprep.mubr.bf16.mxu0 %v1614
    %2775 = vmatmul.mubr.bf16.gmra.mrb[0].mxu0 %v1613
    %v2776 = vpop.f32.mrb[0].mxu0
    %v2777 = vadd.f32 %v2584, %v2776
    %v2778 = vpop.f32.mrb[0].mxu0
    %v2779 = vadd.f32 %v2586, %v2778
    %v2780 = vpop.f32.mrb[0].mxu0
    %v2781 = vadd.f32 %v2588, %v2780
    %v2782 = vpop.f32.mrb[0].mxu0
    %v2783 = vadd.f32 %v2590, %v2782
    %2784 = vmatprep.mubr.bf16.mxu0 %v1618
    %2785 = vmatmul.mubr.bf16.gmra.mrb[0].mxu0 %v1617
    %v2786 = vpop.f32.mrb[0].mxu0
    %v2787 = vadd.f32 %v2594, %v2786
    %v2788 = vpop.f32.mrb[0].mxu0
    %v2789 = vadd.f32 %v2596, %v2788
    %v2790 = vpop.f32.mrb[0].mxu0
    %v2791 = vadd.f32 %v2598, %v2790
    %v2792 = vpop.f32.mrb[0].mxu0
    %v2793 = vadd.f32 %v2600, %v2792
    %2794 = vdwg.mxu0
    %2795 = vmatprep.subr.bf16.mxu0 %v2156
    %2796 = vmatpush1.bf16.msra.mxu0 %v2155
    %2797 = vmatprep.subr.bf16.mxu0 %v2160
    %2798 = vmatpush1.bf16.msra.mxu0 %v2159
    %2799 = vmatprep.subr.bf16.mxu0 %v2164
    %2800 = vmatpush1.bf16.msra.mxu0 %v2163
    %2801 = vmatprep.subr.bf16.mxu0 %v2168
    %2802 = vmatpush1.bf16.msra.mxu0 %v2167
    %2803 = vmatprep.subr.bf16.mxu0 %v2172
    %2804 = vmatpush1.bf16.msra.mxu0 %v2171
    %2805 = vmatprep.subr.bf16.mxu0 %v2176
    %2806 = vmatpush1.bf16.msra.mxu0 %v2175
    %2807 = vmatprep.subr.bf16.mxu0 %v2180
    %2808 = vmatpush1.bf16.msra.mxu0 %v2179
    %2809 = vmatprep.subr.bf16.mxu0 %v2184
    %2810 = vmatpush1.bf16.msra.mxu0 %v2183
    %2811 = vmatprep.subr.bf16.mxu0 %v2188
    %2812 = vmatpush1.bf16.msra.mxu0 %v2187
    %2813 = vmatprep.subr.bf16.mxu0 %v2192
    %2814 = vmatpush1.bf16.msra.mxu0 %v2191
    %2815 = vmatprep.subr.bf16.mxu0 %v2196
    %2816 = vmatpush1.bf16.msra.mxu0 %v2195
    %2817 = vmatprep.subr.bf16.mxu0 %v2200
    %2818 = vmatpush1.bf16.msra.mxu0 %v2199
    %2819 = vmatprep.subr.bf16.mxu0 %v2204
    %2820 = vmatpush1.bf16.msra.mxu0 %v2203
    %2821 = vmatprep.subr.bf16.mxu0 %v2208
    %2822 = vmatpush1.bf16.msra.mxu0 %v2207
    %2823 = vmatprep.subr.bf16.mxu0 %v2212
    %2824 = vmatpush1.bf16.msra.mxu0 %v2211
    %2825 = vmatprep.subr.bf16.mxu0 %v2216
    %2826 = vmatpush1.bf16.msra.mxu0 %v2215
    %2827 = vmatprep.mubr.bf16.mxu0 %v1556
    %2828 = vmatmul.mubr.bf16.gmra.mrb[0].mxu0 %v1555
    %v2829 = vpop.f32.mrb[0].mxu0
    %v2830 = vadd.f32 %v1760, %v2829
    %v2831 = vpop.f32.mrb[0].mxu0
    %v2832 = vadd.f32 %v1764, %v2831
    %v2833 = vpop.f32.mrb[0].mxu0
    %v2834 = vadd.f32 %v1760, %v2833
    %v2835 = vpop.f32.mrb[0].mxu0
    %v2836 = vadd.f32 %v1764, %v2835
    %2837 = vmatprep.mubr.bf16.mxu0 %v1560
    %2838 = vmatmul.mubr.bf16.gmra.mrb[0].mxu0 %v1559
    %v2839 = vpop.f32.mrb[0].mxu0
    %v2840 = vadd.f32 %v1760, %v2839
    %v2841 = vpop.f32.mrb[0].mxu0
    %v2842 = vadd.f32 %v1764, %v2841
    %v2843 = vpop.f32.mrb[0].mxu0
    %v2844 = vadd.f32 %v1760, %v2843
    %v2845 = vpop.f32.mrb[0].mxu0
    %v2846 = vadd.f32 %v1764, %v2845
    %2847 = vmatprep.mubr.bf16.mxu0 %v1564
    %2848 = vmatmul.mubr.bf16.gmra.mrb[0].mxu0 %v1563
    %v2849 = vpop.f32.mrb[0].mxu0
    %v2850 = vadd.f32 %v1760, %v2849
    %v2851 = vpop.f32.mrb[0].mxu0
    %v2852 = vadd.f32 %v1764, %v2851
    %v2853 = vpop.f32.mrb[0].mxu0
    %v2854 = vadd.f32 %v1760, %v2853
    %v2855 = vpop.f32.mrb[0].mxu0
    %v2856 = vadd.f32 %v1764, %v2855
    %2857 = vmatprep.mubr.bf16.mxu0 %v1568
    %2858 = vmatmul.mubr.bf16.gmra.mrb[0].mxu0 %v1567
    %v2859 = vpop.f32.mrb[0].mxu0
    %v2860 = vadd.f32 %v1760, %v2859
    %v2861 = vpop.f32.mrb[0].mxu0
    %v2862 = vadd.f32 %v1764, %v2861
    %v2863 = vpop.f32.mrb[0].mxu0
    %v2864 = vadd.f32 %v1760, %v2863
    %v2865 = vpop.f32.mrb[0].mxu0
    %v2866 = vadd.f32 %v1764, %v2865
    %2867 = vmatprep.mubr.bf16.mxu0 %v1572
    %2868 = vmatmul.mubr.bf16.gmra.mrb[0].mxu0 %v1571
    %v2869 = vpop.f32.mrb[0].mxu0
    %v2870 = vadd.f32 %v1760, %v2869
    %v2871 = vpop.f32.mrb[0].mxu0
    %v2872 = vadd.f32 %v1764, %v2871
    %v2873 = vpop.f32.mrb[0].mxu0
    %v2874 = vadd.f32 %v1760, %v2873
    %v2875 = vpop.f32.mrb[0].mxu0
    %v2876 = vadd.f32 %v1764, %v2875
    %2877 = vmatprep.mubr.bf16.mxu0 %v1576
    %2878 = vmatmul.mubr.bf16.gmra.mrb[0].mxu0 %v1575
    %v2879 = vpop.f32.mrb[0].mxu0
    %v2880 = vadd.f32 %v1760, %v2879
    %v2881 = vpop.f32.mrb[0].mxu0
    %v2882 = vadd.f32 %v1764, %v2881
    %v2883 = vpop.f32.mrb[0].mxu0
    %v2884 = vadd.f32 %v1760, %v2883
    %v2885 = vpop.f32.mrb[0].mxu0
    %v2886 = vadd.f32 %v1764, %v2885
    %2887 = vmatprep.mubr.bf16.mxu0 %v1580
    %2888 = vmatmul.mubr.bf16.gmra.mrb[0].mxu0 %v1579
    %v2889 = vpop.f32.mrb[0].mxu0
    %v2890 = vadd.f32 %v1760, %v2889
    %v2891 = vpop.f32.mrb[0].mxu0
    %v2892 = vadd.f32 %v1764, %v2891
    %v2893 = vpop.f32.mrb[0].mxu0
    %v2894 = vadd.f32 %v1760, %v2893
    %v2895 = vpop.f32.mrb[0].mxu0
    %v2896 = vadd.f32 %v1764, %v2895
    %2897 = vmatprep.mubr.bf16.mxu0 %v1584
    %2898 = vmatmul.mubr.bf16.gmra.mrb[0].mxu0 %v1583
    %v2899 = vpop.f32.mrb[0].mxu0
    %v2900 = vadd.f32 %v1760, %v2899
    %v2901 = vpop.f32.mrb[0].mxu0
    %v2902 = vadd.f32 %v1764, %v2901
    %v2903 = vpop.f32.mrb[0].mxu0
    %v2904 = vadd.f32 %v1760, %v2903
    %v2905 = vpop.f32.mrb[0].mxu0
    %v2906 = vadd.f32 %v1764, %v2905
    %2907 = vmatprep.mubr.bf16.mxu0 %v1588
    %2908 = vmatmul.mubr.bf16.gmra.mrb[0].mxu0 %v1587
    %v2909 = vpop.f32.mrb[0].mxu0
    %v2910 = vadd.f32 %v1760, %v2909
    %v2911 = vpop.f32.mrb[0].mxu0
    %v2912 = vadd.f32 %v1764, %v2911
    %v2913 = vpop.f32.mrb[0].mxu0
    %v2914 = vadd.f32 %v1760, %v2913
    %v2915 = vpop.f32.mrb[0].mxu0
    %v2916 = vadd.f32 %v1764, %v2915
    %2917 = vmatprep.mubr.bf16.mxu0 %v1592
    %2918 = vmatmul.mubr.bf16.gmra.mrb[0].mxu0 %v1591
    %v2919 = vpop.f32.mrb[0].mxu0
    %v2920 = vadd.f32 %v1760, %v2919
    %v2921 = vpop.f32.mrb[0].mxu0
    %v2922 = vadd.f32 %v1764, %v2921
    %v2923 = vpop.f32.mrb[0].mxu0
    %v2924 = vadd.f32 %v1760, %v2923
    %v2925 = vpop.f32.mrb[0].mxu0
    %v2926 = vadd.f32 %v1764, %v2925
    %2927 = vmatprep.mubr.bf16.mxu0 %v1596
    %2928 = vmatmul.mubr.bf16.gmra.mrb[0].mxu0 %v1595
    %v2929 = vpop.f32.mrb[0].mxu0
    %v2930 = vadd.f32 %v1760, %v2929
    %v2931 = vpop.f32.mrb[0].mxu0
    %v2932 = vadd.f32 %v1764, %v2931
    %v2933 = vpop.f32.mrb[0].mxu0
    %v2934 = vadd.f32 %v1760, %v2933
    %v2935 = vpop.f32.mrb[0].mxu0
    %v2936 = vadd.f32 %v1764, %v2935
    %2937 = vmatprep.mubr.bf16.mxu0 %v1600
    %2938 = vmatmul.mubr.bf16.gmra.mrb[0].mxu0 %v1599
    %v2939 = vpop.f32.mrb[0].mxu0
    %v2940 = vadd.f32 %v1760, %v2939
    %v2941 = vpop.f32.mrb[0].mxu0
    %v2942 = vadd.f32 %v1764, %v2941
    %v2943 = vpop.f32.mrb[0].mxu0
    %v2944 = vadd.f32 %v1760, %v2943
    %v2945 = vpop.f32.mrb[0].mxu0
    %v2946 = vadd.f32 %v1764, %v2945
    %2947 = vmatprep.mubr.bf16.mxu0 %v1604
    %2948 = vmatmul.mubr.bf16.gmra.mrb[0].mxu0 %v1603
    %v2949 = vpop.f32.mrb[0].mxu0
    %v2950 = vadd.f32 %v1760, %v2949
    %v2951 = vpop.f32.mrb[0].mxu0
    %v2952 = vadd.f32 %v1764, %v2951
    %v2953 = vpop.f32.mrb[0].mxu0
    %v2954 = vadd.f32 %v1760, %v2953
    %v2955 = vpop.f32.mrb[0].mxu0
    %v2956 = vadd.f32 %v1764, %v2955
    %2957 = vmatprep.mubr.bf16.mxu0 %v1608
    %2958 = vmatmul.mubr.bf16.gmra.mrb[0].mxu0 %v1607
    %v2959 = vpop.f32.mrb[0].mxu0
    %v2960 = vadd.f32 %v1760, %v2959
    %v2961 = vpop.f32.mrb[0].mxu0
    %v2962 = vadd.f32 %v1764, %v2961
    %v2963 = vpop.f32.mrb[0].mxu0
    %v2964 = vadd.f32 %v1760, %v2963
    %v2965 = vpop.f32.mrb[0].mxu0
    %v2966 = vadd.f32 %v1764, %v2965
    %2967 = vmatprep.mubr.bf16.mxu0 %v1612
    %2968 = vmatmul.mubr.bf16.gmra.mrb[0].mxu0 %v1611
    %v2969 = vpop.f32.mrb[0].mxu0
    %v2970 = vadd.f32 %v1760, %v2969
    %v2971 = vpop.f32.mrb[0].mxu0
    %v2972 = vadd.f32 %v1764, %v2971
    %v2973 = vpop.f32.mrb[0].mxu0
    %v2974 = vadd.f32 %v1760, %v2973
    %v2975 = vpop.f32.mrb[0].mxu0
    %v2976 = vadd.f32 %v1764, %v2975
    %2977 = vmatprep.mubr.bf16.mxu0 %v1616
    %2978 = vmatmul.mubr.bf16.gmra.mrb[0].mxu0 %v1615
    %v2979 = vpop.f32.mrb[0].mxu0
    %v2980 = vadd.f32 %v1760, %v2979
    %v2981 = vpop.f32.mrb[0].mxu0
    %v2982 = vadd.f32 %v1764, %v2981
    %v2983 = vpop.f32.mrb[0].mxu0
    %v2984 = vadd.f32 %v1760, %v2983
    %v2985 = vpop.f32.mrb[0].mxu0
    %v2986 = vadd.f32 %v1764, %v2985
    %2987 = vdwg.mxu0
    %2988 = vmatprep.subr.bf16.mxu0 %v2220
    %2989 = vmatpush1.bf16.msra.mxu0 %v2219
    %2990 = vmatprep.subr.bf16.mxu0 %v2224
    %2991 = vmatpush1.bf16.msra.mxu0 %v2223
    %2992 = vmatprep.subr.bf16.mxu0 %v2228
    %2993 = vmatpush1.bf16.msra.mxu0 %v2227
    %2994 = vmatprep.subr.bf16.mxu0 %v2232
    %2995 = vmatpush1.bf16.msra.mxu0 %v2231
    %2996 = vmatprep.subr.bf16.mxu0 %v2236
    %2997 = vmatpush1.bf16.msra.mxu0 %v2235
    %2998 = vmatprep.subr.bf16.mxu0 %v2240
    %2999 = vmatpush1.bf16.msra.mxu0 %v2239
    %3000 = vmatprep.subr.bf16.mxu0 %v2244
    %3001 = vmatpush1.bf16.msra.mxu0 %v2243
    %3002 = vmatprep.subr.bf16.mxu0 %v2248
    %3003 = vmatpush1.bf16.msra.mxu0 %v2247
    %3004 = vmatprep.subr.bf16.mxu0 %v2252
    %3005 = vmatpush1.bf16.msra.mxu0 %v2251
    %3006 = vmatprep.subr.bf16.mxu0 %v2256
    %3007 = vmatpush1.bf16.msra.mxu0 %v2255
    %3008 = vmatprep.subr.bf16.mxu0 %v2260
    %3009 = vmatpush1.bf16.msra.mxu0 %v2259
    %3010 = vmatprep.subr.bf16.mxu0 %v2264
    %3011 = vmatpush1.bf16.msra.mxu0 %v2263
    %3012 = vmatprep.subr.bf16.mxu0 %v2268
    %3013 = vmatpush1.bf16.msra.mxu0 %v2267
    %3014 = vmatprep.subr.bf16.mxu0 %v2272
    %3015 = vmatpush1.bf16.msra.mxu0 %v2271
    %3016 = vmatprep.subr.bf16.mxu0 %v2276
    %3017 = vmatpush1.bf16.msra.mxu0 %v2275
    %3018 = vmatprep.subr.bf16.mxu0 %v2280
    %3019 = vmatpush1.bf16.msra.mxu0 %v2279
    %3020 = vmatprep.mubr.bf16.mxu0 %v1558
    %3021 = vmatmul.mubr.bf16.gmra.mrb[0].mxu0 %v1557
    %v3022 = vpop.f32.mrb[0].mxu0
    %v3023 = vadd.f32 %v2830, %v3022
    %v3024 = vpop.f32.mrb[0].mxu0
    %v3025 = vadd.f32 %v2832, %v3024
    %v3026 = vpop.f32.mrb[0].mxu0
    %v3027 = vadd.f32 %v2834, %v3026
    %v3028 = vpop.f32.mrb[0].mxu0
    %v3029 = vadd.f32 %v2836, %v3028
    %3030 = vmatprep.mubr.bf16.mxu0 %v1562
    %3031 = vmatmul.mubr.bf16.gmra.mrb[0].mxu0 %v1561
    %v3032 = vpop.f32.mrb[0].mxu0
    %v3033 = vadd.f32 %v2840, %v3032
    %v3034 = vpop.f32.mrb[0].mxu0
    %v3035 = vadd.f32 %v2842, %v3034
    %v3036 = vpop.f32.mrb[0].mxu0
    %v3037 = vadd.f32 %v2844, %v3036
    %v3038 = vpop.f32.mrb[0].mxu0
    %v3039 = vadd.f32 %v2846, %v3038
    %3040 = vmatprep.mubr.bf16.mxu0 %v1566
    %3041 = vmatmul.mubr.bf16.gmra.mrb[0].mxu0 %v1565
    %v3042 = vpop.f32.mrb[0].mxu0
    %v3043 = vadd.f32 %v2850, %v3042
    %v3044 = vpop.f32.mrb[0].mxu0
    %v3045 = vadd.f32 %v2852, %v3044
    %v3046 = vpop.f32.mrb[0].mxu0
    %v3047 = vadd.f32 %v2854, %v3046
    %v3048 = vpop.f32.mrb[0].mxu0
    %v3049 = vadd.f32 %v2856, %v3048
    %3050 = vmatprep.mubr.bf16.mxu0 %v1570
    %3051 = vmatmul.mubr.bf16.gmra.mrb[0].mxu0 %v1569
    %v3052 = vpop.f32.mrb[0].mxu0
    %v3053 = vadd.f32 %v2860, %v3052
    %v3054 = vpop.f32.mrb[0].mxu0
    %v3055 = vadd.f32 %v2862, %v3054
    %v3056 = vpop.f32.mrb[0].mxu0
    %v3057 = vadd.f32 %v2864, %v3056
    %v3058 = vpop.f32.mrb[0].mxu0
    %v3059 = vadd.f32 %v2866, %v3058
    %3060 = vmatprep.mubr.bf16.mxu0 %v1574
    %3061 = vmatmul.mubr.bf16.gmra.mrb[0].mxu0 %v1573
    %v3062 = vpop.f32.mrb[0].mxu0
    %v3063 = vadd.f32 %v2870, %v3062
    %v3064 = vpop.f32.mrb[0].mxu0
    %v3065 = vadd.f32 %v2872, %v3064
    %v3066 = vpop.f32.mrb[0].mxu0
    %v3067 = vadd.f32 %v2874, %v3066
    %v3068 = vpop.f32.mrb[0].mxu0
    %v3069 = vadd.f32 %v2876, %v3068
    %3070 = vmatprep.mubr.bf16.mxu0 %v1578
    %3071 = vmatmul.mubr.bf16.gmra.mrb[0].mxu0 %v1577
    %v3072 = vpop.f32.mrb[0].mxu0
    %v3073 = vadd.f32 %v2880, %v3072
    %v3074 = vpop.f32.mrb[0].mxu0
    %v3075 = vadd.f32 %v2882, %v3074
    %v3076 = vpop.f32.mrb[0].mxu0
    %v3077 = vadd.f32 %v2884, %v3076
    %v3078 = vpop.f32.mrb[0].mxu0
    %v3079 = vadd.f32 %v2886, %v3078
    %3080 = vmatprep.mubr.bf16.mxu0 %v1582
    %3081 = vmatmul.mubr.bf16.gmra.mrb[0].mxu0 %v1581
    %v3082 = vpop.f32.mrb[0].mxu0
    %v3083 = vadd.f32 %v2890, %v3082
    %v3084 = vpop.f32.mrb[0].mxu0
    %v3085 = vadd.f32 %v2892, %v3084
    %v3086 = vpop.f32.mrb[0].mxu0
    %v3087 = vadd.f32 %v2894, %v3086
    %v3088 = vpop.f32.mrb[0].mxu0
    %v3089 = vadd.f32 %v2896, %v3088
    %3090 = vmatprep.mubr.bf16.mxu0 %v1586
    %3091 = vmatmul.mubr.bf16.gmra.mrb[0].mxu0 %v1585
    %v3092 = vpop.f32.mrb[0].mxu0
    %v3093 = vadd.f32 %v2900, %v3092
    %v3094 = vpop.f32.mrb[0].mxu0
    %v3095 = vadd.f32 %v2902, %v3094
    %v3096 = vpop.f32.mrb[0].mxu0
    %v3097 = vadd.f32 %v2904, %v3096
    %v3098 = vpop.f32.mrb[0].mxu0
    %v3099 = vadd.f32 %v2906, %v3098
    %3100 = vmatprep.mubr.bf16.mxu0 %v1590
    %3101 = vmatmul.mubr.bf16.gmra.mrb[0].mxu0 %v1589
    %v3102 = vpop.f32.mrb[0].mxu0
    %v3103 = vadd.f32 %v2910, %v3102
    %v3104 = vpop.f32.mrb[0].mxu0
    %v3105 = vadd.f32 %v2912, %v3104
    %v3106 = vpop.f32.mrb[0].mxu0
    %v3107 = vadd.f32 %v2914, %v3106
    %v3108 = vpop.f32.mrb[0].mxu0
    %v3109 = vadd.f32 %v2916, %v3108
    %3110 = vmatprep.mubr.bf16.mxu0 %v1594
    %3111 = vmatmul.mubr.bf16.gmra.mrb[0].mxu0 %v1593
    %v3112 = vpop.f32.mrb[0].mxu0
    %v3113 = vadd.f32 %v2920, %v3112
    %v3114 = vpop.f32.mrb[0].mxu0
    %v3115 = vadd.f32 %v2922, %v3114
    %v3116 = vpop.f32.mrb[0].mxu0
    %v3117 = vadd.f32 %v2924, %v3116
    %v3118 = vpop.f32.mrb[0].mxu0
    %v3119 = vadd.f32 %v2926, %v3118
    %3120 = vmatprep.mubr.bf16.mxu0 %v1598
    %3121 = vmatmul.mubr.bf16.gmra.mrb[0].mxu0 %v1597
    %v3122 = vpop.f32.mrb[0].mxu0
    %v3123 = vadd.f32 %v2930, %v3122
    %v3124 = vpop.f32.mrb[0].mxu0
    %v3125 = vadd.f32 %v2932, %v3124
    %v3126 = vpop.f32.mrb[0].mxu0
    %v3127 = vadd.f32 %v2934, %v3126
    %v3128 = vpop.f32.mrb[0].mxu0
    %v3129 = vadd.f32 %v2936, %v3128
    %3130 = vmatprep.mubr.bf16.mxu0 %v1602
    %3131 = vmatmul.mubr.bf16.gmra.mrb[0].mxu0 %v1601
    %v3132 = vpop.f32.mrb[0].mxu0
    %v3133 = vadd.f32 %v2940, %v3132
    %v3134 = vpop.f32.mrb[0].mxu0
    %v3135 = vadd.f32 %v2942, %v3134
    %v3136 = vpop.f32.mrb[0].mxu0
    %v3137 = vadd.f32 %v2944, %v3136
    %v3138 = vpop.f32.mrb[0].mxu0
    %v3139 = vadd.f32 %v2946, %v3138
    %3140 = vmatprep.mubr.bf16.mxu0 %v1606
    %3141 = vmatmul.mubr.bf16.gmra.mrb[0].mxu0 %v1605
    %v3142 = vpop.f32.mrb[0].mxu0
    %v3143 = vadd.f32 %v2950, %v3142
    %v3144 = vpop.f32.mrb[0].mxu0
    %v3145 = vadd.f32 %v2952, %v3144
    %v3146 = vpop.f32.mrb[0].mxu0
    %v3147 = vadd.f32 %v2954, %v3146
    %v3148 = vpop.f32.mrb[0].mxu0
    %v3149 = vadd.f32 %v2956, %v3148
    %3150 = vmatprep.mubr.bf16.mxu0 %v1610
    %3151 = vmatmul.mubr.bf16.gmra.mrb[0].mxu0 %v1609
    %v3152 = vpop.f32.mrb[0].mxu0
    %v3153 = vadd.f32 %v2960, %v3152
    %v3154 = vpop.f32.mrb[0].mxu0
    %v3155 = vadd.f32 %v2962, %v3154
    %v3156 = vpop.f32.mrb[0].mxu0
    %v3157 = vadd.f32 %v2964, %v3156
    %v3158 = vpop.f32.mrb[0].mxu0
    %v3159 = vadd.f32 %v2966, %v3158
    %3160 = vmatprep.mubr.bf16.mxu0 %v1614
    %3161 = vmatmul.mubr.bf16.gmra.mrb[0].mxu0 %v1613
    %v3162 = vpop.f32.mrb[0].mxu0
    %v3163 = vadd.f32 %v2970, %v3162
    %v3164 = vpop.f32.mrb[0].mxu0
    %v3165 = vadd.f32 %v2972, %v3164
    %v3166 = vpop.f32.mrb[0].mxu0
    %v3167 = vadd.f32 %v2974, %v3166
    %v3168 = vpop.f32.mrb[0].mxu0
    %v3169 = vadd.f32 %v2976, %v3168
    %3170 = vmatprep.mubr.bf16.mxu0 %v1618
    %3171 = vmatmul.mubr.bf16.gmra.mrb[0].mxu0 %v1617
    %v3172 = vpop.f32.mrb[0].mxu0
    %v3173 = vadd.f32 %v2980, %v3172
    %v3174 = vpop.f32.mrb[0].mxu0
    %v3175 = vadd.f32 %v2982, %v3174
    %v3176 = vpop.f32.mrb[0].mxu0
    %v3177 = vadd.f32 %v2984, %v3176
    %v3178 = vpop.f32.mrb[0].mxu0
    %v3179 = vadd.f32 %v2986, %v3178
    %3180 = vdwg.mxu0
    %v3181 = vmul.f32 %v2637, 0.5
    %v3182 = vmul.f32 %v2639, 0.5
    %v3183 = vmul.f32 %v3023, 0.5
    %v3184 = vmul.f32 %v3025, 0.5
    %v3185 = vmul.f32 %v2641, 0.5
    %v3186 = vmul.f32 %v2643, 0.5
    %v3187 = vmul.f32 %v3027, 0.5
    %v3188 = vmul.f32 %v3029, 0.5
    %v3189 = vmul.f32 %v2647, 0.5
    %v3190 = vmul.f32 %v2649, 0.5
    %v3191 = vmul.f32 %v3033, 0.5
    %v3192 = vmul.f32 %v3035, 0.5
    %v3193 = vmul.f32 %v2651, 0.5
    %v3194 = vmul.f32 %v2653, 0.5
    %v3195 = vmul.f32 %v3037, 0.5
    %v3196 = vmul.f32 %v3039, 0.5
    %v3197 = vmul.f32 %v2657, 0.5
    %v3198 = vmul.f32 %v2659, 0.5
    %v3199 = vmul.f32 %v3043, 0.5
    %v3200 = vmul.f32 %v3045, 0.5
    %v3201 = vmul.f32 %v2661, 0.5
    %v3202 = vmul.f32 %v2663, 0.5
    %v3203 = vmul.f32 %v3047, 0.5
    %v3204 = vmul.f32 %v3049, 0.5
    %v3205 = vmul.f32 %v2667, 0.5
    %v3206 = vmul.f32 %v2669, 0.5
    %v3207 = vmul.f32 %v3053, 0.5
    %v3208 = vmul.f32 %v3055, 0.5
    %v3209 = vmul.f32 %v2671, 0.5
    %v3210 = vmul.f32 %v2673, 0.5
    %v3211 = vmul.f32 %v3057, 0.5
    %v3212 = vmul.f32 %v3059, 0.5
    %v3213 = vmul.f32 %v2677, 0.5
    %v3214 = vmul.f32 %v2679, 0.5
    %v3215 = vmul.f32 %v3063, 0.5
    %v3216 = vmul.f32 %v3065, 0.5
    %v3217 = vmul.f32 %v2681, 0.5
    %v3218 = vmul.f32 %v2683, 0.5
    %v3219 = vmul.f32 %v3067, 0.5
    %v3220 = vmul.f32 %v3069, 0.5
    %v3221 = vmul.f32 %v2687, 0.5
    %v3222 = vmul.f32 %v2689, 0.5
    %v3223 = vmul.f32 %v3073, 0.5
    %v3224 = vmul.f32 %v3075, 0.5
    %v3225 = vmul.f32 %v2691, 0.5
    %v3226 = vmul.f32 %v2693, 0.5
    %v3227 = vmul.f32 %v3077, 0.5
    %v3228 = vmul.f32 %v3079, 0.5
    %v3229 = vmul.f32 %v2697, 0.5
    %v3230 = vmul.f32 %v2699, 0.5
    %v3231 = vmul.f32 %v3083, 0.5
    %v3232 = vmul.f32 %v3085, 0.5
    %v3233 = vmul.f32 %v2701, 0.5
    %v3234 = vmul.f32 %v2703, 0.5
    %v3235 = vmul.f32 %v3087, 0.5
    %v3236 = vmul.f32 %v3089, 0.5
    %v3237 = vmul.f32 %v2707, 0.5
    %v3238 = vmul.f32 %v2709, 0.5
    %v3239 = vmul.f32 %v3093, 0.5
    %v3240 = vmul.f32 %v3095, 0.5
    %v3241 = vmul.f32 %v2711, 0.5
    %v3242 = vmul.f32 %v2713, 0.5
    %v3243 = vmul.f32 %v3097, 0.5
    %v3244 = vmul.f32 %v3099, 0.5
    %v3245 = vmul.f32 %v2717, 0.5
    %v3246 = vmul.f32 %v2719, 0.5
    %v3247 = vmul.f32 %v3103, 0.5
    %v3248 = vmul.f32 %v3105, 0.5
    %v3249 = vmul.f32 %v2721, 0.5
    %v3250 = vmul.f32 %v2723, 0.5
    %v3251 = vmul.f32 %v3107, 0.5
    %v3252 = vmul.f32 %v3109, 0.5
    %v3253 = vmul.f32 %v2727, 0.5
    %v3254 = vmul.f32 %v2729, 0.5
    %v3255 = vmul.f32 %v3113, 0.5
    %v3256 = vmul.f32 %v3115, 0.5
    %v3257 = vmul.f32 %v2731, 0.5
    %v3258 = vmul.f32 %v2733, 0.5
    %v3259 = vmul.f32 %v3117, 0.5
    %v3260 = vmul.f32 %v3119, 0.5
    %v3261 = vmul.f32 %v2737, 0.5
    %v3262 = vmul.f32 %v2739, 0.5
    %v3263 = vmul.f32 %v3123, 0.5
    %v3264 = vmul.f32 %v3125, 0.5
    %v3265 = vmul.f32 %v2741, 0.5
    %v3266 = vmul.f32 %v2743, 0.5
    %v3267 = vmul.f32 %v3127, 0.5
    %v3268 = vmul.f32 %v3129, 0.5
    %v3269 = vmul.f32 %v2747, 0.5
    %v3270 = vmul.f32 %v2749, 0.5
    %v3271 = vmul.f32 %v3133, 0.5
    %v3272 = vmul.f32 %v3135, 0.5
    %v3273 = vmul.f32 %v2751, 0.5
    %v3274 = vmul.f32 %v2753, 0.5
    %v3275 = vmul.f32 %v3137, 0.5
    %v3276 = vmul.f32 %v3139, 0.5
    %v3277 = vmul.f32 %v2757, 0.5
    %v3278 = vmul.f32 %v2759, 0.5
    %v3279 = vmul.f32 %v3143, 0.5
    %v3280 = vmul.f32 %v3145, 0.5
    %v3281 = vmul.f32 %v2761, 0.5
    %v3282 = vmul.f32 %v2763, 0.5
    %v3283 = vmul.f32 %v3147, 0.5
    %v3284 = vmul.f32 %v3149, 0.5
    %v3285 = vmul.f32 %v2767, 0.5
    %v3286 = vmul.f32 %v2769, 0.5
    %v3287 = vmul.f32 %v3153, 0.5
    %v3288 = vmul.f32 %v3155, 0.5
    %v3289 = vmul.f32 %v2771, 0.5
    %v3290 = vmul.f32 %v2773, 0.5
    %v3291 = vmul.f32 %v3157, 0.5
    %v3292 = vmul.f32 %v3159, 0.5
    %v3293 = vmul.f32 %v2777, 0.5
    %v3294 = vmul.f32 %v2779, 0.5
    %v3295 = vmul.f32 %v3163, 0.5
    %v3296 = vmul.f32 %v3165, 0.5
    %v3297 = vmul.f32 %v2781, 0.5
    %v3298 = vmul.f32 %v2783, 0.5
    %v3299 = vmul.f32 %v3167, 0.5
    %v3300 = vmul.f32 %v3169, 0.5
    %v3301 = vmul.f32 %v2787, 0.5
    %v3302 = vmul.f32 %v2789, 0.5
    %v3303 = vmul.f32 %v3173, 0.5
    %v3304 = vmul.f32 %v3175, 0.5
    %v3305 = vmul.f32 %v2791, 0.5
    %v3306 = vmul.f32 %v2793, 0.5
    %v3307 = vmul.f32 %v3177, 0.5
    %v3308 = vmul.f32 %v3179, 0.5
    %v3309 = vmul.f32 %v2637, 0.70710677
    %v3310 = vmul.f32 %v2639, 0.70710677
    %v3311 = vmul.f32 %v3023, 0.70710677
    %v3312 = vmul.f32 %v3025, 0.70710677
    %v3313 = vmul.f32 %v2641, 0.70710677
    %v3314 = vmul.f32 %v2643, 0.70710677
    %v3315 = vmul.f32 %v3027, 0.70710677
    %v3316 = vmul.f32 %v3029, 0.70710677
    %v3317 = vmul.f32 %v2647, 0.70710677
    %v3318 = vmul.f32 %v2649, 0.70710677
    %v3319 = vmul.f32 %v3033, 0.70710677
    %v3320 = vmul.f32 %v3035, 0.70710677
    %v3321 = vmul.f32 %v2651, 0.70710677
    %v3322 = vmul.f32 %v2653, 0.70710677
    %v3323 = vmul.f32 %v3037, 0.70710677
    %v3324 = vmul.f32 %v3039, 0.70710677
    %v3325 = vmul.f32 %v2657, 0.70710677
    %v3326 = vmul.f32 %v2659, 0.70710677
    %v3327 = vmul.f32 %v3043, 0.70710677
    %v3328 = vmul.f32 %v3045, 0.70710677
    %v3329 = vmul.f32 %v2661, 0.70710677
    %v3330 = vmul.f32 %v2663, 0.70710677
    %v3331 = vmul.f32 %v3047, 0.70710677
    %v3332 = vmul.f32 %v3049, 0.70710677
    %v3333 = vmul.f32 %v2667, 0.70710677
    %v3334 = vmul.f32 %v2669, 0.70710677
    %v3335 = vmul.f32 %v3053, 0.70710677
    %v3336 = vmul.f32 %v3055, 0.70710677
    %v3337 = vmul.f32 %v2671, 0.70710677
    %v3338 = vmul.f32 %v2673, 0.70710677
    %v3339 = vmul.f32 %v3057, 0.70710677
    %v3340 = vmul.f32 %v3059, 0.70710677
    %v3341 = vmul.f32 %v2677, 0.70710677
    %v3342 = vmul.f32 %v2679, 0.70710677
    %v3343 = vmul.f32 %v3063, 0.70710677
    %v3344 = vmul.f32 %v3065, 0.70710677
    %v3345 = vmul.f32 %v2681, 0.70710677
    %v3346 = vmul.f32 %v2683, 0.70710677
    %v3347 = vmul.f32 %v3067, 0.70710677
    %v3348 = vmul.f32 %v3069, 0.70710677
    %v3349 = vmul.f32 %v2687, 0.70710677
    %v3350 = vmul.f32 %v2689, 0.70710677
    %v3351 = vmul.f32 %v3073, 0.70710677
    %v3352 = vmul.f32 %v3075, 0.70710677
    %v3353 = vmul.f32 %v2691, 0.70710677
    %v3354 = vmul.f32 %v2693, 0.70710677
    %v3355 = vmul.f32 %v3077, 0.70710677
    %v3356 = vmul.f32 %v3079, 0.70710677
    %v3357 = vmul.f32 %v2697, 0.70710677
    %v3358 = vmul.f32 %v2699, 0.70710677
    %v3359 = vmul.f32 %v3083, 0.70710677
    %v3360 = vmul.f32 %v3085, 0.70710677
    %v3361 = vmul.f32 %v2701, 0.70710677
    %v3362 = vmul.f32 %v2703, 0.70710677
    %v3363 = vmul.f32 %v3087, 0.70710677
    %v3364 = vmul.f32 %v3089, 0.70710677
    %v3365 = vmul.f32 %v2707, 0.70710677
    %v3366 = vmul.f32 %v2709, 0.70710677
    %v3367 = vmul.f32 %v3093, 0.70710677
    %v3368 = vmul.f32 %v3095, 0.70710677
    %v3369 = vmul.f32 %v2711, 0.70710677
    %v3370 = vmul.f32 %v2713, 0.70710677
    %v3371 = vmul.f32 %v3097, 0.70710677
    %v3372 = vmul.f32 %v3099, 0.70710677
    %v3373 = vmul.f32 %v2717, 0.70710677
    %v3374 = vmul.f32 %v2719, 0.70710677
    %v3375 = vmul.f32 %v3103, 0.70710677
    %v3376 = vmul.f32 %v3105, 0.70710677
    %v3377 = vmul.f32 %v2721, 0.70710677
    %v3378 = vmul.f32 %v2723, 0.70710677
    %v3379 = vmul.f32 %v3107, 0.70710677
    %v3380 = vmul.f32 %v3109, 0.70710677
    %v3381 = vmul.f32 %v2727, 0.70710677
    %v3382 = vmul.f32 %v2729, 0.70710677
    %v3383 = vmul.f32 %v3113, 0.70710677
    %v3384 = vmul.f32 %v3115, 0.70710677
    %v3385 = vmul.f32 %v2731, 0.70710677
    %v3386 = vmul.f32 %v2733, 0.70710677
    %v3387 = vmul.f32 %v3117, 0.70710677
    %v3388 = vmul.f32 %v3119, 0.70710677
    %v3389 = vmul.f32 %v2737, 0.70710677
    %v3390 = vmul.f32 %v2739, 0.70710677
    %v3391 = vmul.f32 %v3123, 0.70710677
    %v3392 = vmul.f32 %v3125, 0.70710677
    %v3393 = vmul.f32 %v2741, 0.70710677
    %v3394 = vmul.f32 %v2743, 0.70710677
    %v3395 = vmul.f32 %v3127, 0.70710677
    %v3396 = vmul.f32 %v3129, 0.70710677
    %v3397 = vmul.f32 %v2747, 0.70710677
    %v3398 = vmul.f32 %v2749, 0.70710677
    %v3399 = vmul.f32 %v3133, 0.70710677
    %v3400 = vmul.f32 %v3135, 0.70710677
    %v3401 = vmul.f32 %v2751, 0.70710677
    %v3402 = vmul.f32 %v2753, 0.70710677
    %v3403 = vmul.f32 %v3137, 0.70710677
    %v3404 = vmul.f32 %v3139, 0.70710677
    %v3405 = vmul.f32 %v2757, 0.70710677
    %v3406 = vmul.f32 %v2759, 0.70710677
    %v3407 = vmul.f32 %v3143, 0.70710677
    %v3408 = vmul.f32 %v3145, 0.70710677
    %v3409 = vmul.f32 %v2761, 0.70710677
    %v3410 = vmul.f32 %v2763, 0.70710677
    %v3411 = vmul.f32 %v3147, 0.70710677
    %v3412 = vmul.f32 %v3149, 0.70710677
    %v3413 = vmul.f32 %v2767, 0.70710677
    %v3414 = vmul.f32 %v2769, 0.70710677
    %v3415 = vmul.f32 %v3153, 0.70710677
    %v3416 = vmul.f32 %v3155, 0.70710677
    %v3417 = vmul.f32 %v2771, 0.70710677
    %v3418 = vmul.f32 %v2773, 0.70710677
    %v3419 = vmul.f32 %v3157, 0.70710677
    %v3420 = vmul.f32 %v3159, 0.70710677
    %v3421 = vmul.f32 %v2777, 0.70710677
    %v3422 = vmul.f32 %v2779, 0.70710677
    %v3423 = vmul.f32 %v3163, 0.70710677
    %v3424 = vmul.f32 %v3165, 0.70710677
    %v3425 = vmul.f32 %v2781, 0.70710677
    %v3426 = vmul.f32 %v2783, 0.70710677
    %v3427 = vmul.f32 %v3167, 0.70710677
    %v3428 = vmul.f32 %v3169, 0.70710677
    %v3429 = vmul.f32 %v2787, 0.70710677
    %v3430 = vmul.f32 %v2789, 0.70710677
    %v3431 = vmul.f32 %v3173, 0.70710677
    %v3432 = vmul.f32 %v3175, 0.70710677
    %v3433 = vmul.f32 %v2791, 0.70710677
    %v3434 = vmul.f32 %v2793, 0.70710677
    %v3435 = vmul.f32 %v3177, 0.70710677
    %v3436 = vmul.f32 %v3179, 0.70710677
    %v3437 = verf.f32.pop %v3309
    %v3438 = verf.f32.pop %v3310
    %v3439 = verf.f32.pop %v3311
    %v3440 = verf.f32.pop %v3312
    %v3441 = verf.f32.pop %v3313
    %v3442 = verf.f32.pop %v3314
    %v3443 = verf.f32.pop %v3315
    %v3444 = verf.f32.pop %v3316
    %v3445 = verf.f32.pop %v3317
    %v3446 = verf.f32.pop %v3318
    %v3447 = verf.f32.pop %v3319
    %v3448 = verf.f32.pop %v3320
    %v3449 = verf.f32.pop %v3321
    %v3450 = verf.f32.pop %v3322
    %v3451 = verf.f32.pop %v3323
    %v3452 = verf.f32.pop %v3324
    %v3453 = verf.f32.pop %v3325
    %v3454 = verf.f32.pop %v3326
    %v3455 = verf.f32.pop %v3327
    %v3456 = verf.f32.pop %v3328
    %v3457 = verf.f32.pop %v3329
    %v3458 = verf.f32.pop %v3330
    %v3459 = verf.f32.pop %v3331
    %v3460 = verf.f32.pop %v3332
    %v3461 = verf.f32.pop %v3333
    %v3462 = verf.f32.pop %v3334
    %v3463 = verf.f32.pop %v3335
    %v3464 = verf.f32.pop %v3336
    %v3465 = verf.f32.pop %v3337
    %v3466 = verf.f32.pop %v3338
    %v3467 = verf.f32.pop %v3339
    %v3468 = verf.f32.pop %v3340
    %v3469 = verf.f32.pop %v3341
    %v3470 = verf.f32.pop %v3342
    %v3471 = verf.f32.pop %v3343
    %v3472 = verf.f32.pop %v3344
    %v3473 = verf.f32.pop %v3345
    %v3474 = verf.f32.pop %v3346
    %v3475 = verf.f32.pop %v3347
    %v3476 = verf.f32.pop %v3348
    %v3477 = verf.f32.pop %v3349
    %v3478 = verf.f32.pop %v3350
    %v3479 = verf.f32.pop %v3351
    %v3480 = verf.f32.pop %v3352
    %v3481 = verf.f32.pop %v3353
    %v3482 = verf.f32.pop %v3354
    %v3483 = verf.f32.pop %v3355
    %v3484 = verf.f32.pop %v3356
    %v3485 = verf.f32.pop %v3357
    %v3486 = verf.f32.pop %v3358
    %v3487 = verf.f32.pop %v3359
    %v3488 = verf.f32.pop %v3360
    %v3489 = verf.f32.pop %v3361
    %v3490 = verf.f32.pop %v3362
    %v3491 = verf.f32.pop %v3363
    %v3492 = verf.f32.pop %v3364
    %v3493 = verf.f32.pop %v3365
    %v3494 = verf.f32.pop %v3366
    %v3495 = verf.f32.pop %v3367
    %v3496 = verf.f32.pop %v3368
    %v3497 = verf.f32.pop %v3369
    %v3498 = verf.f32.pop %v3370
    %v3499 = verf.f32.pop %v3371
    %v3500 = verf.f32.pop %v3372
    %v3501 = verf.f32.pop %v3373
    %v3502 = verf.f32.pop %v3374
    %v3503 = verf.f32.pop %v3375
    %v3504 = verf.f32.pop %v3376
    %v3505 = verf.f32.pop %v3377
    %v3506 = verf.f32.pop %v3378
    %v3507 = verf.f32.pop %v3379
    %v3508 = verf.f32.pop %v3380
    %v3509 = verf.f32.pop %v3381
    %v3510 = verf.f32.pop %v3382
    %v3511 = verf.f32.pop %v3383
    %v3512 = verf.f32.pop %v3384
    %v3513 = verf.f32.pop %v3385
    %v3514 = verf.f32.pop %v3386
    %v3515 = verf.f32.pop %v3387
    %v3516 = verf.f32.pop %v3388
    %v3517 = verf.f32.pop %v3389
    %v3518 = verf.f32.pop %v3390
    %v3519 = verf.f32.pop %v3391
    %v3520 = verf.f32.pop %v3392
    %v3521 = verf.f32.pop %v3393
    %v3522 = verf.f32.pop %v3394
    %v3523 = verf.f32.pop %v3395
    %v3524 = verf.f32.pop %v3396
    %v3525 = verf.f32.pop %v3397
    %v3526 = verf.f32.pop %v3398
    %v3527 = verf.f32.pop %v3399
    %v3528 = verf.f32.pop %v3400
    %v3529 = verf.f32.pop %v3401
    %v3530 = verf.f32.pop %v3402
    %v3531 = verf.f32.pop %v3403
    %v3532 = verf.f32.pop %v3404
    %v3533 = verf.f32.pop %v3405
    %v3534 = verf.f32.pop %v3406
    %v3535 = verf.f32.pop %v3407
    %v3536 = verf.f32.pop %v3408
    %v3537 = verf.f32.pop %v3409
    %v3538 = verf.f32.pop %v3410
    %v3539 = verf.f32.pop %v3411
    %v3540 = verf.f32.pop %v3412
    %v3541 = verf.f32.pop %v3413
    %v3542 = verf.f32.pop %v3414
    %v3543 = verf.f32.pop %v3415
    %v3544 = verf.f32.pop %v3416
    %v3545 = verf.f32.pop %v3417
    %v3546 = verf.f32.pop %v3418
    %v3547 = verf.f32.pop %v3419
    %v3548 = verf.f32.pop %v3420
    %v3549 = verf.f32.pop %v3421
    %v3550 = verf.f32.pop %v3422
    %v3551 = verf.f32.pop %v3423
    %v3552 = verf.f32.pop %v3424
    %v3553 = verf.f32.pop %v3425
    %v3554 = verf.f32.pop %v3426
    %v3555 = verf.f32.pop %v3427
    %v3556 = verf.f32.pop %v3428
    %v3557 = verf.f32.pop %v3429
    %v3558 = verf.f32.pop %v3430
    %v3559 = verf.f32.pop %v3431
    %v3560 = verf.f32.pop %v3432
    %v3561 = verf.f32.pop %v3433
    %v3562 = verf.f32.pop %v3434
    %v3563 = verf.f32.pop %v3435
    %v3564 = verf.f32.pop %v3436
    %v3565 = vadd.f32 %v3437, 1.0
    %v3566 = vadd.f32 %v3438, 1.0
    %v3567 = vadd.f32 %v3439, 1.0
    %v3568 = vadd.f32 %v3440, 1.0
    %v3569 = vadd.f32 %v3441, 1.0
    %v3570 = vadd.f32 %v3442, 1.0
    %v3571 = vadd.f32 %v3443, 1.0
    %v3572 = vadd.f32 %v3444, 1.0
    %v3573 = vadd.f32 %v3445, 1.0
    %v3574 = vadd.f32 %v3446, 1.0
    %v3575 = vadd.f32 %v3447, 1.0
    %v3576 = vadd.f32 %v3448, 1.0
    %v3577 = vadd.f32 %v3449, 1.0
    %v3578 = vadd.f32 %v3450, 1.0
    %v3579 = vadd.f32 %v3451, 1.0
    %v3580 = vadd.f32 %v3452, 1.0
    %v3581 = vadd.f32 %v3453, 1.0
    %v3582 = vadd.f32 %v3454, 1.0
    %v3583 = vadd.f32 %v3455, 1.0
    %v3584 = vadd.f32 %v3456, 1.0
    %v3585 = vadd.f32 %v3457, 1.0
    %v3586 = vadd.f32 %v3458, 1.0
    %v3587 = vadd.f32 %v3459, 1.0
    %v3588 = vadd.f32 %v3460, 1.0
    %v3589 = vadd.f32 %v3461, 1.0
    %v3590 = vadd.f32 %v3462, 1.0
    %v3591 = vadd.f32 %v3463, 1.0
    %v3592 = vadd.f32 %v3464, 1.0
    %v3593 = vadd.f32 %v3465, 1.0
    %v3594 = vadd.f32 %v3466, 1.0
    %v3595 = vadd.f32 %v3467, 1.0
    %v3596 = vadd.f32 %v3468, 1.0
    %v3597 = vadd.f32 %v3469, 1.0
    %v3598 = vadd.f32 %v3470, 1.0
    %v3599 = vadd.f32 %v3471, 1.0
    %v3600 = vadd.f32 %v3472, 1.0
    %v3601 = vadd.f32 %v3473, 1.0
    %v3602 = vadd.f32 %v3474, 1.0
    %v3603 = vadd.f32 %v3475, 1.0
    %v3604 = vadd.f32 %v3476, 1.0
    %v3605 = vadd.f32 %v3477, 1.0
    %v3606 = vadd.f32 %v3478, 1.0
    %v3607 = vadd.f32 %v3479, 1.0
    %v3608 = vadd.f32 %v3480, 1.0
    %v3609 = vadd.f32 %v3481, 1.0
    %v3610 = vadd.f32 %v3482, 1.0
    %v3611 = vadd.f32 %v3483, 1.0
    %v3612 = vadd.f32 %v3484, 1.0
    %v3613 = vadd.f32 %v3485, 1.0
    %v3614 = vadd.f32 %v3486, 1.0
    %v3615 = vadd.f32 %v3487, 1.0
    %v3616 = vadd.f32 %v3488, 1.0
    %v3617 = vadd.f32 %v3489, 1.0
    %v3618 = vadd.f32 %v3490, 1.0
    %v3619 = vadd.f32 %v3491, 1.0
    %v3620 = vadd.f32 %v3492, 1.0
    %v3621 = vadd.f32 %v3493, 1.0
    %v3622 = vadd.f32 %v3494, 1.0
    %v3623 = vadd.f32 %v3495, 1.0
    %v3624 = vadd.f32 %v3496, 1.0
    %v3625 = vadd.f32 %v3497, 1.0
    %v3626 = vadd.f32 %v3498, 1.0
    %v3627 = vadd.f32 %v3499, 1.0
    %v3628 = vadd.f32 %v3500, 1.0
    %v3629 = vadd.f32 %v3501, 1.0
    %v3630 = vadd.f32 %v3502, 1.0
    %v3631 = vadd.f32 %v3503, 1.0
    %v3632 = vadd.f32 %v3504, 1.0
    %v3633 = vadd.f32 %v3505, 1.0
    %v3634 = vadd.f32 %v3506, 1.0
    %v3635 = vadd.f32 %v3507, 1.0
    %v3636 = vadd.f32 %v3508, 1.0
    %v3637 = vadd.f32 %v3509, 1.0
    %v3638 = vadd.f32 %v3510, 1.0
    %v3639 = vadd.f32 %v3511, 1.0
    %v3640 = vadd.f32 %v3512, 1.0
    %v3641 = vadd.f32 %v3513, 1.0
    %v3642 = vadd.f32 %v3514, 1.0
    %v3643 = vadd.f32 %v3515, 1.0
    %v3644 = vadd.f32 %v3516, 1.0
    %v3645 = vadd.f32 %v3517, 1.0
    %v3646 = vadd.f32 %v3518, 1.0
    %v3647 = vadd.f32 %v3519, 1.0
    %v3648 = vadd.f32 %v3520, 1.0
    %v3649 = vadd.f32 %v3521, 1.0
    %v3650 = vadd.f32 %v3522, 1.0
    %v3651 = vadd.f32 %v3523, 1.0
    %v3652 = vadd.f32 %v3524, 1.0
    %v3653 = vadd.f32 %v3525, 1.0
    %v3654 = vadd.f32 %v3526, 1.0
    %v3655 = vadd.f32 %v3527, 1.0
    %v3656 = vadd.f32 %v3528, 1.0
    %v3657 = vadd.f32 %v3529, 1.0
    %v3658 = vadd.f32 %v3530, 1.0
    %v3659 = vadd.f32 %v3531, 1.0
    %v3660 = vadd.f32 %v3532, 1.0
    %v3661 = vadd.f32 %v3533, 1.0
    %v3662 = vadd.f32 %v3534, 1.0
    %v3663 = vadd.f32 %v3535, 1.0
    %v3664 = vadd.f32 %v3536, 1.0
    %v3665 = vadd.f32 %v3537, 1.0
    %v3666 = vadd.f32 %v3538, 1.0
    %v3667 = vadd.f32 %v3539, 1.0
    %v3668 = vadd.f32 %v3540, 1.0
    %v3669 = vadd.f32 %v3541, 1.0
    %v3670 = vadd.f32 %v3542, 1.0
    %v3671 = vadd.f32 %v3543, 1.0
    %v3672 = vadd.f32 %v3544, 1.0
    %v3673 = vadd.f32 %v3545, 1.0
    %v3674 = vadd.f32 %v3546, 1.0
    %v3675 = vadd.f32 %v3547, 1.0
    %v3676 = vadd.f32 %v3548, 1.0
    %v3677 = vadd.f32 %v3549, 1.0
    %v3678 = vadd.f32 %v3550, 1.0
    %v3679 = vadd.f32 %v3551, 1.0
    %v3680 = vadd.f32 %v3552, 1.0
    %v3681 = vadd.f32 %v3553, 1.0
    %v3682 = vadd.f32 %v3554, 1.0
    %v3683 = vadd.f32 %v3555, 1.0
    %v3684 = vadd.f32 %v3556, 1.0
    %v3685 = vadd.f32 %v3557, 1.0
    %v3686 = vadd.f32 %v3558, 1.0
    %v3687 = vadd.f32 %v3559, 1.0
    %v3688 = vadd.f32 %v3560, 1.0
    %v3689 = vadd.f32 %v3561, 1.0
    %v3690 = vadd.f32 %v3562, 1.0
    %v3691 = vadd.f32 %v3563, 1.0
    %v3692 = vadd.f32 %v3564, 1.0
    %v3693 = vmul.f32 %v3181, %v3565
    %v3694 = vmul.f32 %v3182, %v3566
    %v3695 = vmul.f32 %v3183, %v3567
    %v3696 = vmul.f32 %v3184, %v3568
    %v3697 = vmul.f32 %v3185, %v3569
    %v3698 = vmul.f32 %v3186, %v3570
    %v3699 = vmul.f32 %v3187, %v3571
    %v3700 = vmul.f32 %v3188, %v3572
    %v3701 = vmul.f32 %v3189, %v3573
    %v3702 = vmul.f32 %v3190, %v3574
    %v3703 = vmul.f32 %v3191, %v3575
    %v3704 = vmul.f32 %v3192, %v3576
    %v3705 = vmul.f32 %v3193, %v3577
    %v3706 = vmul.f32 %v3194, %v3578
    %v3707 = vmul.f32 %v3195, %v3579
    %v3708 = vmul.f32 %v3196, %v3580
    %v3709 = vmul.f32 %v3197, %v3581
    %v3710 = vmul.f32 %v3198, %v3582
    %v3711 = vmul.f32 %v3199, %v3583
    %v3712 = vmul.f32 %v3200, %v3584
    %v3713 = vmul.f32 %v3201, %v3585
    %v3714 = vmul.f32 %v3202, %v3586
    %v3715 = vmul.f32 %v3203, %v3587
    %v3716 = vmul.f32 %v3204, %v3588
    %v3717 = vmul.f32 %v3205, %v3589
    %v3718 = vmul.f32 %v3206, %v3590
    %v3719 = vmul.f32 %v3207, %v3591
    %v3720 = vmul.f32 %v3208, %v3592
    %v3721 = vmul.f32 %v3209, %v3593
    %v3722 = vmul.f32 %v3210, %v3594
    %v3723 = vmul.f32 %v3211, %v3595
    %v3724 = vmul.f32 %v3212, %v3596
    %v3725 = vmul.f32 %v3213, %v3597
    %v3726 = vmul.f32 %v3214, %v3598
    %v3727 = vmul.f32 %v3215, %v3599
    %v3728 = vmul.f32 %v3216, %v3600
    %v3729 = vmul.f32 %v3217, %v3601
    %v3730 = vmul.f32 %v3218, %v3602
    %v3731 = vmul.f32 %v3219, %v3603
    %v3732 = vmul.f32 %v3220, %v3604
    %v3733 = vmul.f32 %v3221, %v3605
    %v3734 = vmul.f32 %v3222, %v3606
    %v3735 = vmul.f32 %v3223, %v3607
    %v3736 = vmul.f32 %v3224, %v3608
    %v3737 = vmul.f32 %v3225, %v3609
    %v3738 = vmul.f32 %v3226, %v3610
    %v3739 = vmul.f32 %v3227, %v3611
    %v3740 = vmul.f32 %v3228, %v3612
    %v3741 = vmul.f32 %v3229, %v3613
    %v3742 = vmul.f32 %v3230, %v3614
    %v3743 = vmul.f32 %v3231, %v3615
    %v3744 = vmul.f32 %v3232, %v3616
    %v3745 = vmul.f32 %v3233, %v3617
    %v3746 = vmul.f32 %v3234, %v3618
    %v3747 = vmul.f32 %v3235, %v3619
    %v3748 = vmul.f32 %v3236, %v3620
    %v3749 = vmul.f32 %v3237, %v3621
    %v3750 = vmul.f32 %v3238, %v3622
    %v3751 = vmul.f32 %v3239, %v3623
    %v3752 = vmul.f32 %v3240, %v3624
    %v3753 = vmul.f32 %v3241, %v3625
    %v3754 = vmul.f32 %v3242, %v3626
    %v3755 = vmul.f32 %v3243, %v3627
    %v3756 = vmul.f32 %v3244, %v3628
    %v3757 = vmul.f32 %v3245, %v3629
    %v3758 = vmul.f32 %v3246, %v3630
    %v3759 = vmul.f32 %v3247, %v3631
    %v3760 = vmul.f32 %v3248, %v3632
    %v3761 = vmul.f32 %v3249, %v3633
    %v3762 = vmul.f32 %v3250, %v3634
    %v3763 = vmul.f32 %v3251, %v3635
    %v3764 = vmul.f32 %v3252, %v3636
    %v3765 = vmul.f32 %v3253, %v3637
    %v3766 = vmul.f32 %v3254, %v3638
    %v3767 = vmul.f32 %v3255, %v3639
    %v3768 = vmul.f32 %v3256, %v3640
    %v3769 = vmul.f32 %v3257, %v3641
    %v3770 = vmul.f32 %v3258, %v3642
    %v3771 = vmul.f32 %v3259, %v3643
    %v3772 = vmul.f32 %v3260, %v3644
    %v3773 = vmul.f32 %v3261, %v3645
    %v3774 = vmul.f32 %v3262, %v3646
    %v3775 = vmul.f32 %v3263, %v3647
    %v3776 = vmul.f32 %v3264, %v3648
    %v3777 = vmul.f32 %v3265, %v3649
    %v3778 = vmul.f32 %v3266, %v3650
    %v3779 = vmul.f32 %v3267, %v3651
    %v3780 = vmul.f32 %v3268, %v3652
    %v3781 = vmul.f32 %v3269, %v3653
    %v3782 = vmul.f32 %v3270, %v3654
    %v3783 = vmul.f32 %v3271, %v3655
    %v3784 = vmul.f32 %v3272, %v3656
    %v3785 = vmul.f32 %v3273, %v3657
    %v3786 = vmul.f32 %v3274, %v3658
    %v3787 = vmul.f32 %v3275, %v3659
    %v3788 = vmul.f32 %v3276, %v3660
    %v3789 = vmul.f32 %v3277, %v3661
    %v3790 = vmul.f32 %v3278, %v3662
    %v3791 = vmul.f32 %v3279, %v3663
    %v3792 = vmul.f32 %v3280, %v3664
    %v3793 = vmul.f32 %v3281, %v3665
    %v3794 = vmul.f32 %v3282, %v3666
    %v3795 = vmul.f32 %v3283, %v3667
    %v3796 = vmul.f32 %v3284, %v3668
    %v3797 = vmul.f32 %v3285, %v3669
    %v3798 = vmul.f32 %v3286, %v3670
    %v3799 = vmul.f32 %v3287, %v3671
    %v3800 = vmul.f32 %v3288, %v3672
    %v3801 = vmul.f32 %v3289, %v3673
    %v3802 = vmul.f32 %v3290, %v3674
    %v3803 = vmul.f32 %v3291, %v3675
    %v3804 = vmul.f32 %v3292, %v3676
    %v3805 = vmul.f32 %v3293, %v3677
    %v3806 = vmul.f32 %v3294, %v3678
    %v3807 = vmul.f32 %v3295, %v3679
    %v3808 = vmul.f32 %v3296, %v3680
    %v3809 = vmul.f32 %v3297, %v3681
    %v3810 = vmul.f32 %v3298, %v3682
    %v3811 = vmul.f32 %v3299, %v3683
    %v3812 = vmul.f32 %v3300, %v3684
    %v3813 = vmul.f32 %v3301, %v3685
    %v3814 = vmul.f32 %v3302, %v3686
    %v3815 = vmul.f32 %v3303, %v3687
    %v3816 = vmul.f32 %v3304, %v3688
    %v3817 = vmul.f32 %v3305, %v3689
    %v3818 = vmul.f32 %v3306, %v3690
    %v3819 = vmul.f32 %v3307, %v3691
    %v3820 = vmul.f32 %v3308, %v3692
    %v3821 = vpack.c.bf16 %v3697, %v3693
    %v3822 = vpack.c.bf16 %v3698, %v3694
    %v3823 = vpack.c.bf16 %v3699, %v3695
    %v3824 = vpack.c.bf16 %v3700, %v3696
    %v3825 = vpack.c.bf16 %v3705, %v3701
    %v3826 = vpack.c.bf16 %v3706, %v3702
    %v3827 = vpack.c.bf16 %v3707, %v3703
    %v3828 = vpack.c.bf16 %v3708, %v3704
    %v3829 = vpack.c.bf16 %v3713, %v3709
    %v3830 = vpack.c.bf16 %v3714, %v3710
    %v3831 = vpack.c.bf16 %v3715, %v3711
    %v3832 = vpack.c.bf16 %v3716, %v3712
    %v3833 = vpack.c.bf16 %v3721, %v3717
    %v3834 = vpack.c.bf16 %v3722, %v3718
    %v3835 = vpack.c.bf16 %v3723, %v3719
    %v3836 = vpack.c.bf16 %v3724, %v3720
    %v3837 = vpack.c.bf16 %v3729, %v3725
    %v3838 = vpack.c.bf16 %v3730, %v3726
    %v3839 = vpack.c.bf16 %v3731, %v3727
    %v3840 = vpack.c.bf16 %v3732, %v3728
    %v3841 = vpack.c.bf16 %v3737, %v3733
    %v3842 = vpack.c.bf16 %v3738, %v3734
    %v3843 = vpack.c.bf16 %v3739, %v3735
    %v3844 = vpack.c.bf16 %v3740, %v3736
    %v3845 = vpack.c.bf16 %v3745, %v3741
    %v3846 = vpack.c.bf16 %v3746, %v3742
    %v3847 = vpack.c.bf16 %v3747, %v3743
    %v3848 = vpack.c.bf16 %v3748, %v3744
    %v3849 = vpack.c.bf16 %v3753, %v3749
    %v3850 = vpack.c.bf16 %v3754, %v3750
    %v3851 = vpack.c.bf16 %v3755, %v3751
    %v3852 = vpack.c.bf16 %v3756, %v3752
    %v3853 = vpack.c.bf16 %v3761, %v3757
    %v3854 = vpack.c.bf16 %v3762, %v3758
    %v3855 = vpack.c.bf16 %v3763, %v3759
    %v3856 = vpack.c.bf16 %v3764, %v3760
    %v3857 = vpack.c.bf16 %v3769, %v3765
    %v3858 = vpack.c.bf16 %v3770, %v3766
    %v3859 = vpack.c.bf16 %v3771, %v3767
    %v3860 = vpack.c.bf16 %v3772, %v3768
    %v3861 = vpack.c.bf16 %v3777, %v3773
    %v3862 = vpack.c.bf16 %v3778, %v3774
    %v3863 = vpack.c.bf16 %v3779, %v3775
    %v3864 = vpack.c.bf16 %v3780, %v3776
    %v3865 = vpack.c.bf16 %v3785, %v3781
    %v3866 = vpack.c.bf16 %v3786, %v3782
    %v3867 = vpack.c.bf16 %v3787, %v3783
    %v3868 = vpack.c.bf16 %v3788, %v3784
    %v3869 = vpack.c.bf16 %v3793, %v3789
    %v3870 = vpack.c.bf16 %v3794, %v3790
    %v3871 = vpack.c.bf16 %v3795, %v3791
    %v3872 = vpack.c.bf16 %v3796, %v3792
    %v3873 = vpack.c.bf16 %v3801, %v3797
    %v3874 = vpack.c.bf16 %v3802, %v3798
    %v3875 = vpack.c.bf16 %v3803, %v3799
    %v3876 = vpack.c.bf16 %v3804, %v3800
    %v3877 = vpack.c.bf16 %v3809, %v3805
    %v3878 = vpack.c.bf16 %v3810, %v3806
    %v3879 = vpack.c.bf16 %v3811, %v3807
    %v3880 = vpack.c.bf16 %v3812, %v3808
    %v3881 = vpack.c.bf16 %v3817, %v3813
    %v3882 = vpack.c.bf16 %v3818, %v3814
    %v3883 = vpack.c.bf16 %v3819, %v3815
    %v3884 = vpack.c.bf16 %v3820, %v3816
    %v3885 = vld [vmem:[%s5] sm:$0xff]
    %v3886 = vld [vmem:[%s5 + $0x8] sm:$0xff]
    %v3887 = vld [vmem:[%s5 + $0x10] sm:$0xff]
    %v3888 = vld [vmem:[%s5 + $0x18] sm:$0xff]
    %v3889 = vld [vmem:[%s5 + $0x20] sm:$0xff]
    %v3890 = vld [vmem:[%s5 + $0x28] sm:$0xff]
    %v3891 = vld [vmem:[%s5 + $0x30] sm:$0xff]
    %v3892 = vld [vmem:[%s5 + $0x38] sm:$0xff]
    %v3893 = vld [vmem:[%s5 + $0x40] sm:$0xff]
    %v3894 = vld [vmem:[%s5 + $0x48] sm:$0xff]
    %v3895 = vld [vmem:[%s5 + $0x50] sm:$0xff]
    %v3896 = vld [vmem:[%s5 + $0x58] sm:$0xff]
    %v3897 = vld [vmem:[%s5 + $0x60] sm:$0xff]
    %v3898 = vld [vmem:[%s5 + $0x68] sm:$0xff]
    %v3899 = vld [vmem:[%s5 + $0x70] sm:$0xff]
    %v3900 = vld [vmem:[%s5 + $0x78] sm:$0xff]
    %v3901 = vld [vmem:[%s5 + $0x80] sm:$0xff]
    %v3902 = vld [vmem:[%s5 + $0x88] sm:$0xff]
    %v3903 = vld [vmem:[%s5 + $0x90] sm:$0xff]
    %v3904 = vld [vmem:[%s5 + $0x98] sm:$0xff]
    %v3905 = vld [vmem:[%s5 + $0xa0] sm:$0xff]
    %v3906 = vld [vmem:[%s5 + $0xa8] sm:$0xff]
    %v3907 = vld [vmem:[%s5 + $0xb0] sm:$0xff]
    %v3908 = vld [vmem:[%s5 + $0xb8] sm:$0xff]
    %v3909 = vld [vmem:[%s5 + $0xc0] sm:$0xff]
    %v3910 = vld [vmem:[%s5 + $0xc8] sm:$0xff]
    %v3911 = vld [vmem:[%s5 + $0xd0] sm:$0xff]
    %v3912 = vld [vmem:[%s5 + $0xd8] sm:$0xff]
    %v3913 = vld [vmem:[%s5 + $0xe0] sm:$0xff]
    %v3914 = vld [vmem:[%s5 + $0xe8] sm:$0xff]
    %v3915 = vld [vmem:[%s5 + $0xf0] sm:$0xff]
    %v3916 = vld [vmem:[%s5 + $0xf8] sm:$0xff]
    %v3917 = vld [vmem:[%s5 + $0x100] sm:$0xff]
    %v3918 = vld [vmem:[%s5 + $0x108] sm:$0xff]
    %v3919 = vld [vmem:[%s5 + $0x110] sm:$0xff]
    %v3920 = vld [vmem:[%s5 + $0x118] sm:$0xff]
    %v3921 = vld [vmem:[%s5 + $0x120] sm:$0xff]
    %v3922 = vld [vmem:[%s5 + $0x128] sm:$0xff]
    %v3923 = vld [vmem:[%s5 + $0x130] sm:$0xff]
    %v3924 = vld [vmem:[%s5 + $0x138] sm:$0xff]
    %v3925 = vld [vmem:[%s5 + $0x140] sm:$0xff]
    %v3926 = vld [vmem:[%s5 + $0x148] sm:$0xff]
    %v3927 = vld [vmem:[%s5 + $0x150] sm:$0xff]
    %v3928 = vld [vmem:[%s5 + $0x158] sm:$0xff]
    %v3929 = vld [vmem:[%s5 + $0x160] sm:$0xff]
    %v3930 = vld [vmem:[%s5 + $0x168] sm:$0xff]
    %v3931 = vld [vmem:[%s5 + $0x170] sm:$0xff]
    %v3932 = vld [vmem:[%s5 + $0x178] sm:$0xff]
    %v3933 = vld [vmem:[%s5 + $0x180] sm:$0xff]
    %v3934 = vld [vmem:[%s5 + $0x188] sm:$0xff]
    %v3935 = vld [vmem:[%s5 + $0x190] sm:$0xff]
    %v3936 = vld [vmem:[%s5 + $0x198] sm:$0xff]
    %v3937 = vld [vmem:[%s5 + $0x1a0] sm:$0xff]
    %v3938 = vld [vmem:[%s5 + $0x1a8] sm:$0xff]
    %v3939 = vld [vmem:[%s5 + $0x1b0] sm:$0xff]
    %v3940 = vld [vmem:[%s5 + $0x1b8] sm:$0xff]
    %v3941 = vld [vmem:[%s5 + $0x1c0] sm:$0xff]
    %v3942 = vld [vmem:[%s5 + $0x1c8] sm:$0xff]
    %v3943 = vld [vmem:[%s5 + $0x1d0] sm:$0xff]
    %v3944 = vld [vmem:[%s5 + $0x1d8] sm:$0xff]
    %v3945 = vld [vmem:[%s5 + $0x1e0] sm:$0xff]
    %v3946 = vld [vmem:[%s5 + $0x1e8] sm:$0xff]
    %v3947 = vld [vmem:[%s5 + $0x1f0] sm:$0xff]
    %v3948 = vld [vmem:[%s5 + $0x1f8] sm:$0xff]
    %v3949 = vld [vmem:[%s6] sm:$0x3]
    %v3951 = vlaneseq
    %v3952 = vshrl.u32 %v3951, 7
    %v3953 = vsub.s32 0, %v3952
    %v3954 = vrot.slane %v3949, %v3953
    %v3955 = vlaneseq
    %v3956 = vshrl.u32 %v3955, 7
    %v3957 = vsub.s32 1, %v3956
    %v3958 = vrot.slane %v3949, %v3957
    %v4025 = vunpack.c.l.b16 %v3885
    %v4026 = vunpack.c.h.b16 %v3885
    %v4027 = vunpack.c.l.b16 %v3886
    %v4028 = vunpack.c.h.b16 %v3886
    %v4029 = vunpack.c.l.b16 %v3887
    %v4030 = vunpack.c.h.b16 %v3887
    %v4031 = vunpack.c.l.b16 %v3888
    %v4032 = vunpack.c.h.b16 %v3888
    %v4033 = vunpack.c.l.b16 %v3889
    %v4034 = vunpack.c.h.b16 %v3889
    %v4035 = vunpack.c.l.b16 %v3890
    %v4036 = vunpack.c.h.b16 %v3890
    %v4037 = vunpack.c.l.b16 %v3891
    %v4038 = vunpack.c.h.b16 %v3891
    %v4039 = vunpack.c.l.b16 %v3892
    %v4040 = vunpack.c.h.b16 %v3892
    %v4041 = vunpack.c.l.b16 %v3893
    %v4042 = vunpack.c.h.b16 %v3893
    %v4043 = vunpack.c.l.b16 %v3894
    %v4044 = vunpack.c.h.b16 %v3894
    %v4045 = vunpack.c.l.b16 %v3895
    %v4046 = vunpack.c.h.b16 %v3895
    %v4047 = vunpack.c.l.b16 %v3896
    %v4048 = vunpack.c.h.b16 %v3896
    %v4049 = vunpack.c.l.b16 %v3897
    %v4050 = vunpack.c.h.b16 %v3897
    %v4051 = vunpack.c.l.b16 %v3898
    %v4052 = vunpack.c.h.b16 %v3898
    %v4053 = vunpack.c.l.b16 %v3899
    %v4054 = vunpack.c.h.b16 %v3899
    %v4055 = vunpack.c.l.b16 %v3900
    %v4056 = vunpack.c.h.b16 %v3900
    %v4057 = vunpack.c.l.b16 %v3901
    %v4058 = vunpack.c.h.b16 %v3901
    %v4059 = vunpack.c.l.b16 %v3902
    %v4060 = vunpack.c.h.b16 %v3902
    %v4061 = vunpack.c.l.b16 %v3903
    %v4062 = vunpack.c.h.b16 %v3903
    %v4063 = vunpack.c.l.b16 %v3904
    %v4064 = vunpack.c.h.b16 %v3904
    %v4065 = vunpack.c.l.b16 %v3905
    %v4066 = vunpack.c.h.b16 %v3905
    %v4067 = vunpack.c.l.b16 %v3906
    %v4068 = vunpack.c.h.b16 %v3906
    %v4069 = vunpack.c.l.b16 %v3907
    %v4070 = vunpack.c.h.b16 %v3907
    %v4071 = vunpack.c.l.b16 %v3908
    %v4072 = vunpack.c.h.b16 %v3908
    %v4073 = vunpack.c.l.b16 %v3909
    %v4074 = vunpack.c.h.b16 %v3909
    %v4075 = vunpack.c.l.b16 %v3910
    %v4076 = vunpack.c.h.b16 %v3910
    %v4077 = vunpack.c.l.b16 %v3911
    %v4078 = vunpack.c.h.b16 %v3911
    %v4079 = vunpack.c.l.b16 %v3912
    %v4080 = vunpack.c.h.b16 %v3912
    %v4081 = vunpack.c.l.b16 %v3913
    %v4082 = vunpack.c.h.b16 %v3913
    %v4083 = vunpack.c.l.b16 %v3914
    %v4084 = vunpack.c.h.b16 %v3914
    %v4085 = vunpack.c.l.b16 %v3915
    %v4086 = vunpack.c.h.b16 %v3915
    %v4087 = vunpack.c.l.b16 %v3916
    %v4088 = vunpack.c.h.b16 %v3916
    %v4089 = vunpack.c.l.b16 %v3917
    %v4090 = vunpack.c.h.b16 %v3917
    %v4091 = vunpack.c.l.b16 %v3918
    %v4092 = vunpack.c.h.b16 %v3918
    %v4093 = vunpack.c.l.b16 %v3919
    %v4094 = vunpack.c.h.b16 %v3919
    %v4095 = vunpack.c.l.b16 %v3920
    %v4096 = vunpack.c.h.b16 %v3920
    %v4097 = vunpack.c.l.b16 %v3921
    %v4098 = vunpack.c.h.b16 %v3921
    %v4099 = vunpack.c.l.b16 %v3922
    %v4100 = vunpack.c.h.b16 %v3922
    %v4101 = vunpack.c.l.b16 %v3923
    %v4102 = vunpack.c.h.b16 %v3923
    %v4103 = vunpack.c.l.b16 %v3924
    %v4104 = vunpack.c.h.b16 %v3924
    %v4105 = vunpack.c.l.b16 %v3925
    %v4106 = vunpack.c.h.b16 %v3925
    %v4107 = vunpack.c.l.b16 %v3926
    %v4108 = vunpack.c.h.b16 %v3926
    %v4109 = vunpack.c.l.b16 %v3927
    %v4110 = vunpack.c.h.b16 %v3927
    %v4111 = vunpack.c.l.b16 %v3928
    %v4112 = vunpack.c.h.b16 %v3928
    %v4113 = vunpack.c.l.b16 %v3929
    %v4114 = vunpack.c.h.b16 %v3929
    %v4115 = vunpack.c.l.b16 %v3930
    %v4116 = vunpack.c.h.b16 %v3930
    %v4117 = vunpack.c.l.b16 %v3931
    %v4118 = vunpack.c.h.b16 %v3931
    %v4119 = vunpack.c.l.b16 %v3932
    %v4120 = vunpack.c.h.b16 %v3932
    %v4121 = vunpack.c.l.b16 %v3933
    %v4122 = vunpack.c.h.b16 %v3933
    %v4123 = vunpack.c.l.b16 %v3934
    %v4124 = vunpack.c.h.b16 %v3934
    %v4125 = vunpack.c.l.b16 %v3935
    %v4126 = vunpack.c.h.b16 %v3935
    %v4127 = vunpack.c.l.b16 %v3936
    %v4128 = vunpack.c.h.b16 %v3936
    %v4129 = vunpack.c.l.b16 %v3937
    %v4130 = vunpack.c.h.b16 %v3937
    %v4131 = vunpack.c.l.b16 %v3938
    %v4132 = vunpack.c.h.b16 %v3938
    %v4133 = vunpack.c.l.b16 %v3939
    %v4134 = vunpack.c.h.b16 %v3939
    %v4135 = vunpack.c.l.b16 %v3940
    %v4136 = vunpack.c.h.b16 %v3940
    %v4137 = vunpack.c.l.b16 %v3941
    %v4138 = vunpack.c.h.b16 %v3941
    %v4139 = vunpack.c.l.b16 %v3942
    %v4140 = vunpack.c.h.b16 %v3942
    %v4141 = vunpack.c.l.b16 %v3943
    %v4142 = vunpack.c.h.b16 %v3943
    %v4143 = vunpack.c.l.b16 %v3944
    %v4144 = vunpack.c.h.b16 %v3944
    %v4145 = vunpack.c.l.b16 %v3945
    %v4146 = vunpack.c.h.b16 %v3945
    %v4147 = vunpack.c.l.b16 %v3946
    %v4148 = vunpack.c.h.b16 %v3946
    %v4149 = vunpack.c.l.b16 %v3947
    %v4150 = vunpack.c.h.b16 %v3947
    %v4151 = vunpack.c.l.b16 %v3948
    %v4152 = vunpack.c.h.b16 %v3948
    %v4153 = vpack.c.b16 %v4027, %v4025
    %v4154 = vpack.c.b16 %v4028, %v4026
    %v4155 = vpack.c.b16 %v4031, %v4029
    %v4156 = vpack.c.b16 %v4032, %v4030
    %v4157 = vpack.c.b16 %v4035, %v4033
    %v4158 = vpack.c.b16 %v4036, %v4034
    %v4159 = vpack.c.b16 %v4039, %v4037
    %v4160 = vpack.c.b16 %v4040, %v4038
    %v4161 = vpack.c.b16 %v4043, %v4041
    %v4162 = vpack.c.b16 %v4044, %v4042
    %v4163 = vpack.c.b16 %v4047, %v4045
    %v4164 = vpack.c.b16 %v4048, %v4046
    %v4165 = vpack.c.b16 %v4051, %v4049
    %v4166 = vpack.c.b16 %v4052, %v4050
    %v4167 = vpack.c.b16 %v4055, %v4053
    %v4168 = vpack.c.b16 %v4056, %v4054
    %v4169 = vpack.c.b16 %v4059, %v4057
    %v4170 = vpack.c.b16 %v4060, %v4058
    %v4171 = vpack.c.b16 %v4063, %v4061
    %v4172 = vpack.c.b16 %v4064, %v4062
    %v4173 = vpack.c.b16 %v4067, %v4065
    %v4174 = vpack.c.b16 %v4068, %v4066
    %v4175 = vpack.c.b16 %v4071, %v4069
    %v4176 = vpack.c.b16 %v4072, %v4070
    %v4177 = vpack.c.b16 %v4075, %v4073
    %v4178 = vpack.c.b16 %v4076, %v4074
    %v4179 = vpack.c.b16 %v4079, %v4077
    %v4180 = vpack.c.b16 %v4080, %v4078
    %v4181 = vpack.c.b16 %v4083, %v4081
    %v4182 = vpack.c.b16 %v4084, %v4082
    %v4183 = vpack.c.b16 %v4087, %v4085
    %v4184 = vpack.c.b16 %v4088, %v4086
    %v4185 = vpack.c.b16 %v4091, %v4089
    %v4186 = vpack.c.b16 %v4092, %v4090
    %v4187 = vpack.c.b16 %v4095, %v4093
    %v4188 = vpack.c.b16 %v4096, %v4094
    %v4189 = vpack.c.b16 %v4099, %v4097
    %v4190 = vpack.c.b16 %v4100, %v4098
    %v4191 = vpack.c.b16 %v4103, %v4101
    %v4192 = vpack.c.b16 %v4104, %v4102
    %v4193 = vpack.c.b16 %v4107, %v4105
    %v4194 = vpack.c.b16 %v4108, %v4106
    %v4195 = vpack.c.b16 %v4111, %v4109
    %v4196 = vpack.c.b16 %v4112, %v4110
    %v4197 = vpack.c.b16 %v4115, %v4113
    %v4198 = vpack.c.b16 %v4116, %v4114
    %v4199 = vpack.c.b16 %v4119, %v4117
    %v4200 = vpack.c.b16 %v4120, %v4118
    %v4201 = vpack.c.b16 %v4123, %v4121
    %v4202 = vpack.c.b16 %v4124, %v4122
    %v4203 = vpack.c.b16 %v4127, %v4125
    %v4204 = vpack.c.b16 %v4128, %v4126
    %v4205 = vpack.c.b16 %v4131, %v4129
    %v4206 = vpack.c.b16 %v4132, %v4130
    %v4207 = vpack.c.b16 %v4135, %v4133
    %v4208 = vpack.c.b16 %v4136, %v4134
    %v4209 = vpack.c.b16 %v4139, %v4137
    %v4210 = vpack.c.b16 %v4140, %v4138
    %v4211 = vpack.c.b16 %v4143, %v4141
    %v4212 = vpack.c.b16 %v4144, %v4142
    %v4213 = vpack.c.b16 %v4147, %v4145
    %v4214 = vpack.c.b16 %v4148, %v4146
    %v4215 = vpack.c.b16 %v4151, %v4149
    %v4216 = vpack.c.b16 %v4152, %v4150
    %4281 = vmatprep.subr.bf16.mxu0 %v4154
    %4282 = vmatpush1.bf16.msra.mxu0 %v4153
    %4283 = vmatprep.subr.bf16.mxu0 %v4156
    %4284 = vmatpush1.bf16.msra.mxu0 %v4155
    %4285 = vmatprep.subr.bf16.mxu0 %v4158
    %4286 = vmatpush1.bf16.msra.mxu0 %v4157
    %4287 = vmatprep.subr.bf16.mxu0 %v4160
    %4288 = vmatpush1.bf16.msra.mxu0 %v4159
    %4289 = vmatprep.subr.bf16.mxu0 %v4162
    %4290 = vmatpush1.bf16.msra.mxu0 %v4161
    %4291 = vmatprep.subr.bf16.mxu0 %v4164
    %4292 = vmatpush1.bf16.msra.mxu0 %v4163
    %4293 = vmatprep.subr.bf16.mxu0 %v4166
    %4294 = vmatpush1.bf16.msra.mxu0 %v4165
    %4295 = vmatprep.subr.bf16.mxu0 %v4168
    %4296 = vmatpush1.bf16.msra.mxu0 %v4167
    %4297 = vmatprep.subr.bf16.mxu0 %v4170
    %4298 = vmatpush1.bf16.msra.mxu0 %v4169
    %4299 = vmatprep.subr.bf16.mxu0 %v4172
    %4300 = vmatpush1.bf16.msra.mxu0 %v4171
    %4301 = vmatprep.subr.bf16.mxu0 %v4174
    %4302 = vmatpush1.bf16.msra.mxu0 %v4173
    %4303 = vmatprep.subr.bf16.mxu0 %v4176
    %4304 = vmatpush1.bf16.msra.mxu0 %v4175
    %4305 = vmatprep.subr.bf16.mxu0 %v4178
    %4306 = vmatpush1.bf16.msra.mxu0 %v4177
    %4307 = vmatprep.subr.bf16.mxu0 %v4180
    %4308 = vmatpush1.bf16.msra.mxu0 %v4179
    %4309 = vmatprep.subr.bf16.mxu0 %v4182
    %4310 = vmatpush1.bf16.msra.mxu0 %v4181
    %4311 = vmatprep.subr.bf16.mxu0 %v4184
    %4312 = vmatpush1.bf16.msra.mxu0 %v4183
    %4313 = vmatprep.mubr.bf16.mxu0 %v3822
    %4314 = vmatmul.mubr.bf16.gmra.mrb[0].mxu0 %v3821
    %v4315 = vpop.f32.mrb[0].mxu0
    %v4316 = vadd.f32 %v3954, %v4315
    %v4317 = vpop.f32.mrb[0].mxu0
    %v4318 = vadd.f32 %v3958, %v4317
    %v4319 = vpop.f32.mrb[0].mxu0
    %v4320 = vadd.f32 %v3954, %v4319
    %v4321 = vpop.f32.mrb[0].mxu0
    %v4322 = vadd.f32 %v3958, %v4321
    %4323 = vmatprep.mubr.bf16.mxu0 %v3826
    %4324 = vmatmul.mubr.bf16.gmra.mrb[0].mxu0 %v3825
    %v4325 = vpop.f32.mrb[0].mxu0
    %v4326 = vadd.f32 %v3954, %v4325
    %v4327 = vpop.f32.mrb[0].mxu0
    %v4328 = vadd.f32 %v3958, %v4327
    %v4329 = vpop.f32.mrb[0].mxu0
    %v4330 = vadd.f32 %v3954, %v4329
    %v4331 = vpop.f32.mrb[0].mxu0
    %v4332 = vadd.f32 %v3958, %v4331
    %4333 = vmatprep.mubr.bf16.mxu0 %v3830
    %4334 = vmatmul.mubr.bf16.gmra.mrb[0].mxu0 %v3829
    %v4335 = vpop.f32.mrb[0].mxu0
    %v4336 = vadd.f32 %v3954, %v4335
    %v4337 = vpop.f32.mrb[0].mxu0
    %v4338 = vadd.f32 %v3958, %v4337
    %v4339 = vpop.f32.mrb[0].mxu0
    %v4340 = vadd.f32 %v3954, %v4339
    %v4341 = vpop.f32.mrb[0].mxu0
    %v4342 = vadd.f32 %v3958, %v4341
    %4343 = vmatprep.mubr.bf16.mxu0 %v3834
    %4344 = vmatmul.mubr.bf16.gmra.mrb[0].mxu0 %v3833
    %v4345 = vpop.f32.mrb[0].mxu0
    %v4346 = vadd.f32 %v3954, %v4345
    %v4347 = vpop.f32.mrb[0].mxu0
    %v4348 = vadd.f32 %v3958, %v4347
    %v4349 = vpop.f32.mrb[0].mxu0
    %v4350 = vadd.f32 %v3954, %v4349
    %v4351 = vpop.f32.mrb[0].mxu0
    %v4352 = vadd.f32 %v3958, %v4351
    %4353 = vmatprep.mubr.bf16.mxu0 %v3838
    %4354 = vmatmul.mubr.bf16.gmra.mrb[0].mxu0 %v3837
    %v4355 = vpop.f32.mrb[0].mxu0
    %v4356 = vadd.f32 %v3954, %v4355
    %v4357 = vpop.f32.mrb[0].mxu0
    %v4358 = vadd.f32 %v3958, %v4357
    %v4359 = vpop.f32.mrb[0].mxu0
    %v4360 = vadd.f32 %v3954, %v4359
    %v4361 = vpop.f32.mrb[0].mxu0
    %v4362 = vadd.f32 %v3958, %v4361
    %4363 = vmatprep.mubr.bf16.mxu0 %v3842
    %4364 = vmatmul.mubr.bf16.gmra.mrb[0].mxu0 %v3841
    %v4365 = vpop.f32.mrb[0].mxu0
    %v4366 = vadd.f32 %v3954, %v4365
    %v4367 = vpop.f32.mrb[0].mxu0
    %v4368 = vadd.f32 %v3958, %v4367
    %v4369 = vpop.f32.mrb[0].mxu0
    %v4370 = vadd.f32 %v3954, %v4369
    %v4371 = vpop.f32.mrb[0].mxu0
    %v4372 = vadd.f32 %v3958, %v4371
    %4373 = vmatprep.mubr.bf16.mxu0 %v3846
    %4374 = vmatmul.mubr.bf16.gmra.mrb[0].mxu0 %v3845
    %v4375 = vpop.f32.mrb[0].mxu0
    %v4376 = vadd.f32 %v3954, %v4375
    %v4377 = vpop.f32.mrb[0].mxu0
    %v4378 = vadd.f32 %v3958, %v4377
    %v4379 = vpop.f32.mrb[0].mxu0
    %v4380 = vadd.f32 %v3954, %v4379
    %v4381 = vpop.f32.mrb[0].mxu0
    %v4382 = vadd.f32 %v3958, %v4381
    %4383 = vmatprep.mubr.bf16.mxu0 %v3850
    %4384 = vmatmul.mubr.bf16.gmra.mrb[0].mxu0 %v3849
    %v4385 = vpop.f32.mrb[0].mxu0
    %v4386 = vadd.f32 %v3954, %v4385
    %v4387 = vpop.f32.mrb[0].mxu0
    %v4388 = vadd.f32 %v3958, %v4387
    %v4389 = vpop.f32.mrb[0].mxu0
    %v4390 = vadd.f32 %v3954, %v4389
    %v4391 = vpop.f32.mrb[0].mxu0
    %v4392 = vadd.f32 %v3958, %v4391
    %4393 = vmatprep.mubr.bf16.mxu0 %v3854
    %4394 = vmatmul.mubr.bf16.gmra.mrb[0].mxu0 %v3853
    %v4395 = vpop.f32.mrb[0].mxu0
    %v4396 = vadd.f32 %v3954, %v4395
    %v4397 = vpop.f32.mrb[0].mxu0
    %v4398 = vadd.f32 %v3958, %v4397
    %v4399 = vpop.f32.mrb[0].mxu0
    %v4400 = vadd.f32 %v3954, %v4399
    %v4401 = vpop.f32.mrb[0].mxu0
    %v4402 = vadd.f32 %v3958, %v4401
    %4403 = vmatprep.mubr.bf16.mxu0 %v3858
    %4404 = vmatmul.mubr.bf16.gmra.mrb[0].mxu0 %v3857
    %v4405 = vpop.f32.mrb[0].mxu0
    %v4406 = vadd.f32 %v3954, %v4405
    %v4407 = vpop.f32.mrb[0].mxu0
    %v4408 = vadd.f32 %v3958, %v4407
    %v4409 = vpop.f32.mrb[0].mxu0
    %v4410 = vadd.f32 %v3954, %v4409
    %v4411 = vpop.f32.mrb[0].mxu0
    %v4412 = vadd.f32 %v3958, %v4411
    %4413 = vmatprep.mubr.bf16.mxu0 %v3862
    %4414 = vmatmul.mubr.bf16.gmra.mrb[0].mxu0 %v3861
    %v4415 = vpop.f32.mrb[0].mxu0
    %v4416 = vadd.f32 %v3954, %v4415
    %v4417 = vpop.f32.mrb[0].mxu0
    %v4418 = vadd.f32 %v3958, %v4417
    %v4419 = vpop.f32.mrb[0].mxu0
    %v4420 = vadd.f32 %v3954, %v4419
    %v4421 = vpop.f32.mrb[0].mxu0
    %v4422 = vadd.f32 %v3958, %v4421
    %4423 = vmatprep.mubr.bf16.mxu0 %v3866
    %4424 = vmatmul.mubr.bf16.gmra.mrb[0].mxu0 %v3865
    %v4425 = vpop.f32.mrb[0].mxu0
    %v4426 = vadd.f32 %v3954, %v4425
    %v4427 = vpop.f32.mrb[0].mxu0
    %v4428 = vadd.f32 %v3958, %v4427
    %v4429 = vpop.f32.mrb[0].mxu0
    %v4430 = vadd.f32 %v3954, %v4429
    %v4431 = vpop.f32.mrb[0].mxu0
    %v4432 = vadd.f32 %v3958, %v4431
    %4433 = vmatprep.mubr.bf16.mxu0 %v3870
    %4434 = vmatmul.mubr.bf16.gmra.mrb[0].mxu0 %v3869
    %v4435 = vpop.f32.mrb[0].mxu0
    %v4436 = vadd.f32 %v3954, %v4435
    %v4437 = vpop.f32.mrb[0].mxu0
    %v4438 = vadd.f32 %v3958, %v4437
    %v4439 = vpop.f32.mrb[0].mxu0
    %v4440 = vadd.f32 %v3954, %v4439
    %v4441 = vpop.f32.mrb[0].mxu0
    %v4442 = vadd.f32 %v3958, %v4441
    %4443 = vmatprep.mubr.bf16.mxu0 %v3874
    %4444 = vmatmul.mubr.bf16.gmra.mrb[0].mxu0 %v3873
    %v4445 = vpop.f32.mrb[0].mxu0
    %v4446 = vadd.f32 %v3954, %v4445
    %v4447 = vpop.f32.mrb[0].mxu0
    %v4448 = vadd.f32 %v3958, %v4447
    %v4449 = vpop.f32.mrb[0].mxu0
    %v4450 = vadd.f32 %v3954, %v4449
    %v4451 = vpop.f32.mrb[0].mxu0
    %v4452 = vadd.f32 %v3958, %v4451
    %4453 = vmatprep.mubr.bf16.mxu0 %v3878
    %4454 = vmatmul.mubr.bf16.gmra.mrb[0].mxu0 %v3877
    %v4455 = vpop.f32.mrb[0].mxu0
    %v4456 = vadd.f32 %v3954, %v4455
    %v4457 = vpop.f32.mrb[0].mxu0
    %v4458 = vadd.f32 %v3958, %v4457
    %v4459 = vpop.f32.mrb[0].mxu0
    %v4460 = vadd.f32 %v3954, %v4459
    %v4461 = vpop.f32.mrb[0].mxu0
    %v4462 = vadd.f32 %v3958, %v4461
    %4463 = vmatprep.mubr.bf16.mxu0 %v3882
    %4464 = vmatmul.mubr.bf16.gmra.mrb[0].mxu0 %v3881
    %v4465 = vpop.f32.mrb[0].mxu0
    %v4466 = vadd.f32 %v3954, %v4465
    %v4467 = vpop.f32.mrb[0].mxu0
    %v4468 = vadd.f32 %v3958, %v4467
    %v4469 = vpop.f32.mrb[0].mxu0
    %v4470 = vadd.f32 %v3954, %v4469
    %v4471 = vpop.f32.mrb[0].mxu0
    %v4472 = vadd.f32 %v3958, %v4471
    %4473 = vdwg.mxu0
    %4474 = vmatprep.subr.bf16.mxu0 %v4186
    %4475 = vmatpush1.bf16.msra.mxu0 %v4185
    %4476 = vmatprep.subr.bf16.mxu0 %v4188
    %4477 = vmatpush1.bf16.msra.mxu0 %v4187
    %4478 = vmatprep.subr.bf16.mxu0 %v4190
    %4479 = vmatpush1.bf16.msra.mxu0 %v4189
    %4480 = vmatprep.subr.bf16.mxu0 %v4192
    %4481 = vmatpush1.bf16.msra.mxu0 %v4191
    %4482 = vmatprep.subr.bf16.mxu0 %v4194
    %4483 = vmatpush1.bf16.msra.mxu0 %v4193
    %4484 = vmatprep.subr.bf16.mxu0 %v4196
    %4485 = vmatpush1.bf16.msra.mxu0 %v4195
    %4486 = vmatprep.subr.bf16.mxu0 %v4198
    %4487 = vmatpush1.bf16.msra.mxu0 %v4197
    %4488 = vmatprep.subr.bf16.mxu0 %v4200
    %4489 = vmatpush1.bf16.msra.mxu0 %v4199
    %4490 = vmatprep.subr.bf16.mxu0 %v4202
    %4491 = vmatpush1.bf16.msra.mxu0 %v4201
    %4492 = vmatprep.subr.bf16.mxu0 %v4204
    %4493 = vmatpush1.bf16.msra.mxu0 %v4203
    %4494 = vmatprep.subr.bf16.mxu0 %v4206
    %4495 = vmatpush1.bf16.msra.mxu0 %v4205
    %4496 = vmatprep.subr.bf16.mxu0 %v4208
    %4497 = vmatpush1.bf16.msra.mxu0 %v4207
    %4498 = vmatprep.subr.bf16.mxu0 %v4210
    %4499 = vmatpush1.bf16.msra.mxu0 %v4209
    %4500 = vmatprep.subr.bf16.mxu0 %v4212
    %4501 = vmatpush1.bf16.msra.mxu0 %v4211
    %4502 = vmatprep.subr.bf16.mxu0 %v4214
    %4503 = vmatpush1.bf16.msra.mxu0 %v4213
    %4504 = vmatprep.subr.bf16.mxu0 %v4216
    %4505 = vmatpush1.bf16.msra.mxu0 %v4215
    %4506 = vmatprep.mubr.bf16.mxu0 %v3824
    %4507 = vmatmul.mubr.bf16.gmra.mrb[0].mxu0 %v3823
    %v4508 = vpop.f32.mrb[0].mxu0
    %v4509 = vadd.f32 %v4316, %v4508
    %v4510 = vpop.f32.mrb[0].mxu0
    %v4511 = vadd.f32 %v4318, %v4510
    %v4512 = vpop.f32.mrb[0].mxu0
    %v4513 = vadd.f32 %v4320, %v4512
    %v4514 = vpop.f32.mrb[0].mxu0
    %v4515 = vadd.f32 %v4322, %v4514
    %4516 = vmatprep.mubr.bf16.mxu0 %v3828
    %4517 = vmatmul.mubr.bf16.gmra.mrb[0].mxu0 %v3827
    %v4518 = vpop.f32.mrb[0].mxu0
    %v4519 = vadd.f32 %v4326, %v4518
    %v4520 = vpop.f32.mrb[0].mxu0
    %v4521 = vadd.f32 %v4328, %v4520
    %v4522 = vpop.f32.mrb[0].mxu0
    %v4523 = vadd.f32 %v4330, %v4522
    %v4524 = vpop.f32.mrb[0].mxu0
    %v4525 = vadd.f32 %v4332, %v4524
    %4526 = vmatprep.mubr.bf16.mxu0 %v3832
    %4527 = vmatmul.mubr.bf16.gmra.mrb[0].mxu0 %v3831
    %v4528 = vpop.f32.mrb[0].mxu0
    %v4529 = vadd.f32 %v4336, %v4528
    %v4530 = vpop.f32.mrb[0].mxu0
    %v4531 = vadd.f32 %v4338, %v4530
    %v4532 = vpop.f32.mrb[0].mxu0
    %v4533 = vadd.f32 %v4340, %v4532
    %v4534 = vpop.f32.mrb[0].mxu0
    %v4535 = vadd.f32 %v4342, %v4534
    %4536 = vmatprep.mubr.bf16.mxu0 %v3836
    %4537 = vmatmul.mubr.bf16.gmra.mrb[0].mxu0 %v3835
    %v4538 = vpop.f32.mrb[0].mxu0
    %v4539 = vadd.f32 %v4346, %v4538
    %v4540 = vpop.f32.mrb[0].mxu0
    %v4541 = vadd.f32 %v4348, %v4540
    %v4542 = vpop.f32.mrb[0].mxu0
    %v4543 = vadd.f32 %v4350, %v4542
    %v4544 = vpop.f32.mrb[0].mxu0
    %v4545 = vadd.f32 %v4352, %v4544
    %4546 = vmatprep.mubr.bf16.mxu0 %v3840
    %4547 = vmatmul.mubr.bf16.gmra.mrb[0].mxu0 %v3839
    %v4548 = vpop.f32.mrb[0].mxu0
    %v4549 = vadd.f32 %v4356, %v4548
    %v4550 = vpop.f32.mrb[0].mxu0
    %v4551 = vadd.f32 %v4358, %v4550
    %v4552 = vpop.f32.mrb[0].mxu0
    %v4553 = vadd.f32 %v4360, %v4552
    %v4554 = vpop.f32.mrb[0].mxu0
    %v4555 = vadd.f32 %v4362, %v4554
    %4556 = vmatprep.mubr.bf16.mxu0 %v3844
    %4557 = vmatmul.mubr.bf16.gmra.mrb[0].mxu0 %v3843
    %v4558 = vpop.f32.mrb[0].mxu0
    %v4559 = vadd.f32 %v4366, %v4558
    %v4560 = vpop.f32.mrb[0].mxu0
    %v4561 = vadd.f32 %v4368, %v4560
    %v4562 = vpop.f32.mrb[0].mxu0
    %v4563 = vadd.f32 %v4370, %v4562
    %v4564 = vpop.f32.mrb[0].mxu0
    %v4565 = vadd.f32 %v4372, %v4564
    %4566 = vmatprep.mubr.bf16.mxu0 %v3848
    %4567 = vmatmul.mubr.bf16.gmra.mrb[0].mxu0 %v3847
    %v4568 = vpop.f32.mrb[0].mxu0
    %v4569 = vadd.f32 %v4376, %v4568
    %v4570 = vpop.f32.mrb[0].mxu0
    %v4571 = vadd.f32 %v4378, %v4570
    %v4572 = vpop.f32.mrb[0].mxu0
    %v4573 = vadd.f32 %v4380, %v4572
    %v4574 = vpop.f32.mrb[0].mxu0
    %v4575 = vadd.f32 %v4382, %v4574
    %4576 = vmatprep.mubr.bf16.mxu0 %v3852
    %4577 = vmatmul.mubr.bf16.gmra.mrb[0].mxu0 %v3851
    %v4578 = vpop.f32.mrb[0].mxu0
    %v4579 = vadd.f32 %v4386, %v4578
    %v4580 = vpop.f32.mrb[0].mxu0
    %v4581 = vadd.f32 %v4388, %v4580
    %v4582 = vpop.f32.mrb[0].mxu0
    %v4583 = vadd.f32 %v4390, %v4582
    %v4584 = vpop.f32.mrb[0].mxu0
    %v4585 = vadd.f32 %v4392, %v4584
    %4586 = vmatprep.mubr.bf16.mxu0 %v3856
    %4587 = vmatmul.mubr.bf16.gmra.mrb[0].mxu0 %v3855
    %v4588 = vpop.f32.mrb[0].mxu0
    %v4589 = vadd.f32 %v4396, %v4588
    %v4590 = vpop.f32.mrb[0].mxu0
    %v4591 = vadd.f32 %v4398, %v4590
    %v4592 = vpop.f32.mrb[0].mxu0
    %v4593 = vadd.f32 %v4400, %v4592
    %v4594 = vpop.f32.mrb[0].mxu0
    %v4595 = vadd.f32 %v4402, %v4594
    %4596 = vmatprep.mubr.bf16.mxu0 %v3860
    %4597 = vmatmul.mubr.bf16.gmra.mrb[0].mxu0 %v3859
    %v4598 = vpop.f32.mrb[0].mxu0
    %v4599 = vadd.f32 %v4406, %v4598
    %v4600 = vpop.f32.mrb[0].mxu0
    %v4601 = vadd.f32 %v4408, %v4600
    %v4602 = vpop.f32.mrb[0].mxu0
    %v4603 = vadd.f32 %v4410, %v4602
    %v4604 = vpop.f32.mrb[0].mxu0
    %v4605 = vadd.f32 %v4412, %v4604
    %4606 = vmatprep.mubr.bf16.mxu0 %v3864
    %4607 = vmatmul.mubr.bf16.gmra.mrb[0].mxu0 %v3863
    %v4608 = vpop.f32.mrb[0].mxu0
    %v4609 = vadd.f32 %v4416, %v4608
    %v4610 = vpop.f32.mrb[0].mxu0
    %v4611 = vadd.f32 %v4418, %v4610
    %v4612 = vpop.f32.mrb[0].mxu0
    %v4613 = vadd.f32 %v4420, %v4612
    %v4614 = vpop.f32.mrb[0].mxu0
    %v4615 = vadd.f32 %v4422, %v4614
    %4616 = vmatprep.mubr.bf16.mxu0 %v3868
    %4617 = vmatmul.mubr.bf16.gmra.mrb[0].mxu0 %v3867
    %v4618 = vpop.f32.mrb[0].mxu0
    %v4619 = vadd.f32 %v4426, %v4618
    %v4620 = vpop.f32.mrb[0].mxu0
    %v4621 = vadd.f32 %v4428, %v4620
    %v4622 = vpop.f32.mrb[0].mxu0
    %v4623 = vadd.f32 %v4430, %v4622
    %v4624 = vpop.f32.mrb[0].mxu0
    %v4625 = vadd.f32 %v4432, %v4624
    %4626 = vmatprep.mubr.bf16.mxu0 %v3872
    %4627 = vmatmul.mubr.bf16.gmra.mrb[0].mxu0 %v3871
    %v4628 = vpop.f32.mrb[0].mxu0
    %v4629 = vadd.f32 %v4436, %v4628
    %v4630 = vpop.f32.mrb[0].mxu0
    %v4631 = vadd.f32 %v4438, %v4630
    %v4632 = vpop.f32.mrb[0].mxu0
    %v4633 = vadd.f32 %v4440, %v4632
    %v4634 = vpop.f32.mrb[0].mxu0
    %v4635 = vadd.f32 %v4442, %v4634
    %4636 = vmatprep.mubr.bf16.mxu0 %v3876
    %4637 = vmatmul.mubr.bf16.gmra.mrb[0].mxu0 %v3875
    %v4638 = vpop.f32.mrb[0].mxu0
    %v4639 = vadd.f32 %v4446, %v4638
    %v4640 = vpop.f32.mrb[0].mxu0
    %v4641 = vadd.f32 %v4448, %v4640
    %v4642 = vpop.f32.mrb[0].mxu0
    %v4643 = vadd.f32 %v4450, %v4642
    %v4644 = vpop.f32.mrb[0].mxu0
    %v4645 = vadd.f32 %v4452, %v4644
    %4646 = vmatprep.mubr.bf16.mxu0 %v3880
    %4647 = vmatmul.mubr.bf16.gmra.mrb[0].mxu0 %v3879
    %v4648 = vpop.f32.mrb[0].mxu0
    %v4649 = vadd.f32 %v4456, %v4648
    %v4650 = vpop.f32.mrb[0].mxu0
    %v4651 = vadd.f32 %v4458, %v4650
    %v4652 = vpop.f32.mrb[0].mxu0
    %v4653 = vadd.f32 %v4460, %v4652
    %v4654 = vpop.f32.mrb[0].mxu0
    %v4655 = vadd.f32 %v4462, %v4654
    %4656 = vmatprep.mubr.bf16.mxu0 %v3884
    %4657 = vmatmul.mubr.bf16.gmra.mrb[0].mxu0 %v3883
    %v4658 = vpop.f32.mrb[0].mxu0
    %v4659 = vadd.f32 %v4466, %v4658
    %v4660 = vpop.f32.mrb[0].mxu0
    %v4661 = vadd.f32 %v4468, %v4660
    %v4662 = vpop.f32.mrb[0].mxu0
    %v4663 = vadd.f32 %v4470, %v4662
    %v4664 = vpop.f32.mrb[0].mxu0
    %v4665 = vadd.f32 %v4472, %v4664
    %4666 = vdwg.mxu0
    %4667 = vst [vmem:[#allocation2] sm:$0xff] %v4509
    %4668 = vst [vmem:[#allocation2 + $0x8] sm:$0xff] %v4511
    %4669 = vst [vmem:[#allocation2 + $0x10] sm:$0xff] %v4513
    %4670 = vst [vmem:[#allocation2 + $0x18] sm:$0xff] %v4515
    %4671 = vst [vmem:[#allocation2 + $0x20] sm:$0xff] %v4519
    %4672 = vst [vmem:[#allocation2 + $0x28] sm:$0xff] %v4521
    %4673 = vst [vmem:[#allocation2 + $0x30] sm:$0xff] %v4523
    %4674 = vst [vmem:[#allocation2 + $0x38] sm:$0xff] %v4525
    %4675 = vst [vmem:[#allocation2 + $0x40] sm:$0xff] %v4529
    %4676 = vst [vmem:[#allocation2 + $0x48] sm:$0xff] %v4531
    %4677 = vst [vmem:[#allocation2 + $0x50] sm:$0xff] %v4533
    %4678 = vst [vmem:[#allocation2 + $0x58] sm:$0xff] %v4535
    %4679 = vst [vmem:[#allocation2 + $0x60] sm:$0xff] %v4539
    %4680 = vst [vmem:[#allocation2 + $0x68] sm:$0xff] %v4541
    %4681 = vst [vmem:[#allocation2 + $0x70] sm:$0xff] %v4543
    %4682 = vst [vmem:[#allocation2 + $0x78] sm:$0xff] %v4545
    %4683 = vst [vmem:[#allocation2 + $0x80] sm:$0xff] %v4549
    %4684 = vst [vmem:[#allocation2 + $0x88] sm:$0xff] %v4551
    %4685 = vst [vmem:[#allocation2 + $0x90] sm:$0xff] %v4553
    %4686 = vst [vmem:[#allocation2 + $0x98] sm:$0xff] %v4555
    %4687 = vst [vmem:[#allocation2 + $0xa0] sm:$0xff] %v4559
    %4688 = vst [vmem:[#allocation2 + $0xa8] sm:$0xff] %v4561
    %4689 = vst [vmem:[#allocation2 + $0xb0] sm:$0xff] %v4563
    %4690 = vst [vmem:[#allocation2 + $0xb8] sm:$0xff] %v4565
    %4691 = vst [vmem:[#allocation2 + $0xc0] sm:$0xff] %v4569
    %4692 = vst [vmem:[#allocation2 + $0xc8] sm:$0xff] %v4571
    %4693 = vst [vmem:[#allocation2 + $0xd0] sm:$0xff] %v4573
    %4694 = vst [vmem:[#allocation2 + $0xd8] sm:$0xff] %v4575
    %4695 = vst [vmem:[#allocation2 + $0xe0] sm:$0xff] %v4579
    %4696 = vst [vmem:[#allocation2 + $0xe8] sm:$0xff] %v4581
    %4697 = vst [vmem:[#allocation2 + $0xf0] sm:$0xff] %v4583
    %4698 = vst [vmem:[#allocation2 + $0xf8] sm:$0xff] %v4585
    %4699 = vst [vmem:[#allocation2 + $0x100] sm:$0xff] %v4589
    %4700 = vst [vmem:[#allocation2 + $0x108] sm:$0xff] %v4591
    %4701 = vst [vmem:[#allocation2 + $0x110] sm:$0xff] %v4593
    %4702 = vst [vmem:[#allocation2 + $0x118] sm:$0xff] %v4595
    %4703 = vst [vmem:[#allocation2 + $0x120] sm:$0xff] %v4599
    %4704 = vst [vmem:[#allocation2 + $0x128] sm:$0xff] %v4601
    %4705 = vst [vmem:[#allocation2 + $0x130] sm:$0xff] %v4603
    %4706 = vst [vmem:[#allocation2 + $0x138] sm:$0xff] %v4605
    %4707 = vst [vmem:[#allocation2 + $0x140] sm:$0xff] %v4609
    %4708 = vst [vmem:[#allocation2 + $0x148] sm:$0xff] %v4611
    %4709 = vst [vmem:[#allocation2 + $0x150] sm:$0xff] %v4613
    %4710 = vst [vmem:[#allocation2 + $0x158] sm:$0xff] %v4615
    %4711 = vst [vmem:[#allocation2 + $0x160] sm:$0xff] %v4619
    %4712 = vst [vmem:[#allocation2 + $0x168] sm:$0xff] %v4621
    %4713 = vst [vmem:[#allocation2 + $0x170] sm:$0xff] %v4623
    %4714 = vst [vmem:[#allocation2 + $0x178] sm:$0xff] %v4625
    %4715 = vst [vmem:[#allocation2 + $0x180] sm:$0xff] %v4629
    %4716 = vst [vmem:[#allocation2 + $0x188] sm:$0xff] %v4631
    %4717 = vst [vmem:[#allocation2 + $0x190] sm:$0xff] %v4633
    %4718 = vst [vmem:[#allocation2 + $0x198] sm:$0xff] %v4635
    %4719 = vst [vmem:[#allocation2 + $0x1a0] sm:$0xff] %v4639
    %4720 = vst [vmem:[#allocation2 + $0x1a8] sm:$0xff] %v4641
    %4721 = vst [vmem:[#allocation2 + $0x1b0] sm:$0xff] %v4643
    %4722 = vst [vmem:[#allocation2 + $0x1b8] sm:$0xff] %v4645
    %4723 = vst [vmem:[#allocation2 + $0x1c0] sm:$0xff] %v4649
    %4724 = vst [vmem:[#allocation2 + $0x1c8] sm:$0xff] %v4651
    %4725 = vst [vmem:[#allocation2 + $0x1d0] sm:$0xff] %v4653
    %4726 = vst [vmem:[#allocation2 + $0x1d8] sm:$0xff] %v4655
    %4727 = vst [vmem:[#allocation2 + $0x1e0] sm:$0xff] %v4659
    %4728 = vst [vmem:[#allocation2 + $0x1e8] sm:$0xff] %v4661
    %4729 = vst [vmem:[#allocation2 + $0x1f0] sm:$0xff] %v4663
    %4730 = vst [vmem:[#allocation2 + $0x1f8] sm:$0xff] %v4665
    // Predicated region
    $region30: #{dino_head_forward.2} parent=1 // pred_check
      _
    $region31: #{dino_head_forward.2} parent=1 // pred_check_branch
      %4732 = sbr.rel (0) target = $region33
    $region32: #{dino_head_forward.2} parent=1 // pred_region
      %s4734 = ssub.s32 8192, 8192
      %4735 = vsyncadd [#allocation3], %s4734
      %s4736 = sshll.u32 [#allocation2], 4
      %s4737 = int_to_ptr.vmem [resolvable:$true] %s4736
      %4742 = dma.vmem_to_hbm [thread:$0]  %s4737, 8192, %s7, [#allocation3], 256, 256, 16
    $region33: #{dino_head_forward.2} parent=1 // pred_fallthru
      _
    // Predicated region
    $region34: #{dino_head_forward.2} parent=1 // pred_check
      _
    $region35: #{dino_head_forward.2} parent=1 // pred_check_branch
      %4744 = sbr.rel (0) target = $region37
    $region36: #{dino_head_forward.2} parent=1 // pred_region
      %4745 = dma.done [#allocation3], 8192
    $region37: #{dino_head_forward.2} parent=1 // pred_fallthru
      _
    %4746 = vsyncpa [#allocation3], 1

</llo_original>
